<compile_context>
chip_gen: v6e
topology: v6e:2x2x1
jax: 0.10.0
libtpu: 0.0.40
codegen_flags: <defaults>
</compile_context>

<pallas_src>
import functools
import math

import jax
import jax.numpy as jnp
from jax.experimental import pallas as pl
from jax.experimental.pallas import tpu as pltpu


def _round_up(x, m):
    return ((x + m - 1) // m) * m


_COMPILER_PARAMS = pltpu.CompilerParams(
    dimension_semantics=("parallel",),       # row / batch tiles are independent
    vmem_limit_bytes=48 * 1024 * 1024,       # headroom under v7x's 64 MiB VMEM
)

# Fixed geometry implied by the module (8/4 -> 4/2 -> 3/1 -> 7x7 => 84x84 in).
_WIN1, _ROWS1, _ROWS1P = 21, 21 * 21, 448    # conv1 after space-to-depth(4)
_WIN2, _ROWS2, _ROWS2P = 10, 10 * 10, 112    # conv2 after space-to-depth(2)
_WIN3, _ROWS3, _ROWS3P = 9, 9 * 9, 96        # conv3 (already stride 1)


# ----------------------------------------------------------------------------
# Pallas kernel: stride-1 conv as kh*kw shifted-slab matmuls, fused bias+ReLU.
#   x_ref: (BT*rows_pad, Cin)  flattened per-sample planes (row = y*Win + x)
#   w_ref: (kh*kw*Cin, Cout)   tap (e,f) occupies rows [(e*kw+f)*Cin, ...+Cin)
#   o_ref: (BT*rows_pad, Cout) full-plane output (margin rows are garbage and
#                              never read downstream)
# ----------------------------------------------------------------------------
def _conv_shift_kernel(x_ref, w_ref, b_ref, o_ref, *, win, kh, kw, cin):
    block_rows = o_ref.shape[0]
    cout = o_ref.shape[1]
    max_shift = (kh - 1) * win + (kw - 1)
    r_out = block_rows - max_shift            # rows covering every valid output

    acc = jnp.zeros((r_out, cout), jnp.float32)
    for e in range(kh):
        for f in range(kw):
            shift = e * win + f
            xs = x_ref[pl.ds(shift, r_out), :]                      # (r_out, Cin)
            wk = w_ref[(e * kw + f) * cin:(e * kw + f + 1) * cin, :]
            acc += jnp.dot(xs, wk, preferred_element_type=jnp.float32)

    acc = jnp.maximum(acc + b_ref[...], jnp.float32(0.0))
    o_ref[0:r_out, :] = acc.astype(o_ref.dtype)                     # partial store


def pallas_conv_s1(x2d, w, b, *, win, kh, kw, rows_per_sample, batch,
                   out_dtype=jnp.bfloat16, max_block_rows=8192, max_bt=64):
    """Stride-1 'valid' conv on flattened per-sample planes.

    x2d: (batch*rows_per_sample, Cin), w: (kh*kw*Cin, Cout), b: (1, Cout).
    Returns (batch*rows_per_sample, Cout) full-plane output in out_dtype.
    """
    total_rows, cin = x2d.shape
    assert total_rows == batch * rows_per_sample
    cout = w.shape[1]

    bt = max(1, min(max_bt, max_block_rows // rows_per_sample))
    if batch >= 2:
        bt = min(bt, max(1, batch // 2))      # >=2 grid steps for v7x dual-TC
    bt = max(1, min(bt, batch))
    block_rows = bt * rows_per_sample         # rows_per_sample is 16-aligned

    kernel = functools.partial(_conv_shift_kernel, win=win, kh=kh, kw=kw, cin=cin)
    return pl.pallas_call(
        kernel,
        out_shape=jax.ShapeDtypeStruct((total_rows, cout), out_dtype),
        grid=(pl.cdiv(batch, bt),),
        in_specs=[
            pl.BlockSpec((block_rows, cin), lambda i: (i, 0)),       # streamed
            pl.BlockSpec((kh * kw * cin, cout), lambda i: (0, 0)),   # resident
            pl.BlockSpec((1, cout), lambda i: (0, 0)),               # resident
        ],
        out_specs=pl.BlockSpec((block_rows, cout), lambda i: (i, 0)),
        compiler_params=_COMPILER_PARAMS,
    )(x2d, w, b)


# ----------------------------------------------------------------------------
# Pallas kernel: fused fc(+ReLU) + critic head.
#   hidden stored in bf16; critic matmul reads the bf16 hidden back from its
#   ref; 1-wide critic output lane-padded to 128 so stores are unmasked.
# ----------------------------------------------------------------------------
def _fc_critic_kernel(x_ref, wf_ref, bf_ref, wc_ref, bc_ref, h_ref, v_ref):
    h = jnp.dot(x_ref[...], wf_ref[...], preferred_element_type=jnp.float32)
    h = jnp.maximum(h + bf_ref[...], jnp.float32(0.0))
    h_ref[...] = h.astype(h_ref.dtype)                         # bf16 store
    v = jnp.dot(h_ref[...], wc_ref[...], preferred_element_type=jnp.float32)
    v_ref[...] = v + bc_ref[...]


def _pick_tile_rows(m, max_rows=1024, align=16):
    if m <= 2 * align:
        return m                               # single block == full dim
    return max(align, min(max_rows, _round_up(pl.cdiv(m, 2), align)))


def pallas_fc_critic(x, fc_w, fc_b, critic_w, critic_b, *, max_tm=1024):
    """x: (M, K) bf16; fc_w: (K, H) bf16; critic_w: (H, 128) bf16 (lane-padded).

    Returns (hidden bf16 (M, H), value f32 (M, 1)).
    """
    m, k = x.shape
    h = fc_w.shape[1]
    nc = critic_w.shape[1]
    tm = _pick_tile_rows(m, max_tm)

    hidden, value = pl.pallas_call(
        _fc_critic_kernel,
        out_shape=(
            jax.ShapeDtypeStruct((m, h), jnp.bfloat16),
            jax.ShapeDtypeStruct((m, nc), jnp.float32),
        ),
        grid=(pl.cdiv(m, tm),),
        in_specs=[
            pl.BlockSpec((tm, k), lambda i: (i, 0)),
            pl.BlockSpec((k, h), lambda i: (0, 0)),
            pl.BlockSpec((1, h), lambda i: (0, 0)),
            pl.BlockSpec((h, nc), lambda i: (0, 0)),
            pl.BlockSpec((1, nc), lambda i: (0, 0)),
        ],
        out_specs=(
            pl.BlockSpec((tm, h), lambda i: (i, 0)),
            pl.BlockSpec((tm, nc), lambda i: (i, 0)),
        ),
        compiler_params=_COMPILER_PARAMS,
    )(x, fc_w, fc_b, critic_w, critic_b)
    return hidden, value[:, :1]


# ----------------------------------------------------------------------------
# Plain-JAX layout glue (cheap, non-duplicating):
# space-to-depth + flatten each sample's plane to (rows_pad, C).
# ----------------------------------------------------------------------------
def _space_to_depth(x, s):
    b, hh, ww, c = x.shape
    x = x.reshape(b, hh // s, s, ww // s, s, c).transpose(0, 1, 3, 2, 4, 5)
    return x.reshape(b, hh // s, ww // s, s * s * c)


def _plane_pad_flatten(x, rows_pad):
    b, hh, ww, c = x.shape
    x = x.reshape(b, hh * ww, c)
    pad = rows_pad - hh * ww
    if pad:
        x = jnp.pad(x, ((0, 0), (0, pad), (0, 0)))
    return x.reshape(b * rows_pad, c)


# ----------------------------------------------------------------------------
# Parameter init (mirrors the module's orthogonal_/constant_ init) and
# one-time preparation of all kernel-side weight layouts.
# ----------------------------------------------------------------------------
def _orthogonal(key, shape, gain=1.0):
    rows = shape[0]
    cols = math.prod(shape[1:])
    a = jax.random.normal(key, (max(rows, cols), min(rows, cols)), dtype=jnp.float32)
    q, r = jnp.linalg.qr(a)
    q = q * jnp.sign(jnp.diagonal(r))
    if rows < cols:
        q = q.T
    return (gain * q).reshape(shape).astype(jnp.float32)


def init_cnn_base_params(key, num_inputs, hidden_size=512):
    relu_gain = math.sqrt(2.0)
    ks = jax.random.split(key, 5)
    return {
        "conv1_w": _orthogonal(ks[0], (32, num_inputs, 8, 8), relu_gain),
        "conv1_b": jnp.zeros((32,), jnp.float32),
        "conv2_w": _orthogonal(ks[1], (64, 32, 4, 4), relu_gain),
        "conv2_b": jnp.zeros((64,), jnp.float32),
        "conv3_w": _orthogonal(ks[2], (32, 64, 3, 3), relu_gain),
        "conv3_b": jnp.zeros((32,), jnp.float32),
        "fc_w": _orthogonal(ks[3], (hidden_size, 32 * 7 * 7), relu_gain),  # [out, in]
        "fc_b": jnp.zeros((hidden_size,), jnp.float32),
        "critic_w": _orthogonal(ks[4], (1, hidden_size), 1.0),             # [out, in]
        "critic_b": jnp.zeros((1,), jnp.float32),
    }


def prepare_cnn_base_params(params):
    """One-time: permute for space-to-depth, fold /255, pad critic, cast bf16."""
    f32 = jnp.float32
    bf16 = jnp.bfloat16

    # conv1: (32, C, 8, 8), stride 4 -> 2x2 stride-1 tap weights over 16*C chans.
    w1 = params["conv1_w"].astype(f32) / 255.0            # fold the /255 here
    co1, c1 = w1.shape[0], w1.shape[1]
    w1 = w1.reshape(co1, c1, 2, 4, 2, 4).transpose(2, 4, 3, 5, 1, 0)
    w1 = w1.reshape(2 * 2 * 4 * 4 * c1, co1)               # ((e,f),(p,q,c)) rows

    # conv2: (64, 32, 4, 4), stride 2 -> 2x2 stride-1 tap weights over 128 chans.
    w2 = params["conv2_w"].astype(f32)
    w2 = w2.reshape(64, 32, 2, 2, 2, 2).transpose(2, 4, 3, 5, 1, 0)
    w2 = w2.reshape(2 * 2 * 2 * 2 * 32, 64)

    # conv3: (32, 64, 3, 3), stride 1 -> (kh*kw*Cin, Cout).
    w3 = params["conv3_w"].astype(f32).transpose(2, 3, 1, 0).reshape(3 * 3 * 64, 32)

    # fc: permute input columns CHW -> HWC once (NHWC flatten == PyTorch flatten).
    hid = params["fc_w"].shape[0]
    fc_w = (params["fc_w"].astype(f32).reshape(hid, 32, 7, 7)
            .transpose(0, 2, 3, 1).reshape(hid, 7 * 7 * 32).T)

    # critic: transpose and lane-pad the single output column to 128.
    cw = params["critic_w"].astype(f32).T                   # (hid, 1)
    cw = jnp.pad(cw, ((0, 0), (0, 128 - cw.shape[1])))
    cb = jnp.pad(params["critic_b"].astype(f32).reshape(1, -1), ((0, 0), (0, 127)))

    return {
        "w1": w1.astype(bf16), "b1": params["conv1_b"].astype(f32).reshape(1, -1),
        "w2": w2.astype(bf16), "b2": params["conv2_b"].astype(f32).reshape(1, -1),
        "w3": w3.astype(bf16), "b3": params["conv3_b"].astype(f32).reshape(1, -1),
        "fc_w": fc_w.astype(bf16), "fc_b": params["fc_b"].astype(f32).reshape(1, -1),
        "critic_w": cw.astype(bf16), "critic_b": cb,
    }


# ----------------------------------------------------------------------------
# CNNBase.forward (recurrent=False)
# ----------------------------------------------------------------------------
def cnn_base_forward(prep, inputs, rnn_hxs, masks):
    b = inputs.shape[0]
    assert inputs.shape[2] == 84 and inputs.shape[3] == 84, "CNNBase expects 84x84"

    # NCHW -> NHWC once; bf16 activations end-to-end (0..255 exact in bf16).
    xh = inputs.transpose(0, 2, 3, 1).astype(jnp.bfloat16)

    # conv1: 8x8 s4 == space-to-depth(4) + 2x2 s1 over 64 chans; /255 in weight.
    x1 = _plane_pad_flatten(_space_to_depth(xh, 4), _ROWS1P)          # (B*448, 64)
    y1 = pallas_conv_s1(x1, prep["w1"], prep["b1"], win=_WIN1, kh=2, kw=2,
                        rows_per_sample=_ROWS1P, batch=b)             # (B*448, 32)
    y1 = (y1.reshape(b, _ROWS1P, 32)[:, :_ROWS1]
            .reshape(b, _WIN1, _WIN1, 32)[:, :20, :20, :])            # (B,20,20,32)

    # conv2: 4x4 s2 == space-to-depth(2) + 2x2 s1 over 128 chans.
    x2 = _plane_pad_flatten(_space_to_depth(y1, 2), _ROWS2P)          # (B*112, 128)
    y2 = pallas_conv_s1(x2, prep["w2"], prep["b2"], win=_WIN2, kh=2, kw=2,
                        rows_per_sample=_ROWS2P, batch=b)             # (B*112, 64)
    y2 = (y2.reshape(b, _ROWS2P, 64)[:, :_ROWS2]
            .reshape(b, _WIN2, _WIN2, 64)[:, :9, :9, :])              # (B,9,9,64)

    # conv3: 3x3 s1.
    x3 = _plane_pad_flatten(y2, _ROWS3P)                              # (B*96, 64)
    y3 = pallas_conv_s1(x3, prep["w3"], prep["b3"], win=_WIN3, kh=3, kw=3,
                        rows_per_sample=_ROWS3P, batch=b)             # (B*96, 32)
    y3 = (y3.reshape(b, _ROWS3P, 32)[:, :_ROWS3]
            .reshape(b, _WIN3, _WIN3, 32)[:, :7, :7, :])              # (B,7,7,32)

    flat = y3.reshape(b, 7 * 7 * 32)                                  # NHWC flatten

    hidden, value = pallas_fc_critic(flat, prep["fc_w"], prep["fc_b"],
                                     prep["critic_w"], prep["critic_b"])

    # recurrent=False -> rnn_hxs passed through unchanged, masks unused.
    return value, hidden, rnn_hxs


# ----------------------------------------------------------------------------
# Pure-JAX f32 reference (mirrors the PyTorch module) for a loose tolerance test.
# ----------------------------------------------------------------------------
def cnn_base_reference(params, inputs, rnn_hxs, masks):
    x = inputs.astype(jnp.float32) / 255.0

    def conv(x, w, bias, stride):
        y = jax.lax.conv_general_dilated(
            x, w, (stride, stride), "VALID",
            dimension_numbers=("NCHW", "OIHW", "NCHW"))
        return jax.nn.relu(y + bias.reshape(1, -1, 1, 1))

    x = conv(x, params["conv1_w"], params["conv1_b"], 4)
    x = conv(x, params["conv2_w"], params["conv2_b"], 2)
    x = conv(x, params["conv3_w"], params["conv3_b"], 1)
    x = x.reshape(x.shape[0], -1)                                    # NCHW flatten
    h = jax.nn.relu(x @ params["fc_w"].T + params["fc_b"])
    v = h @ params["critic_w"].T + params["critic_b"]
    return v, h, rnn_hxs


if __name__ == "__main__":
    key = jax.random.PRNGKey(0)
    k_param, k_in = jax.random.split(key)

    num_inputs = 4
    hidden_size = 512
    batch = 2
    # The conv stack (8/4, 4/2, 3/1 -> 7x7) implies 84x84 spatial input.
    inputs = jax.random.uniform(k_in, (batch, num_inputs, 84, 84), jnp.float32) * 255.0
    rnn_hxs = jnp.zeros((batch, 1), jnp.float32)    # recurrent_hidden_state_size == 1
    masks = jnp.ones((batch, 1), jnp.float32)

    params = init_cnn_base_params(k_param, num_inputs, hidden_size)
    prep = prepare_cnn_base_params(params)          # one-time weight preparation

    fwd = jax.jit(cnn_base_forward)
    value, feat, out_hxs = fwd(prep, inputs, rnn_hxs, masks)
    value = jax.block_until_ready(value)
    feat = jax.block_until_ready(feat)
    out_hxs = jax.block_until_ready(out_hxs)

    assert value.shape == (batch, 1)
    assert feat.shape == (batch, hidden_size)
    assert out_hxs.shape == rnn_hxs.shape
    assert bool(jnp.all(jnp.isfinite(value))) and bool(jnp.all(jnp.isfinite(feat)))

    # Loose tolerance vs the f32 reference (bf16 weights/activations in kernels).
    v_ref, h_ref, _ = cnn_base_reference(params, inputs, rnn_hxs, masks)
    h_scale = float(jnp.max(jnp.abs(h_ref))) + 1e-6
    v_scale = float(jnp.max(jnp.abs(v_ref))) + 1.0
    h_err = float(jnp.max(jnp.abs(feat.astype(jnp.float32) - h_ref))) / h_scale
    v_err = float(jnp.max(jnp.abs(value - v_ref))) / v_scale
    assert h_err < 0.15, f"hidden mismatch vs reference: rel max err {h_err:.4f}"
    assert v_err < 0.15, f"value mismatch vs reference: rel max err {v_err:.4f}"

    print("KERNEL_OK")
</pallas_src>

<mosaic_0001>
module attributes {stable_mosaic.version = 11 : i64} {
  func.func @_conv_shift_kernel(%arg0: i32, %arg1: memref<448x64xbf16, #tpu.memory_space<vmem>>, %arg2: memref<256x32xbf16, #tpu.memory_space<vmem>>, %arg3: memref<1x32xf32, #tpu.memory_space<vmem>>, %arg4: memref<448x32xbf16, #tpu.memory_space<vmem>>) attributes {dimension_semantics = [#tpu.dimension_semantics<parallel>], iteration_bounds = array<i64: 2>, scalar_prefetch = 0 : i64, scratch_operands = 0 : i64, tpu.core_type = #tpu.core_type<tc>, window_params = [{transform_indices = @transform_0, window_bounds = array<i64: 448, 64>}, {pipeline_mode = #tpu.pipeline_mode<synchronous>, transform_indices = @transform_1, window_bounds = array<i64: 256, 32>}, {pipeline_mode = #tpu.pipeline_mode<synchronous>, transform_indices = @transform_2, window_bounds = array<i64: 1, 32>}, {transform_indices = @transform_3, window_bounds = array<i64: 448, 32>}]} {
    %cst = arith.constant 0.000000e+00 : f32
    %0 = vector.broadcast %cst : f32 to vector<426x32xf32>
    %c0 = arith.constant 0 : index
    %c0_0 = arith.constant 0 : index
    %1 = vector.load %arg1[%c0, %c0_0] : memref<448x64xbf16, #tpu.memory_space<vmem>>, vector<426x64xbf16>
    %c0_1 = arith.constant 0 : index
    %c0_2 = arith.constant 0 : index
    %2 = vector.load %arg2[%c0_1, %c0_2] : memref<256x32xbf16, #tpu.memory_space<vmem>>, vector<64x32xbf16>
    %cst_3 = arith.constant dense<0.000000e+00> : vector<426x32xf32>
    %3 = tpu.matmul %1, %2, %cst_3 {dimension_numbers = #tpu.dot_dimension_numbers<[1], [0], [0], [1], [0, 0, 1, 1], [], []>} : vector<426x64xbf16>, vector<64x32xbf16>, vector<426x32xf32> -> vector<426x32xf32>
    %4 = arith.addf %0, %3 : vector<426x32xf32>
    %c1 = arith.constant 1 : index
    %c0_4 = arith.constant 0 : index
    %5 = vector.load %arg1[%c1, %c0_4] : memref<448x64xbf16, #tpu.memory_space<vmem>>, vector<426x64xbf16>
    %c64 = arith.constant 64 : index
    %c0_5 = arith.constant 0 : index
    %6 = vector.load %arg2[%c64, %c0_5] : memref<256x32xbf16, #tpu.memory_space<vmem>>, vector<64x32xbf16>
    %cst_6 = arith.constant dense<0.000000e+00> : vector<426x32xf32>
    %7 = tpu.matmul %5, %6, %cst_6 {dimension_numbers = #tpu.dot_dimension_numbers<[1], [0], [0], [1], [0, 0, 1, 1], [], []>} : vector<426x64xbf16>, vector<64x32xbf16>, vector<426x32xf32> -> vector<426x32xf32>
    %8 = arith.addf %4, %7 : vector<426x32xf32>
    %c21 = arith.constant 21 : index
    %c0_7 = arith.constant 0 : index
    %9 = vector.load %arg1[%c21, %c0_7] : memref<448x64xbf16, #tpu.memory_space<vmem>>, vector<426x64xbf16>
    %c128 = arith.constant 128 : index
    %c0_8 = arith.constant 0 : index
    %10 = vector.load %arg2[%c128, %c0_8] : memref<256x32xbf16, #tpu.memory_space<vmem>>, vector<64x32xbf16>
    %cst_9 = arith.constant dense<0.000000e+00> : vector<426x32xf32>
    %11 = tpu.matmul %9, %10, %cst_9 {dimension_numbers = #tpu.dot_dimension_numbers<[1], [0], [0], [1], [0, 0, 1, 1], [], []>} : vector<426x64xbf16>, vector<64x32xbf16>, vector<426x32xf32> -> vector<426x32xf32>
    %12 = arith.addf %8, %11 : vector<426x32xf32>
    %c22 = arith.constant 22 : index
    %c0_10 = arith.constant 0 : index
    %13 = vector.load %arg1[%c22, %c0_10] : memref<448x64xbf16, #tpu.memory_space<vmem>>, vector<426x64xbf16>
    %c192 = arith.constant 192 : index
    %c0_11 = arith.constant 0 : index
    %14 = vector.load %arg2[%c192, %c0_11] : memref<256x32xbf16, #tpu.memory_space<vmem>>, vector<64x32xbf16>
    %cst_12 = arith.constant dense<0.000000e+00> : vector<426x32xf32>
    %15 = tpu.matmul %13, %14, %cst_12 {dimension_numbers = #tpu.dot_dimension_numbers<[1], [0], [0], [1], [0, 0, 1, 1], [], []>} : vector<426x64xbf16>, vector<64x32xbf16>, vector<426x32xf32> -> vector<426x32xf32>
    %16 = arith.addf %12, %15 : vector<426x32xf32>
    %c0_13 = arith.constant 0 : index
    %c0_14 = arith.constant 0 : index
    %17 = vector.load %arg3[%c0_13, %c0_14] : memref<1x32xf32, #tpu.memory_space<vmem>>, vector<1x32xf32>
    %18 = vector.broadcast %17 : vector<1x32xf32> to vector<426x32xf32>
    %19 = arith.addf %16, %18 : vector<426x32xf32>
    %cst_15 = arith.constant 0.000000e+00 : f32
    %20 = vector.broadcast %cst_15 : f32 to vector<426x32xf32>
    %21 = arith.maximumf %19, %20 : vector<426x32xf32>
    %22 = arith.truncf %21 : vector<426x32xf32> to vector<426x32xbf16>
    %c0_16 = arith.constant 0 : index
    %c0_17 = arith.constant 0 : index
    %23 = vector.load %arg4[%c0_16, %c0_17] : memref<448x32xbf16, #tpu.memory_space<vmem>>, vector<426x32xbf16>
    tpu.vector_store %arg4[%c0_16, %c0_17], %22 {strides = array<i32>} : memref<448x32xbf16, #tpu.memory_space<vmem>>, vector<426x32xbf16>,
    return
  }
  func.func @transform_0(%arg0: i32) -> (i32, i32) {
    %c0_i32 = arith.constant 0 : i32
    %c0_i32_0 = arith.constant 0 : i32
    return %arg0, %c0_i32 : i32, i32
  }
  func.func @transform_1(%arg0: i32) -> (i32, i32) {
    %c0_i32 = arith.constant 0 : i32
    %c0_i32_0 = arith.constant 0 : i32
    %c0_i32_1 = arith.constant 0 : i32
    return %c0_i32, %c0_i32_0 : i32, i32
  }
  func.func @transform_2(%arg0: i32) -> (i32, i32) {
    %c0_i32 = arith.constant 0 : i32
    %c0_i32_0 = arith.constant 0 : i32
    %c0_i32_1 = arith.constant 0 : i32
    return %c0_i32, %c0_i32_0 : i32, i32
  }
  func.func @transform_3(%arg0: i32) -> (i32, i32) {
    %c0_i32 = arith.constant 0 : i32
    %c0_i32_0 = arith.constant 0 : i32
    return %arg0, %c0_i32 : i32, i32
  }
}

module attributes {stable_mosaic.version = 11 : i64} {
  func.func @_conv_shift_kernel(%arg0: i32, %arg1: memref<112x128xbf16, #tpu.memory_space<vmem>>, %arg2: memref<512x64xbf16, #tpu.memory_space<vmem>>, %arg3: memref<1x64xf32, #tpu.memory_space<vmem>>, %arg4: memref<112x64xbf16, #tpu.memory_space<vmem>>) attributes {dimension_semantics = [#tpu.dimension_semantics<parallel>], iteration_bounds = array<i64: 2>, scalar_prefetch = 0 : i64, scratch_operands = 0 : i64, tpu.core_type = #tpu.core_type<tc>, window_params = [{transform_indices = @transform_0, window_bounds = array<i64: 112, 128>}, {pipeline_mode = #tpu.pipeline_mode<synchronous>, transform_indices = @transform_1, window_bounds = array<i64: 512, 64>}, {pipeline_mode = #tpu.pipeline_mode<synchronous>, transform_indices = @transform_2, window_bounds = array<i64: 1, 64>}, {transform_indices = @transform_3, window_bounds = array<i64: 112, 64>}]} {
    %cst = arith.constant 0.000000e+00 : f32
    %0 = vector.broadcast %cst : f32 to vector<101x64xf32>
    %c0 = arith.constant 0 : index
    %c0_0 = arith.constant 0 : index
    %1 = vector.load %arg1[%c0, %c0_0] : memref<112x128xbf16, #tpu.memory_space<vmem>>, vector<101x128xbf16>
    %c0_1 = arith.constant 0 : index
    %c0_2 = arith.constant 0 : index
    %2 = vector.load %arg2[%c0_1, %c0_2] : memref<512x64xbf16, #tpu.memory_space<vmem>>, vector<128x64xbf16>
    %cst_3 = arith.constant dense<0.000000e+00> : vector<101x64xf32>
    %3 = tpu.matmul %1, %2, %cst_3 {dimension_numbers = #tpu.dot_dimension_numbers<[1], [0], [0], [1], [0, 0, 1, 1], [], []>} : vector<101x128xbf16>, vector<128x64xbf16>, vector<101x64xf32> -> vector<101x64xf32>
    %4 = arith.addf %0, %3 : vector<101x64xf32>
    %c1 = arith.constant 1 : index
    %c0_4 = arith.constant 0 : index
    %5 = vector.load %arg1[%c1, %c0_4] : memref<112x128xbf16, #tpu.memory_space<vmem>>, vector<101x128xbf16>
    %c128 = arith.constant 128 : index
    %c0_5 = arith.constant 0 : index
    %6 = vector.load %arg2[%c128, %c0_5] : memref<512x64xbf16, #tpu.memory_space<vmem>>, vector<128x64xbf16>
    %cst_6 = arith.constant dense<0.000000e+00> : vector<101x64xf32>
    %7 = tpu.matmul %5, %6, %cst_6 {dimension_numbers = #tpu.dot_dimension_numbers<[1], [0], [0], [1], [0, 0, 1, 1], [], []>} : vector<101x128xbf16>, vector<128x64xbf16>, vector<101x64xf32> -> vector<101x64xf32>
    %8 = arith.addf %4, %7 : vector<101x64xf32>
    %c10 = arith.constant 10 : index
    %c0_7 = arith.constant 0 : index
    %9 = vector.load %arg1[%c10, %c0_7] : memref<112x128xbf16, #tpu.memory_space<vmem>>, vector<101x128xbf16>
    %c256 = arith.constant 256 : index
    %c0_8 = arith.constant 0 : index
    %10 = vector.load %arg2[%c256, %c0_8] : memref<512x64xbf16, #tpu.memory_space<vmem>>, vector<128x64xbf16>
    %cst_9 = arith.constant dense<0.000000e+00> : vector<101x64xf32>
    %11 = tpu.matmul %9, %10, %cst_9 {dimension_numbers = #tpu.dot_dimension_numbers<[1], [0], [0], [1], [0, 0, 1, 1], [], []>} : vector<101x128xbf16>, vector<128x64xbf16>, vector<101x64xf32> -> vector<101x64xf32>
    %12 = arith.addf %8, %11 : vector<101x64xf32>
    %c11 = arith.constant 11 : index
    %c0_10 = arith.constant 0 : index
    %13 = vector.load %arg1[%c11, %c0_10] : memref<112x128xbf16, #tpu.memory_space<vmem>>, vector<101x128xbf16>
    %c384 = arith.constant 384 : index
    %c0_11 = arith.constant 0 : index
    %14 = vector.load %arg2[%c384, %c0_11] : memref<512x64xbf16, #tpu.memory_space<vmem>>, vector<128x64xbf16>
    %cst_12 = arith.constant dense<0.000000e+00> : vector<101x64xf32>
    %15 = tpu.matmul %13, %14, %cst_12 {dimension_numbers = #tpu.dot_dimension_numbers<[1], [0], [0], [1], [0, 0, 1, 1], [], []>} : vector<101x128xbf16>, vector<128x64xbf16>, vector<101x64xf32> -> vector<101x64xf32>
    %16 = arith.addf %12, %15 : vector<101x64xf32>
    %c0_13 = arith.constant 0 : index
    %c0_14 = arith.constant 0 : index
    %17 = vector.load %arg3[%c0_13, %c0_14] : memref<1x64xf32, #tpu.memory_space<vmem>>, vector<1x64xf32>
    %18 = vector.broadcast %17 : vector<1x64xf32> to vector<101x64xf32>
    %19 = arith.addf %16, %18 : vector<101x64xf32>
    %cst_15 = arith.constant 0.000000e+00 : f32
    %20 = vector.broadcast %cst_15 : f32 to vector<101x64xf32>
    %21 = arith.maximumf %19, %20 : vector<101x64xf32>
    %22 = arith.truncf %21 : vector<101x64xf32> to vector<101x64xbf16>
    %c0_16 = arith.constant 0 : index
    %c0_17 = arith.constant 0 : index
    %23 = vector.load %arg4[%c0_16, %c0_17] : memref<112x64xbf16, #tpu.memory_space<vmem>>, vector<101x64xbf16>
    tpu.vector_store %arg4[%c0_16, %c0_17], %22 {strides = array<i32>} : memref<112x64xbf16, #tpu.memory_space<vmem>>, vector<101x64xbf16>,
    return
  }
  func.func @transform_0(%arg0: i32) -> (i32, i32) {
    %c0_i32 = arith.constant 0 : i32
    %c0_i32_0 = arith.constant 0 : i32
    return %arg0, %c0_i32 : i32, i32
  }
  func.func @transform_1(%arg0: i32) -> (i32, i32) {
    %c0_i32 = arith.constant 0 : i32
    %c0_i32_0 = arith.constant 0 : i32
    %c0_i32_1 = arith.constant 0 : i32
    return %c0_i32, %c0_i32_0 : i32, i32
  }
  func.func @transform_2(%arg0: i32) -> (i32, i32) {
    %c0_i32 = arith.constant 0 : i32
    %c0_i32_0 = arith.constant 0 : i32
    %c0_i32_1 = arith.constant 0 : i32
    return %c0_i32, %c0_i32_0 : i32, i32
  }
  func.func @transform_3(%arg0: i32) -> (i32, i32) {
    %c0_i32 = arith.constant 0 : i32
    %c0_i32_0 = arith.constant 0 : i32
    return %arg0, %c0_i32 : i32, i32
  }
}

module attributes {stable_mosaic.version = 11 : i64} {
  func.func @_conv_shift_kernel(%arg0: i32, %arg1: memref<96x64xbf16, #tpu.memory_space<vmem>>, %arg2: memref<576x32xbf16, #tpu.memory_space<vmem>>, %arg3: memref<1x32xf32, #tpu.memory_space<vmem>>, %arg4: memref<96x32xbf16, #tpu.memory_space<vmem>>) attributes {dimension_semantics = [#tpu.dimension_semantics<parallel>], iteration_bounds = array<i64: 2>, scalar_prefetch = 0 : i64, scratch_operands = 0 : i64, tpu.core_type = #tpu.core_type<tc>, window_params = [{transform_indices = @transform_0, window_bounds = array<i64: 96, 64>}, {pipeline_mode = #tpu.pipeline_mode<synchronous>, transform_indices = @transform_1, window_bounds = array<i64: 576, 32>}, {pipeline_mode = #tpu.pipeline_mode<synchronous>, transform_indices = @transform_2, window_bounds = array<i64: 1, 32>}, {transform_indices = @transform_3, window_bounds = array<i64: 96, 32>}]} {
    %cst = arith.constant 0.000000e+00 : f32
    %0 = vector.broadcast %cst : f32 to vector<76x32xf32>
    %c0 = arith.constant 0 : index
    %c0_0 = arith.constant 0 : index
    %1 = vector.load %arg1[%c0, %c0_0] : memref<96x64xbf16, #tpu.memory_space<vmem>>, vector<76x64xbf16>
    %c0_1 = arith.constant 0 : index
    %c0_2 = arith.constant 0 : index
    %2 = vector.load %arg2[%c0_1, %c0_2] : memref<576x32xbf16, #tpu.memory_space<vmem>>, vector<64x32xbf16>
    %cst_3 = arith.constant dense<0.000000e+00> : vector<76x32xf32>
    %3 = tpu.matmul %1, %2, %cst_3 {dimension_numbers = #tpu.dot_dimension_numbers<[1], [0], [0], [1], [0, 0, 1, 1], [], []>} : vector<76x64xbf16>, vector<64x32xbf16>, vector<76x32xf32> -> vector<76x32xf32>
    %4 = arith.addf %0, %3 : vector<76x32xf32>
    %c1 = arith.constant 1 : index
    %c0_4 = arith.constant 0 : index
    %5 = vector.load %arg1[%c1, %c0_4] : memref<96x64xbf16, #tpu.memory_space<vmem>>, vector<76x64xbf16>
    %c64 = arith.constant 64 : index
    %c0_5 = arith.constant 0 : index
    %6 = vector.load %arg2[%c64, %c0_5] : memref<576x32xbf16, #tpu.memory_space<vmem>>, vector<64x32xbf16>
    %cst_6 = arith.constant dense<0.000000e+00> : vector<76x32xf32>
    %7 = tpu.matmul %5, %6, %cst_6 {dimension_numbers = #tpu.dot_dimension_numbers<[1], [0], [0], [1], [0, 0, 1, 1], [], []>} : vector<76x64xbf16>, vector<64x32xbf16>, vector<76x32xf32> -> vector<76x32xf32>
    %8 = arith.addf %4, %7 : vector<76x32xf32>
    %c2 = arith.constant 2 : index
    %c0_7 = arith.constant 0 : index
    %9 = vector.load %arg1[%c2, %c0_7] : memref<96x64xbf16, #tpu.memory_space<vmem>>, vector<76x64xbf16>
    %c128 = arith.constant 128 : index
    %c0_8 = arith.constant 0 : index
    %10 = vector.load %arg2[%c128, %c0_8] : memref<576x32xbf16, #tpu.memory_space<vmem>>, vector<64x32xbf16>
    %cst_9 = arith.constant dense<0.000000e+00> : vector<76x32xf32>
    %11 = tpu.matmul %9, %10, %cst_9 {dimension_numbers = #tpu.dot_dimension_numbers<[1], [0], [0], [1], [0, 0, 1, 1], [], []>} : vector<76x64xbf16>, vector<64x32xbf16>, vector<76x32xf32> -> vector<76x32xf32>
    %12 = arith.addf %8, %11 : vector<76x32xf32>
    %c9 = arith.constant 9 : index
    %c0_10 = arith.constant 0 : index
    %13 = vector.load %arg1[%c9, %c0_10] : memref<96x64xbf16, #tpu.memory_space<vmem>>, vector<76x64xbf16>
    %c192 = arith.constant 192 : index
    %c0_11 = arith.constant 0 : index
    %14 = vector.load %arg2[%c192, %c0_11] : memref<576x32xbf16, #tpu.memory_space<vmem>>, vector<64x32xbf16>
    %cst_12 = arith.constant dense<0.000000e+00> : vector<76x32xf32>
    %15 = tpu.matmul %13, %14, %cst_12 {dimension_numbers = #tpu.dot_dimension_numbers<[1], [0], [0], [1], [0, 0, 1, 1], [], []>} : vector<76x64xbf16>, vector<64x32xbf16>, vector<76x32xf32> -> vector<76x32xf32>
    %16 = arith.addf %12, %15 : vector<76x32xf32>
    %c10 = arith.constant 10 : index
    %c0_13 = arith.constant 0 : index
    %17 = vector.load %arg1[%c10, %c0_13] : memref<96x64xbf16, #tpu.memory_space<vmem>>, vector<76x64xbf16>
    %c256 = arith.constant 256 : index
    %c0_14 = arith.constant 0 : index
    %18 = vector.load %arg2[%c256, %c0_14] : memref<576x32xbf16, #tpu.memory_space<vmem>>, vector<64x32xbf16>
    %cst_15 = arith.constant dense<0.000000e+00> : vector<76x32xf32>
    %19 = tpu.matmul %17, %18, %cst_15 {dimension_numbers = #tpu.dot_dimension_numbers<[1], [0], [0], [1], [0, 0, 1, 1], [], []>} : vector<76x64xbf16>, vector<64x32xbf16>, vector<76x32xf32> -> vector<76x32xf32>
    %20 = arith.addf %16, %19 : vector<76x32xf32>
    %c11 = arith.constant 11 : index
    %c0_16 = arith.constant 0 : index
    %21 = vector.load %arg1[%c11, %c0_16] : memref<96x64xbf16, #tpu.memory_space<vmem>>, vector<76x64xbf16>
    %c320 = arith.constant 320 : index
    %c0_17 = arith.constant 0 : index
    %22 = vector.load %arg2[%c320, %c0_17] : memref<576x32xbf16, #tpu.memory_space<vmem>>, vector<64x32xbf16>
    %cst_18 = arith.constant dense<0.000000e+00> : vector<76x32xf32>
    %23 = tpu.matmul %21, %22, %cst_18 {dimension_numbers = #tpu.dot_dimension_numbers<[1], [0], [0], [1], [0, 0, 1, 1], [], []>} : vector<76x64xbf16>, vector<64x32xbf16>, vector<76x32xf32> -> vector<76x32xf32>
    %24 = arith.addf %20, %23 : vector<76x32xf32>
    %c18 = arith.constant 18 : index
    %c0_19 = arith.constant 0 : index
    %25 = vector.load %arg1[%c18, %c0_19] : memref<96x64xbf16, #tpu.memory_space<vmem>>, vector<76x64xbf16>
    %c384 = arith.constant 384 : index
    %c0_20 = arith.constant 0 : index
    %26 = vector.load %arg2[%c384, %c0_20] : memref<576x32xbf16, #tpu.memory_space<vmem>>, vector<64x32xbf16>
    %cst_21 = arith.constant dense<0.000000e+00> : vector<76x32xf32>
    %27 = tpu.matmul %25, %26, %cst_21 {dimension_numbers = #tpu.dot_dimension_numbers<[1], [0], [0], [1], [0, 0, 1, 1], [], []>} : vector<76x64xbf16>, vector<64x32xbf16>, vector<76x32xf32> -> vector<76x32xf32>
    %28 = arith.addf %24, %27 : vector<76x32xf32>
    %c19 = arith.constant 19 : index
    %c0_22 = arith.constant 0 : index
    %29 = vector.load %arg1[%c19, %c0_22] : memref<96x64xbf16, #tpu.memory_space<vmem>>, vector<76x64xbf16>
    %c448 = arith.constant 448 : index
    %c0_23 = arith.constant 0 : index
    %30 = vector.load %arg2[%c448, %c0_23] : memref<576x32xbf16, #tpu.memory_space<vmem>>, vector<64x32xbf16>
    %cst_24 = arith.constant dense<0.000000e+00> : vector<76x32xf32>
    %31 = tpu.matmul %29, %30, %cst_24 {dimension_numbers = #tpu.dot_dimension_numbers<[1], [0], [0], [1], [0, 0, 1, 1], [], []>} : vector<76x64xbf16>, vector<64x32xbf16>, vector<76x32xf32> -> vector<76x32xf32>
    %32 = arith.addf %28, %31 : vector<76x32xf32>
    %c20 = arith.constant 20 : index
    %c0_25 = arith.constant 0 : index
    %33 = vector.load %arg1[%c20, %c0_25] : memref<96x64xbf16, #tpu.memory_space<vmem>>, vector<76x64xbf16>
    %c512 = arith.constant 512 : index
    %c0_26 = arith.constant 0 : index
    %34 = vector.load %arg2[%c512, %c0_26] : memref<576x32xbf16, #tpu.memory_space<vmem>>, vector<64x32xbf16>
    %cst_27 = arith.constant dense<0.000000e+00> : vector<76x32xf32>
    %35 = tpu.matmul %33, %34, %cst_27 {dimension_numbers = #tpu.dot_dimension_numbers<[1], [0], [0], [1], [0, 0, 1, 1], [], []>} : vector<76x64xbf16>, vector<64x32xbf16>, vector<76x32xf32> -> vector<76x32xf32>
    %36 = arith.addf %32, %35 : vector<76x32xf32>
    %c0_28 = arith.constant 0 : index
    %c0_29 = arith.constant 0 : index
    %37 = vector.load %arg3[%c0_28, %c0_29] : memref<1x32xf32, #tpu.memory_space<vmem>>, vector<1x32xf32>
    %38 = vector.broadcast %37 : vector<1x32xf32> to vector<76x32xf32>
    %39 = arith.addf %36, %38 : vector<76x32xf32>
    %cst_30 = arith.constant 0.000000e+00 : f32
    %40 = vector.broadcast %cst_30 : f32 to vector<76x32xf32>
    %41 = arith.maximumf %39, %40 : vector<76x32xf32>
    %42 = arith.truncf %41 : vector<76x32xf32> to vector<76x32xbf16>
    %c0_31 = arith.constant 0 : index
    %c0_32 = arith.constant 0 : index
    %43 = vector.load %arg4[%c0_31, %c0_32] : memref<96x32xbf16, #tpu.memory_space<vmem>>, vector<76x32xbf16>
    tpu.vector_store %arg4[%c0_31, %c0_32], %42 {strides = array<i32>} : memref<96x32xbf16, #tpu.memory_space<vmem>>, vector<76x32xbf16>,
    return
  }
  func.func @transform_0(%arg0: i32) -> (i32, i32) {
    %c0_i32 = arith.constant 0 : i32
    %c0_i32_0 = arith.constant 0 : i32
    return %arg0, %c0_i32 : i32, i32
  }
  func.func @transform_1(%arg0: i32) -> (i32, i32) {
    %c0_i32 = arith.constant 0 : i32
    %c0_i32_0 = arith.constant 0 : i32
    %c0_i32_1 = arith.constant 0 : i32
    return %c0_i32, %c0_i32_0 : i32, i32
  }
  func.func @transform_2(%arg0: i32) -> (i32, i32) {
    %c0_i32 = arith.constant 0 : i32
    %c0_i32_0 = arith.constant 0 : i32
    %c0_i32_1 = arith.constant 0 : i32
    return %c0_i32, %c0_i32_0 : i32, i32
  }
  func.func @transform_3(%arg0: i32) -> (i32, i32) {
    %c0_i32 = arith.constant 0 : i32
    %c0_i32_0 = arith.constant 0 : i32
    return %arg0, %c0_i32 : i32, i32
  }
}

module attributes {stable_mosaic.version = 11 : i64} {
  func.func @_fc_critic_kernel(%arg0: i32, %arg1: memref<2x1568xbf16, #tpu.memory_space<vmem>>, %arg2: memref<1568x512xbf16, #tpu.memory_space<vmem>>, %arg3: memref<1x512xf32, #tpu.memory_space<vmem>>, %arg4: memref<512x128xbf16, #tpu.memory_space<vmem>>, %arg5: memref<1x128xf32, #tpu.memory_space<vmem>>, %arg6: memref<2x512xbf16, #tpu.memory_space<vmem>>, %arg7: memref<2x128xf32, #tpu.memory_space<vmem>>) attributes {dimension_semantics = [#tpu.dimension_semantics<parallel>], iteration_bounds = array<i64: 1>, scalar_prefetch = 0 : i64, scratch_operands = 0 : i64, tpu.core_type = #tpu.core_type<tc>, window_params = [{transform_indices = @transform_0, window_bounds = array<i64: 2, 1568>}, {pipeline_mode = #tpu.pipeline_mode<synchronous>, transform_indices = @transform_1, window_bounds = array<i64: 1568, 512>}, {pipeline_mode = #tpu.pipeline_mode<synchronous>, transform_indices = @transform_2, window_bounds = array<i64: 1, 512>}, {pipeline_mode = #tpu.pipeline_mode<synchronous>, transform_indices = @transform_3, window_bounds = array<i64: 512, 128>}, {pipeline_mode = #tpu.pipeline_mode<synchronous>, transform_indices = @transform_4, window_bounds = array<i64: 1, 128>}, {transform_indices = @transform_5, window_bounds = array<i64: 2, 512>}, {transform_indices = @transform_6, window_bounds = array<i64: 2, 128>}]} {
    %c0 = arith.constant 0 : index
    %c0_0 = arith.constant 0 : index
    %0 = vector.load %arg1[%c0, %c0_0] : memref<2x1568xbf16, #tpu.memory_space<vmem>>, vector<2x1568xbf16>
    %c0_1 = arith.constant 0 : index
    %c0_2 = arith.constant 0 : index
    %1 = vector.load %arg2[%c0_1, %c0_2] : memref<1568x512xbf16, #tpu.memory_space<vmem>>, vector<1568x512xbf16>
    %cst = arith.constant dense<0.000000e+00> : vector<2x512xf32>
    %2 = tpu.matmul %0, %1, %cst {dimension_numbers = #tpu.dot_dimension_numbers<[1], [0], [0], [1], [0, 0, 1, 1], [], []>} : vector<2x1568xbf16>, vector<1568x512xbf16>, vector<2x512xf32> -> vector<2x512xf32>
    %c0_3 = arith.constant 0 : index
    %c0_4 = arith.constant 0 : index
    %3 = vector.load %arg3[%c0_3, %c0_4] : memref<1x512xf32, #tpu.memory_space<vmem>>, vector<1x512xf32>
    %4 = vector.broadcast %3 : vector<1x512xf32> to vector<2x512xf32>
    %5 = arith.addf %2, %4 : vector<2x512xf32>
    %cst_5 = arith.constant 0.000000e+00 : f32
    %6 = vector.broadcast %cst_5 : f32 to vector<2x512xf32>
    %7 = arith.maximumf %5, %6 : vector<2x512xf32>
    %8 = arith.truncf %7 : vector<2x512xf32> to vector<2x512xbf16>
    %c0_6 = arith.constant 0 : index
    %c0_7 = arith.constant 0 : index
    %9 = vector.load %arg6[%c0_6, %c0_7] : memref<2x512xbf16, #tpu.memory_space<vmem>>, vector<2x512xbf16>
    tpu.vector_store %arg6[%c0_6, %c0_7], %8 {strides = array<i32>} : memref<2x512xbf16, #tpu.memory_space<vmem>>, vector<2x512xbf16>,
    %c0_8 = arith.constant 0 : index
    %c0_9 = arith.constant 0 : index
    %10 = vector.load %arg6[%c0_8, %c0_9] : memref<2x512xbf16, #tpu.memory_space<vmem>>, vector<2x512xbf16>
    %c0_10 = arith.constant 0 : index
    %c0_11 = arith.constant 0 : index
    %11 = vector.load %arg4[%c0_10, %c0_11] : memref<512x128xbf16, #tpu.memory_space<vmem>>, vector<512x128xbf16>
    %cst_12 = arith.constant dense<0.000000e+00> : vector<2x128xf32>
    %12 = tpu.matmul %10, %11, %cst_12 {dimension_numbers = #tpu.dot_dimension_numbers<[1], [0], [0], [1], [0, 0, 1, 1], [], []>} : vector<2x512xbf16>, vector<512x128xbf16>, vector<2x128xf32> -> vector<2x128xf32>
    %c0_13 = arith.constant 0 : index
    %c0_14 = arith.constant 0 : index
    %13 = vector.load %arg5[%c0_13, %c0_14] : memref<1x128xf32, #tpu.memory_space<vmem>>, vector<1x128xf32>
    %14 = vector.broadcast %13 : vector<1x128xf32> to vector<2x128xf32>
    %15 = arith.addf %12, %14 : vector<2x128xf32>
    %c0_15 = arith.constant 0 : index
    %c0_16 = arith.constant 0 : index
    %16 = vector.load %arg7[%c0_15, %c0_16] : memref<2x128xf32, #tpu.memory_space<vmem>>, vector<2x128xf32>
    tpu.vector_store %arg7[%c0_15, %c0_16], %15 {strides = array<i32>} : memref<2x128xf32, #tpu.memory_space<vmem>>, vector<2x128xf32>,
    return
  }
  func.func @transform_0(%arg0: i32) -> (i32, i32) {
    %c0_i32 = arith.constant 0 : i32
    %c0_i32_0 = arith.constant 0 : i32
    return %arg0, %c0_i32 : i32, i32
  }
  func.func @transform_1(%arg0: i32) -> (i32, i32) {
    %c0_i32 = arith.constant 0 : i32
    %c0_i32_0 = arith.constant 0 : i32
    %c0_i32_1 = arith.constant 0 : i32
    return %c0_i32, %c0_i32_0 : i32, i32
  }
  func.func @transform_2(%arg0: i32) -> (i32, i32) {
    %c0_i32 = arith.constant 0 : i32
    %c0_i32_0 = arith.constant 0 : i32
    %c0_i32_1 = arith.constant 0 : i32
    return %c0_i32, %c0_i32_0 : i32, i32
  }
  func.func @transform_3(%arg0: i32) -> (i32, i32) {
    %c0_i32 = arith.constant 0 : i32
    %c0_i32_0 = arith.constant 0 : i32
    %c0_i32_1 = arith.constant 0 : i32
    return %c0_i32, %c0_i32_0 : i32, i32
  }
  func.func @transform_4(%arg0: i32) -> (i32, i32) {
    %c0_i32 = arith.constant 0 : i32
    %c0_i32_0 = arith.constant 0 : i32
    %c0_i32_1 = arith.constant 0 : i32
    return %c0_i32, %c0_i32_0 : i32, i32
  }
  func.func @transform_5(%arg0: i32) -> (i32, i32) {
    %c0_i32 = arith.constant 0 : i32
    %c0_i32_0 = arith.constant 0 : i32
    return %arg0, %c0_i32 : i32, i32
  }
  func.func @transform_6(%arg0: i32) -> (i32, i32) {
    %c0_i32 = arith.constant 0 : i32
    %c0_i32_0 = arith.constant 0 : i32
    return %arg0, %c0_i32 : i32, i32
  }
}

</mosaic_0001>

<llo_original>
// kernel: cnn_base_forward.4
$region0: #{cnn_base_forward.4}
  #allocation0 [shape = 'u32[]', space=smem, size = 0x4, offset = 0x4, fixed_abs, tag = 'smem constant byte address 0x4 - core index']
  #allocation1 [shape = 'u32[144,128]{1,0:T(1,128)}', space=vmem, size = 0x12000, scoped, tag = 'internal scratch']
  %s0 = inlined_call_operand.vmem [shape: bf16[896,64], index: 0, kind: input, shape index: {}]
  %s1 = inlined_call_operand.vmem [shape: bf16[256,32], index: 1, kind: input, shape index: {}]
  %s2 = inlined_call_operand.vmem [shape: f32[1,32], index: 2, kind: input, shape index: {}]
  %s3 = inlined_call_operand.vmem [shape: bf16[896,32], index: 3, kind: output, shape index: {}]
  %s4 = sld [smem:[#allocation0]]
  $region45: #{cnn_base_forward.4} parent=0
    _
  %s6 = ssub.s32 1, %s4
  %s7 = scalar_select 0, %s6, %s4
  loop: start=0, step=1, limit=4
  $region2: #{cnn_base_forward.4} parent=0 // loop_pre_header
    _
  $region3: #{cnn_base_forward.4} parent=0 // loop_header
    %s9 = sphi 0, %s13
    %p10 = scmp.ge.s32.totalorder %s9, 4
    %s19 = sphi 0, %s21
    %s22 = sphi 0, %s19
    %s23 = sphi 0, %s22
    %s39 = sphi 0, %s23
    %s43 = sphi 0, %s43
    %s45 = sphi 0, %s43
    %s46 = sphi 0, %s45
    %s60 = sphi 0, %s46
    %s64 = sphi 0, %s64
    %s66 = sphi 0, %s64
    %s67 = sphi 0, %s66
    %s81 = sphi 0, %s67
    %s87 = sphi 0, %s89
    %s90 = sphi 0, %s87
    %s91 = sphi 0, %s90
    %s107 = sphi 0, %s91
  $region4: #{cnn_base_forward.4} parent=0 // loop_header_branch
    %12 = sbr.rel (%p10) target = $region8
  $region5: #{cnn_base_forward.4} parent=0 // loop_body
    %s14 = ssub.s32 %s9, 1
    %s15 = ssub.s32 %s9, 2
    %s16 = sadd.s32 %s9, 1
    %s17 = ssub.s32 %s9, %s16
    %p18 = scmp.eq.s32.totalorder %s17, 0
    %s20 = sadd.s32 %s19, 1
    %s21 = scalar_select %p18, %s19, %s20
    %p24 = pneg %p18
    %p25 = scmp.eq.s32.totalorder %s9, 1
    %p26 = por %p24, %p25
    %p27 = scmp.ne.s32.totalorder %s19, %s22
    %p28 = scmp.eq.s32.totalorder %s9, 0
    %p29 = por %p27, %p28
    %p30 = scmp.ne.s32.totalorder %s19, %s22
    %p31 = scmp.eq.s32.totalorder %s14, 1
    %p32 = por %p30, %p31
    %p33 = scmp.ne.s32.totalorder %s22, %s23
    %p34 = scmp.eq.s32.totalorder %s14, 0
    %p35 = por %p33, %p34
    %p36 = scmp.ne.s32.totalorder %s22, %s23
    %p37 = scmp.eq.s32.totalorder %s15, 1
    %p38 = por %p36, %p37
    %p40 = scmp.ne.s32.totalorder %s23, %s39
    %p41 = scmp.eq.s32.totalorder %s15, 0
    %p42 = por %p40, %p41
    %s44 = sadd.s32 %s43, 1
    %p47 = scmp.eq.s32.totalorder %s9, 1
    %p48 = scmp.ne.s32.totalorder %s43, %s45
    %p49 = scmp.eq.s32.totalorder %s9, 0
    %p50 = por %p48, %p49
    %p51 = scmp.ne.s32.totalorder %s43, %s45
    %p52 = scmp.eq.s32.totalorder %s14, 1
    %p53 = por %p51, %p52
    %p54 = scmp.ne.s32.totalorder %s45, %s46
    %p55 = scmp.eq.s32.totalorder %s14, 0
    %p56 = por %p54, %p55
    %p57 = scmp.ne.s32.totalorder %s45, %s46
    %p58 = scmp.eq.s32.totalorder %s15, 1
    %p59 = por %p57, %p58
    %p61 = scmp.ne.s32.totalorder %s46, %s60
    %p62 = scmp.eq.s32.totalorder %s15, 0
    %p63 = por %p61, %p62
    %s65 = sadd.s32 %s64, 1
    %p68 = scmp.eq.s32.totalorder %s9, 1
    %p69 = scmp.ne.s32.totalorder %s64, %s66
    %p70 = scmp.eq.s32.totalorder %s9, 0
    %p71 = por %p69, %p70
    %p72 = scmp.ne.s32.totalorder %s64, %s66
    %p73 = scmp.eq.s32.totalorder %s14, 1
    %p74 = por %p72, %p73
    %p75 = scmp.ne.s32.totalorder %s66, %s67
    %p76 = scmp.eq.s32.totalorder %s14, 0
    %p77 = por %p75, %p76
    %p78 = scmp.ne.s32.totalorder %s66, %s67
    %p79 = scmp.eq.s32.totalorder %s15, 1
    %p80 = por %p78, %p79
    %p82 = scmp.ne.s32.totalorder %s67, %s81
    %p83 = scmp.eq.s32.totalorder %s15, 0
    %p84 = por %p82, %p83
    %s85 = ssub.s32 %s9, %s16
    %p86 = scmp.eq.s32.totalorder %s85, 0
    %s88 = sadd.s32 %s87, 1
    %s89 = scalar_select %p86, %s87, %s88
    %p92 = pneg %p86
    %p93 = scmp.eq.s32.totalorder %s9, 1
    %p94 = por %p92, %p93
    %p95 = scmp.ne.s32.totalorder %s87, %s90
    %p96 = scmp.eq.s32.totalorder %s9, 0
    %p97 = por %p95, %p96
    %p98 = scmp.ne.s32.totalorder %s87, %s90
    %p99 = scmp.eq.s32.totalorder %s14, 1
    %p100 = por %p98, %p99
    %p101 = scmp.ne.s32.totalorder %s90, %s91
    %p102 = scmp.eq.s32.totalorder %s14, 0
    %p103 = por %p101, %p102
    %p104 = scmp.ne.s32.totalorder %s90, %s91
    %p105 = scmp.eq.s32.totalorder %s15, 1
    %p106 = por %p104, %p105
    %p108 = scmp.ne.s32.totalorder %s91, %s107
    %p109 = scmp.eq.s32.totalorder %s15, 0
    %p110 = por %p108, %p109
    %p111 = scmp.le.s32.totalorder 1, %s9
    %p112 = scmp.lt.s32.totalorder %s9, 3
    %p113 = pnand %p111, %p112
    %p114 = pneg %p113
    // Predicated region
    $region9: #{cnn_base_forward.4} parent=5 // pred_check
      _
    $region10: #{cnn_base_forward.4} parent=5 // pred_check_branch
      %116 = sbr.rel (%p113) target = $region12
    $region11: #{cnn_base_forward.4} parent=5 // pred_region
      %s117 = ssub.s32 %s9, 1
      // Predicated region
      $region13: #{cnn_base_forward.4} parent=11 // pred_check
        %p118 = pneg %p56
      $region14: #{cnn_base_forward.4} parent=11 // pred_check_branch
        %120 = sbr.rel (%p118) target = $region16
      $region15: #{cnn_base_forward.4} parent=11 // pred_region
        _
      $region16: #{cnn_base_forward.4} parent=11 // pred_fallthru
        _
      // Predicated region
      $region17: #{cnn_base_forward.4} parent=11 // pred_check
        %p121 = pneg %p77
      $region18: #{cnn_base_forward.4} parent=11 // pred_check_branch
        %123 = sbr.rel (%p121) target = $region20
      $region19: #{cnn_base_forward.4} parent=11 // pred_region
        _
      $region20: #{cnn_base_forward.4} parent=11 // pred_fallthru
        _
    $region12: #{cnn_base_forward.4} parent=5 // pred_fallthru
      _
    %p124 = scmp.lt.s32.totalorder %s9, 2
    // Predicated region
    $region21: #{cnn_base_forward.4} parent=5 // pred_check
      %p125 = pneg %p124
    $region22: #{cnn_base_forward.4} parent=5 // pred_check_branch
      %127 = sbr.rel (%p125) target = $region24
    $region23: #{cnn_base_forward.4} parent=5 // pred_region
      // Predicated region
      $region25: #{cnn_base_forward.4} parent=23 // pred_check
        %p128 = pneg %p29
      $region26: #{cnn_base_forward.4} parent=23 // pred_check_branch
        %130 = sbr.rel (%p128) target = $region28
      $region27: #{cnn_base_forward.4} parent=23 // pred_region
        %s131 = smul.u32 56, %s9
        %p132 = scmp.lt.s32.totalorder %s131, 111
        %s133 = scalar_select %p132, %s131, 111
        %s134 = smul.addr %s133, 4
        %s135 = scalar_lea.vmem %s0, %s134
        %s136 = smul.u32 56, %s9
      $region28: #{cnn_base_forward.4} parent=23 // pred_fallthru
        _
    $region24: #{cnn_base_forward.4} parent=5 // pred_fallthru
      _
    %p137 = scmp.le.s32.totalorder 1, %s9
    %p138 = scmp.lt.s32.totalorder %s9, 3
    %p139 = pnand %p137, %p138
    %p140 = pneg %p139
    // Predicated region
    $region29: #{cnn_base_forward.4} parent=5 // pred_check
      _
    $region30: #{cnn_base_forward.4} parent=5 // pred_check_branch
      %142 = sbr.rel (%p139) target = $region32
    $region31: #{cnn_base_forward.4} parent=5 // pred_region
      %s143 = ssub.s32 %s9, 1
      %s144 = smul.u32 56, %s14
      %p145 = scmp.lt.s32.totalorder %s144, 111
      %s146 = scalar_select %p145, %s144, 111
      %s147 = smul.addr %s146, 4
      %s148 = scalar_lea.vmem %s0, %s147
      %p149 = pneg %p35
      %p150 = pneg %p32
      %p151 = pneg %p56
      %p152 = pneg %p53
      %p153 = pneg %p77
      %p154 = pneg %p74
      %p155 = pneg %p103
      %p156 = pneg %p100
      %s157 = smul.u32 56, %s14
      %p158 = scmp.lt.s32.totalorder %s157, 111
      %s159 = scalar_select %p158, %s157, 111
      %s160 = smul.addr %s159, 4
      %s161 = scalar_lea.vmem %s3, %s160
      %s162 = smul.u32 56, %s14
      %p163 = scmp.lt.s32.totalorder %s162, 111
      %s164 = scalar_select %p163, %s162, 111
      %s165 = smul.addr %s164, 4
      %s166 = scalar_lea.vmem %s0, %s165
      %s167 = smul.u32 56, %s14
      %s168 = smul.u32 56, %s14
      %p169 = scmp.lt.s32.totalorder %s168, 111
      %s170 = scalar_select %p169, %s168, 111
      %s171 = smul.addr %s170, 4
      %s172 = scalar_lea.vmem %s3, %s171
      %s173 = smul.u32 56, %s14
      %v175 = vld [vmem:[%s166] sm:$0xf]
      %v176 = vld [vmem:[%s166 + $0x4] sm:$0xf]
      %v177 = vld [vmem:[%s166 + $0x8] sm:$0xf]
      %v178 = vld [vmem:[%s166 + $0xc] sm:$0xf]
      %v179 = vld [vmem:[%s166 + $0x10] sm:$0xf]
      %v180 = vld [vmem:[%s166 + $0x14] sm:$0xf]
      %v181 = vld [vmem:[%s166 + $0x18] sm:$0xf]
      %v182 = vld [vmem:[%s166 + $0x1c] sm:$0xf]
      %v183 = vld [vmem:[%s166 + $0x20] sm:$0xf]
      %v184 = vld [vmem:[%s166 + $0x24] sm:$0xf]
      %v185 = vld [vmem:[%s166 + $0x28] sm:$0xf]
      %v186 = vld [vmem:[%s166 + $0x2c] sm:$0xf]
      %v187 = vld [vmem:[%s166 + $0x30] sm:$0xf]
      %v188 = vld [vmem:[%s166 + $0x34] sm:$0xf]
      %v189 = vld [vmem:[%s166 + $0x38] sm:$0xf]
      %v190 = vld [vmem:[%s166 + $0x3c] sm:$0xf]
      %v191 = vld [vmem:[%s166 + $0x40] sm:$0xf]
      %v192 = vld [vmem:[%s166 + $0x44] sm:$0xf]
      %v193 = vld [vmem:[%s166 + $0x48] sm:$0xf]
      %v194 = vld [vmem:[%s166 + $0x4c] sm:$0xf]
      %v195 = vld [vmem:[%s166 + $0x50] sm:$0xf]
      %v196 = vld [vmem:[%s166 + $0x54] sm:$0xf]
      %v197 = vld [vmem:[%s166 + $0x58] sm:$0xf]
      %v198 = vld [vmem:[%s166 + $0x5c] sm:$0xf]
      %v199 = vld [vmem:[%s166 + $0x60] sm:$0xf]
      %v200 = vld [vmem:[%s166 + $0x64] sm:$0xf]
      %v201 = vld [vmem:[%s166 + $0x68] sm:$0xf]
      %v202 = vld [vmem:[%s166 + $0x6c] sm:$0xf]
      %v203 = vld [vmem:[%s166 + $0x70] sm:$0xf]
      %v204 = vld [vmem:[%s166 + $0x74] sm:$0xf]
      %v205 = vld [vmem:[%s166 + $0x78] sm:$0xf]
      %v206 = vld [vmem:[%s166 + $0x7c] sm:$0xf]
      %v207 = vld [vmem:[%s166 + $0x80] sm:$0xf]
      %v208 = vld [vmem:[%s166 + $0x84] sm:$0xf]
      %v209 = vld [vmem:[%s166 + $0x88] sm:$0xf]
      %v210 = vld [vmem:[%s166 + $0x8c] sm:$0xf]
      %v211 = vld [vmem:[%s166 + $0x90] sm:$0xf]
      %v212 = vld [vmem:[%s166 + $0x94] sm:$0xf]
      %v213 = vld [vmem:[%s166 + $0x98] sm:$0xf]
      %v214 = vld [vmem:[%s166 + $0x9c] sm:$0xf]
      %v215 = vld [vmem:[%s166 + $0xa0] sm:$0xf]
      %v216 = vld [vmem:[%s166 + $0xa4] sm:$0xf]
      %v217 = vld [vmem:[%s166 + $0xa8] sm:$0xf]
      %v218 = vld [vmem:[%s166 + $0xac] sm:$0xf]
      %v219 = vld [vmem:[%s166 + $0xb0] sm:$0xf]
      %v220 = vld [vmem:[%s166 + $0xb4] sm:$0xf]
      %v221 = vld [vmem:[%s166 + $0xb8] sm:$0xf]
      %v222 = vld [vmem:[%s166 + $0xbc] sm:$0xf]
      %v223 = vld [vmem:[%s166 + $0xc0] sm:$0xf]
      %v224 = vld [vmem:[%s166 + $0xc4] sm:$0xf]
      %v225 = vld [vmem:[%s166 + $0xc8] sm:$0xf]
      %v226 = vld [vmem:[%s166 + $0xcc] sm:$0xf]
      %v227 = vld [vmem:[%s166 + $0xd0] sm:$0xf]
      %v228 = vld [vmem:[%s166 + $0xd4] sm:$0x1]
      %v229 = vld [vmem:[%s1] sm:$0xf]
      %v230 = vld [vmem:[%s1 + $0x4] sm:$0xf]
      %v231 = vld [vmem:[%s1 + $0x8] sm:$0xf]
      %v232 = vld [vmem:[%s1 + $0xc] sm:$0xf]
      %v233 = vld [vmem:[%s1 + $0x10] sm:$0xf]
      %v234 = vld [vmem:[%s1 + $0x14] sm:$0xf]
      %v235 = vld [vmem:[%s1 + $0x18] sm:$0xf]
      %v236 = vld [vmem:[%s1 + $0x1c] sm:$0xf]
      %v237 = vld [vmem:[%s166 + $0xd4] sm:$0x3]
      %v238 = vld [vmem:[%s1 + $0x20] sm:$0xf]
      %v239 = vld [vmem:[%s1 + $0x24] sm:$0xf]
      %v240 = vld [vmem:[%s1 + $0x28] sm:$0xf]
      %v241 = vld [vmem:[%s1 + $0x2c] sm:$0xf]
      %v242 = vld [vmem:[%s1 + $0x30] sm:$0xf]
      %v243 = vld [vmem:[%s1 + $0x34] sm:$0xf]
      %v244 = vld [vmem:[%s1 + $0x38] sm:$0xf]
      %v245 = vld [vmem:[%s1 + $0x3c] sm:$0xf]
      %v300 = vunpack.c.l.b16 %v175
      %v301 = vunpack.c.l.b16 %v176
      %v302 = vunpack.c.l.b16 %v177
      %v303 = vunpack.c.l.b16 %v178
      %v304 = vunpack.c.l.b16 %v179
      %v305 = vunpack.c.l.b16 %v180
      %v306 = vunpack.c.l.b16 %v181
      %v307 = vunpack.c.l.b16 %v182
      %v308 = vunpack.c.l.b16 %v183
      %v309 = vunpack.c.l.b16 %v184
      %v310 = vunpack.c.l.b16 %v185
      %v311 = vunpack.c.l.b16 %v186
      %v312 = vunpack.c.l.b16 %v187
      %v313 = vunpack.c.l.b16 %v188
      %v314 = vunpack.c.l.b16 %v189
      %v315 = vunpack.c.l.b16 %v190
      %v316 = vunpack.c.l.b16 %v191
      %v317 = vunpack.c.l.b16 %v192
      %v318 = vunpack.c.l.b16 %v193
      %v319 = vunpack.c.l.b16 %v194
      %v320 = vunpack.c.l.b16 %v195
      %v321 = vunpack.c.l.b16 %v196
      %v322 = vunpack.c.l.b16 %v197
      %v323 = vunpack.c.l.b16 %v198
      %v324 = vunpack.c.l.b16 %v199
      %v325 = vunpack.c.l.b16 %v200
      %v326 = vunpack.c.l.b16 %v201
      %v327 = vunpack.c.l.b16 %v202
      %v328 = vunpack.c.l.b16 %v203
      %v329 = vunpack.c.l.b16 %v204
      %v330 = vunpack.c.l.b16 %v205
      %v331 = vunpack.c.l.b16 %v206
      %v332 = vunpack.c.l.b16 %v207
      %v333 = vunpack.c.l.b16 %v208
      %v334 = vunpack.c.l.b16 %v209
      %v335 = vunpack.c.l.b16 %v210
      %v336 = vunpack.c.l.b16 %v211
      %v337 = vunpack.c.l.b16 %v212
      %v338 = vunpack.c.l.b16 %v213
      %v339 = vunpack.c.l.b16 %v214
      %v340 = vunpack.c.l.b16 %v215
      %v341 = vunpack.c.l.b16 %v216
      %v342 = vunpack.c.l.b16 %v217
      %v343 = vunpack.c.l.b16 %v218
      %v344 = vunpack.c.l.b16 %v219
      %v345 = vunpack.c.l.b16 %v220
      %v346 = vunpack.c.l.b16 %v221
      %v347 = vunpack.c.l.b16 %v222
      %v348 = vunpack.c.l.b16 %v223
      %v349 = vunpack.c.l.b16 %v224
      %v350 = vunpack.c.l.b16 %v225
      %v351 = vunpack.c.l.b16 %v226
      %v352 = vunpack.c.l.b16 %v227
      %v353 = vunpack.c.l.b16 %v237
      %v354 = vpack.c.b16 %v301, %v300
      %v355 = vpack.c.b16 %v303, %v302
      %v356 = vpack.c.b16 %v305, %v304
      %v357 = vpack.c.b16 %v307, %v306
      %v358 = vpack.c.b16 %v309, %v308
      %v359 = vpack.c.b16 %v311, %v310
      %v360 = vpack.c.b16 %v313, %v312
      %v361 = vpack.c.b16 %v315, %v314
      %v362 = vpack.c.b16 %v317, %v316
      %v363 = vpack.c.b16 %v319, %v318
      %v364 = vpack.c.b16 %v321, %v320
      %v365 = vpack.c.b16 %v323, %v322
      %v366 = vpack.c.b16 %v325, %v324
      %v367 = vpack.c.b16 %v327, %v326
      %v368 = vpack.c.b16 %v329, %v328
      %v369 = vpack.c.b16 %v331, %v330
      %v370 = vpack.c.b16 %v333, %v332
      %v371 = vpack.c.b16 %v335, %v334
      %v372 = vpack.c.b16 %v337, %v336
      %v373 = vpack.c.b16 %v339, %v338
      %v374 = vpack.c.b16 %v341, %v340
      %v375 = vpack.c.b16 %v343, %v342
      %v376 = vpack.c.b16 %v345, %v344
      %v377 = vpack.c.b16 %v347, %v346
      %v378 = vpack.c.b16 %v349, %v348
      %v379 = vpack.c.b16 %v351, %v350
      %v380 = vpack.c.b16 %v353, %v352
      %vm381 = vsmask.f32 7424
      %v383 = vshrl.u32 %v354, 16
      %v385 = vshll.u32 %v354, 16
      %v387 = vrot.slane %v385, 1
      %v388 = vor.u32 %v383, %v387
      %v390 = vshll.u32 %v355, 16
      %v392 = vrot.slane %v390, 1
      %v393 = vsel %vm381, %v388, %v392
      %v394 = vshrl.u32 %v355, 16
      %v396 = vor.u32 %v394, %v392
      %v398 = vshll.u32 %v356, 16
      %v400 = vrot.slane %v398, 1
      %v401 = vsel %vm381, %v396, %v400
      %v402 = vshrl.u32 %v356, 16
      %v404 = vor.u32 %v402, %v400
      %v406 = vshll.u32 %v357, 16
      %v408 = vrot.slane %v406, 1
      %v409 = vsel %vm381, %v404, %v408
      %v410 = vshrl.u32 %v357, 16
      %v412 = vor.u32 %v410, %v408
      %v414 = vshll.u32 %v358, 16
      %v416 = vrot.slane %v414, 1
      %v417 = vsel %vm381, %v412, %v416
      %v418 = vshrl.u32 %v358, 16
      %v420 = vor.u32 %v418, %v416
      %v422 = vshll.u32 %v359, 16
      %v424 = vrot.slane %v422, 1
      %v425 = vsel %vm381, %v420, %v424
      %v426 = vshrl.u32 %v359, 16
      %v428 = vor.u32 %v426, %v424
      %v430 = vshll.u32 %v360, 16
      %v432 = vrot.slane %v430, 1
      %v433 = vsel %vm381, %v428, %v432
      %v434 = vshrl.u32 %v360, 16
      %v436 = vor.u32 %v434, %v432
      %v438 = vshll.u32 %v361, 16
      %v440 = vrot.slane %v438, 1
      %v441 = vsel %vm381, %v436, %v440
      %v442 = vshrl.u32 %v361, 16
      %v444 = vor.u32 %v442, %v440
      %v446 = vshll.u32 %v362, 16
      %v448 = vrot.slane %v446, 1
      %v449 = vsel %vm381, %v444, %v448
      %v450 = vshrl.u32 %v362, 16
      %v452 = vor.u32 %v450, %v448
      %v454 = vshll.u32 %v363, 16
      %v456 = vrot.slane %v454, 1
      %v457 = vsel %vm381, %v452, %v456
      %v458 = vshrl.u32 %v363, 16
      %v460 = vor.u32 %v458, %v456
      %v462 = vshll.u32 %v364, 16
      %v464 = vrot.slane %v462, 1
      %v465 = vsel %vm381, %v460, %v464
      %v466 = vshrl.u32 %v364, 16
      %v468 = vor.u32 %v466, %v464
      %v470 = vshll.u32 %v365, 16
      %v472 = vrot.slane %v470, 1
      %v473 = vsel %vm381, %v468, %v472
      %v474 = vshrl.u32 %v365, 16
      %v476 = vor.u32 %v474, %v472
      %v478 = vshll.u32 %v366, 16
      %v480 = vrot.slane %v478, 1
      %v481 = vsel %vm381, %v476, %v480
      %v482 = vshrl.u32 %v366, 16
      %v484 = vor.u32 %v482, %v480
      %v486 = vshll.u32 %v367, 16
      %v488 = vrot.slane %v486, 1
      %v489 = vsel %vm381, %v484, %v488
      %v490 = vshrl.u32 %v367, 16
      %v492 = vor.u32 %v490, %v488
      %v494 = vshll.u32 %v368, 16
      %v496 = vrot.slane %v494, 1
      %v497 = vsel %vm381, %v492, %v496
      %v498 = vshrl.u32 %v368, 16
      %v500 = vor.u32 %v498, %v496
      %v502 = vshll.u32 %v369, 16
      %v504 = vrot.slane %v502, 1
      %v505 = vsel %vm381, %v500, %v504
      %v506 = vshrl.u32 %v369, 16
      %v508 = vor.u32 %v506, %v504
      %v510 = vshll.u32 %v370, 16
      %v512 = vrot.slane %v510, 1
      %v513 = vsel %vm381, %v508, %v512
      %v514 = vshrl.u32 %v370, 16
      %v516 = vor.u32 %v514, %v512
      %v518 = vshll.u32 %v371, 16
      %v520 = vrot.slane %v518, 1
      %v521 = vsel %vm381, %v516, %v520
      %v522 = vshrl.u32 %v371, 16
      %v524 = vor.u32 %v522, %v520
      %v526 = vshll.u32 %v372, 16
      %v528 = vrot.slane %v526, 1
      %v529 = vsel %vm381, %v524, %v528
      %v530 = vshrl.u32 %v372, 16
      %v532 = vor.u32 %v530, %v528
      %v534 = vshll.u32 %v373, 16
      %v536 = vrot.slane %v534, 1
      %v537 = vsel %vm381, %v532, %v536
      %v538 = vshrl.u32 %v373, 16
      %v540 = vor.u32 %v538, %v536
      %v542 = vshll.u32 %v374, 16
      %v544 = vrot.slane %v542, 1
      %v545 = vsel %vm381, %v540, %v544
      %v546 = vshrl.u32 %v374, 16
      %v548 = vor.u32 %v546, %v544
      %v550 = vshll.u32 %v375, 16
      %v552 = vrot.slane %v550, 1
      %v553 = vsel %vm381, %v548, %v552
      %v554 = vshrl.u32 %v375, 16
      %v556 = vor.u32 %v554, %v552
      %v558 = vshll.u32 %v376, 16
      %v560 = vrot.slane %v558, 1
      %v561 = vsel %vm381, %v556, %v560
      %v562 = vshrl.u32 %v376, 16
      %v564 = vor.u32 %v562, %v560
      %v566 = vshll.u32 %v377, 16
      %v568 = vrot.slane %v566, 1
      %v569 = vsel %vm381, %v564, %v568
      %v570 = vshrl.u32 %v377, 16
      %v572 = vor.u32 %v570, %v568
      %v574 = vshll.u32 %v378, 16
      %v576 = vrot.slane %v574, 1
      %v577 = vsel %vm381, %v572, %v576
      %v578 = vshrl.u32 %v378, 16
      %v580 = vor.u32 %v578, %v576
      %v582 = vshll.u32 %v379, 16
      %v584 = vrot.slane %v582, 1
      %v585 = vsel %vm381, %v580, %v584
      %v586 = vshrl.u32 %v379, 16
      %v588 = vor.u32 %v586, %v584
      %v590 = vshll.u32 %v380, 16
      %v592 = vrot.slane %v590, 1
      %v593 = vsel %vm381, %v588, %v592
      %v594 = vshrl.u32 %v380, 16
      %v596 = vor.u32 %v594, %v592
      %v605 = vunpack.c.l.b16 %v238
      %v606 = vunpack.c.l.b16 %v239
      %v607 = vunpack.c.l.b16 %v240
      %v608 = vunpack.c.l.b16 %v241
      %v609 = vunpack.c.l.b16 %v242
      %v610 = vunpack.c.l.b16 %v243
      %v611 = vunpack.c.l.b16 %v244
      %v612 = vunpack.c.l.b16 %v245
      %v613 = vpack.c.b16 %v606, %v605
      %v614 = vpack.c.b16 %v608, %v607
      %v615 = vpack.c.b16 %v610, %v609
      %v616 = vpack.c.b16 %v612, %v611
      %vm621 = vcmask 523264
      %v623 = vsel %vm621, %v393, 0
      %v626 = vsel %vm621, %v401, 0
      %v629 = vsel %vm621, %v409, 0
      %v632 = vsel %vm621, %v417, 0
      %v635 = vsel %vm621, %v425, 0
      %v638 = vsel %vm621, %v433, 0
      %v641 = vsel %vm621, %v441, 0
      %v644 = vsel %vm621, %v449, 0
      %v647 = vsel %vm621, %v457, 0
      %v650 = vsel %vm621, %v465, 0
      %v653 = vsel %vm621, %v473, 0
      %v656 = vsel %vm621, %v481, 0
      %v659 = vsel %vm621, %v489, 0
      %v662 = vsel %vm621, %v497, 0
      %v665 = vsel %vm621, %v505, 0
      %v668 = vsel %vm621, %v513, 0
      %v671 = vsel %vm621, %v521, 0
      %v674 = vsel %vm621, %v529, 0
      %v677 = vsel %vm621, %v537, 0
      %v680 = vsel %vm621, %v545, 0
      %v683 = vsel %vm621, %v553, 0
      %v686 = vsel %vm621, %v561, 0
      %v689 = vsel %vm621, %v569, 0
      %v692 = vsel %vm621, %v577, 0
      %v695 = vsel %vm621, %v585, 0
      %v698 = vsel %vm621, %v593, 0
      %v701 = vsel %vm621, %v596, 0
      %703 = vmatprep.subr.bf16.mxu0 0
      %704 = vmatpush1.bf16.msra.mxu0 0
      %705 = vmatprep.subr.bf16.mxu0 0
      %706 = vmatpush1.bf16.msra.mxu0 0
      %707 = vmatprep.subr.bf16.mxu0 0
      %708 = vmatpush1.bf16.msra.mxu0 0
      %709 = vmatprep.subr.bf16.mxu0 0
      %710 = vmatpush1.bf16.msra.mxu0 0
      %711 = vmatprep.subr.bf16.mxu0 0
      %712 = vmatpush1.bf16.msra.mxu0 %v616
      %713 = vmatprep.subr.bf16.mxu0 0
      %714 = vmatpush1.bf16.msra.mxu0 %v615
      %715 = vmatprep.subr.bf16.mxu0 0
      %716 = vmatpush1.bf16.msra.mxu0 %v614
      %717 = vmatprep.subr.bf16.mxu0 0
      %718 = vmatpush1.bf16.msra.mxu0 %v613
      %719 = vmatprep.subr.bf16.mxu0 0
      %720 = vmatpush2.bf16.msra.mxu0 0
      %721 = vmatprep.subr.bf16.mxu0 0
      %722 = vmatpush2.bf16.msra.mxu0 0
      %723 = vmatprep.subr.bf16.mxu0 0
      %724 = vmatpush2.bf16.msra.mxu0 0
      %725 = vmatprep.subr.bf16.mxu0 0
      %726 = vmatpush2.bf16.msra.mxu0 0
      %727 = vmatprep.subr.bf16.mxu0 0
      %728 = vmatpush2.bf16.msra.mxu0 0
      %729 = vmatprep.subr.bf16.mxu0 0
      %730 = vmatpush2.bf16.msra.mxu0 0
      %731 = vmatprep.subr.bf16.mxu0 0
      %732 = vmatpush2.bf16.msra.mxu0 0
      %733 = vmatprep.subr.bf16.mxu0 0
      %734 = vmatpush2.bf16.msra.mxu0 0
      %735 = vmatprep.mubr.bf16.mxu0 0
      %736 = vmatmul.mubr.bf16.gmra.mxu0 %v623
      %v737 = vpop.f32.mrf.mxu0
      %v738 = vadd.f32 0.0, %v737
      %v739 = vpop.f32.mrf.mxu0
      %v740 = vpop.f32.mrf.mxu0
      %v741 = vadd.f32 0.0, %v740
      %v742 = vpop.f32.mrf.mxu0
      %743 = vmatprep.mubr.bf16.mxu0 0
      %744 = vmatmul.mubr.bf16.gmra.mxu0 %v626
      %v745 = vpop.f32.mrf.mxu0
      %v746 = vadd.f32 0.0, %v745
      %v747 = vpop.f32.mrf.mxu0
      %v748 = vpop.f32.mrf.mxu0
      %v749 = vadd.f32 0.0, %v748
      %v750 = vpop.f32.mrf.mxu0
      %751 = vmatprep.mubr.bf16.mxu0 0
      %752 = vmatmul.mubr.bf16.gmra.mxu0 %v629
      %v753 = vpop.f32.mrf.mxu0
      %v754 = vadd.f32 0.0, %v753
      %v755 = vpop.f32.mrf.mxu0
      %v756 = vpop.f32.mrf.mxu0
      %v757 = vadd.f32 0.0, %v756
      %v758 = vpop.f32.mrf.mxu0
      %759 = vmatprep.mubr.bf16.mxu0 0
      %760 = vmatmul.mubr.bf16.gmra.mxu0 %v632
      %v761 = vpop.f32.mrf.mxu0
      %v762 = vadd.f32 0.0, %v761
      %v763 = vpop.f32.mrf.mxu0
      %v764 = vpop.f32.mrf.mxu0
      %v765 = vadd.f32 0.0, %v764
      %v766 = vpop.f32.mrf.mxu0
      %767 = vmatprep.mubr.bf16.mxu0 0
      %768 = vmatmul.mubr.bf16.gmra.mxu0 %v635
      %v769 = vpop.f32.mrf.mxu0
      %v770 = vadd.f32 0.0, %v769
      %v771 = vpop.f32.mrf.mxu0
      %v772 = vpop.f32.mrf.mxu0
      %v773 = vadd.f32 0.0, %v772
      %v774 = vpop.f32.mrf.mxu0
      %775 = vmatprep.mubr.bf16.mxu0 0
      %776 = vmatmul.mubr.bf16.gmra.mxu0 %v638
      %v777 = vpop.f32.mrf.mxu0
      %v778 = vadd.f32 0.0, %v777
      %v779 = vpop.f32.mrf.mxu0
      %v780 = vpop.f32.mrf.mxu0
      %v781 = vadd.f32 0.0, %v780
      %v782 = vpop.f32.mrf.mxu0
      %783 = vmatprep.mubr.bf16.mxu0 0
      %784 = vmatmul.mubr.bf16.gmra.mxu0 %v641
      %v785 = vpop.f32.mrf.mxu0
      %v786 = vadd.f32 0.0, %v785
      %v787 = vpop.f32.mrf.mxu0
      %v788 = vpop.f32.mrf.mxu0
      %v789 = vadd.f32 0.0, %v788
      %v790 = vpop.f32.mrf.mxu0
      %791 = vmatprep.mubr.bf16.mxu0 0
      %792 = vmatmul.mubr.bf16.gmra.mxu0 %v644
      %v793 = vpop.f32.mrf.mxu0
      %v794 = vadd.f32 0.0, %v793
      %v795 = vpop.f32.mrf.mxu0
      %v796 = vpop.f32.mrf.mxu0
      %v797 = vadd.f32 0.0, %v796
      %v798 = vpop.f32.mrf.mxu0
      %799 = vmatprep.mubr.bf16.mxu0 0
      %800 = vmatmul.mubr.bf16.gmra.mxu0 %v647
      %v801 = vpop.f32.mrf.mxu0
      %v802 = vadd.f32 0.0, %v801
      %v803 = vpop.f32.mrf.mxu0
      %v804 = vpop.f32.mrf.mxu0
      %v805 = vadd.f32 0.0, %v804
      %v806 = vpop.f32.mrf.mxu0
      %807 = vmatprep.mubr.bf16.mxu0 0
      %808 = vmatmul.mubr.bf16.gmra.mxu0 %v650
      %v809 = vpop.f32.mrf.mxu0
      %v810 = vadd.f32 0.0, %v809
      %v811 = vpop.f32.mrf.mxu0
      %v812 = vpop.f32.mrf.mxu0
      %v813 = vadd.f32 0.0, %v812
      %v814 = vpop.f32.mrf.mxu0
      %815 = vmatprep.mubr.bf16.mxu0 0
      %816 = vmatmul.mubr.bf16.gmra.mxu0 %v653
      %v817 = vpop.f32.mrf.mxu0
      %v818 = vadd.f32 0.0, %v817
      %v819 = vpop.f32.mrf.mxu0
      %v820 = vpop.f32.mrf.mxu0
      %v821 = vadd.f32 0.0, %v820
      %v822 = vpop.f32.mrf.mxu0
      %823 = vmatprep.mubr.bf16.mxu0 0
      %824 = vmatmul.mubr.bf16.gmra.mxu0 %v656
      %v825 = vpop.f32.mrf.mxu0
      %v826 = vadd.f32 0.0, %v825
      %v827 = vpop.f32.mrf.mxu0
      %v828 = vpop.f32.mrf.mxu0
      %v829 = vadd.f32 0.0, %v828
      %v830 = vpop.f32.mrf.mxu0
      %831 = vmatprep.mubr.bf16.mxu0 0
      %832 = vmatmul.mubr.bf16.gmra.mxu0 %v659
      %v833 = vpop.f32.mrf.mxu0
      %v834 = vadd.f32 0.0, %v833
      %v835 = vpop.f32.mrf.mxu0
      %v836 = vpop.f32.mrf.mxu0
      %v837 = vadd.f32 0.0, %v836
      %v838 = vpop.f32.mrf.mxu0
      %839 = vmatprep.mubr.bf16.mxu0 0
      %840 = vmatmul.mubr.bf16.gmra.mxu0 %v662
      %v841 = vpop.f32.mrf.mxu0
      %v842 = vadd.f32 0.0, %v841
      %v843 = vpop.f32.mrf.mxu0
      %v844 = vpop.f32.mrf.mxu0
      %v845 = vadd.f32 0.0, %v844
      %v846 = vpop.f32.mrf.mxu0
      %847 = vmatprep.mubr.bf16.mxu0 0
      %848 = vmatmul.mubr.bf16.gmra.mxu0 %v665
      %v849 = vpop.f32.mrf.mxu0
      %v850 = vadd.f32 0.0, %v849
      %v851 = vpop.f32.mrf.mxu0
      %v852 = vpop.f32.mrf.mxu0
      %v853 = vadd.f32 0.0, %v852
      %v854 = vpop.f32.mrf.mxu0
      %855 = vmatprep.mubr.bf16.mxu0 0
      %856 = vmatmul.mubr.bf16.gmra.mxu0 %v668
      %v857 = vpop.f32.mrf.mxu0
      %v858 = vadd.f32 0.0, %v857
      %v859 = vpop.f32.mrf.mxu0
      %v860 = vpop.f32.mrf.mxu0
      %v861 = vadd.f32 0.0, %v860
      %v862 = vpop.f32.mrf.mxu0
      %863 = vmatprep.mubr.bf16.mxu0 0
      %864 = vmatmul.mubr.bf16.gmra.mxu0 %v671
      %v865 = vpop.f32.mrf.mxu0
      %v866 = vadd.f32 0.0, %v865
      %v867 = vpop.f32.mrf.mxu0
      %v868 = vpop.f32.mrf.mxu0
      %v869 = vadd.f32 0.0, %v868
      %v870 = vpop.f32.mrf.mxu0
      %871 = vmatprep.mubr.bf16.mxu0 0
      %872 = vmatmul.mubr.bf16.gmra.mxu0 %v674
      %v873 = vpop.f32.mrf.mxu0
      %v874 = vadd.f32 0.0, %v873
      %v875 = vpop.f32.mrf.mxu0
      %v876 = vpop.f32.mrf.mxu0
      %v877 = vadd.f32 0.0, %v876
      %v878 = vpop.f32.mrf.mxu0
      %879 = vmatprep.mubr.bf16.mxu0 0
      %880 = vmatmul.mubr.bf16.gmra.mxu0 %v677
      %v881 = vpop.f32.mrf.mxu0
      %v882 = vadd.f32 0.0, %v881
      %v883 = vpop.f32.mrf.mxu0
      %v884 = vpop.f32.mrf.mxu0
      %v885 = vadd.f32 0.0, %v884
      %v886 = vpop.f32.mrf.mxu0
      %887 = vmatprep.mubr.bf16.mxu0 0
      %888 = vmatmul.mubr.bf16.gmra.mxu0 %v680
      %v889 = vpop.f32.mrf.mxu0
      %v890 = vadd.f32 0.0, %v889
      %v891 = vpop.f32.mrf.mxu0
      %v892 = vpop.f32.mrf.mxu0
      %v893 = vadd.f32 0.0, %v892
      %v894 = vpop.f32.mrf.mxu0
      %895 = vmatprep.mubr.bf16.mxu0 0
      %896 = vmatmul.mubr.bf16.gmra.mxu0 %v683
      %v897 = vpop.f32.mrf.mxu0
      %v898 = vadd.f32 0.0, %v897
      %v899 = vpop.f32.mrf.mxu0
      %v900 = vpop.f32.mrf.mxu0
      %v901 = vadd.f32 0.0, %v900
      %v902 = vpop.f32.mrf.mxu0
      %903 = vmatprep.mubr.bf16.mxu0 0
      %904 = vmatmul.mubr.bf16.gmra.mxu0 %v686
      %v905 = vpop.f32.mrf.mxu0
      %v906 = vadd.f32 0.0, %v905
      %v907 = vpop.f32.mrf.mxu0
      %v908 = vpop.f32.mrf.mxu0
      %v909 = vadd.f32 0.0, %v908
      %v910 = vpop.f32.mrf.mxu0
      %911 = vmatprep.mubr.bf16.mxu0 0
      %912 = vmatmul.mubr.bf16.gmra.mxu0 %v689
      %v913 = vpop.f32.mrf.mxu0
      %v914 = vadd.f32 0.0, %v913
      %v915 = vpop.f32.mrf.mxu0
      %v916 = vpop.f32.mrf.mxu0
      %v917 = vadd.f32 0.0, %v916
      %v918 = vpop.f32.mrf.mxu0
      %919 = vmatprep.mubr.bf16.mxu0 0
      %920 = vmatmul.mubr.bf16.gmra.mxu0 %v692
      %v921 = vpop.f32.mrf.mxu0
      %v922 = vadd.f32 0.0, %v921
      %v923 = vpop.f32.mrf.mxu0
      %v924 = vpop.f32.mrf.mxu0
      %v925 = vadd.f32 0.0, %v924
      %v926 = vpop.f32.mrf.mxu0
      %927 = vmatprep.mubr.bf16.mxu0 0
      %928 = vmatmul.mubr.bf16.gmra.mxu0 %v695
      %v929 = vpop.f32.mrf.mxu0
      %v930 = vadd.f32 0.0, %v929
      %v931 = vpop.f32.mrf.mxu0
      %v932 = vpop.f32.mrf.mxu0
      %v933 = vadd.f32 0.0, %v932
      %v934 = vpop.f32.mrf.mxu0
      %935 = vmatprep.mubr.bf16.mxu0 0
      %936 = vmatmul.mubr.bf16.gmra.mxu0 %v698
      %v937 = vpop.f32.mrf.mxu0
      %v938 = vadd.f32 0.0, %v937
      %v939 = vpop.f32.mrf.mxu0
      %v940 = vpop.f32.mrf.mxu0
      %v941 = vadd.f32 0.0, %v940
      %v942 = vpop.f32.mrf.mxu0
      %943 = vmatprep.mubr.bf16.mxu0 0
      %944 = vmatmul.mubr.bf16.gmra.mxu0 %v701
      %v945 = vpop.f32.mrf.mxu0
      %v946 = vadd.f32 0.0, %v945
      %v947 = vpop.f32.mrf.mxu0
      %v948 = vpop.f32.mrf.mxu0
      %v949 = vadd.f32 0.0, %v948
      %v950 = vpop.f32.mrf.mxu0
      %951 = vdwg.mxu0
      %v953 = vunpack.c.l.b16 %v228
      %v954 = vpack.c.b16 %v953, %v352
      %v963 = vunpack.c.l.b16 %v229
      %v964 = vunpack.c.l.b16 %v230
      %v965 = vunpack.c.l.b16 %v231
      %v966 = vunpack.c.l.b16 %v232
      %v967 = vunpack.c.l.b16 %v233
      %v968 = vunpack.c.l.b16 %v234
      %v969 = vunpack.c.l.b16 %v235
      %v970 = vunpack.c.l.b16 %v236
      %v971 = vpack.c.b16 %v964, %v963
      %v972 = vpack.c.b16 %v966, %v965
      %v973 = vpack.c.b16 %v968, %v967
      %v974 = vpack.c.b16 %v970, %v969
      %v979 = vsel %vm621, %v354, 0
      %v981 = vsel %vm621, %v355, 0
      %v983 = vsel %vm621, %v356, 0
      %v985 = vsel %vm621, %v357, 0
      %v987 = vsel %vm621, %v358, 0
      %v989 = vsel %vm621, %v359, 0
      %v991 = vsel %vm621, %v360, 0
      %v993 = vsel %vm621, %v361, 0
      %v995 = vsel %vm621, %v362, 0
      %v997 = vsel %vm621, %v363, 0
      %v999 = vsel %vm621, %v364, 0
      %v1001 = vsel %vm621, %v365, 0
      %v1003 = vsel %vm621, %v366, 0
      %v1005 = vsel %vm621, %v367, 0
      %v1007 = vsel %vm621, %v368, 0
      %v1009 = vsel %vm621, %v369, 0
      %v1011 = vsel %vm621, %v370, 0
      %v1013 = vsel %vm621, %v371, 0
      %v1015 = vsel %vm621, %v372, 0
      %v1017 = vsel %vm621, %v373, 0
      %v1019 = vsel %vm621, %v374, 0
      %v1021 = vsel %vm621, %v375, 0
      %v1023 = vsel %vm621, %v376, 0
      %v1025 = vsel %vm621, %v377, 0
      %v1027 = vsel %vm621, %v378, 0
      %v1029 = vsel %vm621, %v379, 0
      %v1032 = vsel %vm621, %v954, 0
      %1034 = vmatprep.subr.bf16.mxu0 0
      %1035 = vmatpush1.bf16.msra.mxu0 0
      %1036 = vmatprep.subr.bf16.mxu0 0
      %1037 = vmatpush1.bf16.msra.mxu0 0
      %1038 = vmatprep.subr.bf16.mxu0 0
      %1039 = vmatpush1.bf16.msra.mxu0 0
      %1040 = vmatprep.subr.bf16.mxu0 0
      %1041 = vmatpush1.bf16.msra.mxu0 0
      %1042 = vmatprep.subr.bf16.mxu0 0
      %1043 = vmatpush1.bf16.msra.mxu0 %v974
      %1044 = vmatprep.subr.bf16.mxu0 0
      %1045 = vmatpush1.bf16.msra.mxu0 %v973
      %1046 = vmatprep.subr.bf16.mxu0 0
      %1047 = vmatpush1.bf16.msra.mxu0 %v972
      %1048 = vmatprep.subr.bf16.mxu0 0
      %1049 = vmatpush1.bf16.msra.mxu0 %v971
      %1050 = vmatprep.subr.bf16.mxu0 0
      %1051 = vmatpush2.bf16.msra.mxu0 0
      %1052 = vmatprep.subr.bf16.mxu0 0
      %1053 = vmatpush2.bf16.msra.mxu0 0
      %1054 = vmatprep.subr.bf16.mxu0 0
      %1055 = vmatpush2.bf16.msra.mxu0 0
      %1056 = vmatprep.subr.bf16.mxu0 0
      %1057 = vmatpush2.bf16.msra.mxu0 0
      %1058 = vmatprep.subr.bf16.mxu0 0
      %1059 = vmatpush2.bf16.msra.mxu0 0
      %1060 = vmatprep.subr.bf16.mxu0 0
      %1061 = vmatpush2.bf16.msra.mxu0 0
      %1062 = vmatprep.subr.bf16.mxu0 0
      %1063 = vmatpush2.bf16.msra.mxu0 0
      %1064 = vmatprep.subr.bf16.mxu0 0
      %1065 = vmatpush2.bf16.msra.mxu0 0
      %1066 = vmatprep.mubr.bf16.mxu0 0
      %1067 = vmatmul.mubr.bf16.gmra.mxu0 %v979
      %v1068 = vpop.f32.mrf.mxu0
      %v1069 = vadd.f32 %v738, %v1068
      %v1070 = vpop.f32.mrf.mxu0
      %v1071 = vpop.f32.mrf.mxu0
      %v1072 = vadd.f32 %v741, %v1071
      %v1073 = vpop.f32.mrf.mxu0
      %1074 = vmatprep.mubr.bf16.mxu0 0
      %1075 = vmatmul.mubr.bf16.gmra.mxu0 %v981
      %v1076 = vpop.f32.mrf.mxu0
      %v1077 = vadd.f32 %v746, %v1076
      %v1078 = vpop.f32.mrf.mxu0
      %v1079 = vpop.f32.mrf.mxu0
      %v1080 = vadd.f32 %v749, %v1079
      %v1081 = vpop.f32.mrf.mxu0
      %1082 = vmatprep.mubr.bf16.mxu0 0
      %1083 = vmatmul.mubr.bf16.gmra.mxu0 %v983
      %v1084 = vpop.f32.mrf.mxu0
      %v1085 = vadd.f32 %v754, %v1084
      %v1086 = vpop.f32.mrf.mxu0
      %v1087 = vpop.f32.mrf.mxu0
      %v1088 = vadd.f32 %v757, %v1087
      %v1089 = vpop.f32.mrf.mxu0
      %1090 = vmatprep.mubr.bf16.mxu0 0
      %1091 = vmatmul.mubr.bf16.gmra.mxu0 %v985
      %v1092 = vpop.f32.mrf.mxu0
      %v1093 = vadd.f32 %v762, %v1092
      %v1094 = vpop.f32.mrf.mxu0
      %v1095 = vpop.f32.mrf.mxu0
      %v1096 = vadd.f32 %v765, %v1095
      %v1097 = vpop.f32.mrf.mxu0
      %1098 = vmatprep.mubr.bf16.mxu0 0
      %1099 = vmatmul.mubr.bf16.gmra.mxu0 %v987
      %v1100 = vpop.f32.mrf.mxu0
      %v1101 = vadd.f32 %v770, %v1100
      %v1102 = vpop.f32.mrf.mxu0
      %v1103 = vpop.f32.mrf.mxu0
      %v1104 = vadd.f32 %v773, %v1103
      %v1105 = vpop.f32.mrf.mxu0
      %1106 = vmatprep.mubr.bf16.mxu0 0
      %1107 = vmatmul.mubr.bf16.gmra.mxu0 %v989
      %v1108 = vpop.f32.mrf.mxu0
      %v1109 = vadd.f32 %v778, %v1108
      %v1110 = vpop.f32.mrf.mxu0
      %v1111 = vpop.f32.mrf.mxu0
      %v1112 = vadd.f32 %v781, %v1111
      %v1113 = vpop.f32.mrf.mxu0
      %1114 = vmatprep.mubr.bf16.mxu0 0
      %1115 = vmatmul.mubr.bf16.gmra.mxu0 %v991
      %v1116 = vpop.f32.mrf.mxu0
      %v1117 = vadd.f32 %v786, %v1116
      %v1118 = vpop.f32.mrf.mxu0
      %v1119 = vpop.f32.mrf.mxu0
      %v1120 = vadd.f32 %v789, %v1119
      %v1121 = vpop.f32.mrf.mxu0
      %1122 = vmatprep.mubr.bf16.mxu0 0
      %1123 = vmatmul.mubr.bf16.gmra.mxu0 %v993
      %v1124 = vpop.f32.mrf.mxu0
      %v1125 = vadd.f32 %v794, %v1124
      %v1126 = vpop.f32.mrf.mxu0
      %v1127 = vpop.f32.mrf.mxu0
      %v1128 = vadd.f32 %v797, %v1127
      %v1129 = vpop.f32.mrf.mxu0
      %1130 = vmatprep.mubr.bf16.mxu0 0
      %1131 = vmatmul.mubr.bf16.gmra.mxu0 %v995
      %v1132 = vpop.f32.mrf.mxu0
      %v1133 = vadd.f32 %v802, %v1132
      %v1134 = vpop.f32.mrf.mxu0
      %v1135 = vpop.f32.mrf.mxu0
      %v1136 = vadd.f32 %v805, %v1135
      %v1137 = vpop.f32.mrf.mxu0
      %1138 = vmatprep.mubr.bf16.mxu0 0
      %1139 = vmatmul.mubr.bf16.gmra.mxu0 %v997
      %v1140 = vpop.f32.mrf.mxu0
      %v1141 = vadd.f32 %v810, %v1140
      %v1142 = vpop.f32.mrf.mxu0
      %v1143 = vpop.f32.mrf.mxu0
      %v1144 = vadd.f32 %v813, %v1143
      %v1145 = vpop.f32.mrf.mxu0
      %1146 = vmatprep.mubr.bf16.mxu0 0
      %1147 = vmatmul.mubr.bf16.gmra.mxu0 %v999
      %v1148 = vpop.f32.mrf.mxu0
      %v1149 = vadd.f32 %v818, %v1148
      %v1150 = vpop.f32.mrf.mxu0
      %v1151 = vpop.f32.mrf.mxu0
      %v1152 = vadd.f32 %v821, %v1151
      %v1153 = vpop.f32.mrf.mxu0
      %1154 = vmatprep.mubr.bf16.mxu0 0
      %1155 = vmatmul.mubr.bf16.gmra.mxu0 %v1001
      %v1156 = vpop.f32.mrf.mxu0
      %v1157 = vadd.f32 %v826, %v1156
      %v1158 = vpop.f32.mrf.mxu0
      %v1159 = vpop.f32.mrf.mxu0
      %v1160 = vadd.f32 %v829, %v1159
      %v1161 = vpop.f32.mrf.mxu0
      %1162 = vmatprep.mubr.bf16.mxu0 0
      %1163 = vmatmul.mubr.bf16.gmra.mxu0 %v1003
      %v1164 = vpop.f32.mrf.mxu0
      %v1165 = vadd.f32 %v834, %v1164
      %v1166 = vpop.f32.mrf.mxu0
      %v1167 = vpop.f32.mrf.mxu0
      %v1168 = vadd.f32 %v837, %v1167
      %v1169 = vpop.f32.mrf.mxu0
      %1170 = vmatprep.mubr.bf16.mxu0 0
      %1171 = vmatmul.mubr.bf16.gmra.mxu0 %v1005
      %v1172 = vpop.f32.mrf.mxu0
      %v1173 = vadd.f32 %v842, %v1172
      %v1174 = vpop.f32.mrf.mxu0
      %v1175 = vpop.f32.mrf.mxu0
      %v1176 = vadd.f32 %v845, %v1175
      %v1177 = vpop.f32.mrf.mxu0
      %1178 = vmatprep.mubr.bf16.mxu0 0
      %1179 = vmatmul.mubr.bf16.gmra.mxu0 %v1007
      %v1180 = vpop.f32.mrf.mxu0
      %v1181 = vadd.f32 %v850, %v1180
      %v1182 = vpop.f32.mrf.mxu0
      %v1183 = vpop.f32.mrf.mxu0
      %v1184 = vadd.f32 %v853, %v1183
      %v1185 = vpop.f32.mrf.mxu0
      %1186 = vmatprep.mubr.bf16.mxu0 0
      %1187 = vmatmul.mubr.bf16.gmra.mxu0 %v1009
      %v1188 = vpop.f32.mrf.mxu0
      %v1189 = vadd.f32 %v858, %v1188
      %v1190 = vpop.f32.mrf.mxu0
      %v1191 = vpop.f32.mrf.mxu0
      %v1192 = vadd.f32 %v861, %v1191
      %v1193 = vpop.f32.mrf.mxu0
      %1194 = vmatprep.mubr.bf16.mxu0 0
      %1195 = vmatmul.mubr.bf16.gmra.mxu0 %v1011
      %v1196 = vpop.f32.mrf.mxu0
      %v1197 = vadd.f32 %v866, %v1196
      %v1198 = vpop.f32.mrf.mxu0
      %v1199 = vpop.f32.mrf.mxu0
      %v1200 = vadd.f32 %v869, %v1199
      %v1201 = vpop.f32.mrf.mxu0
      %1202 = vmatprep.mubr.bf16.mxu0 0
      %1203 = vmatmul.mubr.bf16.gmra.mxu0 %v1013
      %v1204 = vpop.f32.mrf.mxu0
      %v1205 = vadd.f32 %v874, %v1204
      %v1206 = vpop.f32.mrf.mxu0
      %v1207 = vpop.f32.mrf.mxu0
      %v1208 = vadd.f32 %v877, %v1207
      %v1209 = vpop.f32.mrf.mxu0
      %1210 = vmatprep.mubr.bf16.mxu0 0
      %1211 = vmatmul.mubr.bf16.gmra.mxu0 %v1015
      %v1212 = vpop.f32.mrf.mxu0
      %v1213 = vadd.f32 %v882, %v1212
      %v1214 = vpop.f32.mrf.mxu0
      %v1215 = vpop.f32.mrf.mxu0
      %v1216 = vadd.f32 %v885, %v1215
      %v1217 = vpop.f32.mrf.mxu0
      %1218 = vmatprep.mubr.bf16.mxu0 0
      %1219 = vmatmul.mubr.bf16.gmra.mxu0 %v1017
      %v1220 = vpop.f32.mrf.mxu0
      %v1221 = vadd.f32 %v890, %v1220
      %v1222 = vpop.f32.mrf.mxu0
      %v1223 = vpop.f32.mrf.mxu0
      %v1224 = vadd.f32 %v893, %v1223
      %v1225 = vpop.f32.mrf.mxu0
      %1226 = vmatprep.mubr.bf16.mxu0 0
      %1227 = vmatmul.mubr.bf16.gmra.mxu0 %v1019
      %v1228 = vpop.f32.mrf.mxu0
      %v1229 = vadd.f32 %v898, %v1228
      %v1230 = vpop.f32.mrf.mxu0
      %v1231 = vpop.f32.mrf.mxu0
      %v1232 = vadd.f32 %v901, %v1231
      %v1233 = vpop.f32.mrf.mxu0
      %1234 = vmatprep.mubr.bf16.mxu0 0
      %1235 = vmatmul.mubr.bf16.gmra.mxu0 %v1021
      %v1236 = vpop.f32.mrf.mxu0
      %v1237 = vadd.f32 %v906, %v1236
      %v1238 = vpop.f32.mrf.mxu0
      %v1239 = vpop.f32.mrf.mxu0
      %v1240 = vadd.f32 %v909, %v1239
      %v1241 = vpop.f32.mrf.mxu0
      %1242 = vmatprep.mubr.bf16.mxu0 0
      %1243 = vmatmul.mubr.bf16.gmra.mxu0 %v1023
      %v1244 = vpop.f32.mrf.mxu0
      %v1245 = vadd.f32 %v914, %v1244
      %v1246 = vpop.f32.mrf.mxu0
      %v1247 = vpop.f32.mrf.mxu0
      %v1248 = vadd.f32 %v917, %v1247
      %v1249 = vpop.f32.mrf.mxu0
      %1250 = vmatprep.mubr.bf16.mxu0 0
      %1251 = vmatmul.mubr.bf16.gmra.mxu0 %v1025
      %v1252 = vpop.f32.mrf.mxu0
      %v1253 = vadd.f32 %v922, %v1252
      %v1254 = vpop.f32.mrf.mxu0
      %v1255 = vpop.f32.mrf.mxu0
      %v1256 = vadd.f32 %v925, %v1255
      %v1257 = vpop.f32.mrf.mxu0
      %1258 = vmatprep.mubr.bf16.mxu0 0
      %1259 = vmatmul.mubr.bf16.gmra.mxu0 %v1027
      %v1260 = vpop.f32.mrf.mxu0
      %v1261 = vadd.f32 %v930, %v1260
      %v1262 = vpop.f32.mrf.mxu0
      %v1263 = vpop.f32.mrf.mxu0
      %v1264 = vadd.f32 %v933, %v1263
      %v1265 = vpop.f32.mrf.mxu0
      %1266 = vmatprep.mubr.bf16.mxu0 0
      %1267 = vmatmul.mubr.bf16.gmra.mxu0 %v1029
      %v1268 = vpop.f32.mrf.mxu0
      %v1269 = vadd.f32 %v938, %v1268
      %v1270 = vpop.f32.mrf.mxu0
      %v1271 = vpop.f32.mrf.mxu0
      %v1272 = vadd.f32 %v941, %v1271
      %v1273 = vpop.f32.mrf.mxu0
      %1274 = vmatprep.mubr.bf16.mxu0 0
      %1275 = vmatmul.mubr.bf16.gmra.mxu0 %v1032
      %v1276 = vpop.f32.mrf.mxu0
      %v1277 = vadd.f32 %v946, %v1276
      %v1278 = vpop.f32.mrf.mxu0
      %v1279 = vpop.f32.mrf.mxu0
      %v1280 = vadd.f32 %v949, %v1279
      %v1281 = vpop.f32.mrf.mxu0
      %1282 = vdwg.mxu0
      %v1283 = vld [vmem:[%s166 + $0x8] sm:$0xc]
      %v1284 = vld [vmem:[%s166 + $0xc] sm:$0xf]
      %v1285 = vld [vmem:[%s166 + $0x10] sm:$0xf]
      %v1286 = vld [vmem:[%s166 + $0x14] sm:$0xf]
      %v1287 = vld [vmem:[%s166 + $0x18] sm:$0xf]
      %v1288 = vld [vmem:[%s166 + $0x1c] sm:$0xf]
      %v1289 = vld [vmem:[%s166 + $0x20] sm:$0xf]
      %v1290 = vld [vmem:[%s166 + $0x24] sm:$0xf]
      %v1291 = vld [vmem:[%s166 + $0x28] sm:$0xf]
      %v1292 = vld [vmem:[%s166 + $0x2c] sm:$0xf]
      %v1293 = vld [vmem:[%s166 + $0x30] sm:$0xf]
      %v1294 = vld [vmem:[%s166 + $0x34] sm:$0xf]
      %v1295 = vld [vmem:[%s166 + $0x38] sm:$0xf]
      %v1296 = vld [vmem:[%s166 + $0x3c] sm:$0xf]
      %v1297 = vld [vmem:[%s166 + $0x40] sm:$0xf]
      %v1298 = vld [vmem:[%s166 + $0x44] sm:$0xf]
      %v1299 = vld [vmem:[%s166 + $0x48] sm:$0xf]
      %v1300 = vld [vmem:[%s166 + $0x4c] sm:$0xf]
      %v1301 = vld [vmem:[%s166 + $0x50] sm:$0xf]
      %v1302 = vld [vmem:[%s166 + $0x54] sm:$0xf]
      %v1303 = vld [vmem:[%s166 + $0x58] sm:$0xf]
      %v1304 = vld [vmem:[%s166 + $0x5c] sm:$0xf]
      %v1305 = vld [vmem:[%s166 + $0x60] sm:$0xf]
      %v1306 = vld [vmem:[%s166 + $0x64] sm:$0xf]
      %v1307 = vld [vmem:[%s166 + $0x68] sm:$0xf]
      %v1308 = vld [vmem:[%s166 + $0x6c] sm:$0xf]
      %v1309 = vld [vmem:[%s166 + $0x70] sm:$0xf]
      %v1310 = vld [vmem:[%s166 + $0x74] sm:$0xf]
      %v1311 = vld [vmem:[%s166 + $0x78] sm:$0xf]
      %v1312 = vld [vmem:[%s166 + $0x7c] sm:$0xf]
      %v1313 = vld [vmem:[%s166 + $0x80] sm:$0xf]
      %v1314 = vld [vmem:[%s166 + $0x84] sm:$0xf]
      %v1315 = vld [vmem:[%s166 + $0x88] sm:$0xf]
      %v1316 = vld [vmem:[%s166 + $0x8c] sm:$0xf]
      %v1317 = vld [vmem:[%s166 + $0x90] sm:$0xf]
      %v1318 = vld [vmem:[%s166 + $0x94] sm:$0xf]
      %v1319 = vld [vmem:[%s166 + $0x98] sm:$0xf]
      %v1320 = vld [vmem:[%s166 + $0x9c] sm:$0xf]
      %v1321 = vld [vmem:[%s166 + $0xa0] sm:$0xf]
      %v1322 = vld [vmem:[%s166 + $0xa4] sm:$0xf]
      %v1323 = vld [vmem:[%s166 + $0xa8] sm:$0xf]
      %v1324 = vld [vmem:[%s166 + $0xac] sm:$0xf]
      %v1325 = vld [vmem:[%s166 + $0xb0] sm:$0xf]
      %v1326 = vld [vmem:[%s166 + $0xb4] sm:$0xf]
      %v1327 = vld [vmem:[%s166 + $0xb8] sm:$0xf]
      %v1328 = vld [vmem:[%s166 + $0xbc] sm:$0xf]
      %v1329 = vld [vmem:[%s166 + $0xc0] sm:$0xf]
      %v1330 = vld [vmem:[%s166 + $0xc4] sm:$0xf]
      %v1331 = vld [vmem:[%s166 + $0xc8] sm:$0xf]
      %v1332 = vld [vmem:[%s166 + $0xcc] sm:$0xf]
      %v1333 = vld [vmem:[%s166 + $0xd0] sm:$0xf]
      %v1334 = vld [vmem:[%s166 + $0xd4] sm:$0xf]
      %v1335 = vld [vmem:[%s166 + $0xd8] sm:$0xf]
      %v1336 = vld [vmem:[%s166 + $0xdc] sm:$0xf]
      %v1337 = vld [vmem:[%s1 + $0x40] sm:$0xf]
      %v1338 = vld [vmem:[%s1 + $0x44] sm:$0xf]
      %v1339 = vld [vmem:[%s1 + $0x48] sm:$0xf]
      %v1340 = vld [vmem:[%s1 + $0x4c] sm:$0xf]
      %v1341 = vld [vmem:[%s1 + $0x50] sm:$0xf]
      %v1342 = vld [vmem:[%s1 + $0x54] sm:$0xf]
      %v1343 = vld [vmem:[%s1 + $0x58] sm:$0xf]
      %v1344 = vld [vmem:[%s1 + $0x5c] sm:$0xf]
      %v1399 = vunpack.c.l.b16 %v1283
      %v1400 = vunpack.c.l.b16 %v1284
      %v1401 = vunpack.c.l.b16 %v1285
      %v1402 = vunpack.c.l.b16 %v1286
      %v1403 = vunpack.c.l.b16 %v1287
      %v1404 = vunpack.c.l.b16 %v1288
      %v1405 = vunpack.c.l.b16 %v1289
      %v1406 = vunpack.c.l.b16 %v1290
      %v1407 = vunpack.c.l.b16 %v1291
      %v1408 = vunpack.c.l.b16 %v1292
      %v1409 = vunpack.c.l.b16 %v1293
      %v1410 = vunpack.c.l.b16 %v1294
      %v1411 = vunpack.c.l.b16 %v1295
      %v1412 = vunpack.c.l.b16 %v1296
      %v1413 = vunpack.c.l.b16 %v1297
      %v1414 = vunpack.c.l.b16 %v1298
      %v1415 = vunpack.c.l.b16 %v1299
      %v1416 = vunpack.c.l.b16 %v1300
      %v1417 = vunpack.c.l.b16 %v1301
      %v1418 = vunpack.c.l.b16 %v1302
      %v1419 = vunpack.c.l.b16 %v1303
      %v1420 = vunpack.c.l.b16 %v1304
      %v1421 = vunpack.c.l.b16 %v1305
      %v1422 = vunpack.c.l.b16 %v1306
      %v1423 = vunpack.c.l.b16 %v1307
      %v1424 = vunpack.c.l.b16 %v1308
      %v1425 = vunpack.c.l.b16 %v1309
      %v1426 = vunpack.c.l.b16 %v1310
      %v1427 = vunpack.c.l.b16 %v1311
      %v1428 = vunpack.c.l.b16 %v1312
      %v1429 = vunpack.c.l.b16 %v1313
      %v1430 = vunpack.c.l.b16 %v1314
      %v1431 = vunpack.c.l.b16 %v1315
      %v1432 = vunpack.c.l.b16 %v1316
      %v1433 = vunpack.c.l.b16 %v1317
      %v1434 = vunpack.c.l.b16 %v1318
      %v1435 = vunpack.c.l.b16 %v1319
      %v1436 = vunpack.c.l.b16 %v1320
      %v1437 = vunpack.c.l.b16 %v1321
      %v1438 = vunpack.c.l.b16 %v1322
      %v1439 = vunpack.c.l.b16 %v1323
      %v1440 = vunpack.c.l.b16 %v1324
      %v1441 = vunpack.c.l.b16 %v1325
      %v1442 = vunpack.c.l.b16 %v1326
      %v1443 = vunpack.c.l.b16 %v1327
      %v1444 = vunpack.c.l.b16 %v1328
      %v1445 = vunpack.c.l.b16 %v1329
      %v1446 = vunpack.c.l.b16 %v1330
      %v1447 = vunpack.c.l.b16 %v1331
      %v1448 = vunpack.c.l.b16 %v1332
      %v1449 = vunpack.c.l.b16 %v1333
      %v1450 = vunpack.c.l.b16 %v1334
      %v1451 = vunpack.c.l.b16 %v1335
      %v1452 = vunpack.c.l.b16 %v1336
      %v1453 = vpack.c.b16 %v1400, %v1399
      %v1454 = vpack.c.b16 %v1402, %v1401
      %v1455 = vpack.c.b16 %v1404, %v1403
      %v1456 = vpack.c.b16 %v1406, %v1405
      %v1457 = vpack.c.b16 %v1408, %v1407
      %v1458 = vpack.c.b16 %v1410, %v1409
      %v1459 = vpack.c.b16 %v1412, %v1411
      %v1460 = vpack.c.b16 %v1414, %v1413
      %v1461 = vpack.c.b16 %v1416, %v1415
      %v1462 = vpack.c.b16 %v1418, %v1417
      %v1463 = vpack.c.b16 %v1420, %v1419
      %v1464 = vpack.c.b16 %v1422, %v1421
      %v1465 = vpack.c.b16 %v1424, %v1423
      %v1466 = vpack.c.b16 %v1426, %v1425
      %v1467 = vpack.c.b16 %v1428, %v1427
      %v1468 = vpack.c.b16 %v1430, %v1429
      %v1469 = vpack.c.b16 %v1432, %v1431
      %v1470 = vpack.c.b16 %v1434, %v1433
      %v1471 = vpack.c.b16 %v1436, %v1435
      %v1472 = vpack.c.b16 %v1438, %v1437
      %v1473 = vpack.c.b16 %v1440, %v1439
      %v1474 = vpack.c.b16 %v1442, %v1441
      %v1475 = vpack.c.b16 %v1444, %v1443
      %v1476 = vpack.c.b16 %v1446, %v1445
      %v1477 = vpack.c.b16 %v1448, %v1447
      %v1478 = vpack.c.b16 %v1450, %v1449
      %v1479 = vpack.c.b16 %v1452, %v1451
      %vm1480 = vsmask.f32 5376
      %v1482 = vshrl.u32 %v1453, 16
      %v1484 = vrot.slane %v1482, 2
      %v1485 = vshll.u32 %v1453, 16
      %v1487 = vrot.slane %v1485, 3
      %v1488 = vor.u32 %v1484, %v1487
      %v1490 = vshrl.u32 %v1454, 16
      %v1492 = vrot.slane %v1490, 2
      %v1493 = vshll.u32 %v1454, 16
      %v1495 = vrot.slane %v1493, 3
      %v1496 = vor.u32 %v1492, %v1495
      %v1497 = vsel %vm1480, %v1488, %v1496
      %v1499 = vshrl.u32 %v1455, 16
      %v1501 = vrot.slane %v1499, 2
      %v1502 = vshll.u32 %v1455, 16
      %v1504 = vrot.slane %v1502, 3
      %v1505 = vor.u32 %v1501, %v1504
      %v1506 = vsel %vm1480, %v1496, %v1505
      %v1508 = vshrl.u32 %v1456, 16
      %v1510 = vrot.slane %v1508, 2
      %v1511 = vshll.u32 %v1456, 16
      %v1513 = vrot.slane %v1511, 3
      %v1514 = vor.u32 %v1510, %v1513
      %v1515 = vsel %vm1480, %v1505, %v1514
      %v1517 = vshrl.u32 %v1457, 16
      %v1519 = vrot.slane %v1517, 2
      %v1520 = vshll.u32 %v1457, 16
      %v1522 = vrot.slane %v1520, 3
      %v1523 = vor.u32 %v1519, %v1522
      %v1524 = vsel %vm1480, %v1514, %v1523
      %v1526 = vshrl.u32 %v1458, 16
      %v1528 = vrot.slane %v1526, 2
      %v1529 = vshll.u32 %v1458, 16
      %v1531 = vrot.slane %v1529, 3
      %v1532 = vor.u32 %v1528, %v1531
      %v1533 = vsel %vm1480, %v1523, %v1532
      %v1535 = vshrl.u32 %v1459, 16
      %v1537 = vrot.slane %v1535, 2
      %v1538 = vshll.u32 %v1459, 16
      %v1540 = vrot.slane %v1538, 3
      %v1541 = vor.u32 %v1537, %v1540
      %v1542 = vsel %vm1480, %v1532, %v1541
      %v1544 = vshrl.u32 %v1460, 16
      %v1546 = vrot.slane %v1544, 2
      %v1547 = vshll.u32 %v1460, 16
      %v1549 = vrot.slane %v1547, 3
      %v1550 = vor.u32 %v1546, %v1549
      %v1551 = vsel %vm1480, %v1541, %v1550
      %v1553 = vshrl.u32 %v1461, 16
      %v1555 = vrot.slane %v1553, 2
      %v1556 = vshll.u32 %v1461, 16
      %v1558 = vrot.slane %v1556, 3
      %v1559 = vor.u32 %v1555, %v1558
      %v1560 = vsel %vm1480, %v1550, %v1559
      %v1562 = vshrl.u32 %v1462, 16
      %v1564 = vrot.slane %v1562, 2
      %v1565 = vshll.u32 %v1462, 16
      %v1567 = vrot.slane %v1565, 3
      %v1568 = vor.u32 %v1564, %v1567
      %v1569 = vsel %vm1480, %v1559, %v1568
      %v1571 = vshrl.u32 %v1463, 16
      %v1573 = vrot.slane %v1571, 2
      %v1574 = vshll.u32 %v1463, 16
      %v1576 = vrot.slane %v1574, 3
      %v1577 = vor.u32 %v1573, %v1576
      %v1578 = vsel %vm1480, %v1568, %v1577
      %v1580 = vshrl.u32 %v1464, 16
      %v1582 = vrot.slane %v1580, 2
      %v1583 = vshll.u32 %v1464, 16
      %v1585 = vrot.slane %v1583, 3
      %v1586 = vor.u32 %v1582, %v1585
      %v1587 = vsel %vm1480, %v1577, %v1586
      %v1589 = vshrl.u32 %v1465, 16
      %v1591 = vrot.slane %v1589, 2
      %v1592 = vshll.u32 %v1465, 16
      %v1594 = vrot.slane %v1592, 3
      %v1595 = vor.u32 %v1591, %v1594
      %v1596 = vsel %vm1480, %v1586, %v1595
      %v1598 = vshrl.u32 %v1466, 16
      %v1600 = vrot.slane %v1598, 2
      %v1601 = vshll.u32 %v1466, 16
      %v1603 = vrot.slane %v1601, 3
      %v1604 = vor.u32 %v1600, %v1603
      %v1605 = vsel %vm1480, %v1595, %v1604
      %v1607 = vshrl.u32 %v1467, 16
      %v1609 = vrot.slane %v1607, 2
      %v1610 = vshll.u32 %v1467, 16
      %v1612 = vrot.slane %v1610, 3
      %v1613 = vor.u32 %v1609, %v1612
      %v1614 = vsel %vm1480, %v1604, %v1613
      %v1616 = vshrl.u32 %v1468, 16
      %v1618 = vrot.slane %v1616, 2
      %v1619 = vshll.u32 %v1468, 16
      %v1621 = vrot.slane %v1619, 3
      %v1622 = vor.u32 %v1618, %v1621
      %v1623 = vsel %vm1480, %v1613, %v1622
      %v1625 = vshrl.u32 %v1469, 16
      %v1627 = vrot.slane %v1625, 2
      %v1628 = vshll.u32 %v1469, 16
      %v1630 = vrot.slane %v1628, 3
      %v1631 = vor.u32 %v1627, %v1630
      %v1632 = vsel %vm1480, %v1622, %v1631
      %v1634 = vshrl.u32 %v1470, 16
      %v1636 = vrot.slane %v1634, 2
      %v1637 = vshll.u32 %v1470, 16
      %v1639 = vrot.slane %v1637, 3
      %v1640 = vor.u32 %v1636, %v1639
      %v1641 = vsel %vm1480, %v1631, %v1640
      %v1643 = vshrl.u32 %v1471, 16
      %v1645 = vrot.slane %v1643, 2
      %v1646 = vshll.u32 %v1471, 16
      %v1648 = vrot.slane %v1646, 3
      %v1649 = vor.u32 %v1645, %v1648
      %v1650 = vsel %vm1480, %v1640, %v1649
      %v1652 = vshrl.u32 %v1472, 16
      %v1654 = vrot.slane %v1652, 2
      %v1655 = vshll.u32 %v1472, 16
      %v1657 = vrot.slane %v1655, 3
      %v1658 = vor.u32 %v1654, %v1657
      %v1659 = vsel %vm1480, %v1649, %v1658
      %v1661 = vshrl.u32 %v1473, 16
      %v1663 = vrot.slane %v1661, 2
      %v1664 = vshll.u32 %v1473, 16
      %v1666 = vrot.slane %v1664, 3
      %v1667 = vor.u32 %v1663, %v1666
      %v1668 = vsel %vm1480, %v1658, %v1667
      %v1670 = vshrl.u32 %v1474, 16
      %v1672 = vrot.slane %v1670, 2
      %v1673 = vshll.u32 %v1474, 16
      %v1675 = vrot.slane %v1673, 3
      %v1676 = vor.u32 %v1672, %v1675
      %v1677 = vsel %vm1480, %v1667, %v1676
      %v1679 = vshrl.u32 %v1475, 16
      %v1681 = vrot.slane %v1679, 2
      %v1682 = vshll.u32 %v1475, 16
      %v1684 = vrot.slane %v1682, 3
      %v1685 = vor.u32 %v1681, %v1684
      %v1686 = vsel %vm1480, %v1676, %v1685
      %v1688 = vshrl.u32 %v1476, 16
      %v1690 = vrot.slane %v1688, 2
      %v1691 = vshll.u32 %v1476, 16
      %v1693 = vrot.slane %v1691, 3
      %v1694 = vor.u32 %v1690, %v1693
      %v1695 = vsel %vm1480, %v1685, %v1694
      %v1697 = vshrl.u32 %v1477, 16
      %v1699 = vrot.slane %v1697, 2
      %v1700 = vshll.u32 %v1477, 16
      %v1702 = vrot.slane %v1700, 3
      %v1703 = vor.u32 %v1699, %v1702
      %v1704 = vsel %vm1480, %v1694, %v1703
      %v1706 = vshrl.u32 %v1478, 16
      %v1708 = vrot.slane %v1706, 2
      %v1709 = vshll.u32 %v1478, 16
      %v1711 = vrot.slane %v1709, 3
      %v1712 = vor.u32 %v1708, %v1711
      %v1713 = vsel %vm1480, %v1703, %v1712
      %v1715 = vshrl.u32 %v1479, 16
      %v1717 = vrot.slane %v1715, 2
      %v1718 = vshll.u32 %v1479, 16
      %v1720 = vrot.slane %v1718, 3
      %v1721 = vor.u32 %v1717, %v1720
      %v1722 = vsel %vm1480, %v1712, %v1721
      %v1731 = vunpack.c.l.b16 %v1337
      %v1732 = vunpack.c.l.b16 %v1338
      %v1733 = vunpack.c.l.b16 %v1339
      %v1734 = vunpack.c.l.b16 %v1340
      %v1735 = vunpack.c.l.b16 %v1341
      %v1736 = vunpack.c.l.b16 %v1342
      %v1737 = vunpack.c.l.b16 %v1343
      %v1738 = vunpack.c.l.b16 %v1344
      %v1739 = vpack.c.b16 %v1732, %v1731
      %v1740 = vpack.c.b16 %v1734, %v1733
      %v1741 = vpack.c.b16 %v1736, %v1735
      %v1742 = vpack.c.b16 %v1738, %v1737
      %v1748 = vsel %vm621, %v1497, 0
      %v1751 = vsel %vm621, %v1506, 0
      %v1754 = vsel %vm621, %v1515, 0
      %v1757 = vsel %vm621, %v1524, 0
      %v1760 = vsel %vm621, %v1533, 0
      %v1763 = vsel %vm621, %v1542, 0
      %v1766 = vsel %vm621, %v1551, 0
      %v1769 = vsel %vm621, %v1560, 0
      %v1772 = vsel %vm621, %v1569, 0
      %v1775 = vsel %vm621, %v1578, 0
      %v1778 = vsel %vm621, %v1587, 0
      %v1781 = vsel %vm621, %v1596, 0
      %v1784 = vsel %vm621, %v1605, 0
      %v1787 = vsel %vm621, %v1614, 0
      %v1790 = vsel %vm621, %v1623, 0
      %v1793 = vsel %vm621, %v1632, 0
      %v1796 = vsel %vm621, %v1641, 0
      %v1799 = vsel %vm621, %v1650, 0
      %v1802 = vsel %vm621, %v1659, 0
      %v1805 = vsel %vm621, %v1668, 0
      %v1808 = vsel %vm621, %v1677, 0
      %v1811 = vsel %vm621, %v1686, 0
      %v1814 = vsel %vm621, %v1695, 0
      %v1817 = vsel %vm621, %v1704, 0
      %v1820 = vsel %vm621, %v1713, 0
      %v1823 = vsel %vm621, %v1722, 0
      %v1826 = vsel %vm621, %v1721, 0
      %1828 = vmatprep.subr.bf16.mxu0 0
      %1829 = vmatpush1.bf16.msra.mxu0 0
      %1830 = vmatprep.subr.bf16.mxu0 0
      %1831 = vmatpush1.bf16.msra.mxu0 0
      %1832 = vmatprep.subr.bf16.mxu0 0
      %1833 = vmatpush1.bf16.msra.mxu0 0
      %1834 = vmatprep.subr.bf16.mxu0 0
      %1835 = vmatpush1.bf16.msra.mxu0 0
      %1836 = vmatprep.subr.bf16.mxu0 0
      %1837 = vmatpush1.bf16.msra.mxu0 %v1742
      %1838 = vmatprep.subr.bf16.mxu0 0
      %1839 = vmatpush1.bf16.msra.mxu0 %v1741
      %1840 = vmatprep.subr.bf16.mxu0 0
      %1841 = vmatpush1.bf16.msra.mxu0 %v1740
      %1842 = vmatprep.subr.bf16.mxu0 0
      %1843 = vmatpush1.bf16.msra.mxu0 %v1739
      %1844 = vmatprep.subr.bf16.mxu0 0
      %1845 = vmatpush2.bf16.msra.mxu0 0
      %1846 = vmatprep.subr.bf16.mxu0 0
      %1847 = vmatpush2.bf16.msra.mxu0 0
      %1848 = vmatprep.subr.bf16.mxu0 0
      %1849 = vmatpush2.bf16.msra.mxu0 0
      %1850 = vmatprep.subr.bf16.mxu0 0
      %1851 = vmatpush2.bf16.msra.mxu0 0
      %1852 = vmatprep.subr.bf16.mxu0 0
      %1853 = vmatpush2.bf16.msra.mxu0 0
      %1854 = vmatprep.subr.bf16.mxu0 0
      %1855 = vmatpush2.bf16.msra.mxu0 0
      %1856 = vmatprep.subr.bf16.mxu0 0
      %1857 = vmatpush2.bf16.msra.mxu0 0
      %1858 = vmatprep.subr.bf16.mxu0 0
      %1859 = vmatpush2.bf16.msra.mxu0 0
      %1860 = vmatprep.mubr.bf16.mxu0 0
      %1861 = vmatmul.mubr.bf16.gmra.mxu0 %v1748
      %v1862 = vpop.f32.mrf.mxu0
      %v1863 = vadd.f32 0.0, %v1862
      %v1864 = vpop.f32.mrf.mxu0
      %v1865 = vpop.f32.mrf.mxu0
      %v1866 = vadd.f32 0.0, %v1865
      %v1867 = vpop.f32.mrf.mxu0
      %1868 = vmatprep.mubr.bf16.mxu0 0
      %1869 = vmatmul.mubr.bf16.gmra.mxu0 %v1751
      %v1870 = vpop.f32.mrf.mxu0
      %v1871 = vadd.f32 0.0, %v1870
      %v1872 = vpop.f32.mrf.mxu0
      %v1873 = vpop.f32.mrf.mxu0
      %v1874 = vadd.f32 0.0, %v1873
      %v1875 = vpop.f32.mrf.mxu0
      %1876 = vmatprep.mubr.bf16.mxu0 0
      %1877 = vmatmul.mubr.bf16.gmra.mxu0 %v1754
      %v1878 = vpop.f32.mrf.mxu0
      %v1879 = vadd.f32 0.0, %v1878
      %v1880 = vpop.f32.mrf.mxu0
      %v1881 = vpop.f32.mrf.mxu0
      %v1882 = vadd.f32 0.0, %v1881
      %v1883 = vpop.f32.mrf.mxu0
      %1884 = vmatprep.mubr.bf16.mxu0 0
      %1885 = vmatmul.mubr.bf16.gmra.mxu0 %v1757
      %v1886 = vpop.f32.mrf.mxu0
      %v1887 = vadd.f32 0.0, %v1886
      %v1888 = vpop.f32.mrf.mxu0
      %v1889 = vpop.f32.mrf.mxu0
      %v1890 = vadd.f32 0.0, %v1889
      %v1891 = vpop.f32.mrf.mxu0
      %1892 = vmatprep.mubr.bf16.mxu0 0
      %1893 = vmatmul.mubr.bf16.gmra.mxu0 %v1760
      %v1894 = vpop.f32.mrf.mxu0
      %v1895 = vadd.f32 0.0, %v1894
      %v1896 = vpop.f32.mrf.mxu0
      %v1897 = vpop.f32.mrf.mxu0
      %v1898 = vadd.f32 0.0, %v1897
      %v1899 = vpop.f32.mrf.mxu0
      %1900 = vmatprep.mubr.bf16.mxu0 0
      %1901 = vmatmul.mubr.bf16.gmra.mxu0 %v1763
      %v1902 = vpop.f32.mrf.mxu0
      %v1903 = vadd.f32 0.0, %v1902
      %v1904 = vpop.f32.mrf.mxu0
      %v1905 = vpop.f32.mrf.mxu0
      %v1906 = vadd.f32 0.0, %v1905
      %v1907 = vpop.f32.mrf.mxu0
      %1908 = vmatprep.mubr.bf16.mxu0 0
      %1909 = vmatmul.mubr.bf16.gmra.mxu0 %v1766
      %v1910 = vpop.f32.mrf.mxu0
      %v1911 = vadd.f32 0.0, %v1910
      %v1912 = vpop.f32.mrf.mxu0
      %v1913 = vpop.f32.mrf.mxu0
      %v1914 = vadd.f32 0.0, %v1913
      %v1915 = vpop.f32.mrf.mxu0
      %1916 = vmatprep.mubr.bf16.mxu0 0
      %1917 = vmatmul.mubr.bf16.gmra.mxu0 %v1769
      %v1918 = vpop.f32.mrf.mxu0
      %v1919 = vadd.f32 0.0, %v1918
      %v1920 = vpop.f32.mrf.mxu0
      %v1921 = vpop.f32.mrf.mxu0
      %v1922 = vadd.f32 0.0, %v1921
      %v1923 = vpop.f32.mrf.mxu0
      %1924 = vmatprep.mubr.bf16.mxu0 0
      %1925 = vmatmul.mubr.bf16.gmra.mxu0 %v1772
      %v1926 = vpop.f32.mrf.mxu0
      %v1927 = vadd.f32 0.0, %v1926
      %v1928 = vpop.f32.mrf.mxu0
      %v1929 = vpop.f32.mrf.mxu0
      %v1930 = vadd.f32 0.0, %v1929
      %v1931 = vpop.f32.mrf.mxu0
      %1932 = vmatprep.mubr.bf16.mxu0 0
      %1933 = vmatmul.mubr.bf16.gmra.mxu0 %v1775
      %v1934 = vpop.f32.mrf.mxu0
      %v1935 = vadd.f32 0.0, %v1934
      %v1936 = vpop.f32.mrf.mxu0
      %v1937 = vpop.f32.mrf.mxu0
      %v1938 = vadd.f32 0.0, %v1937
      %v1939 = vpop.f32.mrf.mxu0
      %1940 = vmatprep.mubr.bf16.mxu0 0
      %1941 = vmatmul.mubr.bf16.gmra.mxu0 %v1778
      %v1942 = vpop.f32.mrf.mxu0
      %v1943 = vadd.f32 0.0, %v1942
      %v1944 = vpop.f32.mrf.mxu0
      %v1945 = vpop.f32.mrf.mxu0
      %v1946 = vadd.f32 0.0, %v1945
      %v1947 = vpop.f32.mrf.mxu0
      %1948 = vmatprep.mubr.bf16.mxu0 0
      %1949 = vmatmul.mubr.bf16.gmra.mxu0 %v1781
      %v1950 = vpop.f32.mrf.mxu0
      %v1951 = vadd.f32 0.0, %v1950
      %v1952 = vpop.f32.mrf.mxu0
      %v1953 = vpop.f32.mrf.mxu0
      %v1954 = vadd.f32 0.0, %v1953
      %v1955 = vpop.f32.mrf.mxu0
      %1956 = vmatprep.mubr.bf16.mxu0 0
      %1957 = vmatmul.mubr.bf16.gmra.mxu0 %v1784
      %v1958 = vpop.f32.mrf.mxu0
      %v1959 = vadd.f32 0.0, %v1958
      %v1960 = vpop.f32.mrf.mxu0
      %v1961 = vpop.f32.mrf.mxu0
      %v1962 = vadd.f32 0.0, %v1961
      %v1963 = vpop.f32.mrf.mxu0
      %1964 = vmatprep.mubr.bf16.mxu0 0
      %1965 = vmatmul.mubr.bf16.gmra.mxu0 %v1787
      %v1966 = vpop.f32.mrf.mxu0
      %v1967 = vadd.f32 0.0, %v1966
      %v1968 = vpop.f32.mrf.mxu0
      %v1969 = vpop.f32.mrf.mxu0
      %v1970 = vadd.f32 0.0, %v1969
      %v1971 = vpop.f32.mrf.mxu0
      %1972 = vmatprep.mubr.bf16.mxu0 0
      %1973 = vmatmul.mubr.bf16.gmra.mxu0 %v1790
      %v1974 = vpop.f32.mrf.mxu0
      %v1975 = vadd.f32 0.0, %v1974
      %v1976 = vpop.f32.mrf.mxu0
      %v1977 = vpop.f32.mrf.mxu0
      %v1978 = vadd.f32 0.0, %v1977
      %v1979 = vpop.f32.mrf.mxu0
      %1980 = vmatprep.mubr.bf16.mxu0 0
      %1981 = vmatmul.mubr.bf16.gmra.mxu0 %v1793
      %v1982 = vpop.f32.mrf.mxu0
      %v1983 = vadd.f32 0.0, %v1982
      %v1984 = vpop.f32.mrf.mxu0
      %v1985 = vpop.f32.mrf.mxu0
      %v1986 = vadd.f32 0.0, %v1985
      %v1987 = vpop.f32.mrf.mxu0
      %1988 = vmatprep.mubr.bf16.mxu0 0
      %1989 = vmatmul.mubr.bf16.gmra.mxu0 %v1796
      %v1990 = vpop.f32.mrf.mxu0
      %v1991 = vadd.f32 0.0, %v1990
      %v1992 = vpop.f32.mrf.mxu0
      %v1993 = vpop.f32.mrf.mxu0
      %v1994 = vadd.f32 0.0, %v1993
      %v1995 = vpop.f32.mrf.mxu0
      %1996 = vmatprep.mubr.bf16.mxu0 0
      %1997 = vmatmul.mubr.bf16.gmra.mxu0 %v1799
      %v1998 = vpop.f32.mrf.mxu0
      %v1999 = vadd.f32 0.0, %v1998
      %v2000 = vpop.f32.mrf.mxu0
      %v2001 = vpop.f32.mrf.mxu0
      %v2002 = vadd.f32 0.0, %v2001
      %v2003 = vpop.f32.mrf.mxu0
      %2004 = vmatprep.mubr.bf16.mxu0 0
      %2005 = vmatmul.mubr.bf16.gmra.mxu0 %v1802
      %v2006 = vpop.f32.mrf.mxu0
      %v2007 = vadd.f32 0.0, %v2006
      %v2008 = vpop.f32.mrf.mxu0
      %v2009 = vpop.f32.mrf.mxu0
      %v2010 = vadd.f32 0.0, %v2009
      %v2011 = vpop.f32.mrf.mxu0
      %2012 = vmatprep.mubr.bf16.mxu0 0
      %2013 = vmatmul.mubr.bf16.gmra.mxu0 %v1805
      %v2014 = vpop.f32.mrf.mxu0
      %v2015 = vadd.f32 0.0, %v2014
      %v2016 = vpop.f32.mrf.mxu0
      %v2017 = vpop.f32.mrf.mxu0
      %v2018 = vadd.f32 0.0, %v2017
      %v2019 = vpop.f32.mrf.mxu0
      %2020 = vmatprep.mubr.bf16.mxu0 0
      %2021 = vmatmul.mubr.bf16.gmra.mxu0 %v1808
      %v2022 = vpop.f32.mrf.mxu0
      %v2023 = vadd.f32 0.0, %v2022
      %v2024 = vpop.f32.mrf.mxu0
      %v2025 = vpop.f32.mrf.mxu0
      %v2026 = vadd.f32 0.0, %v2025
      %v2027 = vpop.f32.mrf.mxu0
      %2028 = vmatprep.mubr.bf16.mxu0 0
      %2029 = vmatmul.mubr.bf16.gmra.mxu0 %v1811
      %v2030 = vpop.f32.mrf.mxu0
      %v2031 = vadd.f32 0.0, %v2030
      %v2032 = vpop.f32.mrf.mxu0
      %v2033 = vpop.f32.mrf.mxu0
      %v2034 = vadd.f32 0.0, %v2033
      %v2035 = vpop.f32.mrf.mxu0
      %2036 = vmatprep.mubr.bf16.mxu0 0
      %2037 = vmatmul.mubr.bf16.gmra.mxu0 %v1814
      %v2038 = vpop.f32.mrf.mxu0
      %v2039 = vadd.f32 0.0, %v2038
      %v2040 = vpop.f32.mrf.mxu0
      %v2041 = vpop.f32.mrf.mxu0
      %v2042 = vadd.f32 0.0, %v2041
      %v2043 = vpop.f32.mrf.mxu0
      %2044 = vmatprep.mubr.bf16.mxu0 0
      %2045 = vmatmul.mubr.bf16.gmra.mxu0 %v1817
      %v2046 = vpop.f32.mrf.mxu0
      %v2047 = vadd.f32 0.0, %v2046
      %v2048 = vpop.f32.mrf.mxu0
      %v2049 = vpop.f32.mrf.mxu0
      %v2050 = vadd.f32 0.0, %v2049
      %v2051 = vpop.f32.mrf.mxu0
      %2052 = vmatprep.mubr.bf16.mxu0 0
      %2053 = vmatmul.mubr.bf16.gmra.mxu0 %v1820
      %v2054 = vpop.f32.mrf.mxu0
      %v2055 = vadd.f32 0.0, %v2054
      %v2056 = vpop.f32.mrf.mxu0
      %v2057 = vpop.f32.mrf.mxu0
      %v2058 = vadd.f32 0.0, %v2057
      %v2059 = vpop.f32.mrf.mxu0
      %2060 = vmatprep.mubr.bf16.mxu0 0
      %2061 = vmatmul.mubr.bf16.gmra.mxu0 %v1823
      %v2062 = vpop.f32.mrf.mxu0
      %v2063 = vadd.f32 0.0, %v2062
      %v2064 = vpop.f32.mrf.mxu0
      %v2065 = vpop.f32.mrf.mxu0
      %v2066 = vadd.f32 0.0, %v2065
      %v2067 = vpop.f32.mrf.mxu0
      %2068 = vmatprep.mubr.bf16.mxu0 0
      %2069 = vmatmul.mubr.bf16.gmra.mxu0 %v1826
      %v2070 = vpop.f32.mrf.mxu0
      %v2071 = vadd.f32 0.0, %v2070
      %v2072 = vpop.f32.mrf.mxu0
      %v2073 = vpop.f32.mrf.mxu0
      %v2074 = vadd.f32 0.0, %v2073
      %v2075 = vpop.f32.mrf.mxu0
      %2076 = vdwg.mxu0
      %v2077 = vadd.f32 %v1069, %v1863
      %v2078 = vadd.f32 %v1072, %v1866
      %v2079 = vadd.f32 %v1077, %v1871
      %v2080 = vadd.f32 %v1080, %v1874
      %v2081 = vadd.f32 %v1085, %v1879
      %v2082 = vadd.f32 %v1088, %v1882
      %v2083 = vadd.f32 %v1093, %v1887
      %v2084 = vadd.f32 %v1096, %v1890
      %v2085 = vadd.f32 %v1101, %v1895
      %v2086 = vadd.f32 %v1104, %v1898
      %v2087 = vadd.f32 %v1109, %v1903
      %v2088 = vadd.f32 %v1112, %v1906
      %v2089 = vadd.f32 %v1117, %v1911
      %v2090 = vadd.f32 %v1120, %v1914
      %v2091 = vadd.f32 %v1125, %v1919
      %v2092 = vadd.f32 %v1128, %v1922
      %v2093 = vadd.f32 %v1133, %v1927
      %v2094 = vadd.f32 %v1136, %v1930
      %v2095 = vadd.f32 %v1141, %v1935
      %v2096 = vadd.f32 %v1144, %v1938
      %v2097 = vadd.f32 %v1149, %v1943
      %v2098 = vadd.f32 %v1152, %v1946
      %v2099 = vadd.f32 %v1157, %v1951
      %v2100 = vadd.f32 %v1160, %v1954
      %v2101 = vadd.f32 %v1165, %v1959
      %v2102 = vadd.f32 %v1168, %v1962
      %v2103 = vadd.f32 %v1173, %v1967
      %v2104 = vadd.f32 %v1176, %v1970
      %v2105 = vadd.f32 %v1181, %v1975
      %v2106 = vadd.f32 %v1184, %v1978
      %v2107 = vadd.f32 %v1189, %v1983
      %v2108 = vadd.f32 %v1192, %v1986
      %v2109 = vadd.f32 %v1197, %v1991
      %v2110 = vadd.f32 %v1200, %v1994
      %v2111 = vadd.f32 %v1205, %v1999
      %v2112 = vadd.f32 %v1208, %v2002
      %v2113 = vadd.f32 %v1213, %v2007
      %v2114 = vadd.f32 %v1216, %v2010
      %v2115 = vadd.f32 %v1221, %v2015
      %v2116 = vadd.f32 %v1224, %v2018
      %v2117 = vadd.f32 %v1229, %v2023
      %v2118 = vadd.f32 %v1232, %v2026
      %v2119 = vadd.f32 %v1237, %v2031
      %v2120 = vadd.f32 %v1240, %v2034
      %v2121 = vadd.f32 %v1245, %v2039
      %v2122 = vadd.f32 %v1248, %v2042
      %v2123 = vadd.f32 %v1253, %v2047
      %v2124 = vadd.f32 %v1256, %v2050
      %v2125 = vadd.f32 %v1261, %v2055
      %v2126 = vadd.f32 %v1264, %v2058
      %v2127 = vadd.f32 %v1269, %v2063
      %v2128 = vadd.f32 %v1272, %v2066
      %v2129 = vadd.f32 %v1277, %v2071
      %v2130 = vadd.f32 %v1280, %v2074
      %v2131 = vld [vmem:[%s166 + $0x8] sm:$0x8]
      %v2132 = vld [vmem:[%s1 + $0x60] sm:$0xf]
      %v2133 = vld [vmem:[%s1 + $0x64] sm:$0xf]
      %v2134 = vld [vmem:[%s1 + $0x68] sm:$0xf]
      %v2135 = vld [vmem:[%s1 + $0x6c] sm:$0xf]
      %v2136 = vld [vmem:[%s1 + $0x70] sm:$0xf]
      %v2137 = vld [vmem:[%s1 + $0x74] sm:$0xf]
      %v2138 = vld [vmem:[%s1 + $0x78] sm:$0xf]
      %v2139 = vld [vmem:[%s1 + $0x7c] sm:$0xf]
      %v2141 = vunpack.c.l.b16 %v2131
      %v2142 = vpack.c.b16 %v1400, %v2141
      %vm2143 = vcmask 1044480
      %v2144 = vrot.slane %v2142, 3
      %v2145 = vrot.slane %v1454, 3
      %v2146 = vsel %vm2143, %v2144, %v2145
      %v2147 = vrot.slane %v1455, 3
      %v2148 = vsel %vm2143, %v2145, %v2147
      %v2149 = vrot.slane %v1456, 3
      %v2150 = vsel %vm2143, %v2147, %v2149
      %v2151 = vrot.slane %v1457, 3
      %v2152 = vsel %vm2143, %v2149, %v2151
      %v2153 = vrot.slane %v1458, 3
      %v2154 = vsel %vm2143, %v2151, %v2153
      %v2155 = vrot.slane %v1459, 3
      %v2156 = vsel %vm2143, %v2153, %v2155
      %v2157 = vrot.slane %v1460, 3
      %v2158 = vsel %vm2143, %v2155, %v2157
      %v2159 = vrot.slane %v1461, 3
      %v2160 = vsel %vm2143, %v2157, %v2159
      %v2161 = vrot.slane %v1462, 3
      %v2162 = vsel %vm2143, %v2159, %v2161
      %v2163 = vrot.slane %v1463, 3
      %v2164 = vsel %vm2143, %v2161, %v2163
      %v2165 = vrot.slane %v1464, 3
      %v2166 = vsel %vm2143, %v2163, %v2165
      %v2167 = vrot.slane %v1465, 3
      %v2168 = vsel %vm2143, %v2165, %v2167
      %v2169 = vrot.slane %v1466, 3
      %v2170 = vsel %vm2143, %v2167, %v2169
      %v2171 = vrot.slane %v1467, 3
      %v2172 = vsel %vm2143, %v2169, %v2171
      %v2173 = vrot.slane %v1468, 3
      %v2174 = vsel %vm2143, %v2171, %v2173
      %v2175 = vrot.slane %v1469, 3
      %v2176 = vsel %vm2143, %v2173, %v2175
      %v2177 = vrot.slane %v1470, 3
      %v2178 = vsel %vm2143, %v2175, %v2177
      %v2179 = vrot.slane %v1471, 3
      %v2180 = vsel %vm2143, %v2177, %v2179
      %v2181 = vrot.slane %v1472, 3
      %v2182 = vsel %vm2143, %v2179, %v2181
      %v2183 = vrot.slane %v1473, 3
      %v2184 = vsel %vm2143, %v2181, %v2183
      %v2185 = vrot.slane %v1474, 3
      %v2186 = vsel %vm2143, %v2183, %v2185
      %v2187 = vrot.slane %v1475, 3
      %v2188 = vsel %vm2143, %v2185, %v2187
      %v2189 = vrot.slane %v1476, 3
      %v2190 = vsel %vm2143, %v2187, %v2189
      %v2191 = vrot.slane %v1477, 3
      %v2192 = vsel %vm2143, %v2189, %v2191
      %v2193 = vrot.slane %v1478, 3
      %v2194 = vsel %vm2143, %v2191, %v2193
      %v2195 = vrot.slane %v1479, 3
      %v2196 = vsel %vm2143, %v2193, %v2195
      %v2205 = vunpack.c.l.b16 %v2132
      %v2206 = vunpack.c.l.b16 %v2133
      %v2207 = vunpack.c.l.b16 %v2134
      %v2208 = vunpack.c.l.b16 %v2135
      %v2209 = vunpack.c.l.b16 %v2136
      %v2210 = vunpack.c.l.b16 %v2137
      %v2211 = vunpack.c.l.b16 %v2138
      %v2212 = vunpack.c.l.b16 %v2139
      %v2213 = vpack.c.b16 %v2206, %v2205
      %v2214 = vpack.c.b16 %v2208, %v2207
      %v2215 = vpack.c.b16 %v2210, %v2209
      %v2216 = vpack.c.b16 %v2212, %v2211
      %v2222 = vsel %vm621, %v2146, 0
      %v2225 = vsel %vm621, %v2148, 0
      %v2228 = vsel %vm621, %v2150, 0
      %v2231 = vsel %vm621, %v2152, 0
      %v2234 = vsel %vm621, %v2154, 0
      %v2237 = vsel %vm621, %v2156, 0
      %v2240 = vsel %vm621, %v2158, 0
      %v2243 = vsel %vm621, %v2160, 0
      %v2246 = vsel %vm621, %v2162, 0
      %v2249 = vsel %vm621, %v2164, 0
      %v2252 = vsel %vm621, %v2166, 0
      %v2255 = vsel %vm621, %v2168, 0
      %v2258 = vsel %vm621, %v2170, 0
      %v2261 = vsel %vm621, %v2172, 0
      %v2264 = vsel %vm621, %v2174, 0
      %v2267 = vsel %vm621, %v2176, 0
      %v2270 = vsel %vm621, %v2178, 0
      %v2273 = vsel %vm621, %v2180, 0
      %v2276 = vsel %vm621, %v2182, 0
      %v2279 = vsel %vm621, %v2184, 0
      %v2282 = vsel %vm621, %v2186, 0
      %v2285 = vsel %vm621, %v2188, 0
      %v2288 = vsel %vm621, %v2190, 0
      %v2291 = vsel %vm621, %v2192, 0
      %v2294 = vsel %vm621, %v2194, 0
      %v2297 = vsel %vm621, %v2196, 0
      %v2300 = vsel %vm621, %v2195, 0
      %2302 = vmatprep.subr.bf16.mxu0 0
      %2303 = vmatpush1.bf16.msra.mxu0 0
      %2304 = vmatprep.subr.bf16.mxu0 0
      %2305 = vmatpush1.bf16.msra.mxu0 0
      %2306 = vmatprep.subr.bf16.mxu0 0
      %2307 = vmatpush1.bf16.msra.mxu0 0
      %2308 = vmatprep.subr.bf16.mxu0 0
      %2309 = vmatpush1.bf16.msra.mxu0 0
      %2310 = vmatprep.subr.bf16.mxu0 0
      %2311 = vmatpush1.bf16.msra.mxu0 %v2216
      %2312 = vmatprep.subr.bf16.mxu0 0
      %2313 = vmatpush1.bf16.msra.mxu0 %v2215
      %2314 = vmatprep.subr.bf16.mxu0 0
      %2315 = vmatpush1.bf16.msra.mxu0 %v2214
      %2316 = vmatprep.subr.bf16.mxu0 0
      %2317 = vmatpush1.bf16.msra.mxu0 %v2213
      %2318 = vmatprep.subr.bf16.mxu0 0
      %2319 = vmatpush2.bf16.msra.mxu0 0
      %2320 = vmatprep.subr.bf16.mxu0 0
      %2321 = vmatpush2.bf16.msra.mxu0 0
      %2322 = vmatprep.subr.bf16.mxu0 0
      %2323 = vmatpush2.bf16.msra.mxu0 0
      %2324 = vmatprep.subr.bf16.mxu0 0
      %2325 = vmatpush2.bf16.msra.mxu0 0
      %2326 = vmatprep.subr.bf16.mxu0 0
      %2327 = vmatpush2.bf16.msra.mxu0 0
      %2328 = vmatprep.subr.bf16.mxu0 0
      %2329 = vmatpush2.bf16.msra.mxu0 0
      %2330 = vmatprep.subr.bf16.mxu0 0
      %2331 = vmatpush2.bf16.msra.mxu0 0
      %2332 = vmatprep.subr.bf16.mxu0 0
      %2333 = vmatpush2.bf16.msra.mxu0 0
      %2334 = vmatprep.mubr.bf16.mxu0 0
      %2335 = vmatmul.mubr.bf16.gmra.mxu0 %v2222
      %v2336 = vpop.f32.mrf.mxu0
      %v2337 = vadd.f32 0.0, %v2336
      %v2338 = vpop.f32.mrf.mxu0
      %v2339 = vpop.f32.mrf.mxu0
      %v2340 = vadd.f32 0.0, %v2339
      %v2341 = vpop.f32.mrf.mxu0
      %2342 = vmatprep.mubr.bf16.mxu0 0
      %2343 = vmatmul.mubr.bf16.gmra.mxu0 %v2225
      %v2344 = vpop.f32.mrf.mxu0
      %v2345 = vadd.f32 0.0, %v2344
      %v2346 = vpop.f32.mrf.mxu0
      %v2347 = vpop.f32.mrf.mxu0
      %v2348 = vadd.f32 0.0, %v2347
      %v2349 = vpop.f32.mrf.mxu0
      %2350 = vmatprep.mubr.bf16.mxu0 0
      %2351 = vmatmul.mubr.bf16.gmra.mxu0 %v2228
      %v2352 = vpop.f32.mrf.mxu0
      %v2353 = vadd.f32 0.0, %v2352
      %v2354 = vpop.f32.mrf.mxu0
      %v2355 = vpop.f32.mrf.mxu0
      %v2356 = vadd.f32 0.0, %v2355
      %v2357 = vpop.f32.mrf.mxu0
      %2358 = vmatprep.mubr.bf16.mxu0 0
      %2359 = vmatmul.mubr.bf16.gmra.mxu0 %v2231
      %v2360 = vpop.f32.mrf.mxu0
      %v2361 = vadd.f32 0.0, %v2360
      %v2362 = vpop.f32.mrf.mxu0
      %v2363 = vpop.f32.mrf.mxu0
      %v2364 = vadd.f32 0.0, %v2363
      %v2365 = vpop.f32.mrf.mxu0
      %2366 = vmatprep.mubr.bf16.mxu0 0
      %2367 = vmatmul.mubr.bf16.gmra.mxu0 %v2234
      %v2368 = vpop.f32.mrf.mxu0
      %v2369 = vadd.f32 0.0, %v2368
      %v2370 = vpop.f32.mrf.mxu0
      %v2371 = vpop.f32.mrf.mxu0
      %v2372 = vadd.f32 0.0, %v2371
      %v2373 = vpop.f32.mrf.mxu0
      %2374 = vmatprep.mubr.bf16.mxu0 0
      %2375 = vmatmul.mubr.bf16.gmra.mxu0 %v2237
      %v2376 = vpop.f32.mrf.mxu0
      %v2377 = vadd.f32 0.0, %v2376
      %v2378 = vpop.f32.mrf.mxu0
      %v2379 = vpop.f32.mrf.mxu0
      %v2380 = vadd.f32 0.0, %v2379
      %v2381 = vpop.f32.mrf.mxu0
      %2382 = vmatprep.mubr.bf16.mxu0 0
      %2383 = vmatmul.mubr.bf16.gmra.mxu0 %v2240
      %v2384 = vpop.f32.mrf.mxu0
      %v2385 = vadd.f32 0.0, %v2384
      %v2386 = vpop.f32.mrf.mxu0
      %v2387 = vpop.f32.mrf.mxu0
      %v2388 = vadd.f32 0.0, %v2387
      %v2389 = vpop.f32.mrf.mxu0
      %2390 = vmatprep.mubr.bf16.mxu0 0
      %2391 = vmatmul.mubr.bf16.gmra.mxu0 %v2243
      %v2392 = vpop.f32.mrf.mxu0
      %v2393 = vadd.f32 0.0, %v2392
      %v2394 = vpop.f32.mrf.mxu0
      %v2395 = vpop.f32.mrf.mxu0
      %v2396 = vadd.f32 0.0, %v2395
      %v2397 = vpop.f32.mrf.mxu0
      %2398 = vmatprep.mubr.bf16.mxu0 0
      %2399 = vmatmul.mubr.bf16.gmra.mxu0 %v2246
      %v2400 = vpop.f32.mrf.mxu0
      %v2401 = vadd.f32 0.0, %v2400
      %v2402 = vpop.f32.mrf.mxu0
      %v2403 = vpop.f32.mrf.mxu0
      %v2404 = vadd.f32 0.0, %v2403
      %v2405 = vpop.f32.mrf.mxu0
      %2406 = vmatprep.mubr.bf16.mxu0 0
      %2407 = vmatmul.mubr.bf16.gmra.mxu0 %v2249
      %v2408 = vpop.f32.mrf.mxu0
      %v2409 = vadd.f32 0.0, %v2408
      %v2410 = vpop.f32.mrf.mxu0
      %v2411 = vpop.f32.mrf.mxu0
      %v2412 = vadd.f32 0.0, %v2411
      %v2413 = vpop.f32.mrf.mxu0
      %2414 = vmatprep.mubr.bf16.mxu0 0
      %2415 = vmatmul.mubr.bf16.gmra.mxu0 %v2252
      %v2416 = vpop.f32.mrf.mxu0
      %v2417 = vadd.f32 0.0, %v2416
      %v2418 = vpop.f32.mrf.mxu0
      %v2419 = vpop.f32.mrf.mxu0
      %v2420 = vadd.f32 0.0, %v2419
      %v2421 = vpop.f32.mrf.mxu0
      %2422 = vmatprep.mubr.bf16.mxu0 0
      %2423 = vmatmul.mubr.bf16.gmra.mxu0 %v2255
      %v2424 = vpop.f32.mrf.mxu0
      %v2425 = vadd.f32 0.0, %v2424
      %v2426 = vpop.f32.mrf.mxu0
      %v2427 = vpop.f32.mrf.mxu0
      %v2428 = vadd.f32 0.0, %v2427
      %v2429 = vpop.f32.mrf.mxu0
      %2430 = vmatprep.mubr.bf16.mxu0 0
      %2431 = vmatmul.mubr.bf16.gmra.mxu0 %v2258
      %v2432 = vpop.f32.mrf.mxu0
      %v2433 = vadd.f32 0.0, %v2432
      %v2434 = vpop.f32.mrf.mxu0
      %v2435 = vpop.f32.mrf.mxu0
      %v2436 = vadd.f32 0.0, %v2435
      %v2437 = vpop.f32.mrf.mxu0
      %2438 = vmatprep.mubr.bf16.mxu0 0
      %2439 = vmatmul.mubr.bf16.gmra.mxu0 %v2261
      %v2440 = vpop.f32.mrf.mxu0
      %v2441 = vadd.f32 0.0, %v2440
      %v2442 = vpop.f32.mrf.mxu0
      %v2443 = vpop.f32.mrf.mxu0
      %v2444 = vadd.f32 0.0, %v2443
      %v2445 = vpop.f32.mrf.mxu0
      %2446 = vmatprep.mubr.bf16.mxu0 0
      %2447 = vmatmul.mubr.bf16.gmra.mxu0 %v2264
      %v2448 = vpop.f32.mrf.mxu0
      %v2449 = vadd.f32 0.0, %v2448
      %v2450 = vpop.f32.mrf.mxu0
      %v2451 = vpop.f32.mrf.mxu0
      %v2452 = vadd.f32 0.0, %v2451
      %v2453 = vpop.f32.mrf.mxu0
      %2454 = vmatprep.mubr.bf16.mxu0 0
      %2455 = vmatmul.mubr.bf16.gmra.mxu0 %v2267
      %v2456 = vpop.f32.mrf.mxu0
      %v2457 = vadd.f32 0.0, %v2456
      %v2458 = vpop.f32.mrf.mxu0
      %v2459 = vpop.f32.mrf.mxu0
      %v2460 = vadd.f32 0.0, %v2459
      %v2461 = vpop.f32.mrf.mxu0
      %2462 = vmatprep.mubr.bf16.mxu0 0
      %2463 = vmatmul.mubr.bf16.gmra.mxu0 %v2270
      %v2464 = vpop.f32.mrf.mxu0
      %v2465 = vadd.f32 0.0, %v2464
      %v2466 = vpop.f32.mrf.mxu0
      %v2467 = vpop.f32.mrf.mxu0
      %v2468 = vadd.f32 0.0, %v2467
      %v2469 = vpop.f32.mrf.mxu0
      %2470 = vmatprep.mubr.bf16.mxu0 0
      %2471 = vmatmul.mubr.bf16.gmra.mxu0 %v2273
      %v2472 = vpop.f32.mrf.mxu0
      %v2473 = vadd.f32 0.0, %v2472
      %v2474 = vpop.f32.mrf.mxu0
      %v2475 = vpop.f32.mrf.mxu0
      %v2476 = vadd.f32 0.0, %v2475
      %v2477 = vpop.f32.mrf.mxu0
      %2478 = vmatprep.mubr.bf16.mxu0 0
      %2479 = vmatmul.mubr.bf16.gmra.mxu0 %v2276
      %v2480 = vpop.f32.mrf.mxu0
      %v2481 = vadd.f32 0.0, %v2480
      %v2482 = vpop.f32.mrf.mxu0
      %v2483 = vpop.f32.mrf.mxu0
      %v2484 = vadd.f32 0.0, %v2483
      %v2485 = vpop.f32.mrf.mxu0
      %2486 = vmatprep.mubr.bf16.mxu0 0
      %2487 = vmatmul.mubr.bf16.gmra.mxu0 %v2279
      %v2488 = vpop.f32.mrf.mxu0
      %v2489 = vadd.f32 0.0, %v2488
      %v2490 = vpop.f32.mrf.mxu0
      %v2491 = vpop.f32.mrf.mxu0
      %v2492 = vadd.f32 0.0, %v2491
      %v2493 = vpop.f32.mrf.mxu0
      %2494 = vmatprep.mubr.bf16.mxu0 0
      %2495 = vmatmul.mubr.bf16.gmra.mxu0 %v2282
      %v2496 = vpop.f32.mrf.mxu0
      %v2497 = vadd.f32 0.0, %v2496
      %v2498 = vpop.f32.mrf.mxu0
      %v2499 = vpop.f32.mrf.mxu0
      %v2500 = vadd.f32 0.0, %v2499
      %v2501 = vpop.f32.mrf.mxu0
      %2502 = vmatprep.mubr.bf16.mxu0 0
      %2503 = vmatmul.mubr.bf16.gmra.mxu0 %v2285
      %v2504 = vpop.f32.mrf.mxu0
      %v2505 = vadd.f32 0.0, %v2504
      %v2506 = vpop.f32.mrf.mxu0
      %v2507 = vpop.f32.mrf.mxu0
      %v2508 = vadd.f32 0.0, %v2507
      %v2509 = vpop.f32.mrf.mxu0
      %2510 = vmatprep.mubr.bf16.mxu0 0
      %2511 = vmatmul.mubr.bf16.gmra.mxu0 %v2288
      %v2512 = vpop.f32.mrf.mxu0
      %v2513 = vadd.f32 0.0, %v2512
      %v2514 = vpop.f32.mrf.mxu0
      %v2515 = vpop.f32.mrf.mxu0
      %v2516 = vadd.f32 0.0, %v2515
      %v2517 = vpop.f32.mrf.mxu0
      %2518 = vmatprep.mubr.bf16.mxu0 0
      %2519 = vmatmul.mubr.bf16.gmra.mxu0 %v2291
      %v2520 = vpop.f32.mrf.mxu0
      %v2521 = vadd.f32 0.0, %v2520
      %v2522 = vpop.f32.mrf.mxu0
      %v2523 = vpop.f32.mrf.mxu0
      %v2524 = vadd.f32 0.0, %v2523
      %v2525 = vpop.f32.mrf.mxu0
      %2526 = vmatprep.mubr.bf16.mxu0 0
      %2527 = vmatmul.mubr.bf16.gmra.mxu0 %v2294
      %v2528 = vpop.f32.mrf.mxu0
      %v2529 = vadd.f32 0.0, %v2528
      %v2530 = vpop.f32.mrf.mxu0
      %v2531 = vpop.f32.mrf.mxu0
      %v2532 = vadd.f32 0.0, %v2531
      %v2533 = vpop.f32.mrf.mxu0
      %2534 = vmatprep.mubr.bf16.mxu0 0
      %2535 = vmatmul.mubr.bf16.gmra.mxu0 %v2297
      %v2536 = vpop.f32.mrf.mxu0
      %v2537 = vadd.f32 0.0, %v2536
      %v2538 = vpop.f32.mrf.mxu0
      %v2539 = vpop.f32.mrf.mxu0
      %v2540 = vadd.f32 0.0, %v2539
      %v2541 = vpop.f32.mrf.mxu0
      %2542 = vmatprep.mubr.bf16.mxu0 0
      %2543 = vmatmul.mubr.bf16.gmra.mxu0 %v2300
      %v2544 = vpop.f32.mrf.mxu0
      %v2545 = vadd.f32 0.0, %v2544
      %v2546 = vpop.f32.mrf.mxu0
      %v2547 = vpop.f32.mrf.mxu0
      %v2548 = vadd.f32 0.0, %v2547
      %v2549 = vpop.f32.mrf.mxu0
      %2550 = vdwg.mxu0
      %v2551 = vadd.f32 %v2077, %v2337
      %v2552 = vadd.f32 %v2078, %v2340
      %v2553 = vadd.f32 %v2079, %v2345
      %v2554 = vadd.f32 %v2080, %v2348
      %v2555 = vadd.f32 %v2081, %v2353
      %v2556 = vadd.f32 %v2082, %v2356
      %v2557 = vadd.f32 %v2083, %v2361
      %v2558 = vadd.f32 %v2084, %v2364
      %v2559 = vadd.f32 %v2085, %v2369
      %v2560 = vadd.f32 %v2086, %v2372
      %v2561 = vadd.f32 %v2087, %v2377
      %v2562 = vadd.f32 %v2088, %v2380
      %v2563 = vadd.f32 %v2089, %v2385
      %v2564 = vadd.f32 %v2090, %v2388
      %v2565 = vadd.f32 %v2091, %v2393
      %v2566 = vadd.f32 %v2092, %v2396
      %v2567 = vadd.f32 %v2093, %v2401
      %v2568 = vadd.f32 %v2094, %v2404
      %v2569 = vadd.f32 %v2095, %v2409
      %v2570 = vadd.f32 %v2096, %v2412
      %v2571 = vadd.f32 %v2097, %v2417
      %v2572 = vadd.f32 %v2098, %v2420
      %v2573 = vadd.f32 %v2099, %v2425
      %v2574 = vadd.f32 %v2100, %v2428
      %v2575 = vadd.f32 %v2101, %v2433
      %v2576 = vadd.f32 %v2102, %v2436
      %v2577 = vadd.f32 %v2103, %v2441
      %v2578 = vadd.f32 %v2104, %v2444
      %v2579 = vadd.f32 %v2105, %v2449
      %v2580 = vadd.f32 %v2106, %v2452
      %v2581 = vadd.f32 %v2107, %v2457
      %v2582 = vadd.f32 %v2108, %v2460
      %v2583 = vadd.f32 %v2109, %v2465
      %v2584 = vadd.f32 %v2110, %v2468
      %v2585 = vadd.f32 %v2111, %v2473
      %v2586 = vadd.f32 %v2112, %v2476
      %v2587 = vadd.f32 %v2113, %v2481
      %v2588 = vadd.f32 %v2114, %v2484
      %v2589 = vadd.f32 %v2115, %v2489
      %v2590 = vadd.f32 %v2116, %v2492
      %v2591 = vadd.f32 %v2117, %v2497
      %v2592 = vadd.f32 %v2118, %v2500
      %v2593 = vadd.f32 %v2119, %v2505
      %v2594 = vadd.f32 %v2120, %v2508
      %v2595 = vadd.f32 %v2121, %v2513
      %v2596 = vadd.f32 %v2122, %v2516
      %v2597 = vadd.f32 %v2123, %v2521
      %v2598 = vadd.f32 %v2124, %v2524
      %v2599 = vadd.f32 %v2125, %v2529
      %v2600 = vadd.f32 %v2126, %v2532
      %v2601 = vadd.f32 %v2127, %v2537
      %v2602 = vadd.f32 %v2128, %v2540
      %v2603 = vadd.f32 %v2129, %v2545
      %v2604 = vadd.f32 %v2130, %v2548
      %v2605 = vld [vmem:[%s2] sm:$0x1]
      %v2607 = vlaneseq
      %v2608 = vshrl.u32 %v2607, 7
      %v2609 = vsub.s32 0, %v2608
      %v2610 = vrot.slane %v2605, %v2609
      %v2612 = vadd.f32 %v2551, %v2610
      %v2613 = vadd.f32 %v2552, %v2610
      %v2614 = vadd.f32 %v2553, %v2610
      %v2615 = vadd.f32 %v2554, %v2610
      %v2616 = vadd.f32 %v2555, %v2610
      %v2617 = vadd.f32 %v2556, %v2610
      %v2618 = vadd.f32 %v2557, %v2610
      %v2619 = vadd.f32 %v2558, %v2610
      %v2620 = vadd.f32 %v2559, %v2610
      %v2621 = vadd.f32 %v2560, %v2610
      %v2622 = vadd.f32 %v2561, %v2610
      %v2623 = vadd.f32 %v2562, %v2610
      %v2624 = vadd.f32 %v2563, %v2610
      %v2625 = vadd.f32 %v2564, %v2610
      %v2626 = vadd.f32 %v2565, %v2610
      %v2627 = vadd.f32 %v2566, %v2610
      %v2628 = vadd.f32 %v2567, %v2610
      %v2629 = vadd.f32 %v2568, %v2610
      %v2630 = vadd.f32 %v2569, %v2610
      %v2631 = vadd.f32 %v2570, %v2610
      %v2632 = vadd.f32 %v2571, %v2610
      %v2633 = vadd.f32 %v2572, %v2610
      %v2634 = vadd.f32 %v2573, %v2610
      %v2635 = vadd.f32 %v2574, %v2610
      %v2636 = vadd.f32 %v2575, %v2610
      %v2637 = vadd.f32 %v2576, %v2610
      %v2638 = vadd.f32 %v2577, %v2610
      %v2639 = vadd.f32 %v2578, %v2610
      %v2640 = vadd.f32 %v2579, %v2610
      %v2641 = vadd.f32 %v2580, %v2610
      %v2642 = vadd.f32 %v2581, %v2610
      %v2643 = vadd.f32 %v2582, %v2610
      %v2644 = vadd.f32 %v2583, %v2610
      %v2645 = vadd.f32 %v2584, %v2610
      %v2646 = vadd.f32 %v2585, %v2610
      %v2647 = vadd.f32 %v2586, %v2610
      %v2648 = vadd.f32 %v2587, %v2610
      %v2649 = vadd.f32 %v2588, %v2610
      %v2650 = vadd.f32 %v2589, %v2610
      %v2651 = vadd.f32 %v2590, %v2610
      %v2652 = vadd.f32 %v2591, %v2610
      %v2653 = vadd.f32 %v2592, %v2610
      %v2654 = vadd.f32 %v2593, %v2610
      %v2655 = vadd.f32 %v2594, %v2610
      %v2656 = vadd.f32 %v2595, %v2610
      %v2657 = vadd.f32 %v2596, %v2610
      %v2658 = vadd.f32 %v2597, %v2610
      %v2659 = vadd.f32 %v2598, %v2610
      %v2660 = vadd.f32 %v2599, %v2610
      %v2661 = vadd.f32 %v2600, %v2610
      %v2662 = vadd.f32 %v2601, %v2610
      %v2663 = vadd.f32 %v2602, %v2610
      %v2664 = vadd.f32 %v2603, %v2610
      %v2665 = vadd.f32 %v2604, %v2610
      %v2666 = vmax.f32 %v2612, 0.0
      %v2667 = vmax.f32 %v2613, 0.0
      %v2668 = vmax.f32 %v2614, 0.0
      %v2669 = vmax.f32 %v2615, 0.0
      %v2670 = vmax.f32 %v2616, 0.0
      %v2671 = vmax.f32 %v2617, 0.0
      %v2672 = vmax.f32 %v2618, 0.0
      %v2673 = vmax.f32 %v2619, 0.0
      %v2674 = vmax.f32 %v2620, 0.0
      %v2675 = vmax.f32 %v2621, 0.0
      %v2676 = vmax.f32 %v2622, 0.0
      %v2677 = vmax.f32 %v2623, 0.0
      %v2678 = vmax.f32 %v2624, 0.0
      %v2679 = vmax.f32 %v2625, 0.0
      %v2680 = vmax.f32 %v2626, 0.0
      %v2681 = vmax.f32 %v2627, 0.0
      %v2682 = vmax.f32 %v2628, 0.0
      %v2683 = vmax.f32 %v2629, 0.0
      %v2684 = vmax.f32 %v2630, 0.0
      %v2685 = vmax.f32 %v2631, 0.0
      %v2686 = vmax.f32 %v2632, 0.0
      %v2687 = vmax.f32 %v2633, 0.0
      %v2688 = vmax.f32 %v2634, 0.0
      %v2689 = vmax.f32 %v2635, 0.0
      %v2690 = vmax.f32 %v2636, 0.0
      %v2691 = vmax.f32 %v2637, 0.0
      %v2692 = vmax.f32 %v2638, 0.0
      %v2693 = vmax.f32 %v2639, 0.0
      %v2694 = vmax.f32 %v2640, 0.0
      %v2695 = vmax.f32 %v2641, 0.0
      %v2696 = vmax.f32 %v2642, 0.0
      %v2697 = vmax.f32 %v2643, 0.0
      %v2698 = vmax.f32 %v2644, 0.0
      %v2699 = vmax.f32 %v2645, 0.0
      %v2700 = vmax.f32 %v2646, 0.0
      %v2701 = vmax.f32 %v2647, 0.0
      %v2702 = vmax.f32 %v2648, 0.0
      %v2703 = vmax.f32 %v2649, 0.0
      %v2704 = vmax.f32 %v2650, 0.0
      %v2705 = vmax.f32 %v2651, 0.0
      %v2706 = vmax.f32 %v2652, 0.0
      %v2707 = vmax.f32 %v2653, 0.0
      %v2708 = vmax.f32 %v2654, 0.0
      %v2709 = vmax.f32 %v2655, 0.0
      %v2710 = vmax.f32 %v2656, 0.0
      %v2711 = vmax.f32 %v2657, 0.0
      %v2712 = vmax.f32 %v2658, 0.0
      %v2713 = vmax.f32 %v2659, 0.0
      %v2714 = vmax.f32 %v2660, 0.0
      %v2715 = vmax.f32 %v2661, 0.0
      %v2716 = vmax.f32 %v2662, 0.0
      %v2717 = vmax.f32 %v2663, 0.0
      %v2718 = vmax.f32 %v2664, 0.0
      %v2719 = vmax.f32 %v2665, 0.0
      %v2720 = vpack.c.bf16 %v2667, %v2666
      %v2721 = vpack.c.bf16 %v2669, %v2668
      %v2722 = vpack.c.bf16 %v2671, %v2670
      %v2723 = vpack.c.bf16 %v2673, %v2672
      %v2724 = vpack.c.bf16 %v2675, %v2674
      %v2725 = vpack.c.bf16 %v2677, %v2676
      %v2726 = vpack.c.bf16 %v2679, %v2678
      %v2727 = vpack.c.bf16 %v2681, %v2680
      %v2728 = vpack.c.bf16 %v2683, %v2682
      %v2729 = vpack.c.bf16 %v2685, %v2684
      %v2730 = vpack.c.bf16 %v2687, %v2686
      %v2731 = vpack.c.bf16 %v2689, %v2688
      %v2732 = vpack.c.bf16 %v2691, %v2690
      %v2733 = vpack.c.bf16 %v2693, %v2692
      %v2734 = vpack.c.bf16 %v2695, %v2694
      %v2735 = vpack.c.bf16 %v2697, %v2696
      %v2736 = vpack.c.bf16 %v2699, %v2698
      %v2737 = vpack.c.bf16 %v2701, %v2700
      %v2738 = vpack.c.bf16 %v2703, %v2702
      %v2739 = vpack.c.bf16 %v2705, %v2704
      %v2740 = vpack.c.bf16 %v2707, %v2706
      %v2741 = vpack.c.bf16 %v2709, %v2708
      %v2742 = vpack.c.bf16 %v2711, %v2710
      %v2743 = vpack.c.bf16 %v2713, %v2712
      %v2744 = vpack.c.bf16 %v2715, %v2714
      %v2745 = vpack.c.bf16 %v2717, %v2716
      %v2746 = vpack.c.bf16 %v2719, %v2718
      %v2774 = vunpack.c.l.b16 %v2720
      %v2775 = vunpack.c.h.b16 %v2720
      %v2776 = vunpack.c.l.b16 %v2721
      %v2777 = vunpack.c.h.b16 %v2721
      %v2778 = vunpack.c.l.b16 %v2722
      %v2779 = vunpack.c.h.b16 %v2722
      %v2780 = vunpack.c.l.b16 %v2723
      %v2781 = vunpack.c.h.b16 %v2723
      %v2782 = vunpack.c.l.b16 %v2724
      %v2783 = vunpack.c.h.b16 %v2724
      %v2784 = vunpack.c.l.b16 %v2725
      %v2785 = vunpack.c.h.b16 %v2725
      %v2786 = vunpack.c.l.b16 %v2726
      %v2787 = vunpack.c.h.b16 %v2726
      %v2788 = vunpack.c.l.b16 %v2727
      %v2789 = vunpack.c.h.b16 %v2727
      %v2790 = vunpack.c.l.b16 %v2728
      %v2791 = vunpack.c.h.b16 %v2728
      %v2792 = vunpack.c.l.b16 %v2729
      %v2793 = vunpack.c.h.b16 %v2729
      %v2794 = vunpack.c.l.b16 %v2730
      %v2795 = vunpack.c.h.b16 %v2730
      %v2796 = vunpack.c.l.b16 %v2731
      %v2797 = vunpack.c.h.b16 %v2731
      %v2798 = vunpack.c.l.b16 %v2732
      %v2799 = vunpack.c.h.b16 %v2732
      %v2800 = vunpack.c.l.b16 %v2733
      %v2801 = vunpack.c.h.b16 %v2733
      %v2802 = vunpack.c.l.b16 %v2734
      %v2803 = vunpack.c.h.b16 %v2734
      %v2804 = vunpack.c.l.b16 %v2735
      %v2805 = vunpack.c.h.b16 %v2735
      %v2806 = vunpack.c.l.b16 %v2736
      %v2807 = vunpack.c.h.b16 %v2736
      %v2808 = vunpack.c.l.b16 %v2737
      %v2809 = vunpack.c.h.b16 %v2737
      %v2810 = vunpack.c.l.b16 %v2738
      %v2811 = vunpack.c.h.b16 %v2738
      %v2812 = vunpack.c.l.b16 %v2739
      %v2813 = vunpack.c.h.b16 %v2739
      %v2814 = vunpack.c.l.b16 %v2740
      %v2815 = vunpack.c.h.b16 %v2740
      %v2816 = vunpack.c.l.b16 %v2741
      %v2817 = vunpack.c.h.b16 %v2741
      %v2818 = vunpack.c.l.b16 %v2742
      %v2819 = vunpack.c.h.b16 %v2742
      %v2820 = vunpack.c.l.b16 %v2743
      %v2821 = vunpack.c.h.b16 %v2743
      %v2822 = vunpack.c.l.b16 %v2744
      %v2823 = vunpack.c.h.b16 %v2744
      %v2824 = vunpack.c.l.b16 %v2745
      %v2825 = vunpack.c.h.b16 %v2745
      %v2826 = vunpack.c.l.b16 %v2746
      %v2827 = vunpack.c.h.b16 %v2746
      %v2828 = vpack.c.b16 %v2774, %v2774
      %v2829 = vpack.c.b16 %v2775, %v2775
      %v2830 = vpack.c.b16 %v2776, %v2776
      %v2831 = vpack.c.b16 %v2777, %v2777
      %v2832 = vpack.c.b16 %v2778, %v2778
      %v2833 = vpack.c.b16 %v2779, %v2779
      %v2834 = vpack.c.b16 %v2780, %v2780
      %v2835 = vpack.c.b16 %v2781, %v2781
      %v2836 = vpack.c.b16 %v2782, %v2782
      %v2837 = vpack.c.b16 %v2783, %v2783
      %v2838 = vpack.c.b16 %v2784, %v2784
      %v2839 = vpack.c.b16 %v2785, %v2785
      %v2840 = vpack.c.b16 %v2786, %v2786
      %v2841 = vpack.c.b16 %v2787, %v2787
      %v2842 = vpack.c.b16 %v2788, %v2788
      %v2843 = vpack.c.b16 %v2789, %v2789
      %v2844 = vpack.c.b16 %v2790, %v2790
      %v2845 = vpack.c.b16 %v2791, %v2791
      %v2846 = vpack.c.b16 %v2792, %v2792
      %v2847 = vpack.c.b16 %v2793, %v2793
      %v2848 = vpack.c.b16 %v2794, %v2794
      %v2849 = vpack.c.b16 %v2795, %v2795
      %v2850 = vpack.c.b16 %v2796, %v2796
      %v2851 = vpack.c.b16 %v2797, %v2797
      %v2852 = vpack.c.b16 %v2798, %v2798
      %v2853 = vpack.c.b16 %v2799, %v2799
      %v2854 = vpack.c.b16 %v2800, %v2800
      %v2855 = vpack.c.b16 %v2801, %v2801
      %v2856 = vpack.c.b16 %v2802, %v2802
      %v2857 = vpack.c.b16 %v2803, %v2803
      %v2858 = vpack.c.b16 %v2804, %v2804
      %v2859 = vpack.c.b16 %v2805, %v2805
      %v2860 = vpack.c.b16 %v2806, %v2806
      %v2861 = vpack.c.b16 %v2807, %v2807
      %v2862 = vpack.c.b16 %v2808, %v2808
      %v2863 = vpack.c.b16 %v2809, %v2809
      %v2864 = vpack.c.b16 %v2810, %v2810
      %v2865 = vpack.c.b16 %v2811, %v2811
      %v2866 = vpack.c.b16 %v2812, %v2812
      %v2867 = vpack.c.b16 %v2813, %v2813
      %v2868 = vpack.c.b16 %v2814, %v2814
      %v2869 = vpack.c.b16 %v2815, %v2815
      %v2870 = vpack.c.b16 %v2816, %v2816
      %v2871 = vpack.c.b16 %v2817, %v2817
      %v2872 = vpack.c.b16 %v2818, %v2818
      %v2873 = vpack.c.b16 %v2819, %v2819
      %v2874 = vpack.c.b16 %v2820, %v2820
      %v2875 = vpack.c.b16 %v2821, %v2821
      %v2876 = vpack.c.b16 %v2822, %v2822
      %v2877 = vpack.c.b16 %v2823, %v2823
      %v2878 = vpack.c.b16 %v2824, %v2824
      %v2879 = vpack.c.b16 %v2825, %v2825
      %v2880 = vpack.c.b16 %v2826, %v2826
      %v2881 = vpack.c.b16 %v2827, %v2827
      %vm2936 = vcmask 257024
      %2937 = vst.msk [vmem:[%s172] sm:$0xf] %vm2936, %v2828
      %2938 = vst.msk [vmem:[%s172 + $0x4] sm:$0xf] %vm2936, %v2829
      %2939 = vst.msk [vmem:[%s172 + $0x8] sm:$0xf] %vm2936, %v2830
      %2940 = vst.msk [vmem:[%s172 + $0xc] sm:$0xf] %vm2936, %v2831
      %2941 = vst.msk [vmem:[%s172 + $0x10] sm:$0xf] %vm2936, %v2832
      %2942 = vst.msk [vmem:[%s172 + $0x14] sm:$0xf] %vm2936, %v2833
      %2943 = vst.msk [vmem:[%s172 + $0x18] sm:$0xf] %vm2936, %v2834
      %2944 = vst.msk [vmem:[%s172 + $0x1c] sm:$0xf] %vm2936, %v2835
      %2945 = vst.msk [vmem:[%s172 + $0x20] sm:$0xf] %vm2936, %v2836
      %2946 = vst.msk [vmem:[%s172 + $0x24] sm:$0xf] %vm2936, %v2837
      %2947 = vst.msk [vmem:[%s172 + $0x28] sm:$0xf] %vm2936, %v2838
      %2948 = vst.msk [vmem:[%s172 + $0x2c] sm:$0xf] %vm2936, %v2839
      %2949 = vst.msk [vmem:[%s172 + $0x30] sm:$0xf] %vm2936, %v2840
      %2950 = vst.msk [vmem:[%s172 + $0x34] sm:$0xf] %vm2936, %v2841
      %2951 = vst.msk [vmem:[%s172 + $0x38] sm:$0xf] %vm2936, %v2842
      %2952 = vst.msk [vmem:[%s172 + $0x3c] sm:$0xf] %vm2936, %v2843
      %2953 = vst.msk [vmem:[%s172 + $0x40] sm:$0xf] %vm2936, %v2844
      %2954 = vst.msk [vmem:[%s172 + $0x44] sm:$0xf] %vm2936, %v2845
      %2955 = vst.msk [vmem:[%s172 + $0x48] sm:$0xf] %vm2936, %v2846
      %2956 = vst.msk [vmem:[%s172 + $0x4c] sm:$0xf] %vm2936, %v2847
      %2957 = vst.msk [vmem:[%s172 + $0x50] sm:$0xf] %vm2936, %v2848
      %2958 = vst.msk [vmem:[%s172 + $0x54] sm:$0xf] %vm2936, %v2849
      %2959 = vst.msk [vmem:[%s172 + $0x58] sm:$0xf] %vm2936, %v2850
      %2960 = vst.msk [vmem:[%s172 + $0x5c] sm:$0xf] %vm2936, %v2851
      %2961 = vst.msk [vmem:[%s172 + $0x60] sm:$0xf] %vm2936, %v2852
      %2962 = vst.msk [vmem:[%s172 + $0x64] sm:$0xf] %vm2936, %v2853
      %2963 = vst.msk [vmem:[%s172 + $0x68] sm:$0xf] %vm2936, %v2854
      %2964 = vst.msk [vmem:[%s172 + $0x6c] sm:$0xf] %vm2936, %v2855
      %2965 = vst.msk [vmem:[%s172 + $0x70] sm:$0xf] %vm2936, %v2856
      %2966 = vst.msk [vmem:[%s172 + $0x74] sm:$0xf] %vm2936, %v2857
      %2967 = vst.msk [vmem:[%s172 + $0x78] sm:$0xf] %vm2936, %v2858
      %2968 = vst.msk [vmem:[%s172 + $0x7c] sm:$0xf] %vm2936, %v2859
      %2969 = vst.msk [vmem:[%s172 + $0x80] sm:$0xf] %vm2936, %v2860
      %2970 = vst.msk [vmem:[%s172 + $0x84] sm:$0xf] %vm2936, %v2861
      %2971 = vst.msk [vmem:[%s172 + $0x88] sm:$0xf] %vm2936, %v2862
      %2972 = vst.msk [vmem:[%s172 + $0x8c] sm:$0xf] %vm2936, %v2863
      %2973 = vst.msk [vmem:[%s172 + $0x90] sm:$0xf] %vm2936, %v2864
      %2974 = vst.msk [vmem:[%s172 + $0x94] sm:$0xf] %vm2936, %v2865
      %2975 = vst.msk [vmem:[%s172 + $0x98] sm:$0xf] %vm2936, %v2866
      %2976 = vst.msk [vmem:[%s172 + $0x9c] sm:$0xf] %vm2936, %v2867
      %2977 = vst.msk [vmem:[%s172 + $0xa0] sm:$0xf] %vm2936, %v2868
      %2978 = vst.msk [vmem:[%s172 + $0xa4] sm:$0xf] %vm2936, %v2869
      %2979 = vst.msk [vmem:[%s172 + $0xa8] sm:$0xf] %vm2936, %v2870
      %2980 = vst.msk [vmem:[%s172 + $0xac] sm:$0xf] %vm2936, %v2871
      %2981 = vst.msk [vmem:[%s172 + $0xb0] sm:$0xf] %vm2936, %v2872
      %2982 = vst.msk [vmem:[%s172 + $0xb4] sm:$0xf] %vm2936, %v2873
      %2983 = vst.msk [vmem:[%s172 + $0xb8] sm:$0xf] %vm2936, %v2874
      %2984 = vst.msk [vmem:[%s172 + $0xbc] sm:$0xf] %vm2936, %v2875
      %2985 = vst.msk [vmem:[%s172 + $0xc0] sm:$0xf] %vm2936, %v2876
      %2986 = vst.msk [vmem:[%s172 + $0xc4] sm:$0xf] %vm2936, %v2877
      %2987 = vst.msk [vmem:[%s172 + $0xc8] sm:$0xf] %vm2936, %v2878
      %2988 = vst.msk [vmem:[%s172 + $0xcc] sm:$0xf] %vm2936, %v2879
      %2989 = vst.msk [vmem:[%s172 + $0xd0] sm:$0xf] %vm2936, %v2880
      %vm2990 = vcmask 253952
      %2991 = vst.msk [vmem:[%s172 + $0xd4] sm:$0x1] %vm2990, %v2881
      %s2992 = smul.u32 56, %s14
      %p2993 = scmp.lt.s32.totalorder %s2992, 111
      %s2994 = scalar_select %p2993, %s2992, 111
      %s2995 = smul.addr %s2994, 4
      %s2996 = scalar_lea.vmem %s3, %s2995
      // Predicated region
      $region33: #{cnn_base_forward.4} parent=31 // pred_check
        %p2997 = pneg %p100
      $region34: #{cnn_base_forward.4} parent=31 // pred_check_branch
        %2999 = sbr.rel (%p2997) target = $region36
      $region35: #{cnn_base_forward.4} parent=31 // pred_region
        %s3000 = smul.u32 56, %s14
      $region36: #{cnn_base_forward.4} parent=31 // pred_fallthru
        _
    $region32: #{cnn_base_forward.4} parent=5 // pred_fallthru
      _
    %p3001 = scmp.le.s32.totalorder 2, %s9
    // Predicated region
    $region37: #{cnn_base_forward.4} parent=5 // pred_check
      %p3002 = pneg %p3001
    $region38: #{cnn_base_forward.4} parent=5 // pred_check_branch
      %3004 = sbr.rel (%p3002) target = $region40
    $region39: #{cnn_base_forward.4} parent=5 // pred_region
      %s3005 = ssub.s32 %s9, 2
      // Predicated region
      $region41: #{cnn_base_forward.4} parent=39 // pred_check
        %p3006 = pneg %p106
      $region42: #{cnn_base_forward.4} parent=39 // pred_check_branch
        %3008 = sbr.rel (%p3006) target = $region44
      $region43: #{cnn_base_forward.4} parent=39 // pred_region
        %s3009 = smul.u32 56, %s15
        %p3010 = scmp.lt.s32.totalorder %s3009, 111
        %s3011 = scalar_select %p3010, %s3009, 111
        %s3012 = smul.addr %s3011, 4
        %s3013 = scalar_lea.vmem %s3, %s3012
      $region44: #{cnn_base_forward.4} parent=39 // pred_fallthru
        _
    $region40: #{cnn_base_forward.4} parent=5 // pred_fallthru
      _
  $region6: #{cnn_base_forward.4} parent=0 // loop_footer
    %s13 = sadd.s32 1, %s9
  $region7: #{cnn_base_forward.4} parent=0 // loop_footer_branch
    %8 = sbr.rel target = $region3
  $region8: #{cnn_base_forward.4} parent=0 // loop_exit
    _

// kernel: cnn_base_forward.5
$region0: #{cnn_base_forward.5}
  #allocation0 [shape = 'u32[]', space=smem, size = 0x4, offset = 0x4, fixed_abs, tag = 'smem constant byte address 0x4 - core index']
  #allocation1 [shape = 'u32[144,128]{1,0:T(1,128)}', space=vmem, size = 0x12000, scoped, tag = 'internal scratch']
  %s0 = inlined_call_operand.vmem [shape: bf16[224,128], index: 0, kind: input, shape index: {}]
  %s1 = inlined_call_operand.vmem [shape: bf16[512,64], index: 1, kind: input, shape index: {}]
  %s2 = inlined_call_operand.vmem [shape: f32[1,64], index: 2, kind: input, shape index: {}]
  %s3 = inlined_call_operand.vmem [shape: bf16[224,64], index: 3, kind: output, shape index: {}]
  %s4 = sld [smem:[#allocation0]]
  $region45: #{cnn_base_forward.5} parent=0
    _
  %s6 = ssub.s32 1, %s4
  %s7 = scalar_select 0, %s6, %s4
  loop: start=0, step=1, limit=4
  $region2: #{cnn_base_forward.5} parent=0 // loop_pre_header
    _
  $region3: #{cnn_base_forward.5} parent=0 // loop_header
    %s9 = sphi 0, %s13
    %p10 = scmp.ge.s32.totalorder %s9, 4
    %s19 = sphi 0, %s21
    %s22 = sphi 0, %s19
    %s23 = sphi 0, %s22
    %s39 = sphi 0, %s23
    %s43 = sphi 0, %s43
    %s45 = sphi 0, %s43
    %s46 = sphi 0, %s45
    %s60 = sphi 0, %s46
    %s64 = sphi 0, %s64
    %s66 = sphi 0, %s64
    %s67 = sphi 0, %s66
    %s81 = sphi 0, %s67
    %s87 = sphi 0, %s89
    %s90 = sphi 0, %s87
    %s91 = sphi 0, %s90
    %s107 = sphi 0, %s91
  $region4: #{cnn_base_forward.5} parent=0 // loop_header_branch
    %12 = sbr.rel (%p10) target = $region8
  $region5: #{cnn_base_forward.5} parent=0 // loop_body
    %s14 = ssub.s32 %s9, 1
    %s15 = ssub.s32 %s9, 2
    %s16 = sadd.s32 %s9, 1
    %s17 = ssub.s32 %s9, %s16
    %p18 = scmp.eq.s32.totalorder %s17, 0
    %s20 = sadd.s32 %s19, 1
    %s21 = scalar_select %p18, %s19, %s20
    %p24 = pneg %p18
    %p25 = scmp.eq.s32.totalorder %s9, 1
    %p26 = por %p24, %p25
    %p27 = scmp.ne.s32.totalorder %s19, %s22
    %p28 = scmp.eq.s32.totalorder %s9, 0
    %p29 = por %p27, %p28
    %p30 = scmp.ne.s32.totalorder %s19, %s22
    %p31 = scmp.eq.s32.totalorder %s14, 1
    %p32 = por %p30, %p31
    %p33 = scmp.ne.s32.totalorder %s22, %s23
    %p34 = scmp.eq.s32.totalorder %s14, 0
    %p35 = por %p33, %p34
    %p36 = scmp.ne.s32.totalorder %s22, %s23
    %p37 = scmp.eq.s32.totalorder %s15, 1
    %p38 = por %p36, %p37
    %p40 = scmp.ne.s32.totalorder %s23, %s39
    %p41 = scmp.eq.s32.totalorder %s15, 0
    %p42 = por %p40, %p41
    %s44 = sadd.s32 %s43, 1
    %p47 = scmp.eq.s32.totalorder %s9, 1
    %p48 = scmp.ne.s32.totalorder %s43, %s45
    %p49 = scmp.eq.s32.totalorder %s9, 0
    %p50 = por %p48, %p49
    %p51 = scmp.ne.s32.totalorder %s43, %s45
    %p52 = scmp.eq.s32.totalorder %s14, 1
    %p53 = por %p51, %p52
    %p54 = scmp.ne.s32.totalorder %s45, %s46
    %p55 = scmp.eq.s32.totalorder %s14, 0
    %p56 = por %p54, %p55
    %p57 = scmp.ne.s32.totalorder %s45, %s46
    %p58 = scmp.eq.s32.totalorder %s15, 1
    %p59 = por %p57, %p58
    %p61 = scmp.ne.s32.totalorder %s46, %s60
    %p62 = scmp.eq.s32.totalorder %s15, 0
    %p63 = por %p61, %p62
    %s65 = sadd.s32 %s64, 1
    %p68 = scmp.eq.s32.totalorder %s9, 1
    %p69 = scmp.ne.s32.totalorder %s64, %s66
    %p70 = scmp.eq.s32.totalorder %s9, 0
    %p71 = por %p69, %p70
    %p72 = scmp.ne.s32.totalorder %s64, %s66
    %p73 = scmp.eq.s32.totalorder %s14, 1
    %p74 = por %p72, %p73
    %p75 = scmp.ne.s32.totalorder %s66, %s67
    %p76 = scmp.eq.s32.totalorder %s14, 0
    %p77 = por %p75, %p76
    %p78 = scmp.ne.s32.totalorder %s66, %s67
    %p79 = scmp.eq.s32.totalorder %s15, 1
    %p80 = por %p78, %p79
    %p82 = scmp.ne.s32.totalorder %s67, %s81
    %p83 = scmp.eq.s32.totalorder %s15, 0
    %p84 = por %p82, %p83
    %s85 = ssub.s32 %s9, %s16
    %p86 = scmp.eq.s32.totalorder %s85, 0
    %s88 = sadd.s32 %s87, 1
    %s89 = scalar_select %p86, %s87, %s88
    %p92 = pneg %p86
    %p93 = scmp.eq.s32.totalorder %s9, 1
    %p94 = por %p92, %p93
    %p95 = scmp.ne.s32.totalorder %s87, %s90
    %p96 = scmp.eq.s32.totalorder %s9, 0
    %p97 = por %p95, %p96
    %p98 = scmp.ne.s32.totalorder %s87, %s90
    %p99 = scmp.eq.s32.totalorder %s14, 1
    %p100 = por %p98, %p99
    %p101 = scmp.ne.s32.totalorder %s90, %s91
    %p102 = scmp.eq.s32.totalorder %s14, 0
    %p103 = por %p101, %p102
    %p104 = scmp.ne.s32.totalorder %s90, %s91
    %p105 = scmp.eq.s32.totalorder %s15, 1
    %p106 = por %p104, %p105
    %p108 = scmp.ne.s32.totalorder %s91, %s107
    %p109 = scmp.eq.s32.totalorder %s15, 0
    %p110 = por %p108, %p109
    %p111 = scmp.le.s32.totalorder 1, %s9
    %p112 = scmp.lt.s32.totalorder %s9, 3
    %p113 = pnand %p111, %p112
    %p114 = pneg %p113
    // Predicated region
    $region9: #{cnn_base_forward.5} parent=5 // pred_check
      _
    $region10: #{cnn_base_forward.5} parent=5 // pred_check_branch
      %116 = sbr.rel (%p113) target = $region12
    $region11: #{cnn_base_forward.5} parent=5 // pred_region
      %s117 = ssub.s32 %s9, 1
      // Predicated region
      $region13: #{cnn_base_forward.5} parent=11 // pred_check
        %p118 = pneg %p56
      $region14: #{cnn_base_forward.5} parent=11 // pred_check_branch
        %120 = sbr.rel (%p118) target = $region16
      $region15: #{cnn_base_forward.5} parent=11 // pred_region
        _
      $region16: #{cnn_base_forward.5} parent=11 // pred_fallthru
        _
      // Predicated region
      $region17: #{cnn_base_forward.5} parent=11 // pred_check
        %p121 = pneg %p77
      $region18: #{cnn_base_forward.5} parent=11 // pred_check_branch
        %123 = sbr.rel (%p121) target = $region20
      $region19: #{cnn_base_forward.5} parent=11 // pred_region
        _
      $region20: #{cnn_base_forward.5} parent=11 // pred_fallthru
        _
    $region12: #{cnn_base_forward.5} parent=5 // pred_fallthru
      _
    %p124 = scmp.lt.s32.totalorder %s9, 2
    // Predicated region
    $region21: #{cnn_base_forward.5} parent=5 // pred_check
      %p125 = pneg %p124
    $region22: #{cnn_base_forward.5} parent=5 // pred_check_branch
      %127 = sbr.rel (%p125) target = $region24
    $region23: #{cnn_base_forward.5} parent=5 // pred_region
      // Predicated region
      $region25: #{cnn_base_forward.5} parent=23 // pred_check
        %p128 = pneg %p29
      $region26: #{cnn_base_forward.5} parent=23 // pred_check_branch
        %130 = sbr.rel (%p128) target = $region28
      $region27: #{cnn_base_forward.5} parent=23 // pred_region
        %s131 = smul.u32 14, %s9
        %p132 = scmp.lt.s32.totalorder %s131, 27
        %s133 = scalar_select %p132, %s131, 27
        %s134 = smul.addr %s133, 4
        %s135 = scalar_lea.vmem %s0, %s134
        %s136 = smul.u32 14, %s9
      $region28: #{cnn_base_forward.5} parent=23 // pred_fallthru
        _
    $region24: #{cnn_base_forward.5} parent=5 // pred_fallthru
      _
    %p137 = scmp.le.s32.totalorder 1, %s9
    %p138 = scmp.lt.s32.totalorder %s9, 3
    %p139 = pnand %p137, %p138
    %p140 = pneg %p139
    // Predicated region
    $region29: #{cnn_base_forward.5} parent=5 // pred_check
      _
    $region30: #{cnn_base_forward.5} parent=5 // pred_check_branch
      %142 = sbr.rel (%p139) target = $region32
    $region31: #{cnn_base_forward.5} parent=5 // pred_region
      %s143 = ssub.s32 %s9, 1
      %s144 = smul.u32 14, %s14
      %p145 = scmp.lt.s32.totalorder %s144, 27
      %s146 = scalar_select %p145, %s144, 27
      %s147 = smul.addr %s146, 4
      %s148 = scalar_lea.vmem %s0, %s147
      %p149 = pneg %p35
      %p150 = pneg %p32
      %p151 = pneg %p56
      %p152 = pneg %p53
      %p153 = pneg %p77
      %p154 = pneg %p74
      %p155 = pneg %p103
      %p156 = pneg %p100
      %s157 = smul.u32 14, %s14
      %p158 = scmp.lt.s32.totalorder %s157, 27
      %s159 = scalar_select %p158, %s157, 27
      %s160 = smul.addr %s159, 4
      %s161 = scalar_lea.vmem %s3, %s160
      %s162 = smul.u32 14, %s14
      %p163 = scmp.lt.s32.totalorder %s162, 27
      %s164 = scalar_select %p163, %s162, 27
      %s165 = smul.addr %s164, 4
      %s166 = scalar_lea.vmem %s0, %s165
      %s167 = smul.u32 14, %s14
      %s168 = smul.u32 14, %s14
      %p169 = scmp.lt.s32.totalorder %s168, 27
      %s170 = scalar_select %p169, %s168, 27
      %s171 = smul.addr %s170, 4
      %s172 = scalar_lea.vmem %s3, %s171
      %s173 = smul.u32 14, %s14
      %v175 = vld [vmem:[%s166] sm:$0xf]
      %v176 = vld [vmem:[%s166 + $0x4] sm:$0xf]
      %v177 = vld [vmem:[%s166 + $0x8] sm:$0xf]
      %v178 = vld [vmem:[%s166 + $0xc] sm:$0xf]
      %v179 = vld [vmem:[%s166 + $0x10] sm:$0xf]
      %v180 = vld [vmem:[%s166 + $0x14] sm:$0xf]
      %v181 = vld [vmem:[%s166 + $0x18] sm:$0xf]
      %v182 = vld [vmem:[%s166 + $0x1c] sm:$0xf]
      %v183 = vld [vmem:[%s166 + $0x20] sm:$0xf]
      %v184 = vld [vmem:[%s166 + $0x24] sm:$0xf]
      %v185 = vld [vmem:[%s166 + $0x28] sm:$0xf]
      %v186 = vld [vmem:[%s166 + $0x2c] sm:$0xf]
      %v187 = vld [vmem:[%s166 + $0x30] sm:$0x7]
      %v188 = vld [vmem:[%s1] sm:$0xf]
      %v189 = vld [vmem:[%s1 + $0x4] sm:$0xf]
      %v190 = vld [vmem:[%s1 + $0x8] sm:$0xf]
      %v191 = vld [vmem:[%s1 + $0xc] sm:$0xf]
      %v192 = vld [vmem:[%s1 + $0x10] sm:$0xf]
      %v193 = vld [vmem:[%s1 + $0x14] sm:$0xf]
      %v194 = vld [vmem:[%s1 + $0x18] sm:$0xf]
      %v195 = vld [vmem:[%s1 + $0x1c] sm:$0xf]
      %v196 = vld [vmem:[%s1 + $0x20] sm:$0xf]
      %v197 = vld [vmem:[%s1 + $0x24] sm:$0xf]
      %v198 = vld [vmem:[%s1 + $0x28] sm:$0xf]
      %v199 = vld [vmem:[%s1 + $0x2c] sm:$0xf]
      %v200 = vld [vmem:[%s1 + $0x30] sm:$0xf]
      %v201 = vld [vmem:[%s1 + $0x34] sm:$0xf]
      %v202 = vld [vmem:[%s1 + $0x38] sm:$0xf]
      %v203 = vld [vmem:[%s1 + $0x3c] sm:$0xf]
      %v204 = vld [vmem:[%s1 + $0x40] sm:$0xf]
      %v205 = vld [vmem:[%s1 + $0x44] sm:$0xf]
      %v206 = vld [vmem:[%s1 + $0x48] sm:$0xf]
      %v207 = vld [vmem:[%s1 + $0x4c] sm:$0xf]
      %v208 = vld [vmem:[%s1 + $0x50] sm:$0xf]
      %v209 = vld [vmem:[%s1 + $0x54] sm:$0xf]
      %v210 = vld [vmem:[%s1 + $0x58] sm:$0xf]
      %v211 = vld [vmem:[%s1 + $0x5c] sm:$0xf]
      %v212 = vld [vmem:[%s1 + $0x60] sm:$0xf]
      %v213 = vld [vmem:[%s1 + $0x64] sm:$0xf]
      %v214 = vld [vmem:[%s1 + $0x68] sm:$0xf]
      %v215 = vld [vmem:[%s1 + $0x6c] sm:$0xf]
      %v216 = vld [vmem:[%s1 + $0x70] sm:$0xf]
      %v217 = vld [vmem:[%s1 + $0x74] sm:$0xf]
      %v218 = vld [vmem:[%s1 + $0x78] sm:$0xf]
      %v219 = vld [vmem:[%s1 + $0x7c] sm:$0xf]
      %v233 = vunpack.c.l.b16 %v175
      %v234 = vunpack.c.l.b16 %v176
      %v235 = vunpack.c.l.b16 %v177
      %v236 = vunpack.c.l.b16 %v178
      %v237 = vunpack.c.l.b16 %v179
      %v238 = vunpack.c.l.b16 %v180
      %v239 = vunpack.c.l.b16 %v181
      %v240 = vunpack.c.l.b16 %v182
      %v241 = vunpack.c.l.b16 %v183
      %v242 = vunpack.c.l.b16 %v184
      %v243 = vunpack.c.l.b16 %v185
      %v244 = vunpack.c.l.b16 %v186
      %v245 = vunpack.c.l.b16 %v187
      %v246 = vpack.c.b16 %v234, %v233
      %v247 = vpack.c.b16 %v236, %v235
      %v248 = vpack.c.b16 %v238, %v237
      %v249 = vpack.c.b16 %v240, %v239
      %v250 = vpack.c.b16 %v242, %v241
      %v251 = vpack.c.b16 %v244, %v243
      %v252 = vpack.c.b16 %v245, %v245
      %vm253 = vsmask.f32 7424
      %v255 = vshrl.u32 %v246, 16
      %v257 = vshll.u32 %v246, 16
      %v259 = vrot.slane %v257, 1
      %v260 = vor.u32 %v255, %v259
      %v262 = vshll.u32 %v247, 16
      %v264 = vrot.slane %v262, 1
      %v265 = vsel %vm253, %v260, %v264
      %v266 = vshrl.u32 %v247, 16
      %v268 = vor.u32 %v266, %v264
      %v270 = vshll.u32 %v248, 16
      %v272 = vrot.slane %v270, 1
      %v273 = vsel %vm253, %v268, %v272
      %v274 = vshrl.u32 %v248, 16
      %v276 = vor.u32 %v274, %v272
      %v278 = vshll.u32 %v249, 16
      %v280 = vrot.slane %v278, 1
      %v281 = vsel %vm253, %v276, %v280
      %v282 = vshrl.u32 %v249, 16
      %v284 = vor.u32 %v282, %v280
      %v286 = vshll.u32 %v250, 16
      %v288 = vrot.slane %v286, 1
      %v289 = vsel %vm253, %v284, %v288
      %v290 = vshrl.u32 %v250, 16
      %v292 = vor.u32 %v290, %v288
      %v294 = vshll.u32 %v251, 16
      %v296 = vrot.slane %v294, 1
      %v297 = vsel %vm253, %v292, %v296
      %v298 = vshrl.u32 %v251, 16
      %v300 = vor.u32 %v298, %v296
      %v302 = vshll.u32 %v252, 16
      %v304 = vrot.slane %v302, 1
      %v305 = vsel %vm253, %v300, %v304
      %v306 = vshrl.u32 %v252, 16
      %v308 = vor.u32 %v306, %v304
      %v332 = vunpack.c.l.b16 %v204
      %v333 = vunpack.c.l.b16 %v205
      %v334 = vunpack.c.l.b16 %v206
      %v335 = vunpack.c.l.b16 %v207
      %v336 = vunpack.c.l.b16 %v208
      %v337 = vunpack.c.l.b16 %v209
      %v338 = vunpack.c.l.b16 %v210
      %v339 = vunpack.c.l.b16 %v211
      %v340 = vunpack.c.l.b16 %v212
      %v341 = vunpack.c.l.b16 %v213
      %v342 = vunpack.c.l.b16 %v214
      %v343 = vunpack.c.l.b16 %v215
      %v344 = vunpack.c.l.b16 %v216
      %v345 = vunpack.c.l.b16 %v217
      %v346 = vunpack.c.l.b16 %v218
      %v347 = vunpack.c.l.b16 %v219
      %v348 = vpack.c.b16 %v333, %v332
      %v349 = vpack.c.b16 %v335, %v334
      %v350 = vpack.c.b16 %v337, %v336
      %v351 = vpack.c.b16 %v339, %v338
      %v352 = vpack.c.b16 %v341, %v340
      %v353 = vpack.c.b16 %v343, %v342
      %v354 = vpack.c.b16 %v345, %v344
      %v355 = vpack.c.b16 %v347, %v346
      %364 = vmatprep.subr.bf16.mxu0 0
      %365 = vmatpush1.bf16.msra.mxu0 %v355
      %366 = vmatprep.subr.bf16.mxu0 0
      %367 = vmatpush1.bf16.msra.mxu0 %v354
      %368 = vmatprep.subr.bf16.mxu0 0
      %369 = vmatpush1.bf16.msra.mxu0 %v353
      %370 = vmatprep.subr.bf16.mxu0 0
      %371 = vmatpush1.bf16.msra.mxu0 %v352
      %372 = vmatprep.subr.bf16.mxu0 0
      %373 = vmatpush1.bf16.msra.mxu0 %v351
      %374 = vmatprep.subr.bf16.mxu0 0
      %375 = vmatpush1.bf16.msra.mxu0 %v350
      %376 = vmatprep.subr.bf16.mxu0 0
      %377 = vmatpush1.bf16.msra.mxu0 %v349
      %378 = vmatprep.subr.bf16.mxu0 0
      %379 = vmatpush1.bf16.msra.mxu0 %v348
      %380 = vmatprep.subr.bf16.mxu0 0
      %381 = vmatpush2.bf16.msra.mxu0 0
      %382 = vmatprep.subr.bf16.mxu0 0
      %383 = vmatpush2.bf16.msra.mxu0 0
      %384 = vmatprep.subr.bf16.mxu0 0
      %385 = vmatpush2.bf16.msra.mxu0 0
      %386 = vmatprep.subr.bf16.mxu0 0
      %387 = vmatpush2.bf16.msra.mxu0 0
      %388 = vmatprep.subr.bf16.mxu0 0
      %389 = vmatpush2.bf16.msra.mxu0 0
      %390 = vmatprep.subr.bf16.mxu0 0
      %391 = vmatpush2.bf16.msra.mxu0 0
      %392 = vmatprep.subr.bf16.mxu0 0
      %393 = vmatpush2.bf16.msra.mxu0 0
      %394 = vmatprep.subr.bf16.mxu0 0
      %395 = vmatpush2.bf16.msra.mxu0 0
      %396 = vmatprep.mubr.bf16.mxu0 0
      %397 = vmatmul.mubr.bf16.gmra.mxu0 %v265
      %v398 = vpop.f32.mrf.mxu0
      %v399 = vadd.f32 0.0, %v398
      %v400 = vpop.f32.mrf.mxu0
      %v401 = vpop.f32.mrf.mxu0
      %v402 = vadd.f32 0.0, %v401
      %v403 = vpop.f32.mrf.mxu0
      %404 = vmatprep.mubr.bf16.mxu0 0
      %405 = vmatmul.mubr.bf16.gmra.mxu0 %v273
      %v406 = vpop.f32.mrf.mxu0
      %v407 = vadd.f32 0.0, %v406
      %v408 = vpop.f32.mrf.mxu0
      %v409 = vpop.f32.mrf.mxu0
      %v410 = vadd.f32 0.0, %v409
      %v411 = vpop.f32.mrf.mxu0
      %412 = vmatprep.mubr.bf16.mxu0 0
      %413 = vmatmul.mubr.bf16.gmra.mxu0 %v281
      %v414 = vpop.f32.mrf.mxu0
      %v415 = vadd.f32 0.0, %v414
      %v416 = vpop.f32.mrf.mxu0
      %v417 = vpop.f32.mrf.mxu0
      %v418 = vadd.f32 0.0, %v417
      %v419 = vpop.f32.mrf.mxu0
      %420 = vmatprep.mubr.bf16.mxu0 0
      %421 = vmatmul.mubr.bf16.gmra.mxu0 %v289
      %v422 = vpop.f32.mrf.mxu0
      %v423 = vadd.f32 0.0, %v422
      %v424 = vpop.f32.mrf.mxu0
      %v425 = vpop.f32.mrf.mxu0
      %v426 = vadd.f32 0.0, %v425
      %v427 = vpop.f32.mrf.mxu0
      %428 = vmatprep.mubr.bf16.mxu0 0
      %429 = vmatmul.mubr.bf16.gmra.mxu0 %v297
      %v430 = vpop.f32.mrf.mxu0
      %v431 = vadd.f32 0.0, %v430
      %v432 = vpop.f32.mrf.mxu0
      %v433 = vpop.f32.mrf.mxu0
      %v434 = vadd.f32 0.0, %v433
      %v435 = vpop.f32.mrf.mxu0
      %436 = vmatprep.mubr.bf16.mxu0 0
      %437 = vmatmul.mubr.bf16.gmra.mxu0 %v305
      %v438 = vpop.f32.mrf.mxu0
      %v439 = vadd.f32 0.0, %v438
      %v440 = vpop.f32.mrf.mxu0
      %v441 = vpop.f32.mrf.mxu0
      %v442 = vadd.f32 0.0, %v441
      %v443 = vpop.f32.mrf.mxu0
      %444 = vmatprep.mubr.bf16.mxu0 0
      %445 = vmatmul.mubr.bf16.gmra.mxu0 %v308
      %v446 = vpop.f32.mrf.mxu0
      %v447 = vadd.f32 0.0, %v446
      %v448 = vpop.f32.mrf.mxu0
      %v449 = vpop.f32.mrf.mxu0
      %v450 = vpop.f32.mrf.mxu0
      %451 = vdwg.mxu0
      %v475 = vunpack.c.l.b16 %v188
      %v476 = vunpack.c.l.b16 %v189
      %v477 = vunpack.c.l.b16 %v190
      %v478 = vunpack.c.l.b16 %v191
      %v479 = vunpack.c.l.b16 %v192
      %v480 = vunpack.c.l.b16 %v193
      %v481 = vunpack.c.l.b16 %v194
      %v482 = vunpack.c.l.b16 %v195
      %v483 = vunpack.c.l.b16 %v196
      %v484 = vunpack.c.l.b16 %v197
      %v485 = vunpack.c.l.b16 %v198
      %v486 = vunpack.c.l.b16 %v199
      %v487 = vunpack.c.l.b16 %v200
      %v488 = vunpack.c.l.b16 %v201
      %v489 = vunpack.c.l.b16 %v202
      %v490 = vunpack.c.l.b16 %v203
      %v491 = vpack.c.b16 %v476, %v475
      %v492 = vpack.c.b16 %v478, %v477
      %v493 = vpack.c.b16 %v480, %v479
      %v494 = vpack.c.b16 %v482, %v481
      %v495 = vpack.c.b16 %v484, %v483
      %v496 = vpack.c.b16 %v486, %v485
      %v497 = vpack.c.b16 %v488, %v487
      %v498 = vpack.c.b16 %v490, %v489
      %507 = vmatprep.subr.bf16.mxu0 0
      %508 = vmatpush1.bf16.msra.mxu0 %v498
      %509 = vmatprep.subr.bf16.mxu0 0
      %510 = vmatpush1.bf16.msra.mxu0 %v497
      %511 = vmatprep.subr.bf16.mxu0 0
      %512 = vmatpush1.bf16.msra.mxu0 %v496
      %513 = vmatprep.subr.bf16.mxu0 0
      %514 = vmatpush1.bf16.msra.mxu0 %v495
      %515 = vmatprep.subr.bf16.mxu0 0
      %516 = vmatpush1.bf16.msra.mxu0 %v494
      %517 = vmatprep.subr.bf16.mxu0 0
      %518 = vmatpush1.bf16.msra.mxu0 %v493
      %519 = vmatprep.subr.bf16.mxu0 0
      %520 = vmatpush1.bf16.msra.mxu0 %v492
      %521 = vmatprep.subr.bf16.mxu0 0
      %522 = vmatpush1.bf16.msra.mxu0 %v491
      %523 = vmatprep.subr.bf16.mxu0 0
      %524 = vmatpush2.bf16.msra.mxu0 0
      %525 = vmatprep.subr.bf16.mxu0 0
      %526 = vmatpush2.bf16.msra.mxu0 0
      %527 = vmatprep.subr.bf16.mxu0 0
      %528 = vmatpush2.bf16.msra.mxu0 0
      %529 = vmatprep.subr.bf16.mxu0 0
      %530 = vmatpush2.bf16.msra.mxu0 0
      %531 = vmatprep.subr.bf16.mxu0 0
      %532 = vmatpush2.bf16.msra.mxu0 0
      %533 = vmatprep.subr.bf16.mxu0 0
      %534 = vmatpush2.bf16.msra.mxu0 0
      %535 = vmatprep.subr.bf16.mxu0 0
      %536 = vmatpush2.bf16.msra.mxu0 0
      %537 = vmatprep.subr.bf16.mxu0 0
      %538 = vmatpush2.bf16.msra.mxu0 0
      %539 = vmatprep.mubr.bf16.mxu0 0
      %540 = vmatmul.mubr.bf16.gmra.mxu0 %v246
      %v541 = vpop.f32.mrf.mxu0
      %v542 = vadd.f32 %v399, %v541
      %v543 = vpop.f32.mrf.mxu0
      %v544 = vpop.f32.mrf.mxu0
      %v545 = vadd.f32 %v402, %v544
      %v546 = vpop.f32.mrf.mxu0
      %547 = vmatprep.mubr.bf16.mxu0 0
      %548 = vmatmul.mubr.bf16.gmra.mxu0 %v247
      %v549 = vpop.f32.mrf.mxu0
      %v550 = vadd.f32 %v407, %v549
      %v551 = vpop.f32.mrf.mxu0
      %v552 = vpop.f32.mrf.mxu0
      %v553 = vadd.f32 %v410, %v552
      %v554 = vpop.f32.mrf.mxu0
      %555 = vmatprep.mubr.bf16.mxu0 0
      %556 = vmatmul.mubr.bf16.gmra.mxu0 %v248
      %v557 = vpop.f32.mrf.mxu0
      %v558 = vadd.f32 %v415, %v557
      %v559 = vpop.f32.mrf.mxu0
      %v560 = vpop.f32.mrf.mxu0
      %v561 = vadd.f32 %v418, %v560
      %v562 = vpop.f32.mrf.mxu0
      %563 = vmatprep.mubr.bf16.mxu0 0
      %564 = vmatmul.mubr.bf16.gmra.mxu0 %v249
      %v565 = vpop.f32.mrf.mxu0
      %v566 = vadd.f32 %v423, %v565
      %v567 = vpop.f32.mrf.mxu0
      %v568 = vpop.f32.mrf.mxu0
      %v569 = vadd.f32 %v426, %v568
      %v570 = vpop.f32.mrf.mxu0
      %571 = vmatprep.mubr.bf16.mxu0 0
      %572 = vmatmul.mubr.bf16.gmra.mxu0 %v250
      %v573 = vpop.f32.mrf.mxu0
      %v574 = vadd.f32 %v431, %v573
      %v575 = vpop.f32.mrf.mxu0
      %v576 = vpop.f32.mrf.mxu0
      %v577 = vadd.f32 %v434, %v576
      %v578 = vpop.f32.mrf.mxu0
      %579 = vmatprep.mubr.bf16.mxu0 0
      %580 = vmatmul.mubr.bf16.gmra.mxu0 %v251
      %v581 = vpop.f32.mrf.mxu0
      %v582 = vadd.f32 %v439, %v581
      %v583 = vpop.f32.mrf.mxu0
      %v584 = vpop.f32.mrf.mxu0
      %v585 = vadd.f32 %v442, %v584
      %v586 = vpop.f32.mrf.mxu0
      %587 = vmatprep.mubr.bf16.mxu0 0
      %588 = vmatmul.mubr.bf16.gmra.mxu0 %v252
      %v589 = vpop.f32.mrf.mxu0
      %v590 = vadd.f32 %v447, %v589
      %v591 = vpop.f32.mrf.mxu0
      %v592 = vpop.f32.mrf.mxu0
      %v593 = vpop.f32.mrf.mxu0
      %594 = vdwg.mxu0
      %v595 = vld [vmem:[%s166 + $0x4] sm:$0xe]
      %v596 = vld [vmem:[%s166 + $0x8] sm:$0xf]
      %v597 = vld [vmem:[%s166 + $0xc] sm:$0xf]
      %v598 = vld [vmem:[%s166 + $0x10] sm:$0xf]
      %v599 = vld [vmem:[%s166 + $0x14] sm:$0xf]
      %v600 = vld [vmem:[%s166 + $0x18] sm:$0xf]
      %v601 = vld [vmem:[%s166 + $0x1c] sm:$0xf]
      %v602 = vld [vmem:[%s166 + $0x20] sm:$0xf]
      %v603 = vld [vmem:[%s166 + $0x24] sm:$0xf]
      %v604 = vld [vmem:[%s166 + $0x28] sm:$0xf]
      %v605 = vld [vmem:[%s166 + $0x2c] sm:$0xf]
      %v606 = vld [vmem:[%s166 + $0x30] sm:$0xf]
      %v607 = vld [vmem:[%s166 + $0x34] sm:$0xf]
      %v608 = vld [vmem:[%s1 + $0x80] sm:$0xf]
      %v609 = vld [vmem:[%s1 + $0x84] sm:$0xf]
      %v610 = vld [vmem:[%s1 + $0x88] sm:$0xf]
      %v611 = vld [vmem:[%s1 + $0x8c] sm:$0xf]
      %v612 = vld [vmem:[%s1 + $0x90] sm:$0xf]
      %v613 = vld [vmem:[%s1 + $0x94] sm:$0xf]
      %v614 = vld [vmem:[%s1 + $0x98] sm:$0xf]
      %v615 = vld [vmem:[%s1 + $0x9c] sm:$0xf]
      %v616 = vld [vmem:[%s1 + $0xa0] sm:$0xf]
      %v617 = vld [vmem:[%s1 + $0xa4] sm:$0xf]
      %v618 = vld [vmem:[%s1 + $0xa8] sm:$0xf]
      %v619 = vld [vmem:[%s1 + $0xac] sm:$0xf]
      %v620 = vld [vmem:[%s1 + $0xb0] sm:$0xf]
      %v621 = vld [vmem:[%s1 + $0xb4] sm:$0xf]
      %v622 = vld [vmem:[%s1 + $0xb8] sm:$0xf]
      %v623 = vld [vmem:[%s1 + $0xbc] sm:$0xf]
      %v637 = vunpack.c.l.b16 %v595
      %v638 = vunpack.c.l.b16 %v596
      %v639 = vunpack.c.l.b16 %v597
      %v640 = vunpack.c.l.b16 %v598
      %v641 = vunpack.c.l.b16 %v599
      %v642 = vunpack.c.l.b16 %v600
      %v643 = vunpack.c.l.b16 %v601
      %v644 = vunpack.c.l.b16 %v602
      %v645 = vunpack.c.l.b16 %v603
      %v646 = vunpack.c.l.b16 %v604
      %v647 = vunpack.c.l.b16 %v605
      %v648 = vunpack.c.l.b16 %v606
      %v649 = vunpack.c.l.b16 %v607
      %v650 = vpack.c.b16 %v638, %v637
      %v651 = vpack.c.b16 %v640, %v639
      %v652 = vpack.c.b16 %v642, %v641
      %v653 = vpack.c.b16 %v644, %v643
      %v654 = vpack.c.b16 %v646, %v645
      %v655 = vpack.c.b16 %v648, %v647
      %v656 = vpack.c.b16 %v649, %v649
      %vm657 = vcmask 1046528
      %v658 = vrot.slane %v650, 1
      %v659 = vrot.slane %v651, 1
      %v660 = vsel %vm657, %v658, %v659
      %v661 = vrot.slane %v652, 1
      %v662 = vsel %vm657, %v659, %v661
      %v663 = vrot.slane %v653, 1
      %v664 = vsel %vm657, %v661, %v663
      %v665 = vrot.slane %v654, 1
      %v666 = vsel %vm657, %v663, %v665
      %v667 = vrot.slane %v655, 1
      %v668 = vsel %vm657, %v665, %v667
      %v669 = vrot.slane %v656, 1
      %v670 = vsel %vm657, %v667, %v669
      %v694 = vunpack.c.l.b16 %v608
      %v695 = vunpack.c.l.b16 %v609
      %v696 = vunpack.c.l.b16 %v610
      %v697 = vunpack.c.l.b16 %v611
      %v698 = vunpack.c.l.b16 %v612
      %v699 = vunpack.c.l.b16 %v613
      %v700 = vunpack.c.l.b16 %v614
      %v701 = vunpack.c.l.b16 %v615
      %v702 = vunpack.c.l.b16 %v616
      %v703 = vunpack.c.l.b16 %v617
      %v704 = vunpack.c.l.b16 %v618
      %v705 = vunpack.c.l.b16 %v619
      %v706 = vunpack.c.l.b16 %v620
      %v707 = vunpack.c.l.b16 %v621
      %v708 = vunpack.c.l.b16 %v622
      %v709 = vunpack.c.l.b16 %v623
      %v710 = vpack.c.b16 %v695, %v694
      %v711 = vpack.c.b16 %v697, %v696
      %v712 = vpack.c.b16 %v699, %v698
      %v713 = vpack.c.b16 %v701, %v700
      %v714 = vpack.c.b16 %v703, %v702
      %v715 = vpack.c.b16 %v705, %v704
      %v716 = vpack.c.b16 %v707, %v706
      %v717 = vpack.c.b16 %v709, %v708
      %726 = vmatprep.subr.bf16.mxu0 0
      %727 = vmatpush1.bf16.msra.mxu0 %v717
      %728 = vmatprep.subr.bf16.mxu0 0
      %729 = vmatpush1.bf16.msra.mxu0 %v716
      %730 = vmatprep.subr.bf16.mxu0 0
      %731 = vmatpush1.bf16.msra.mxu0 %v715
      %732 = vmatprep.subr.bf16.mxu0 0
      %733 = vmatpush1.bf16.msra.mxu0 %v714
      %734 = vmatprep.subr.bf16.mxu0 0
      %735 = vmatpush1.bf16.msra.mxu0 %v713
      %736 = vmatprep.subr.bf16.mxu0 0
      %737 = vmatpush1.bf16.msra.mxu0 %v712
      %738 = vmatprep.subr.bf16.mxu0 0
      %739 = vmatpush1.bf16.msra.mxu0 %v711
      %740 = vmatprep.subr.bf16.mxu0 0
      %741 = vmatpush1.bf16.msra.mxu0 %v710
      %742 = vmatprep.subr.bf16.mxu0 0
      %743 = vmatpush2.bf16.msra.mxu0 0
      %744 = vmatprep.subr.bf16.mxu0 0
      %745 = vmatpush2.bf16.msra.mxu0 0
      %746 = vmatprep.subr.bf16.mxu0 0
      %747 = vmatpush2.bf16.msra.mxu0 0
      %748 = vmatprep.subr.bf16.mxu0 0
      %749 = vmatpush2.bf16.msra.mxu0 0
      %750 = vmatprep.subr.bf16.mxu0 0
      %751 = vmatpush2.bf16.msra.mxu0 0
      %752 = vmatprep.subr.bf16.mxu0 0
      %753 = vmatpush2.bf16.msra.mxu0 0
      %754 = vmatprep.subr.bf16.mxu0 0
      %755 = vmatpush2.bf16.msra.mxu0 0
      %756 = vmatprep.subr.bf16.mxu0 0
      %757 = vmatpush2.bf16.msra.mxu0 0
      %758 = vmatprep.mubr.bf16.mxu0 0
      %759 = vmatmul.mubr.bf16.gmra.mxu0 %v660
      %v760 = vpop.f32.mrf.mxu0
      %v761 = vadd.f32 0.0, %v760
      %v762 = vpop.f32.mrf.mxu0
      %v763 = vpop.f32.mrf.mxu0
      %v764 = vadd.f32 0.0, %v763
      %v765 = vpop.f32.mrf.mxu0
      %766 = vmatprep.mubr.bf16.mxu0 0
      %767 = vmatmul.mubr.bf16.gmra.mxu0 %v662
      %v768 = vpop.f32.mrf.mxu0
      %v769 = vadd.f32 0.0, %v768
      %v770 = vpop.f32.mrf.mxu0
      %v771 = vpop.f32.mrf.mxu0
      %v772 = vadd.f32 0.0, %v771
      %v773 = vpop.f32.mrf.mxu0
      %774 = vmatprep.mubr.bf16.mxu0 0
      %775 = vmatmul.mubr.bf16.gmra.mxu0 %v664
      %v776 = vpop.f32.mrf.mxu0
      %v777 = vadd.f32 0.0, %v776
      %v778 = vpop.f32.mrf.mxu0
      %v779 = vpop.f32.mrf.mxu0
      %v780 = vadd.f32 0.0, %v779
      %v781 = vpop.f32.mrf.mxu0
      %782 = vmatprep.mubr.bf16.mxu0 0
      %783 = vmatmul.mubr.bf16.gmra.mxu0 %v666
      %v784 = vpop.f32.mrf.mxu0
      %v785 = vadd.f32 0.0, %v784
      %v786 = vpop.f32.mrf.mxu0
      %v787 = vpop.f32.mrf.mxu0
      %v788 = vadd.f32 0.0, %v787
      %v789 = vpop.f32.mrf.mxu0
      %790 = vmatprep.mubr.bf16.mxu0 0
      %791 = vmatmul.mubr.bf16.gmra.mxu0 %v668
      %v792 = vpop.f32.mrf.mxu0
      %v793 = vadd.f32 0.0, %v792
      %v794 = vpop.f32.mrf.mxu0
      %v795 = vpop.f32.mrf.mxu0
      %v796 = vadd.f32 0.0, %v795
      %v797 = vpop.f32.mrf.mxu0
      %798 = vmatprep.mubr.bf16.mxu0 0
      %799 = vmatmul.mubr.bf16.gmra.mxu0 %v670
      %v800 = vpop.f32.mrf.mxu0
      %v801 = vadd.f32 0.0, %v800
      %v802 = vpop.f32.mrf.mxu0
      %v803 = vpop.f32.mrf.mxu0
      %v804 = vadd.f32 0.0, %v803
      %v805 = vpop.f32.mrf.mxu0
      %806 = vmatprep.mubr.bf16.mxu0 0
      %807 = vmatmul.mubr.bf16.gmra.mxu0 %v669
      %v808 = vpop.f32.mrf.mxu0
      %v809 = vadd.f32 0.0, %v808
      %v810 = vpop.f32.mrf.mxu0
      %v811 = vpop.f32.mrf.mxu0
      %v812 = vpop.f32.mrf.mxu0
      %813 = vdwg.mxu0
      %v814 = vadd.f32 %v542, %v761
      %v815 = vadd.f32 %v545, %v764
      %v816 = vadd.f32 %v550, %v769
      %v817 = vadd.f32 %v553, %v772
      %v818 = vadd.f32 %v558, %v777
      %v819 = vadd.f32 %v561, %v780
      %v820 = vadd.f32 %v566, %v785
      %v821 = vadd.f32 %v569, %v788
      %v822 = vadd.f32 %v574, %v793
      %v823 = vadd.f32 %v577, %v796
      %v824 = vadd.f32 %v582, %v801
      %v825 = vadd.f32 %v585, %v804
      %v826 = vadd.f32 %v590, %v809
      %v827 = vld [vmem:[%s1 + $0xc0] sm:$0xf]
      %v828 = vld [vmem:[%s1 + $0xc4] sm:$0xf]
      %v829 = vld [vmem:[%s1 + $0xc8] sm:$0xf]
      %v830 = vld [vmem:[%s1 + $0xcc] sm:$0xf]
      %v831 = vld [vmem:[%s1 + $0xd0] sm:$0xf]
      %v832 = vld [vmem:[%s1 + $0xd4] sm:$0xf]
      %v833 = vld [vmem:[%s1 + $0xd8] sm:$0xf]
      %v834 = vld [vmem:[%s1 + $0xdc] sm:$0xf]
      %v835 = vld [vmem:[%s1 + $0xe0] sm:$0xf]
      %v836 = vld [vmem:[%s1 + $0xe4] sm:$0xf]
      %v837 = vld [vmem:[%s1 + $0xe8] sm:$0xf]
      %v838 = vld [vmem:[%s1 + $0xec] sm:$0xf]
      %v839 = vld [vmem:[%s1 + $0xf0] sm:$0xf]
      %v840 = vld [vmem:[%s1 + $0xf4] sm:$0xf]
      %v841 = vld [vmem:[%s1 + $0xf8] sm:$0xf]
      %v842 = vld [vmem:[%s1 + $0xfc] sm:$0xf]
      %vm843 = vsmask.f32 6400
      %v845 = vshrl.u32 %v650, 16
      %v847 = vrot.slane %v845, 1
      %v848 = vshll.u32 %v650, 16
      %v850 = vrot.slane %v848, 2
      %v851 = vor.u32 %v847, %v850
      %v853 = vshrl.u32 %v651, 16
      %v855 = vrot.slane %v853, 1
      %v856 = vshll.u32 %v651, 16
      %v858 = vrot.slane %v856, 2
      %v859 = vor.u32 %v855, %v858
      %v860 = vsel %vm843, %v851, %v859
      %v862 = vshrl.u32 %v652, 16
      %v864 = vrot.slane %v862, 1
      %v865 = vshll.u32 %v652, 16
      %v867 = vrot.slane %v865, 2
      %v868 = vor.u32 %v864, %v867
      %v869 = vsel %vm843, %v859, %v868
      %v871 = vshrl.u32 %v653, 16
      %v873 = vrot.slane %v871, 1
      %v874 = vshll.u32 %v653, 16
      %v876 = vrot.slane %v874, 2
      %v877 = vor.u32 %v873, %v876
      %v878 = vsel %vm843, %v868, %v877
      %v880 = vshrl.u32 %v654, 16
      %v882 = vrot.slane %v880, 1
      %v883 = vshll.u32 %v654, 16
      %v885 = vrot.slane %v883, 2
      %v886 = vor.u32 %v882, %v885
      %v887 = vsel %vm843, %v877, %v886
      %v889 = vshrl.u32 %v655, 16
      %v891 = vrot.slane %v889, 1
      %v892 = vshll.u32 %v655, 16
      %v894 = vrot.slane %v892, 2
      %v895 = vor.u32 %v891, %v894
      %v896 = vsel %vm843, %v886, %v895
      %v898 = vshrl.u32 %v656, 16
      %v900 = vrot.slane %v898, 1
      %v901 = vshll.u32 %v656, 16
      %v903 = vrot.slane %v901, 2
      %v904 = vor.u32 %v900, %v903
      %v905 = vsel %vm843, %v895, %v904
      %v929 = vunpack.c.l.b16 %v827
      %v930 = vunpack.c.l.b16 %v828
      %v931 = vunpack.c.l.b16 %v829
      %v932 = vunpack.c.l.b16 %v830
      %v933 = vunpack.c.l.b16 %v831
      %v934 = vunpack.c.l.b16 %v832
      %v935 = vunpack.c.l.b16 %v833
      %v936 = vunpack.c.l.b16 %v834
      %v937 = vunpack.c.l.b16 %v835
      %v938 = vunpack.c.l.b16 %v836
      %v939 = vunpack.c.l.b16 %v837
      %v940 = vunpack.c.l.b16 %v838
      %v941 = vunpack.c.l.b16 %v839
      %v942 = vunpack.c.l.b16 %v840
      %v943 = vunpack.c.l.b16 %v841
      %v944 = vunpack.c.l.b16 %v842
      %v945 = vpack.c.b16 %v930, %v929
      %v946 = vpack.c.b16 %v932, %v931
      %v947 = vpack.c.b16 %v934, %v933
      %v948 = vpack.c.b16 %v936, %v935
      %v949 = vpack.c.b16 %v938, %v937
      %v950 = vpack.c.b16 %v940, %v939
      %v951 = vpack.c.b16 %v942, %v941
      %v952 = vpack.c.b16 %v944, %v943
      %961 = vmatprep.subr.bf16.mxu0 0
      %962 = vmatpush1.bf16.msra.mxu0 %v952
      %963 = vmatprep.subr.bf16.mxu0 0
      %964 = vmatpush1.bf16.msra.mxu0 %v951
      %965 = vmatprep.subr.bf16.mxu0 0
      %966 = vmatpush1.bf16.msra.mxu0 %v950
      %967 = vmatprep.subr.bf16.mxu0 0
      %968 = vmatpush1.bf16.msra.mxu0 %v949
      %969 = vmatprep.subr.bf16.mxu0 0
      %970 = vmatpush1.bf16.msra.mxu0 %v948
      %971 = vmatprep.subr.bf16.mxu0 0
      %972 = vmatpush1.bf16.msra.mxu0 %v947
      %973 = vmatprep.subr.bf16.mxu0 0
      %974 = vmatpush1.bf16.msra.mxu0 %v946
      %975 = vmatprep.subr.bf16.mxu0 0
      %976 = vmatpush1.bf16.msra.mxu0 %v945
      %977 = vmatprep.subr.bf16.mxu0 0
      %978 = vmatpush2.bf16.msra.mxu0 0
      %979 = vmatprep.subr.bf16.mxu0 0
      %980 = vmatpush2.bf16.msra.mxu0 0
      %981 = vmatprep.subr.bf16.mxu0 0
      %982 = vmatpush2.bf16.msra.mxu0 0
      %983 = vmatprep.subr.bf16.mxu0 0
      %984 = vmatpush2.bf16.msra.mxu0 0
      %985 = vmatprep.subr.bf16.mxu0 0
      %986 = vmatpush2.bf16.msra.mxu0 0
      %987 = vmatprep.subr.bf16.mxu0 0
      %988 = vmatpush2.bf16.msra.mxu0 0
      %989 = vmatprep.subr.bf16.mxu0 0
      %990 = vmatpush2.bf16.msra.mxu0 0
      %991 = vmatprep.subr.bf16.mxu0 0
      %992 = vmatpush2.bf16.msra.mxu0 0
      %993 = vmatprep.mubr.bf16.mxu0 0
      %994 = vmatmul.mubr.bf16.gmra.mxu0 %v860
      %v995 = vpop.f32.mrf.mxu0
      %v996 = vadd.f32 0.0, %v995
      %v997 = vpop.f32.mrf.mxu0
      %v998 = vpop.f32.mrf.mxu0
      %v999 = vadd.f32 0.0, %v998
      %v1000 = vpop.f32.mrf.mxu0
      %1001 = vmatprep.mubr.bf16.mxu0 0
      %1002 = vmatmul.mubr.bf16.gmra.mxu0 %v869
      %v1003 = vpop.f32.mrf.mxu0
      %v1004 = vadd.f32 0.0, %v1003
      %v1005 = vpop.f32.mrf.mxu0
      %v1006 = vpop.f32.mrf.mxu0
      %v1007 = vadd.f32 0.0, %v1006
      %v1008 = vpop.f32.mrf.mxu0
      %1009 = vmatprep.mubr.bf16.mxu0 0
      %1010 = vmatmul.mubr.bf16.gmra.mxu0 %v878
      %v1011 = vpop.f32.mrf.mxu0
      %v1012 = vadd.f32 0.0, %v1011
      %v1013 = vpop.f32.mrf.mxu0
      %v1014 = vpop.f32.mrf.mxu0
      %v1015 = vadd.f32 0.0, %v1014
      %v1016 = vpop.f32.mrf.mxu0
      %1017 = vmatprep.mubr.bf16.mxu0 0
      %1018 = vmatmul.mubr.bf16.gmra.mxu0 %v887
      %v1019 = vpop.f32.mrf.mxu0
      %v1020 = vadd.f32 0.0, %v1019
      %v1021 = vpop.f32.mrf.mxu0
      %v1022 = vpop.f32.mrf.mxu0
      %v1023 = vadd.f32 0.0, %v1022
      %v1024 = vpop.f32.mrf.mxu0
      %1025 = vmatprep.mubr.bf16.mxu0 0
      %1026 = vmatmul.mubr.bf16.gmra.mxu0 %v896
      %v1027 = vpop.f32.mrf.mxu0
      %v1028 = vadd.f32 0.0, %v1027
      %v1029 = vpop.f32.mrf.mxu0
      %v1030 = vpop.f32.mrf.mxu0
      %v1031 = vadd.f32 0.0, %v1030
      %v1032 = vpop.f32.mrf.mxu0
      %1033 = vmatprep.mubr.bf16.mxu0 0
      %1034 = vmatmul.mubr.bf16.gmra.mxu0 %v905
      %v1035 = vpop.f32.mrf.mxu0
      %v1036 = vadd.f32 0.0, %v1035
      %v1037 = vpop.f32.mrf.mxu0
      %v1038 = vpop.f32.mrf.mxu0
      %v1039 = vadd.f32 0.0, %v1038
      %v1040 = vpop.f32.mrf.mxu0
      %1041 = vmatprep.mubr.bf16.mxu0 0
      %1042 = vmatmul.mubr.bf16.gmra.mxu0 %v904
      %v1043 = vpop.f32.mrf.mxu0
      %v1044 = vadd.f32 0.0, %v1043
      %v1045 = vpop.f32.mrf.mxu0
      %v1046 = vpop.f32.mrf.mxu0
      %v1047 = vpop.f32.mrf.mxu0
      %1048 = vdwg.mxu0
      %v1049 = vadd.f32 %v814, %v996
      %v1050 = vadd.f32 %v815, %v999
      %v1051 = vadd.f32 %v816, %v1004
      %v1052 = vadd.f32 %v817, %v1007
      %v1053 = vadd.f32 %v818, %v1012
      %v1054 = vadd.f32 %v819, %v1015
      %v1055 = vadd.f32 %v820, %v1020
      %v1056 = vadd.f32 %v821, %v1023
      %v1057 = vadd.f32 %v822, %v1028
      %v1058 = vadd.f32 %v823, %v1031
      %v1059 = vadd.f32 %v824, %v1036
      %v1060 = vadd.f32 %v825, %v1039
      %v1061 = vadd.f32 %v826, %v1044
      %v1062 = vld [vmem:[%s2] sm:$0x1]
      %v1064 = vlaneseq
      %v1065 = vshrl.u32 %v1064, 7
      %v1066 = vsub.s32 0, %v1065
      %v1067 = vrot.slane %v1062, %v1066
      %v1069 = vadd.f32 %v1049, %v1067
      %v1070 = vadd.f32 %v1050, %v1067
      %v1071 = vadd.f32 %v1051, %v1067
      %v1072 = vadd.f32 %v1052, %v1067
      %v1073 = vadd.f32 %v1053, %v1067
      %v1074 = vadd.f32 %v1054, %v1067
      %v1075 = vadd.f32 %v1055, %v1067
      %v1076 = vadd.f32 %v1056, %v1067
      %v1077 = vadd.f32 %v1057, %v1067
      %v1078 = vadd.f32 %v1058, %v1067
      %v1079 = vadd.f32 %v1059, %v1067
      %v1080 = vadd.f32 %v1060, %v1067
      %v1081 = vadd.f32 %v1061, %v1067
      %v1082 = vmax.f32 %v1069, 0.0
      %v1083 = vmax.f32 %v1070, 0.0
      %v1084 = vmax.f32 %v1071, 0.0
      %v1085 = vmax.f32 %v1072, 0.0
      %v1086 = vmax.f32 %v1073, 0.0
      %v1087 = vmax.f32 %v1074, 0.0
      %v1088 = vmax.f32 %v1075, 0.0
      %v1089 = vmax.f32 %v1076, 0.0
      %v1090 = vmax.f32 %v1077, 0.0
      %v1091 = vmax.f32 %v1078, 0.0
      %v1092 = vmax.f32 %v1079, 0.0
      %v1093 = vmax.f32 %v1080, 0.0
      %v1094 = vmax.f32 %v1081, 0.0
      %v1095 = vpack.c.bf16 %v1083, %v1082
      %v1096 = vpack.c.bf16 %v1085, %v1084
      %v1097 = vpack.c.bf16 %v1087, %v1086
      %v1098 = vpack.c.bf16 %v1089, %v1088
      %v1099 = vpack.c.bf16 %v1091, %v1090
      %v1100 = vpack.c.bf16 %v1093, %v1092
      %v1101 = vpack.c.bf16 %v1094, %v1094
      %v1109 = vunpack.c.l.b16 %v1095
      %v1110 = vunpack.c.h.b16 %v1095
      %v1111 = vunpack.c.l.b16 %v1096
      %v1112 = vunpack.c.h.b16 %v1096
      %v1113 = vunpack.c.l.b16 %v1097
      %v1114 = vunpack.c.h.b16 %v1097
      %v1115 = vunpack.c.l.b16 %v1098
      %v1116 = vunpack.c.h.b16 %v1098
      %v1117 = vunpack.c.l.b16 %v1099
      %v1118 = vunpack.c.h.b16 %v1099
      %v1119 = vunpack.c.l.b16 %v1100
      %v1120 = vunpack.c.h.b16 %v1100
      %v1121 = vunpack.c.l.b16 %v1101
      %v1122 = vpack.c.b16 %v1109, %v1109
      %v1123 = vpack.c.b16 %v1110, %v1110
      %v1124 = vpack.c.b16 %v1111, %v1111
      %v1125 = vpack.c.b16 %v1112, %v1112
      %v1126 = vpack.c.b16 %v1113, %v1113
      %v1127 = vpack.c.b16 %v1114, %v1114
      %v1128 = vpack.c.b16 %v1115, %v1115
      %v1129 = vpack.c.b16 %v1116, %v1116
      %v1130 = vpack.c.b16 %v1117, %v1117
      %v1131 = vpack.c.b16 %v1118, %v1118
      %v1132 = vpack.c.b16 %v1119, %v1119
      %v1133 = vpack.c.b16 %v1120, %v1120
      %v1134 = vpack.c.b16 %v1121, %v1121
      %vm1148 = vcmask 519168
      %1149 = vst.msk [vmem:[%s172] sm:$0xf] %vm1148, %v1122
      %1150 = vst.msk [vmem:[%s172 + $0x4] sm:$0xf] %vm1148, %v1123
      %1151 = vst.msk [vmem:[%s172 + $0x8] sm:$0xf] %vm1148, %v1124
      %1152 = vst.msk [vmem:[%s172 + $0xc] sm:$0xf] %vm1148, %v1125
      %1153 = vst.msk [vmem:[%s172 + $0x10] sm:$0xf] %vm1148, %v1126
      %1154 = vst.msk [vmem:[%s172 + $0x14] sm:$0xf] %vm1148, %v1127
      %1155 = vst.msk [vmem:[%s172 + $0x18] sm:$0xf] %vm1148, %v1128
      %1156 = vst.msk [vmem:[%s172 + $0x1c] sm:$0xf] %vm1148, %v1129
      %1157 = vst.msk [vmem:[%s172 + $0x20] sm:$0xf] %vm1148, %v1130
      %1158 = vst.msk [vmem:[%s172 + $0x24] sm:$0xf] %vm1148, %v1131
      %1159 = vst.msk [vmem:[%s172 + $0x28] sm:$0xf] %vm1148, %v1132
      %1160 = vst.msk [vmem:[%s172 + $0x2c] sm:$0xf] %vm1148, %v1133
      %vm1161 = vcmask 518144
      %vm1162 = vsmask.f32 2304
      %vm1163 = vmand %vm1161, %vm1162
      %v1164 = vld [vmem:[%s172 + $0x30] sm:$0x7]
      %v1165 = vsel %vm1163, %v1134, %v1164
      %1166 = vst [vmem:[%s172 + $0x30] sm:$0x7] %v1165
      %s1167 = smul.u32 14, %s14
      %p1168 = scmp.lt.s32.totalorder %s1167, 27
      %s1169 = scalar_select %p1168, %s1167, 27
      %s1170 = smul.addr %s1169, 4
      %s1171 = scalar_lea.vmem %s3, %s1170
      // Predicated region
      $region33: #{cnn_base_forward.5} parent=31 // pred_check
        %p1172 = pneg %p100
      $region34: #{cnn_base_forward.5} parent=31 // pred_check_branch
        %1174 = sbr.rel (%p1172) target = $region36
      $region35: #{cnn_base_forward.5} parent=31 // pred_region
        %s1175 = smul.u32 14, %s14
      $region36: #{cnn_base_forward.5} parent=31 // pred_fallthru
        _
    $region32: #{cnn_base_forward.5} parent=5 // pred_fallthru
      _
    %p1176 = scmp.le.s32.totalorder 2, %s9
    // Predicated region
    $region37: #{cnn_base_forward.5} parent=5 // pred_check
      %p1177 = pneg %p1176
    $region38: #{cnn_base_forward.5} parent=5 // pred_check_branch
      %1179 = sbr.rel (%p1177) target = $region40
    $region39: #{cnn_base_forward.5} parent=5 // pred_region
      %s1180 = ssub.s32 %s9, 2
      // Predicated region
      $region41: #{cnn_base_forward.5} parent=39 // pred_check
        %p1181 = pneg %p106
      $region42: #{cnn_base_forward.5} parent=39 // pred_check_branch
        %1183 = sbr.rel (%p1181) target = $region44
      $region43: #{cnn_base_forward.5} parent=39 // pred_region
        %s1184 = smul.u32 14, %s15
        %p1185 = scmp.lt.s32.totalorder %s1184, 27
        %s1186 = scalar_select %p1185, %s1184, 27
        %s1187 = smul.addr %s1186, 4
        %s1188 = scalar_lea.vmem %s3, %s1187
      $region44: #{cnn_base_forward.5} parent=39 // pred_fallthru
        _
    $region40: #{cnn_base_forward.5} parent=5 // pred_fallthru
      _
  $region6: #{cnn_base_forward.5} parent=0 // loop_footer
    %s13 = sadd.s32 1, %s9
  $region7: #{cnn_base_forward.5} parent=0 // loop_footer_branch
    %8 = sbr.rel target = $region3
  $region8: #{cnn_base_forward.5} parent=0 // loop_exit
    _

// kernel: cnn_base_forward.6
$region0: #{cnn_base_forward.6}
  #allocation0 [shape = 'u32[]', space=smem, size = 0x4, offset = 0x4, fixed_abs, tag = 'smem constant byte address 0x4 - core index']
  #allocation1 [shape = 'u32[144,128]{1,0:T(1,128)}', space=vmem, size = 0x12000, scoped, tag = 'internal scratch']
  %s0 = inlined_call_operand.vmem [shape: bf16[192,64], index: 0, kind: input, shape index: {}]
  %s1 = inlined_call_operand.vmem [shape: bf16[576,32], index: 1, kind: input, shape index: {}]
  %s2 = inlined_call_operand.vmem [shape: f32[1,32], index: 2, kind: input, shape index: {}]
  %s3 = inlined_call_operand.vmem [shape: bf16[192,32], index: 3, kind: output, shape index: {}]
  %s4 = sld [smem:[#allocation0]]
  $region45: #{cnn_base_forward.6} parent=0
    _
  %s6 = ssub.s32 1, %s4
  %s7 = scalar_select 0, %s6, %s4
  loop: start=0, step=1, limit=4
  $region2: #{cnn_base_forward.6} parent=0 // loop_pre_header
    _
  $region3: #{cnn_base_forward.6} parent=0 // loop_header
    %s9 = sphi 0, %s13
    %p10 = scmp.ge.s32.totalorder %s9, 4
    %s19 = sphi 0, %s21
    %s22 = sphi 0, %s19
    %s23 = sphi 0, %s22
    %s39 = sphi 0, %s23
    %s43 = sphi 0, %s43
    %s45 = sphi 0, %s43
    %s46 = sphi 0, %s45
    %s60 = sphi 0, %s46
    %s64 = sphi 0, %s64
    %s66 = sphi 0, %s64
    %s67 = sphi 0, %s66
    %s81 = sphi 0, %s67
    %s87 = sphi 0, %s89
    %s90 = sphi 0, %s87
    %s91 = sphi 0, %s90
    %s107 = sphi 0, %s91
  $region4: #{cnn_base_forward.6} parent=0 // loop_header_branch
    %12 = sbr.rel (%p10) target = $region8
  $region5: #{cnn_base_forward.6} parent=0 // loop_body
    %s14 = ssub.s32 %s9, 1
    %s15 = ssub.s32 %s9, 2
    %s16 = sadd.s32 %s9, 1
    %s17 = ssub.s32 %s9, %s16
    %p18 = scmp.eq.s32.totalorder %s17, 0
    %s20 = sadd.s32 %s19, 1
    %s21 = scalar_select %p18, %s19, %s20
    %p24 = pneg %p18
    %p25 = scmp.eq.s32.totalorder %s9, 1
    %p26 = por %p24, %p25
    %p27 = scmp.ne.s32.totalorder %s19, %s22
    %p28 = scmp.eq.s32.totalorder %s9, 0
    %p29 = por %p27, %p28
    %p30 = scmp.ne.s32.totalorder %s19, %s22
    %p31 = scmp.eq.s32.totalorder %s14, 1
    %p32 = por %p30, %p31
    %p33 = scmp.ne.s32.totalorder %s22, %s23
    %p34 = scmp.eq.s32.totalorder %s14, 0
    %p35 = por %p33, %p34
    %p36 = scmp.ne.s32.totalorder %s22, %s23
    %p37 = scmp.eq.s32.totalorder %s15, 1
    %p38 = por %p36, %p37
    %p40 = scmp.ne.s32.totalorder %s23, %s39
    %p41 = scmp.eq.s32.totalorder %s15, 0
    %p42 = por %p40, %p41
    %s44 = sadd.s32 %s43, 1
    %p47 = scmp.eq.s32.totalorder %s9, 1
    %p48 = scmp.ne.s32.totalorder %s43, %s45
    %p49 = scmp.eq.s32.totalorder %s9, 0
    %p50 = por %p48, %p49
    %p51 = scmp.ne.s32.totalorder %s43, %s45
    %p52 = scmp.eq.s32.totalorder %s14, 1
    %p53 = por %p51, %p52
    %p54 = scmp.ne.s32.totalorder %s45, %s46
    %p55 = scmp.eq.s32.totalorder %s14, 0
    %p56 = por %p54, %p55
    %p57 = scmp.ne.s32.totalorder %s45, %s46
    %p58 = scmp.eq.s32.totalorder %s15, 1
    %p59 = por %p57, %p58
    %p61 = scmp.ne.s32.totalorder %s46, %s60
    %p62 = scmp.eq.s32.totalorder %s15, 0
    %p63 = por %p61, %p62
    %s65 = sadd.s32 %s64, 1
    %p68 = scmp.eq.s32.totalorder %s9, 1
    %p69 = scmp.ne.s32.totalorder %s64, %s66
    %p70 = scmp.eq.s32.totalorder %s9, 0
    %p71 = por %p69, %p70
    %p72 = scmp.ne.s32.totalorder %s64, %s66
    %p73 = scmp.eq.s32.totalorder %s14, 1
    %p74 = por %p72, %p73
    %p75 = scmp.ne.s32.totalorder %s66, %s67
    %p76 = scmp.eq.s32.totalorder %s14, 0
    %p77 = por %p75, %p76
    %p78 = scmp.ne.s32.totalorder %s66, %s67
    %p79 = scmp.eq.s32.totalorder %s15, 1
    %p80 = por %p78, %p79
    %p82 = scmp.ne.s32.totalorder %s67, %s81
    %p83 = scmp.eq.s32.totalorder %s15, 0
    %p84 = por %p82, %p83
    %s85 = ssub.s32 %s9, %s16
    %p86 = scmp.eq.s32.totalorder %s85, 0
    %s88 = sadd.s32 %s87, 1
    %s89 = scalar_select %p86, %s87, %s88
    %p92 = pneg %p86
    %p93 = scmp.eq.s32.totalorder %s9, 1
    %p94 = por %p92, %p93
    %p95 = scmp.ne.s32.totalorder %s87, %s90
    %p96 = scmp.eq.s32.totalorder %s9, 0
    %p97 = por %p95, %p96
    %p98 = scmp.ne.s32.totalorder %s87, %s90
    %p99 = scmp.eq.s32.totalorder %s14, 1
    %p100 = por %p98, %p99
    %p101 = scmp.ne.s32.totalorder %s90, %s91
    %p102 = scmp.eq.s32.totalorder %s14, 0
    %p103 = por %p101, %p102
    %p104 = scmp.ne.s32.totalorder %s90, %s91
    %p105 = scmp.eq.s32.totalorder %s15, 1
    %p106 = por %p104, %p105
    %p108 = scmp.ne.s32.totalorder %s91, %s107
    %p109 = scmp.eq.s32.totalorder %s15, 0
    %p110 = por %p108, %p109
    %p111 = scmp.le.s32.totalorder 1, %s9
    %p112 = scmp.lt.s32.totalorder %s9, 3
    %p113 = pnand %p111, %p112
    %p114 = pneg %p113
    // Predicated region
    $region9: #{cnn_base_forward.6} parent=5 // pred_check
      _
    $region10: #{cnn_base_forward.6} parent=5 // pred_check_branch
      %116 = sbr.rel (%p113) target = $region12
    $region11: #{cnn_base_forward.6} parent=5 // pred_region
      %s117 = ssub.s32 %s9, 1
      // Predicated region
      $region13: #{cnn_base_forward.6} parent=11 // pred_check
        %p118 = pneg %p56
      $region14: #{cnn_base_forward.6} parent=11 // pred_check_branch
        %120 = sbr.rel (%p118) target = $region16
      $region15: #{cnn_base_forward.6} parent=11 // pred_region
        _
      $region16: #{cnn_base_forward.6} parent=11 // pred_fallthru
        _
      // Predicated region
      $region17: #{cnn_base_forward.6} parent=11 // pred_check
        %p121 = pneg %p77
      $region18: #{cnn_base_forward.6} parent=11 // pred_check_branch
        %123 = sbr.rel (%p121) target = $region20
      $region19: #{cnn_base_forward.6} parent=11 // pred_region
        _
      $region20: #{cnn_base_forward.6} parent=11 // pred_fallthru
        _
    $region12: #{cnn_base_forward.6} parent=5 // pred_fallthru
      _
    %p124 = scmp.lt.s32.totalorder %s9, 2
    // Predicated region
    $region21: #{cnn_base_forward.6} parent=5 // pred_check
      %p125 = pneg %p124
    $region22: #{cnn_base_forward.6} parent=5 // pred_check_branch
      %127 = sbr.rel (%p125) target = $region24
    $region23: #{cnn_base_forward.6} parent=5 // pred_region
      // Predicated region
      $region25: #{cnn_base_forward.6} parent=23 // pred_check
        %p128 = pneg %p29
      $region26: #{cnn_base_forward.6} parent=23 // pred_check_branch
        %130 = sbr.rel (%p128) target = $region28
      $region27: #{cnn_base_forward.6} parent=23 // pred_region
        %s131 = smul.u32 12, %s9
        %p132 = scmp.lt.s32.totalorder %s131, 23
        %s133 = scalar_select %p132, %s131, 23
        %s134 = smul.addr %s133, 4
        %s135 = scalar_lea.vmem %s0, %s134
        %s136 = smul.u32 12, %s9
      $region28: #{cnn_base_forward.6} parent=23 // pred_fallthru
        _
    $region24: #{cnn_base_forward.6} parent=5 // pred_fallthru
      _
    %p137 = scmp.le.s32.totalorder 1, %s9
    %p138 = scmp.lt.s32.totalorder %s9, 3
    %p139 = pnand %p137, %p138
    %p140 = pneg %p139
    // Predicated region
    $region29: #{cnn_base_forward.6} parent=5 // pred_check
      _
    $region30: #{cnn_base_forward.6} parent=5 // pred_check_branch
      %142 = sbr.rel (%p139) target = $region32
    $region31: #{cnn_base_forward.6} parent=5 // pred_region
      %s143 = ssub.s32 %s9, 1
      %s144 = smul.u32 12, %s14
      %p145 = scmp.lt.s32.totalorder %s144, 23
      %s146 = scalar_select %p145, %s144, 23
      %s147 = smul.addr %s146, 4
      %s148 = scalar_lea.vmem %s0, %s147
      %p149 = pneg %p35
      %p150 = pneg %p32
      %p151 = pneg %p56
      %p152 = pneg %p53
      %p153 = pneg %p77
      %p154 = pneg %p74
      %p155 = pneg %p103
      %p156 = pneg %p100
      %s157 = smul.u32 12, %s14
      %p158 = scmp.lt.s32.totalorder %s157, 23
      %s159 = scalar_select %p158, %s157, 23
      %s160 = smul.addr %s159, 4
      %s161 = scalar_lea.vmem %s3, %s160
      %s162 = smul.u32 12, %s14
      %p163 = scmp.lt.s32.totalorder %s162, 23
      %s164 = scalar_select %p163, %s162, 23
      %s165 = smul.addr %s164, 4
      %s166 = scalar_lea.vmem %s0, %s165
      %s167 = smul.u32 12, %s14
      %s168 = smul.u32 12, %s14
      %p169 = scmp.lt.s32.totalorder %s168, 23
      %s170 = scalar_select %p169, %s168, 23
      %s171 = smul.addr %s170, 4
      %s172 = scalar_lea.vmem %s3, %s171
      %s173 = smul.u32 12, %s14
      %v175 = vld [vmem:[%s166] sm:$0xf]
      %v176 = vld [vmem:[%s166 + $0x4] sm:$0xf]
      %v177 = vld [vmem:[%s166 + $0x8] sm:$0xf]
      %v178 = vld [vmem:[%s166 + $0xc] sm:$0xf]
      %v179 = vld [vmem:[%s166 + $0x10] sm:$0xf]
      %v180 = vld [vmem:[%s166 + $0x14] sm:$0xf]
      %v181 = vld [vmem:[%s166 + $0x18] sm:$0xf]
      %v182 = vld [vmem:[%s166 + $0x1c] sm:$0xf]
      %v183 = vld [vmem:[%s166 + $0x20] sm:$0xf]
      %v184 = vld [vmem:[%s166 + $0x24] sm:$0x3]
      %v185 = vld [vmem:[%s1] sm:$0xf]
      %v186 = vld [vmem:[%s1 + $0x4] sm:$0xf]
      %v187 = vld [vmem:[%s1 + $0x8] sm:$0xf]
      %v188 = vld [vmem:[%s1 + $0xc] sm:$0xf]
      %v189 = vld [vmem:[%s1 + $0x10] sm:$0xf]
      %v190 = vld [vmem:[%s1 + $0x14] sm:$0xf]
      %v191 = vld [vmem:[%s1 + $0x18] sm:$0xf]
      %v192 = vld [vmem:[%s1 + $0x1c] sm:$0xf]
      %v193 = vld [vmem:[%s166 + $0x24] sm:$0x7]
      %v194 = vld [vmem:[%s1 + $0x20] sm:$0xf]
      %v195 = vld [vmem:[%s1 + $0x24] sm:$0xf]
      %v196 = vld [vmem:[%s1 + $0x28] sm:$0xf]
      %v197 = vld [vmem:[%s1 + $0x2c] sm:$0xf]
      %v198 = vld [vmem:[%s1 + $0x30] sm:$0xf]
      %v199 = vld [vmem:[%s1 + $0x34] sm:$0xf]
      %v200 = vld [vmem:[%s1 + $0x38] sm:$0xf]
      %v201 = vld [vmem:[%s1 + $0x3c] sm:$0xf]
      %v212 = vunpack.c.l.b16 %v175
      %v213 = vunpack.c.l.b16 %v176
      %v214 = vunpack.c.l.b16 %v177
      %v215 = vunpack.c.l.b16 %v178
      %v216 = vunpack.c.l.b16 %v179
      %v217 = vunpack.c.l.b16 %v180
      %v218 = vunpack.c.l.b16 %v181
      %v219 = vunpack.c.l.b16 %v182
      %v220 = vunpack.c.l.b16 %v183
      %v221 = vunpack.c.l.b16 %v193
      %v222 = vpack.c.b16 %v213, %v212
      %v223 = vpack.c.b16 %v215, %v214
      %v224 = vpack.c.b16 %v217, %v216
      %v225 = vpack.c.b16 %v219, %v218
      %v226 = vpack.c.b16 %v221, %v220
      %vm227 = vsmask.f32 7424
      %v229 = vshrl.u32 %v222, 16
      %v231 = vshll.u32 %v222, 16
      %v233 = vrot.slane %v231, 1
      %v234 = vor.u32 %v229, %v233
      %v236 = vshll.u32 %v223, 16
      %v238 = vrot.slane %v236, 1
      %v239 = vsel %vm227, %v234, %v238
      %v240 = vshrl.u32 %v223, 16
      %v242 = vor.u32 %v240, %v238
      %v244 = vshll.u32 %v224, 16
      %v246 = vrot.slane %v244, 1
      %v247 = vsel %vm227, %v242, %v246
      %v248 = vshrl.u32 %v224, 16
      %v250 = vor.u32 %v248, %v246
      %v252 = vshll.u32 %v225, 16
      %v254 = vrot.slane %v252, 1
      %v255 = vsel %vm227, %v250, %v254
      %v256 = vshrl.u32 %v225, 16
      %v258 = vor.u32 %v256, %v254
      %v260 = vshll.u32 %v226, 16
      %v262 = vrot.slane %v260, 1
      %v263 = vsel %vm227, %v258, %v262
      %v264 = vshrl.u32 %v226, 16
      %v266 = vor.u32 %v264, %v262
      %v275 = vunpack.c.l.b16 %v194
      %v276 = vunpack.c.l.b16 %v195
      %v277 = vunpack.c.l.b16 %v196
      %v278 = vunpack.c.l.b16 %v197
      %v279 = vunpack.c.l.b16 %v198
      %v280 = vunpack.c.l.b16 %v199
      %v281 = vunpack.c.l.b16 %v200
      %v282 = vunpack.c.l.b16 %v201
      %v283 = vpack.c.b16 %v276, %v275
      %v284 = vpack.c.b16 %v278, %v277
      %v285 = vpack.c.b16 %v280, %v279
      %v286 = vpack.c.b16 %v282, %v281
      %vm291 = vcmask 523264
      %v293 = vsel %vm291, %v239, 0
      %v296 = vsel %vm291, %v247, 0
      %v299 = vsel %vm291, %v255, 0
      %v302 = vsel %vm291, %v263, 0
      %v305 = vsel %vm291, %v266, 0
      %307 = vmatprep.subr.bf16.mxu0 0
      %308 = vmatpush1.bf16.msra.mxu0 0
      %309 = vmatprep.subr.bf16.mxu0 0
      %310 = vmatpush1.bf16.msra.mxu0 0
      %311 = vmatprep.subr.bf16.mxu0 0
      %312 = vmatpush1.bf16.msra.mxu0 0
      %313 = vmatprep.subr.bf16.mxu0 0
      %314 = vmatpush1.bf16.msra.mxu0 0
      %315 = vmatprep.subr.bf16.mxu0 0
      %316 = vmatpush1.bf16.msra.mxu0 %v286
      %317 = vmatprep.subr.bf16.mxu0 0
      %318 = vmatpush1.bf16.msra.mxu0 %v285
      %319 = vmatprep.subr.bf16.mxu0 0
      %320 = vmatpush1.bf16.msra.mxu0 %v284
      %321 = vmatprep.subr.bf16.mxu0 0
      %322 = vmatpush1.bf16.msra.mxu0 %v283
      %323 = vmatprep.subr.bf16.mxu0 0
      %324 = vmatpush2.bf16.msra.mxu0 0
      %325 = vmatprep.subr.bf16.mxu0 0
      %326 = vmatpush2.bf16.msra.mxu0 0
      %327 = vmatprep.subr.bf16.mxu0 0
      %328 = vmatpush2.bf16.msra.mxu0 0
      %329 = vmatprep.subr.bf16.mxu0 0
      %330 = vmatpush2.bf16.msra.mxu0 0
      %331 = vmatprep.subr.bf16.mxu0 0
      %332 = vmatpush2.bf16.msra.mxu0 0
      %333 = vmatprep.subr.bf16.mxu0 0
      %334 = vmatpush2.bf16.msra.mxu0 0
      %335 = vmatprep.subr.bf16.mxu0 0
      %336 = vmatpush2.bf16.msra.mxu0 0
      %337 = vmatprep.subr.bf16.mxu0 0
      %338 = vmatpush2.bf16.msra.mxu0 0
      %339 = vmatprep.mubr.bf16.mxu0 0
      %340 = vmatmul.mubr.bf16.gmra.mxu0 %v293
      %v341 = vpop.f32.mrf.mxu0
      %v342 = vadd.f32 0.0, %v341
      %v343 = vpop.f32.mrf.mxu0
      %v344 = vpop.f32.mrf.mxu0
      %v345 = vadd.f32 0.0, %v344
      %v346 = vpop.f32.mrf.mxu0
      %347 = vmatprep.mubr.bf16.mxu0 0
      %348 = vmatmul.mubr.bf16.gmra.mxu0 %v296
      %v349 = vpop.f32.mrf.mxu0
      %v350 = vadd.f32 0.0, %v349
      %v351 = vpop.f32.mrf.mxu0
      %v352 = vpop.f32.mrf.mxu0
      %v353 = vadd.f32 0.0, %v352
      %v354 = vpop.f32.mrf.mxu0
      %355 = vmatprep.mubr.bf16.mxu0 0
      %356 = vmatmul.mubr.bf16.gmra.mxu0 %v299
      %v357 = vpop.f32.mrf.mxu0
      %v358 = vadd.f32 0.0, %v357
      %v359 = vpop.f32.mrf.mxu0
      %v360 = vpop.f32.mrf.mxu0
      %v361 = vadd.f32 0.0, %v360
      %v362 = vpop.f32.mrf.mxu0
      %363 = vmatprep.mubr.bf16.mxu0 0
      %364 = vmatmul.mubr.bf16.gmra.mxu0 %v302
      %v365 = vpop.f32.mrf.mxu0
      %v366 = vadd.f32 0.0, %v365
      %v367 = vpop.f32.mrf.mxu0
      %v368 = vpop.f32.mrf.mxu0
      %v369 = vadd.f32 0.0, %v368
      %v370 = vpop.f32.mrf.mxu0
      %371 = vmatprep.mubr.bf16.mxu0 0
      %372 = vmatmul.mubr.bf16.gmra.mxu0 %v305
      %v373 = vpop.f32.mrf.mxu0
      %v374 = vadd.f32 0.0, %v373
      %v375 = vpop.f32.mrf.mxu0
      %v376 = vpop.f32.mrf.mxu0
      %v377 = vadd.f32 0.0, %v376
      %v378 = vpop.f32.mrf.mxu0
      %379 = vdwg.mxu0
      %v381 = vunpack.c.l.b16 %v184
      %v382 = vpack.c.b16 %v381, %v220
      %v391 = vunpack.c.l.b16 %v185
      %v392 = vunpack.c.l.b16 %v186
      %v393 = vunpack.c.l.b16 %v187
      %v394 = vunpack.c.l.b16 %v188
      %v395 = vunpack.c.l.b16 %v189
      %v396 = vunpack.c.l.b16 %v190
      %v397 = vunpack.c.l.b16 %v191
      %v398 = vunpack.c.l.b16 %v192
      %v399 = vpack.c.b16 %v392, %v391
      %v400 = vpack.c.b16 %v394, %v393
      %v401 = vpack.c.b16 %v396, %v395
      %v402 = vpack.c.b16 %v398, %v397
      %v407 = vsel %vm291, %v222, 0
      %v409 = vsel %vm291, %v223, 0
      %v411 = vsel %vm291, %v224, 0
      %v413 = vsel %vm291, %v225, 0
      %v416 = vsel %vm291, %v382, 0
      %418 = vmatprep.subr.bf16.mxu0 0
      %419 = vmatpush1.bf16.msra.mxu0 0
      %420 = vmatprep.subr.bf16.mxu0 0
      %421 = vmatpush1.bf16.msra.mxu0 0
      %422 = vmatprep.subr.bf16.mxu0 0
      %423 = vmatpush1.bf16.msra.mxu0 0
      %424 = vmatprep.subr.bf16.mxu0 0
      %425 = vmatpush1.bf16.msra.mxu0 0
      %426 = vmatprep.subr.bf16.mxu0 0
      %427 = vmatpush1.bf16.msra.mxu0 %v402
      %428 = vmatprep.subr.bf16.mxu0 0
      %429 = vmatpush1.bf16.msra.mxu0 %v401
      %430 = vmatprep.subr.bf16.mxu0 0
      %431 = vmatpush1.bf16.msra.mxu0 %v400
      %432 = vmatprep.subr.bf16.mxu0 0
      %433 = vmatpush1.bf16.msra.mxu0 %v399
      %434 = vmatprep.subr.bf16.mxu0 0
      %435 = vmatpush2.bf16.msra.mxu0 0
      %436 = vmatprep.subr.bf16.mxu0 0
      %437 = vmatpush2.bf16.msra.mxu0 0
      %438 = vmatprep.subr.bf16.mxu0 0
      %439 = vmatpush2.bf16.msra.mxu0 0
      %440 = vmatprep.subr.bf16.mxu0 0
      %441 = vmatpush2.bf16.msra.mxu0 0
      %442 = vmatprep.subr.bf16.mxu0 0
      %443 = vmatpush2.bf16.msra.mxu0 0
      %444 = vmatprep.subr.bf16.mxu0 0
      %445 = vmatpush2.bf16.msra.mxu0 0
      %446 = vmatprep.subr.bf16.mxu0 0
      %447 = vmatpush2.bf16.msra.mxu0 0
      %448 = vmatprep.subr.bf16.mxu0 0
      %449 = vmatpush2.bf16.msra.mxu0 0
      %450 = vmatprep.mubr.bf16.mxu0 0
      %451 = vmatmul.mubr.bf16.gmra.mxu0 %v407
      %v452 = vpop.f32.mrf.mxu0
      %v453 = vadd.f32 %v342, %v452
      %v454 = vpop.f32.mrf.mxu0
      %v455 = vpop.f32.mrf.mxu0
      %v456 = vadd.f32 %v345, %v455
      %v457 = vpop.f32.mrf.mxu0
      %458 = vmatprep.mubr.bf16.mxu0 0
      %459 = vmatmul.mubr.bf16.gmra.mxu0 %v409
      %v460 = vpop.f32.mrf.mxu0
      %v461 = vadd.f32 %v350, %v460
      %v462 = vpop.f32.mrf.mxu0
      %v463 = vpop.f32.mrf.mxu0
      %v464 = vadd.f32 %v353, %v463
      %v465 = vpop.f32.mrf.mxu0
      %466 = vmatprep.mubr.bf16.mxu0 0
      %467 = vmatmul.mubr.bf16.gmra.mxu0 %v411
      %v468 = vpop.f32.mrf.mxu0
      %v469 = vadd.f32 %v358, %v468
      %v470 = vpop.f32.mrf.mxu0
      %v471 = vpop.f32.mrf.mxu0
      %v472 = vadd.f32 %v361, %v471
      %v473 = vpop.f32.mrf.mxu0
      %474 = vmatprep.mubr.bf16.mxu0 0
      %475 = vmatmul.mubr.bf16.gmra.mxu0 %v413
      %v476 = vpop.f32.mrf.mxu0
      %v477 = vadd.f32 %v366, %v476
      %v478 = vpop.f32.mrf.mxu0
      %v479 = vpop.f32.mrf.mxu0
      %v480 = vadd.f32 %v369, %v479
      %v481 = vpop.f32.mrf.mxu0
      %482 = vmatprep.mubr.bf16.mxu0 0
      %483 = vmatmul.mubr.bf16.gmra.mxu0 %v416
      %v484 = vpop.f32.mrf.mxu0
      %v485 = vadd.f32 %v374, %v484
      %v486 = vpop.f32.mrf.mxu0
      %v487 = vpop.f32.mrf.mxu0
      %v488 = vadd.f32 %v377, %v487
      %v489 = vpop.f32.mrf.mxu0
      %490 = vdwg.mxu0
      %v491 = vld [vmem:[%s166] sm:$0xe]
      %v492 = vld [vmem:[%s1 + $0x40] sm:$0xf]
      %v493 = vld [vmem:[%s1 + $0x44] sm:$0xf]
      %v494 = vld [vmem:[%s1 + $0x48] sm:$0xf]
      %v495 = vld [vmem:[%s1 + $0x4c] sm:$0xf]
      %v496 = vld [vmem:[%s1 + $0x50] sm:$0xf]
      %v497 = vld [vmem:[%s1 + $0x54] sm:$0xf]
      %v498 = vld [vmem:[%s1 + $0x58] sm:$0xf]
      %v499 = vld [vmem:[%s1 + $0x5c] sm:$0xf]
      %v501 = vunpack.c.l.b16 %v491
      %v502 = vpack.c.b16 %v213, %v501
      %vm503 = vcmask 1046528
      %v504 = vrot.slane %v502, 1
      %v505 = vrot.slane %v223, 1
      %v506 = vsel %vm503, %v504, %v505
      %v507 = vrot.slane %v224, 1
      %v508 = vsel %vm503, %v505, %v507
      %v509 = vrot.slane %v225, 1
      %v510 = vsel %vm503, %v507, %v509
      %v511 = vrot.slane %v226, 1
      %v512 = vsel %vm503, %v509, %v511
      %v521 = vunpack.c.l.b16 %v492
      %v522 = vunpack.c.l.b16 %v493
      %v523 = vunpack.c.l.b16 %v494
      %v524 = vunpack.c.l.b16 %v495
      %v525 = vunpack.c.l.b16 %v496
      %v526 = vunpack.c.l.b16 %v497
      %v527 = vunpack.c.l.b16 %v498
      %v528 = vunpack.c.l.b16 %v499
      %v529 = vpack.c.b16 %v522, %v521
      %v530 = vpack.c.b16 %v524, %v523
      %v531 = vpack.c.b16 %v526, %v525
      %v532 = vpack.c.b16 %v528, %v527
      %v538 = vsel %vm291, %v506, 0
      %v541 = vsel %vm291, %v508, 0
      %v544 = vsel %vm291, %v510, 0
      %v547 = vsel %vm291, %v512, 0
      %v550 = vsel %vm291, %v511, 0
      %552 = vmatprep.subr.bf16.mxu0 0
      %553 = vmatpush1.bf16.msra.mxu0 0
      %554 = vmatprep.subr.bf16.mxu0 0
      %555 = vmatpush1.bf16.msra.mxu0 0
      %556 = vmatprep.subr.bf16.mxu0 0
      %557 = vmatpush1.bf16.msra.mxu0 0
      %558 = vmatprep.subr.bf16.mxu0 0
      %559 = vmatpush1.bf16.msra.mxu0 0
      %560 = vmatprep.subr.bf16.mxu0 0
      %561 = vmatpush1.bf16.msra.mxu0 %v532
      %562 = vmatprep.subr.bf16.mxu0 0
      %563 = vmatpush1.bf16.msra.mxu0 %v531
      %564 = vmatprep.subr.bf16.mxu0 0
      %565 = vmatpush1.bf16.msra.mxu0 %v530
      %566 = vmatprep.subr.bf16.mxu0 0
      %567 = vmatpush1.bf16.msra.mxu0 %v529
      %568 = vmatprep.subr.bf16.mxu0 0
      %569 = vmatpush2.bf16.msra.mxu0 0
      %570 = vmatprep.subr.bf16.mxu0 0
      %571 = vmatpush2.bf16.msra.mxu0 0
      %572 = vmatprep.subr.bf16.mxu0 0
      %573 = vmatpush2.bf16.msra.mxu0 0
      %574 = vmatprep.subr.bf16.mxu0 0
      %575 = vmatpush2.bf16.msra.mxu0 0
      %576 = vmatprep.subr.bf16.mxu0 0
      %577 = vmatpush2.bf16.msra.mxu0 0
      %578 = vmatprep.subr.bf16.mxu0 0
      %579 = vmatpush2.bf16.msra.mxu0 0
      %580 = vmatprep.subr.bf16.mxu0 0
      %581 = vmatpush2.bf16.msra.mxu0 0
      %582 = vmatprep.subr.bf16.mxu0 0
      %583 = vmatpush2.bf16.msra.mxu0 0
      %584 = vmatprep.mubr.bf16.mxu0 0
      %585 = vmatmul.mubr.bf16.gmra.mxu0 %v538
      %v586 = vpop.f32.mrf.mxu0
      %v587 = vadd.f32 0.0, %v586
      %v588 = vpop.f32.mrf.mxu0
      %v589 = vpop.f32.mrf.mxu0
      %v590 = vadd.f32 0.0, %v589
      %v591 = vpop.f32.mrf.mxu0
      %592 = vmatprep.mubr.bf16.mxu0 0
      %593 = vmatmul.mubr.bf16.gmra.mxu0 %v541
      %v594 = vpop.f32.mrf.mxu0
      %v595 = vadd.f32 0.0, %v594
      %v596 = vpop.f32.mrf.mxu0
      %v597 = vpop.f32.mrf.mxu0
      %v598 = vadd.f32 0.0, %v597
      %v599 = vpop.f32.mrf.mxu0
      %600 = vmatprep.mubr.bf16.mxu0 0
      %601 = vmatmul.mubr.bf16.gmra.mxu0 %v544
      %v602 = vpop.f32.mrf.mxu0
      %v603 = vadd.f32 0.0, %v602
      %v604 = vpop.f32.mrf.mxu0
      %v605 = vpop.f32.mrf.mxu0
      %v606 = vadd.f32 0.0, %v605
      %v607 = vpop.f32.mrf.mxu0
      %608 = vmatprep.mubr.bf16.mxu0 0
      %609 = vmatmul.mubr.bf16.gmra.mxu0 %v547
      %v610 = vpop.f32.mrf.mxu0
      %v611 = vadd.f32 0.0, %v610
      %v612 = vpop.f32.mrf.mxu0
      %v613 = vpop.f32.mrf.mxu0
      %v614 = vadd.f32 0.0, %v613
      %v615 = vpop.f32.mrf.mxu0
      %616 = vmatprep.mubr.bf16.mxu0 0
      %617 = vmatmul.mubr.bf16.gmra.mxu0 %v550
      %v618 = vpop.f32.mrf.mxu0
      %v619 = vadd.f32 0.0, %v618
      %v620 = vpop.f32.mrf.mxu0
      %v621 = vpop.f32.mrf.mxu0
      %v622 = vadd.f32 0.0, %v621
      %v623 = vpop.f32.mrf.mxu0
      %624 = vdwg.mxu0
      %v625 = vadd.f32 %v453, %v587
      %v626 = vadd.f32 %v456, %v590
      %v627 = vadd.f32 %v461, %v595
      %v628 = vadd.f32 %v464, %v598
      %v629 = vadd.f32 %v469, %v603
      %v630 = vadd.f32 %v472, %v606
      %v631 = vadd.f32 %v477, %v611
      %v632 = vadd.f32 %v480, %v614
      %v633 = vadd.f32 %v485, %v619
      %v634 = vadd.f32 %v488, %v622
      %v635 = vld [vmem:[%s166 + $0x4] sm:$0xf]
      %v636 = vld [vmem:[%s166 + $0x8] sm:$0xf]
      %v637 = vld [vmem:[%s166 + $0xc] sm:$0xf]
      %v638 = vld [vmem:[%s166 + $0x10] sm:$0xf]
      %v639 = vld [vmem:[%s166 + $0x14] sm:$0xf]
      %v640 = vld [vmem:[%s166 + $0x18] sm:$0xf]
      %v641 = vld [vmem:[%s166 + $0x1c] sm:$0xf]
      %v642 = vld [vmem:[%s166 + $0x20] sm:$0xf]
      %v643 = vld [vmem:[%s166 + $0x24] sm:$0xf]
      %v644 = vld [vmem:[%s166 + $0x28] sm:$0x7]
      %v645 = vld [vmem:[%s1 + $0x60] sm:$0xf]
      %v646 = vld [vmem:[%s1 + $0x64] sm:$0xf]
      %v647 = vld [vmem:[%s1 + $0x68] sm:$0xf]
      %v648 = vld [vmem:[%s1 + $0x6c] sm:$0xf]
      %v649 = vld [vmem:[%s1 + $0x70] sm:$0xf]
      %v650 = vld [vmem:[%s1 + $0x74] sm:$0xf]
      %v651 = vld [vmem:[%s1 + $0x78] sm:$0xf]
      %v652 = vld [vmem:[%s1 + $0x7c] sm:$0xf]
      %v663 = vunpack.c.l.b16 %v635
      %v664 = vunpack.c.l.b16 %v636
      %v665 = vunpack.c.l.b16 %v637
      %v666 = vunpack.c.l.b16 %v638
      %v667 = vunpack.c.l.b16 %v639
      %v668 = vunpack.c.l.b16 %v640
      %v669 = vunpack.c.l.b16 %v641
      %v670 = vunpack.c.l.b16 %v642
      %v671 = vunpack.c.l.b16 %v643
      %v672 = vunpack.c.l.b16 %v644
      %v673 = vpack.c.b16 %v664, %v663
      %v674 = vpack.c.b16 %v666, %v665
      %v675 = vpack.c.b16 %v668, %v667
      %v676 = vpack.c.b16 %v670, %v669
      %v677 = vpack.c.b16 %v672, %v671
      %v679 = vshrl.u32 %v673, 16
      %v681 = vshll.u32 %v673, 16
      %v683 = vrot.slane %v681, 1
      %v684 = vor.u32 %v679, %v683
      %v686 = vshll.u32 %v674, 16
      %v688 = vrot.slane %v686, 1
      %v689 = vsel %vm227, %v684, %v688
      %v690 = vshrl.u32 %v674, 16
      %v692 = vor.u32 %v690, %v688
      %v694 = vshll.u32 %v675, 16
      %v696 = vrot.slane %v694, 1
      %v697 = vsel %vm227, %v692, %v696
      %v698 = vshrl.u32 %v675, 16
      %v700 = vor.u32 %v698, %v696
      %v702 = vshll.u32 %v676, 16
      %v704 = vrot.slane %v702, 1
      %v705 = vsel %vm227, %v700, %v704
      %v706 = vshrl.u32 %v676, 16
      %v708 = vor.u32 %v706, %v704
      %v710 = vshll.u32 %v677, 16
      %v712 = vrot.slane %v710, 1
      %v713 = vsel %vm227, %v708, %v712
      %v714 = vshrl.u32 %v677, 16
      %v716 = vor.u32 %v714, %v712
      %v725 = vunpack.c.l.b16 %v645
      %v726 = vunpack.c.l.b16 %v646
      %v727 = vunpack.c.l.b16 %v647
      %v728 = vunpack.c.l.b16 %v648
      %v729 = vunpack.c.l.b16 %v649
      %v730 = vunpack.c.l.b16 %v650
      %v731 = vunpack.c.l.b16 %v651
      %v732 = vunpack.c.l.b16 %v652
      %v733 = vpack.c.b16 %v726, %v725
      %v734 = vpack.c.b16 %v728, %v727
      %v735 = vpack.c.b16 %v730, %v729
      %v736 = vpack.c.b16 %v732, %v731
      %v742 = vsel %vm291, %v689, 0
      %v745 = vsel %vm291, %v697, 0
      %v748 = vsel %vm291, %v705, 0
      %v751 = vsel %vm291, %v713, 0
      %v754 = vsel %vm291, %v716, 0
      %756 = vmatprep.subr.bf16.mxu0 0
      %757 = vmatpush1.bf16.msra.mxu0 0
      %758 = vmatprep.subr.bf16.mxu0 0
      %759 = vmatpush1.bf16.msra.mxu0 0
      %760 = vmatprep.subr.bf16.mxu0 0
      %761 = vmatpush1.bf16.msra.mxu0 0
      %762 = vmatprep.subr.bf16.mxu0 0
      %763 = vmatpush1.bf16.msra.mxu0 0
      %764 = vmatprep.subr.bf16.mxu0 0
      %765 = vmatpush1.bf16.msra.mxu0 %v736
      %766 = vmatprep.subr.bf16.mxu0 0
      %767 = vmatpush1.bf16.msra.mxu0 %v735
      %768 = vmatprep.subr.bf16.mxu0 0
      %769 = vmatpush1.bf16.msra.mxu0 %v734
      %770 = vmatprep.subr.bf16.mxu0 0
      %771 = vmatpush1.bf16.msra.mxu0 %v733
      %772 = vmatprep.subr.bf16.mxu0 0
      %773 = vmatpush2.bf16.msra.mxu0 0
      %774 = vmatprep.subr.bf16.mxu0 0
      %775 = vmatpush2.bf16.msra.mxu0 0
      %776 = vmatprep.subr.bf16.mxu0 0
      %777 = vmatpush2.bf16.msra.mxu0 0
      %778 = vmatprep.subr.bf16.mxu0 0
      %779 = vmatpush2.bf16.msra.mxu0 0
      %780 = vmatprep.subr.bf16.mxu0 0
      %781 = vmatpush2.bf16.msra.mxu0 0
      %782 = vmatprep.subr.bf16.mxu0 0
      %783 = vmatpush2.bf16.msra.mxu0 0
      %784 = vmatprep.subr.bf16.mxu0 0
      %785 = vmatpush2.bf16.msra.mxu0 0
      %786 = vmatprep.subr.bf16.mxu0 0
      %787 = vmatpush2.bf16.msra.mxu0 0
      %788 = vmatprep.mubr.bf16.mxu0 0
      %789 = vmatmul.mubr.bf16.gmra.mxu0 %v742
      %v790 = vpop.f32.mrf.mxu0
      %v791 = vadd.f32 0.0, %v790
      %v792 = vpop.f32.mrf.mxu0
      %v793 = vpop.f32.mrf.mxu0
      %v794 = vadd.f32 0.0, %v793
      %v795 = vpop.f32.mrf.mxu0
      %796 = vmatprep.mubr.bf16.mxu0 0
      %797 = vmatmul.mubr.bf16.gmra.mxu0 %v745
      %v798 = vpop.f32.mrf.mxu0
      %v799 = vadd.f32 0.0, %v798
      %v800 = vpop.f32.mrf.mxu0
      %v801 = vpop.f32.mrf.mxu0
      %v802 = vadd.f32 0.0, %v801
      %v803 = vpop.f32.mrf.mxu0
      %804 = vmatprep.mubr.bf16.mxu0 0
      %805 = vmatmul.mubr.bf16.gmra.mxu0 %v748
      %v806 = vpop.f32.mrf.mxu0
      %v807 = vadd.f32 0.0, %v806
      %v808 = vpop.f32.mrf.mxu0
      %v809 = vpop.f32.mrf.mxu0
      %v810 = vadd.f32 0.0, %v809
      %v811 = vpop.f32.mrf.mxu0
      %812 = vmatprep.mubr.bf16.mxu0 0
      %813 = vmatmul.mubr.bf16.gmra.mxu0 %v751
      %v814 = vpop.f32.mrf.mxu0
      %v815 = vadd.f32 0.0, %v814
      %v816 = vpop.f32.mrf.mxu0
      %v817 = vpop.f32.mrf.mxu0
      %v818 = vadd.f32 0.0, %v817
      %v819 = vpop.f32.mrf.mxu0
      %820 = vmatprep.mubr.bf16.mxu0 0
      %821 = vmatmul.mubr.bf16.gmra.mxu0 %v754
      %v822 = vpop.f32.mrf.mxu0
      %v823 = vadd.f32 0.0, %v822
      %v824 = vpop.f32.mrf.mxu0
      %v825 = vpop.f32.mrf.mxu0
      %v826 = vadd.f32 0.0, %v825
      %v827 = vpop.f32.mrf.mxu0
      %828 = vdwg.mxu0
      %v829 = vadd.f32 %v625, %v791
      %v830 = vadd.f32 %v626, %v794
      %v831 = vadd.f32 %v627, %v799
      %v832 = vadd.f32 %v628, %v802
      %v833 = vadd.f32 %v629, %v807
      %v834 = vadd.f32 %v630, %v810
      %v835 = vadd.f32 %v631, %v815
      %v836 = vadd.f32 %v632, %v818
      %v837 = vadd.f32 %v633, %v823
      %v838 = vadd.f32 %v634, %v826
      %v839 = vld [vmem:[%s166 + $0x4] sm:$0xe]
      %v840 = vld [vmem:[%s1 + $0x80] sm:$0xf]
      %v841 = vld [vmem:[%s1 + $0x84] sm:$0xf]
      %v842 = vld [vmem:[%s1 + $0x88] sm:$0xf]
      %v843 = vld [vmem:[%s1 + $0x8c] sm:$0xf]
      %v844 = vld [vmem:[%s1 + $0x90] sm:$0xf]
      %v845 = vld [vmem:[%s1 + $0x94] sm:$0xf]
      %v846 = vld [vmem:[%s1 + $0x98] sm:$0xf]
      %v847 = vld [vmem:[%s1 + $0x9c] sm:$0xf]
      %v849 = vunpack.c.l.b16 %v839
      %v850 = vpack.c.b16 %v664, %v849
      %v851 = vrot.slane %v850, 1
      %v852 = vrot.slane %v674, 1
      %v853 = vsel %vm503, %v851, %v852
      %v854 = vrot.slane %v675, 1
      %v855 = vsel %vm503, %v852, %v854
      %v856 = vrot.slane %v676, 1
      %v857 = vsel %vm503, %v854, %v856
      %v858 = vrot.slane %v677, 1
      %v859 = vsel %vm503, %v856, %v858
      %v868 = vunpack.c.l.b16 %v840
      %v869 = vunpack.c.l.b16 %v841
      %v870 = vunpack.c.l.b16 %v842
      %v871 = vunpack.c.l.b16 %v843
      %v872 = vunpack.c.l.b16 %v844
      %v873 = vunpack.c.l.b16 %v845
      %v874 = vunpack.c.l.b16 %v846
      %v875 = vunpack.c.l.b16 %v847
      %v876 = vpack.c.b16 %v869, %v868
      %v877 = vpack.c.b16 %v871, %v870
      %v878 = vpack.c.b16 %v873, %v872
      %v879 = vpack.c.b16 %v875, %v874
      %v885 = vsel %vm291, %v853, 0
      %v888 = vsel %vm291, %v855, 0
      %v891 = vsel %vm291, %v857, 0
      %v894 = vsel %vm291, %v859, 0
      %v897 = vsel %vm291, %v858, 0
      %899 = vmatprep.subr.bf16.mxu0 0
      %900 = vmatpush1.bf16.msra.mxu0 0
      %901 = vmatprep.subr.bf16.mxu0 0
      %902 = vmatpush1.bf16.msra.mxu0 0
      %903 = vmatprep.subr.bf16.mxu0 0
      %904 = vmatpush1.bf16.msra.mxu0 0
      %905 = vmatprep.subr.bf16.mxu0 0
      %906 = vmatpush1.bf16.msra.mxu0 0
      %907 = vmatprep.subr.bf16.mxu0 0
      %908 = vmatpush1.bf16.msra.mxu0 %v879
      %909 = vmatprep.subr.bf16.mxu0 0
      %910 = vmatpush1.bf16.msra.mxu0 %v878
      %911 = vmatprep.subr.bf16.mxu0 0
      %912 = vmatpush1.bf16.msra.mxu0 %v877
      %913 = vmatprep.subr.bf16.mxu0 0
      %914 = vmatpush1.bf16.msra.mxu0 %v876
      %915 = vmatprep.subr.bf16.mxu0 0
      %916 = vmatpush2.bf16.msra.mxu0 0
      %917 = vmatprep.subr.bf16.mxu0 0
      %918 = vmatpush2.bf16.msra.mxu0 0
      %919 = vmatprep.subr.bf16.mxu0 0
      %920 = vmatpush2.bf16.msra.mxu0 0
      %921 = vmatprep.subr.bf16.mxu0 0
      %922 = vmatpush2.bf16.msra.mxu0 0
      %923 = vmatprep.subr.bf16.mxu0 0
      %924 = vmatpush2.bf16.msra.mxu0 0
      %925 = vmatprep.subr.bf16.mxu0 0
      %926 = vmatpush2.bf16.msra.mxu0 0
      %927 = vmatprep.subr.bf16.mxu0 0
      %928 = vmatpush2.bf16.msra.mxu0 0
      %929 = vmatprep.subr.bf16.mxu0 0
      %930 = vmatpush2.bf16.msra.mxu0 0
      %931 = vmatprep.mubr.bf16.mxu0 0
      %932 = vmatmul.mubr.bf16.gmra.mxu0 %v885
      %v933 = vpop.f32.mrf.mxu0
      %v934 = vadd.f32 0.0, %v933
      %v935 = vpop.f32.mrf.mxu0
      %v936 = vpop.f32.mrf.mxu0
      %v937 = vadd.f32 0.0, %v936
      %v938 = vpop.f32.mrf.mxu0
      %939 = vmatprep.mubr.bf16.mxu0 0
      %940 = vmatmul.mubr.bf16.gmra.mxu0 %v888
      %v941 = vpop.f32.mrf.mxu0
      %v942 = vadd.f32 0.0, %v941
      %v943 = vpop.f32.mrf.mxu0
      %v944 = vpop.f32.mrf.mxu0
      %v945 = vadd.f32 0.0, %v944
      %v946 = vpop.f32.mrf.mxu0
      %947 = vmatprep.mubr.bf16.mxu0 0
      %948 = vmatmul.mubr.bf16.gmra.mxu0 %v891
      %v949 = vpop.f32.mrf.mxu0
      %v950 = vadd.f32 0.0, %v949
      %v951 = vpop.f32.mrf.mxu0
      %v952 = vpop.f32.mrf.mxu0
      %v953 = vadd.f32 0.0, %v952
      %v954 = vpop.f32.mrf.mxu0
      %955 = vmatprep.mubr.bf16.mxu0 0
      %956 = vmatmul.mubr.bf16.gmra.mxu0 %v894
      %v957 = vpop.f32.mrf.mxu0
      %v958 = vadd.f32 0.0, %v957
      %v959 = vpop.f32.mrf.mxu0
      %v960 = vpop.f32.mrf.mxu0
      %v961 = vadd.f32 0.0, %v960
      %v962 = vpop.f32.mrf.mxu0
      %963 = vmatprep.mubr.bf16.mxu0 0
      %964 = vmatmul.mubr.bf16.gmra.mxu0 %v897
      %v965 = vpop.f32.mrf.mxu0
      %v966 = vadd.f32 0.0, %v965
      %v967 = vpop.f32.mrf.mxu0
      %v968 = vpop.f32.mrf.mxu0
      %v969 = vadd.f32 0.0, %v968
      %v970 = vpop.f32.mrf.mxu0
      %971 = vdwg.mxu0
      %v972 = vadd.f32 %v829, %v934
      %v973 = vadd.f32 %v830, %v937
      %v974 = vadd.f32 %v831, %v942
      %v975 = vadd.f32 %v832, %v945
      %v976 = vadd.f32 %v833, %v950
      %v977 = vadd.f32 %v834, %v953
      %v978 = vadd.f32 %v835, %v958
      %v979 = vadd.f32 %v836, %v961
      %v980 = vadd.f32 %v837, %v966
      %v981 = vadd.f32 %v838, %v969
      %v982 = vld [vmem:[%s166 + $0x28] sm:$0xf]
      %v983 = vld [vmem:[%s1 + $0xa0] sm:$0xf]
      %v984 = vld [vmem:[%s1 + $0xa4] sm:$0xf]
      %v985 = vld [vmem:[%s1 + $0xa8] sm:$0xf]
      %v986 = vld [vmem:[%s1 + $0xac] sm:$0xf]
      %v987 = vld [vmem:[%s1 + $0xb0] sm:$0xf]
      %v988 = vld [vmem:[%s1 + $0xb4] sm:$0xf]
      %v989 = vld [vmem:[%s1 + $0xb8] sm:$0xf]
      %v990 = vld [vmem:[%s1 + $0xbc] sm:$0xf]
      %v992 = vunpack.c.l.b16 %v982
      %v993 = vpack.c.b16 %v992, %v671
      %vm994 = vsmask.f32 6400
      %v996 = vshrl.u32 %v850, 16
      %v998 = vrot.slane %v996, 1
      %v999 = vshll.u32 %v850, 16
      %v1001 = vrot.slane %v999, 2
      %v1002 = vor.u32 %v998, %v1001
      %v1003 = vrot.slane %v690, 1
      %v1004 = vrot.slane %v686, 2
      %v1005 = vor.u32 %v1003, %v1004
      %v1006 = vsel %vm994, %v1002, %v1005
      %v1007 = vrot.slane %v698, 1
      %v1008 = vrot.slane %v694, 2
      %v1009 = vor.u32 %v1007, %v1008
      %v1010 = vsel %vm994, %v1005, %v1009
      %v1011 = vrot.slane %v706, 1
      %v1012 = vrot.slane %v702, 2
      %v1013 = vor.u32 %v1011, %v1012
      %v1014 = vsel %vm994, %v1009, %v1013
      %v1016 = vshrl.u32 %v993, 16
      %v1018 = vrot.slane %v1016, 1
      %v1019 = vshll.u32 %v993, 16
      %v1021 = vrot.slane %v1019, 2
      %v1022 = vor.u32 %v1018, %v1021
      %v1023 = vsel %vm994, %v1013, %v1022
      %v1032 = vunpack.c.l.b16 %v983
      %v1033 = vunpack.c.l.b16 %v984
      %v1034 = vunpack.c.l.b16 %v985
      %v1035 = vunpack.c.l.b16 %v986
      %v1036 = vunpack.c.l.b16 %v987
      %v1037 = vunpack.c.l.b16 %v988
      %v1038 = vunpack.c.l.b16 %v989
      %v1039 = vunpack.c.l.b16 %v990
      %v1040 = vpack.c.b16 %v1033, %v1032
      %v1041 = vpack.c.b16 %v1035, %v1034
      %v1042 = vpack.c.b16 %v1037, %v1036
      %v1043 = vpack.c.b16 %v1039, %v1038
      %v1049 = vsel %vm291, %v1006, 0
      %v1052 = vsel %vm291, %v1010, 0
      %v1055 = vsel %vm291, %v1014, 0
      %v1058 = vsel %vm291, %v1023, 0
      %v1061 = vsel %vm291, %v1022, 0
      %1063 = vmatprep.subr.bf16.mxu0 0
      %1064 = vmatpush1.bf16.msra.mxu0 0
      %1065 = vmatprep.subr.bf16.mxu0 0
      %1066 = vmatpush1.bf16.msra.mxu0 0
      %1067 = vmatprep.subr.bf16.mxu0 0
      %1068 = vmatpush1.bf16.msra.mxu0 0
      %1069 = vmatprep.subr.bf16.mxu0 0
      %1070 = vmatpush1.bf16.msra.mxu0 0
      %1071 = vmatprep.subr.bf16.mxu0 0
      %1072 = vmatpush1.bf16.msra.mxu0 %v1043
      %1073 = vmatprep.subr.bf16.mxu0 0
      %1074 = vmatpush1.bf16.msra.mxu0 %v1042
      %1075 = vmatprep.subr.bf16.mxu0 0
      %1076 = vmatpush1.bf16.msra.mxu0 %v1041
      %1077 = vmatprep.subr.bf16.mxu0 0
      %1078 = vmatpush1.bf16.msra.mxu0 %v1040
      %1079 = vmatprep.subr.bf16.mxu0 0
      %1080 = vmatpush2.bf16.msra.mxu0 0
      %1081 = vmatprep.subr.bf16.mxu0 0
      %1082 = vmatpush2.bf16.msra.mxu0 0
      %1083 = vmatprep.subr.bf16.mxu0 0
      %1084 = vmatpush2.bf16.msra.mxu0 0
      %1085 = vmatprep.subr.bf16.mxu0 0
      %1086 = vmatpush2.bf16.msra.mxu0 0
      %1087 = vmatprep.subr.bf16.mxu0 0
      %1088 = vmatpush2.bf16.msra.mxu0 0
      %1089 = vmatprep.subr.bf16.mxu0 0
      %1090 = vmatpush2.bf16.msra.mxu0 0
      %1091 = vmatprep.subr.bf16.mxu0 0
      %1092 = vmatpush2.bf16.msra.mxu0 0
      %1093 = vmatprep.subr.bf16.mxu0 0
      %1094 = vmatpush2.bf16.msra.mxu0 0
      %1095 = vmatprep.mubr.bf16.mxu0 0
      %1096 = vmatmul.mubr.bf16.gmra.mxu0 %v1049
      %v1097 = vpop.f32.mrf.mxu0
      %v1098 = vadd.f32 0.0, %v1097
      %v1099 = vpop.f32.mrf.mxu0
      %v1100 = vpop.f32.mrf.mxu0
      %v1101 = vadd.f32 0.0, %v1100
      %v1102 = vpop.f32.mrf.mxu0
      %1103 = vmatprep.mubr.bf16.mxu0 0
      %1104 = vmatmul.mubr.bf16.gmra.mxu0 %v1052
      %v1105 = vpop.f32.mrf.mxu0
      %v1106 = vadd.f32 0.0, %v1105
      %v1107 = vpop.f32.mrf.mxu0
      %v1108 = vpop.f32.mrf.mxu0
      %v1109 = vadd.f32 0.0, %v1108
      %v1110 = vpop.f32.mrf.mxu0
      %1111 = vmatprep.mubr.bf16.mxu0 0
      %1112 = vmatmul.mubr.bf16.gmra.mxu0 %v1055
      %v1113 = vpop.f32.mrf.mxu0
      %v1114 = vadd.f32 0.0, %v1113
      %v1115 = vpop.f32.mrf.mxu0
      %v1116 = vpop.f32.mrf.mxu0
      %v1117 = vadd.f32 0.0, %v1116
      %v1118 = vpop.f32.mrf.mxu0
      %1119 = vmatprep.mubr.bf16.mxu0 0
      %1120 = vmatmul.mubr.bf16.gmra.mxu0 %v1058
      %v1121 = vpop.f32.mrf.mxu0
      %v1122 = vadd.f32 0.0, %v1121
      %v1123 = vpop.f32.mrf.mxu0
      %v1124 = vpop.f32.mrf.mxu0
      %v1125 = vadd.f32 0.0, %v1124
      %v1126 = vpop.f32.mrf.mxu0
      %1127 = vmatprep.mubr.bf16.mxu0 0
      %1128 = vmatmul.mubr.bf16.gmra.mxu0 %v1061
      %v1129 = vpop.f32.mrf.mxu0
      %v1130 = vadd.f32 0.0, %v1129
      %v1131 = vpop.f32.mrf.mxu0
      %v1132 = vpop.f32.mrf.mxu0
      %v1133 = vadd.f32 0.0, %v1132
      %v1134 = vpop.f32.mrf.mxu0
      %1135 = vdwg.mxu0
      %v1136 = vadd.f32 %v972, %v1098
      %v1137 = vadd.f32 %v973, %v1101
      %v1138 = vadd.f32 %v974, %v1106
      %v1139 = vadd.f32 %v975, %v1109
      %v1140 = vadd.f32 %v976, %v1114
      %v1141 = vadd.f32 %v977, %v1117
      %v1142 = vadd.f32 %v978, %v1122
      %v1143 = vadd.f32 %v979, %v1125
      %v1144 = vadd.f32 %v980, %v1130
      %v1145 = vadd.f32 %v981, %v1133
      %v1146 = vld [vmem:[%s166 + $0x8] sm:$0xe]
      %v1147 = vld [vmem:[%s166 + $0xc] sm:$0xf]
      %v1148 = vld [vmem:[%s166 + $0x10] sm:$0xf]
      %v1149 = vld [vmem:[%s166 + $0x14] sm:$0xf]
      %v1150 = vld [vmem:[%s166 + $0x18] sm:$0xf]
      %v1151 = vld [vmem:[%s166 + $0x1c] sm:$0xf]
      %v1152 = vld [vmem:[%s166 + $0x20] sm:$0xf]
      %v1153 = vld [vmem:[%s166 + $0x24] sm:$0xf]
      %v1154 = vld [vmem:[%s166 + $0x28] sm:$0xf]
      %v1155 = vld [vmem:[%s166 + $0x2c] sm:$0x7]
      %v1156 = vld [vmem:[%s1 + $0xc0] sm:$0xf]
      %v1157 = vld [vmem:[%s1 + $0xc4] sm:$0xf]
      %v1158 = vld [vmem:[%s1 + $0xc8] sm:$0xf]
      %v1159 = vld [vmem:[%s1 + $0xcc] sm:$0xf]
      %v1160 = vld [vmem:[%s1 + $0xd0] sm:$0xf]
      %v1161 = vld [vmem:[%s1 + $0xd4] sm:$0xf]
      %v1162 = vld [vmem:[%s1 + $0xd8] sm:$0xf]
      %v1163 = vld [vmem:[%s1 + $0xdc] sm:$0xf]
      %v1174 = vunpack.c.l.b16 %v1146
      %v1175 = vunpack.c.l.b16 %v1147
      %v1176 = vunpack.c.l.b16 %v1148
      %v1177 = vunpack.c.l.b16 %v1149
      %v1178 = vunpack.c.l.b16 %v1150
      %v1179 = vunpack.c.l.b16 %v1151
      %v1180 = vunpack.c.l.b16 %v1152
      %v1181 = vunpack.c.l.b16 %v1153
      %v1182 = vunpack.c.l.b16 %v1154
      %v1183 = vunpack.c.l.b16 %v1155
      %v1184 = vpack.c.b16 %v1175, %v1174
      %v1185 = vpack.c.b16 %v1177, %v1176
      %v1186 = vpack.c.b16 %v1179, %v1178
      %v1187 = vpack.c.b16 %v1181, %v1180
      %v1188 = vpack.c.b16 %v1183, %v1182
      %v1189 = vrot.slane %v1184, 1
      %v1190 = vrot.slane %v1185, 1
      %v1191 = vsel %vm503, %v1189, %v1190
      %v1192 = vrot.slane %v1186, 1
      %v1193 = vsel %vm503, %v1190, %v1192
      %v1194 = vrot.slane %v1187, 1
      %v1195 = vsel %vm503, %v1192, %v1194
      %v1196 = vrot.slane %v1188, 1
      %v1197 = vsel %vm503, %v1194, %v1196
      %v1206 = vunpack.c.l.b16 %v1156
      %v1207 = vunpack.c.l.b16 %v1157
      %v1208 = vunpack.c.l.b16 %v1158
      %v1209 = vunpack.c.l.b16 %v1159
      %v1210 = vunpack.c.l.b16 %v1160
      %v1211 = vunpack.c.l.b16 %v1161
      %v1212 = vunpack.c.l.b16 %v1162
      %v1213 = vunpack.c.l.b16 %v1163
      %v1214 = vpack.c.b16 %v1207, %v1206
      %v1215 = vpack.c.b16 %v1209, %v1208
      %v1216 = vpack.c.b16 %v1211, %v1210
      %v1217 = vpack.c.b16 %v1213, %v1212
      %v1223 = vsel %vm291, %v1191, 0
      %v1226 = vsel %vm291, %v1193, 0
      %v1229 = vsel %vm291, %v1195, 0
      %v1232 = vsel %vm291, %v1197, 0
      %v1235 = vsel %vm291, %v1196, 0
      %1237 = vmatprep.subr.bf16.mxu0 0
      %1238 = vmatpush1.bf16.msra.mxu0 0
      %1239 = vmatprep.subr.bf16.mxu0 0
      %1240 = vmatpush1.bf16.msra.mxu0 0
      %1241 = vmatprep.subr.bf16.mxu0 0
      %1242 = vmatpush1.bf16.msra.mxu0 0
      %1243 = vmatprep.subr.bf16.mxu0 0
      %1244 = vmatpush1.bf16.msra.mxu0 0
      %1245 = vmatprep.subr.bf16.mxu0 0
      %1246 = vmatpush1.bf16.msra.mxu0 %v1217
      %1247 = vmatprep.subr.bf16.mxu0 0
      %1248 = vmatpush1.bf16.msra.mxu0 %v1216
      %1249 = vmatprep.subr.bf16.mxu0 0
      %1250 = vmatpush1.bf16.msra.mxu0 %v1215
      %1251 = vmatprep.subr.bf16.mxu0 0
      %1252 = vmatpush1.bf16.msra.mxu0 %v1214
      %1253 = vmatprep.subr.bf16.mxu0 0
      %1254 = vmatpush2.bf16.msra.mxu0 0
      %1255 = vmatprep.subr.bf16.mxu0 0
      %1256 = vmatpush2.bf16.msra.mxu0 0
      %1257 = vmatprep.subr.bf16.mxu0 0
      %1258 = vmatpush2.bf16.msra.mxu0 0
      %1259 = vmatprep.subr.bf16.mxu0 0
      %1260 = vmatpush2.bf16.msra.mxu0 0
      %1261 = vmatprep.subr.bf16.mxu0 0
      %1262 = vmatpush2.bf16.msra.mxu0 0
      %1263 = vmatprep.subr.bf16.mxu0 0
      %1264 = vmatpush2.bf16.msra.mxu0 0
      %1265 = vmatprep.subr.bf16.mxu0 0
      %1266 = vmatpush2.bf16.msra.mxu0 0
      %1267 = vmatprep.subr.bf16.mxu0 0
      %1268 = vmatpush2.bf16.msra.mxu0 0
      %1269 = vmatprep.mubr.bf16.mxu0 0
      %1270 = vmatmul.mubr.bf16.gmra.mxu0 %v1223
      %v1271 = vpop.f32.mrf.mxu0
      %v1272 = vadd.f32 0.0, %v1271
      %v1273 = vpop.f32.mrf.mxu0
      %v1274 = vpop.f32.mrf.mxu0
      %v1275 = vadd.f32 0.0, %v1274
      %v1276 = vpop.f32.mrf.mxu0
      %1277 = vmatprep.mubr.bf16.mxu0 0
      %1278 = vmatmul.mubr.bf16.gmra.mxu0 %v1226
      %v1279 = vpop.f32.mrf.mxu0
      %v1280 = vadd.f32 0.0, %v1279
      %v1281 = vpop.f32.mrf.mxu0
      %v1282 = vpop.f32.mrf.mxu0
      %v1283 = vadd.f32 0.0, %v1282
      %v1284 = vpop.f32.mrf.mxu0
      %1285 = vmatprep.mubr.bf16.mxu0 0
      %1286 = vmatmul.mubr.bf16.gmra.mxu0 %v1229
      %v1287 = vpop.f32.mrf.mxu0
      %v1288 = vadd.f32 0.0, %v1287
      %v1289 = vpop.f32.mrf.mxu0
      %v1290 = vpop.f32.mrf.mxu0
      %v1291 = vadd.f32 0.0, %v1290
      %v1292 = vpop.f32.mrf.mxu0
      %1293 = vmatprep.mubr.bf16.mxu0 0
      %1294 = vmatmul.mubr.bf16.gmra.mxu0 %v1232
      %v1295 = vpop.f32.mrf.mxu0
      %v1296 = vadd.f32 0.0, %v1295
      %v1297 = vpop.f32.mrf.mxu0
      %v1298 = vpop.f32.mrf.mxu0
      %v1299 = vadd.f32 0.0, %v1298
      %v1300 = vpop.f32.mrf.mxu0
      %1301 = vmatprep.mubr.bf16.mxu0 0
      %1302 = vmatmul.mubr.bf16.gmra.mxu0 %v1235
      %v1303 = vpop.f32.mrf.mxu0
      %v1304 = vadd.f32 0.0, %v1303
      %v1305 = vpop.f32.mrf.mxu0
      %v1306 = vpop.f32.mrf.mxu0
      %v1307 = vadd.f32 0.0, %v1306
      %v1308 = vpop.f32.mrf.mxu0
      %1309 = vdwg.mxu0
      %v1310 = vadd.f32 %v1136, %v1272
      %v1311 = vadd.f32 %v1137, %v1275
      %v1312 = vadd.f32 %v1138, %v1280
      %v1313 = vadd.f32 %v1139, %v1283
      %v1314 = vadd.f32 %v1140, %v1288
      %v1315 = vadd.f32 %v1141, %v1291
      %v1316 = vadd.f32 %v1142, %v1296
      %v1317 = vadd.f32 %v1143, %v1299
      %v1318 = vadd.f32 %v1144, %v1304
      %v1319 = vadd.f32 %v1145, %v1307
      %v1320 = vld [vmem:[%s166 + $0x2c] sm:$0xf]
      %v1321 = vld [vmem:[%s1 + $0xe0] sm:$0xf]
      %v1322 = vld [vmem:[%s1 + $0xe4] sm:$0xf]
      %v1323 = vld [vmem:[%s1 + $0xe8] sm:$0xf]
      %v1324 = vld [vmem:[%s1 + $0xec] sm:$0xf]
      %v1325 = vld [vmem:[%s1 + $0xf0] sm:$0xf]
      %v1326 = vld [vmem:[%s1 + $0xf4] sm:$0xf]
      %v1327 = vld [vmem:[%s1 + $0xf8] sm:$0xf]
      %v1328 = vld [vmem:[%s1 + $0xfc] sm:$0xf]
      %v1330 = vunpack.c.l.b16 %v1320
      %v1331 = vpack.c.b16 %v1330, %v1182
      %v1333 = vshrl.u32 %v1184, 16
      %v1335 = vrot.slane %v1333, 1
      %v1336 = vshll.u32 %v1184, 16
      %v1338 = vrot.slane %v1336, 2
      %v1339 = vor.u32 %v1335, %v1338
      %v1341 = vshrl.u32 %v1185, 16
      %v1343 = vrot.slane %v1341, 1
      %v1344 = vshll.u32 %v1185, 16
      %v1346 = vrot.slane %v1344, 2
      %v1347 = vor.u32 %v1343, %v1346
      %v1348 = vsel %vm994, %v1339, %v1347
      %v1350 = vshrl.u32 %v1186, 16
      %v1352 = vrot.slane %v1350, 1
      %v1353 = vshll.u32 %v1186, 16
      %v1355 = vrot.slane %v1353, 2
      %v1356 = vor.u32 %v1352, %v1355
      %v1357 = vsel %vm994, %v1347, %v1356
      %v1359 = vshrl.u32 %v1187, 16
      %v1361 = vrot.slane %v1359, 1
      %v1362 = vshll.u32 %v1187, 16
      %v1364 = vrot.slane %v1362, 2
      %v1365 = vor.u32 %v1361, %v1364
      %v1366 = vsel %vm994, %v1356, %v1365
      %v1368 = vshrl.u32 %v1331, 16
      %v1370 = vrot.slane %v1368, 1
      %v1371 = vshll.u32 %v1331, 16
      %v1373 = vrot.slane %v1371, 2
      %v1374 = vor.u32 %v1370, %v1373
      %v1375 = vsel %vm994, %v1365, %v1374
      %v1384 = vunpack.c.l.b16 %v1321
      %v1385 = vunpack.c.l.b16 %v1322
      %v1386 = vunpack.c.l.b16 %v1323
      %v1387 = vunpack.c.l.b16 %v1324
      %v1388 = vunpack.c.l.b16 %v1325
      %v1389 = vunpack.c.l.b16 %v1326
      %v1390 = vunpack.c.l.b16 %v1327
      %v1391 = vunpack.c.l.b16 %v1328
      %v1392 = vpack.c.b16 %v1385, %v1384
      %v1393 = vpack.c.b16 %v1387, %v1386
      %v1394 = vpack.c.b16 %v1389, %v1388
      %v1395 = vpack.c.b16 %v1391, %v1390
      %v1401 = vsel %vm291, %v1348, 0
      %v1404 = vsel %vm291, %v1357, 0
      %v1407 = vsel %vm291, %v1366, 0
      %v1410 = vsel %vm291, %v1375, 0
      %v1413 = vsel %vm291, %v1374, 0
      %1415 = vmatprep.subr.bf16.mxu0 0
      %1416 = vmatpush1.bf16.msra.mxu0 0
      %1417 = vmatprep.subr.bf16.mxu0 0
      %1418 = vmatpush1.bf16.msra.mxu0 0
      %1419 = vmatprep.subr.bf16.mxu0 0
      %1420 = vmatpush1.bf16.msra.mxu0 0
      %1421 = vmatprep.subr.bf16.mxu0 0
      %1422 = vmatpush1.bf16.msra.mxu0 0
      %1423 = vmatprep.subr.bf16.mxu0 0
      %1424 = vmatpush1.bf16.msra.mxu0 %v1395
      %1425 = vmatprep.subr.bf16.mxu0 0
      %1426 = vmatpush1.bf16.msra.mxu0 %v1394
      %1427 = vmatprep.subr.bf16.mxu0 0
      %1428 = vmatpush1.bf16.msra.mxu0 %v1393
      %1429 = vmatprep.subr.bf16.mxu0 0
      %1430 = vmatpush1.bf16.msra.mxu0 %v1392
      %1431 = vmatprep.subr.bf16.mxu0 0
      %1432 = vmatpush2.bf16.msra.mxu0 0
      %1433 = vmatprep.subr.bf16.mxu0 0
      %1434 = vmatpush2.bf16.msra.mxu0 0
      %1435 = vmatprep.subr.bf16.mxu0 0
      %1436 = vmatpush2.bf16.msra.mxu0 0
      %1437 = vmatprep.subr.bf16.mxu0 0
      %1438 = vmatpush2.bf16.msra.mxu0 0
      %1439 = vmatprep.subr.bf16.mxu0 0
      %1440 = vmatpush2.bf16.msra.mxu0 0
      %1441 = vmatprep.subr.bf16.mxu0 0
      %1442 = vmatpush2.bf16.msra.mxu0 0
      %1443 = vmatprep.subr.bf16.mxu0 0
      %1444 = vmatpush2.bf16.msra.mxu0 0
      %1445 = vmatprep.subr.bf16.mxu0 0
      %1446 = vmatpush2.bf16.msra.mxu0 0
      %1447 = vmatprep.mubr.bf16.mxu0 0
      %1448 = vmatmul.mubr.bf16.gmra.mxu0 %v1401
      %v1449 = vpop.f32.mrf.mxu0
      %v1450 = vadd.f32 0.0, %v1449
      %v1451 = vpop.f32.mrf.mxu0
      %v1452 = vpop.f32.mrf.mxu0
      %v1453 = vadd.f32 0.0, %v1452
      %v1454 = vpop.f32.mrf.mxu0
      %1455 = vmatprep.mubr.bf16.mxu0 0
      %1456 = vmatmul.mubr.bf16.gmra.mxu0 %v1404
      %v1457 = vpop.f32.mrf.mxu0
      %v1458 = vadd.f32 0.0, %v1457
      %v1459 = vpop.f32.mrf.mxu0
      %v1460 = vpop.f32.mrf.mxu0
      %v1461 = vadd.f32 0.0, %v1460
      %v1462 = vpop.f32.mrf.mxu0
      %1463 = vmatprep.mubr.bf16.mxu0 0
      %1464 = vmatmul.mubr.bf16.gmra.mxu0 %v1407
      %v1465 = vpop.f32.mrf.mxu0
      %v1466 = vadd.f32 0.0, %v1465
      %v1467 = vpop.f32.mrf.mxu0
      %v1468 = vpop.f32.mrf.mxu0
      %v1469 = vadd.f32 0.0, %v1468
      %v1470 = vpop.f32.mrf.mxu0
      %1471 = vmatprep.mubr.bf16.mxu0 0
      %1472 = vmatmul.mubr.bf16.gmra.mxu0 %v1410
      %v1473 = vpop.f32.mrf.mxu0
      %v1474 = vadd.f32 0.0, %v1473
      %v1475 = vpop.f32.mrf.mxu0
      %v1476 = vpop.f32.mrf.mxu0
      %v1477 = vadd.f32 0.0, %v1476
      %v1478 = vpop.f32.mrf.mxu0
      %1479 = vmatprep.mubr.bf16.mxu0 0
      %1480 = vmatmul.mubr.bf16.gmra.mxu0 %v1413
      %v1481 = vpop.f32.mrf.mxu0
      %v1482 = vadd.f32 0.0, %v1481
      %v1483 = vpop.f32.mrf.mxu0
      %v1484 = vpop.f32.mrf.mxu0
      %v1485 = vadd.f32 0.0, %v1484
      %v1486 = vpop.f32.mrf.mxu0
      %1487 = vdwg.mxu0
      %v1488 = vadd.f32 %v1310, %v1450
      %v1489 = vadd.f32 %v1311, %v1453
      %v1490 = vadd.f32 %v1312, %v1458
      %v1491 = vadd.f32 %v1313, %v1461
      %v1492 = vadd.f32 %v1314, %v1466
      %v1493 = vadd.f32 %v1315, %v1469
      %v1494 = vadd.f32 %v1316, %v1474
      %v1495 = vadd.f32 %v1317, %v1477
      %v1496 = vadd.f32 %v1318, %v1482
      %v1497 = vadd.f32 %v1319, %v1485
      %v1498 = vld [vmem:[%s166 + $0x8] sm:$0xc]
      %v1499 = vld [vmem:[%s1 + $0x100] sm:$0xf]
      %v1500 = vld [vmem:[%s1 + $0x104] sm:$0xf]
      %v1501 = vld [vmem:[%s1 + $0x108] sm:$0xf]
      %v1502 = vld [vmem:[%s1 + $0x10c] sm:$0xf]
      %v1503 = vld [vmem:[%s1 + $0x110] sm:$0xf]
      %v1504 = vld [vmem:[%s1 + $0x114] sm:$0xf]
      %v1505 = vld [vmem:[%s1 + $0x118] sm:$0xf]
      %v1506 = vld [vmem:[%s1 + $0x11c] sm:$0xf]
      %v1508 = vunpack.c.l.b16 %v1498
      %v1509 = vpack.c.b16 %v1175, %v1508
      %vm1510 = vcmask 1045504
      %v1511 = vrot.slane %v1509, 2
      %v1512 = vrot.slane %v1185, 2
      %v1513 = vsel %vm1510, %v1511, %v1512
      %v1514 = vrot.slane %v1186, 2
      %v1515 = vsel %vm1510, %v1512, %v1514
      %v1516 = vrot.slane %v1187, 2
      %v1517 = vsel %vm1510, %v1514, %v1516
      %v1518 = vrot.slane %v1331, 2
      %v1519 = vsel %vm1510, %v1516, %v1518
      %v1528 = vunpack.c.l.b16 %v1499
      %v1529 = vunpack.c.l.b16 %v1500
      %v1530 = vunpack.c.l.b16 %v1501
      %v1531 = vunpack.c.l.b16 %v1502
      %v1532 = vunpack.c.l.b16 %v1503
      %v1533 = vunpack.c.l.b16 %v1504
      %v1534 = vunpack.c.l.b16 %v1505
      %v1535 = vunpack.c.l.b16 %v1506
      %v1536 = vpack.c.b16 %v1529, %v1528
      %v1537 = vpack.c.b16 %v1531, %v1530
      %v1538 = vpack.c.b16 %v1533, %v1532
      %v1539 = vpack.c.b16 %v1535, %v1534
      %v1545 = vsel %vm291, %v1513, 0
      %v1548 = vsel %vm291, %v1515, 0
      %v1551 = vsel %vm291, %v1517, 0
      %v1554 = vsel %vm291, %v1519, 0
      %v1557 = vsel %vm291, %v1518, 0
      %1559 = vmatprep.subr.bf16.mxu0 0
      %1560 = vmatpush1.bf16.msra.mxu0 0
      %1561 = vmatprep.subr.bf16.mxu0 0
      %1562 = vmatpush1.bf16.msra.mxu0 0
      %1563 = vmatprep.subr.bf16.mxu0 0
      %1564 = vmatpush1.bf16.msra.mxu0 0
      %1565 = vmatprep.subr.bf16.mxu0 0
      %1566 = vmatpush1.bf16.msra.mxu0 0
      %1567 = vmatprep.subr.bf16.mxu0 0
      %1568 = vmatpush1.bf16.msra.mxu0 %v1539
      %1569 = vmatprep.subr.bf16.mxu0 0
      %1570 = vmatpush1.bf16.msra.mxu0 %v1538
      %1571 = vmatprep.subr.bf16.mxu0 0
      %1572 = vmatpush1.bf16.msra.mxu0 %v1537
      %1573 = vmatprep.subr.bf16.mxu0 0
      %1574 = vmatpush1.bf16.msra.mxu0 %v1536
      %1575 = vmatprep.subr.bf16.mxu0 0
      %1576 = vmatpush2.bf16.msra.mxu0 0
      %1577 = vmatprep.subr.bf16.mxu0 0
      %1578 = vmatpush2.bf16.msra.mxu0 0
      %1579 = vmatprep.subr.bf16.mxu0 0
      %1580 = vmatpush2.bf16.msra.mxu0 0
      %1581 = vmatprep.subr.bf16.mxu0 0
      %1582 = vmatpush2.bf16.msra.mxu0 0
      %1583 = vmatprep.subr.bf16.mxu0 0
      %1584 = vmatpush2.bf16.msra.mxu0 0
      %1585 = vmatprep.subr.bf16.mxu0 0
      %1586 = vmatpush2.bf16.msra.mxu0 0
      %1587 = vmatprep.subr.bf16.mxu0 0
      %1588 = vmatpush2.bf16.msra.mxu0 0
      %1589 = vmatprep.subr.bf16.mxu0 0
      %1590 = vmatpush2.bf16.msra.mxu0 0
      %1591 = vmatprep.mubr.bf16.mxu0 0
      %1592 = vmatmul.mubr.bf16.gmra.mxu0 %v1545
      %v1593 = vpop.f32.mrf.mxu0
      %v1594 = vadd.f32 0.0, %v1593
      %v1595 = vpop.f32.mrf.mxu0
      %v1596 = vpop.f32.mrf.mxu0
      %v1597 = vadd.f32 0.0, %v1596
      %v1598 = vpop.f32.mrf.mxu0
      %1599 = vmatprep.mubr.bf16.mxu0 0
      %1600 = vmatmul.mubr.bf16.gmra.mxu0 %v1548
      %v1601 = vpop.f32.mrf.mxu0
      %v1602 = vadd.f32 0.0, %v1601
      %v1603 = vpop.f32.mrf.mxu0
      %v1604 = vpop.f32.mrf.mxu0
      %v1605 = vadd.f32 0.0, %v1604
      %v1606 = vpop.f32.mrf.mxu0
      %1607 = vmatprep.mubr.bf16.mxu0 0
      %1608 = vmatmul.mubr.bf16.gmra.mxu0 %v1551
      %v1609 = vpop.f32.mrf.mxu0
      %v1610 = vadd.f32 0.0, %v1609
      %v1611 = vpop.f32.mrf.mxu0
      %v1612 = vpop.f32.mrf.mxu0
      %v1613 = vadd.f32 0.0, %v1612
      %v1614 = vpop.f32.mrf.mxu0
      %1615 = vmatprep.mubr.bf16.mxu0 0
      %1616 = vmatmul.mubr.bf16.gmra.mxu0 %v1554
      %v1617 = vpop.f32.mrf.mxu0
      %v1618 = vadd.f32 0.0, %v1617
      %v1619 = vpop.f32.mrf.mxu0
      %v1620 = vpop.f32.mrf.mxu0
      %v1621 = vadd.f32 0.0, %v1620
      %v1622 = vpop.f32.mrf.mxu0
      %1623 = vmatprep.mubr.bf16.mxu0 0
      %1624 = vmatmul.mubr.bf16.gmra.mxu0 %v1557
      %v1625 = vpop.f32.mrf.mxu0
      %v1626 = vadd.f32 0.0, %v1625
      %v1627 = vpop.f32.mrf.mxu0
      %v1628 = vpop.f32.mrf.mxu0
      %v1629 = vadd.f32 0.0, %v1628
      %v1630 = vpop.f32.mrf.mxu0
      %1631 = vdwg.mxu0
      %v1632 = vadd.f32 %v1488, %v1594
      %v1633 = vadd.f32 %v1489, %v1597
      %v1634 = vadd.f32 %v1490, %v1602
      %v1635 = vadd.f32 %v1491, %v1605
      %v1636 = vadd.f32 %v1492, %v1610
      %v1637 = vadd.f32 %v1493, %v1613
      %v1638 = vadd.f32 %v1494, %v1618
      %v1639 = vadd.f32 %v1495, %v1621
      %v1640 = vadd.f32 %v1496, %v1626
      %v1641 = vadd.f32 %v1497, %v1629
      %v1642 = vld [vmem:[%s2] sm:$0x1]
      %v1644 = vlaneseq
      %v1645 = vshrl.u32 %v1644, 7
      %v1646 = vsub.s32 0, %v1645
      %v1647 = vrot.slane %v1642, %v1646
      %v1649 = vadd.f32 %v1632, %v1647
      %v1650 = vadd.f32 %v1633, %v1647
      %v1651 = vadd.f32 %v1634, %v1647
      %v1652 = vadd.f32 %v1635, %v1647
      %v1653 = vadd.f32 %v1636, %v1647
      %v1654 = vadd.f32 %v1637, %v1647
      %v1655 = vadd.f32 %v1638, %v1647
      %v1656 = vadd.f32 %v1639, %v1647
      %v1657 = vadd.f32 %v1640, %v1647
      %v1658 = vadd.f32 %v1641, %v1647
      %v1659 = vmax.f32 %v1649, 0.0
      %v1660 = vmax.f32 %v1650, 0.0
      %v1661 = vmax.f32 %v1651, 0.0
      %v1662 = vmax.f32 %v1652, 0.0
      %v1663 = vmax.f32 %v1653, 0.0
      %v1664 = vmax.f32 %v1654, 0.0
      %v1665 = vmax.f32 %v1655, 0.0
      %v1666 = vmax.f32 %v1656, 0.0
      %v1667 = vmax.f32 %v1657, 0.0
      %v1668 = vmax.f32 %v1658, 0.0
      %v1669 = vpack.c.bf16 %v1660, %v1659
      %v1670 = vpack.c.bf16 %v1662, %v1661
      %v1671 = vpack.c.bf16 %v1664, %v1663
      %v1672 = vpack.c.bf16 %v1666, %v1665
      %v1673 = vpack.c.bf16 %v1668, %v1667
      %v1679 = vunpack.c.l.b16 %v1669
      %v1680 = vunpack.c.h.b16 %v1669
      %v1681 = vunpack.c.l.b16 %v1670
      %v1682 = vunpack.c.h.b16 %v1670
      %v1683 = vunpack.c.l.b16 %v1671
      %v1684 = vunpack.c.h.b16 %v1671
      %v1685 = vunpack.c.l.b16 %v1672
      %v1686 = vunpack.c.h.b16 %v1672
      %v1687 = vunpack.c.l.b16 %v1673
      %v1688 = vunpack.c.h.b16 %v1673
      %v1689 = vpack.c.b16 %v1679, %v1679
      %v1690 = vpack.c.b16 %v1680, %v1680
      %v1691 = vpack.c.b16 %v1681, %v1681
      %v1692 = vpack.c.b16 %v1682, %v1682
      %v1693 = vpack.c.b16 %v1683, %v1683
      %v1694 = vpack.c.b16 %v1684, %v1684
      %v1695 = vpack.c.b16 %v1685, %v1685
      %v1696 = vpack.c.b16 %v1686, %v1686
      %v1697 = vpack.c.b16 %v1687, %v1687
      %v1698 = vpack.c.b16 %v1688, %v1688
      %vm1709 = vcmask 257024
      %1710 = vst.msk [vmem:[%s172] sm:$0xf] %vm1709, %v1689
      %1711 = vst.msk [vmem:[%s172 + $0x4] sm:$0xf] %vm1709, %v1690
      %1712 = vst.msk [vmem:[%s172 + $0x8] sm:$0xf] %vm1709, %v1691
      %1713 = vst.msk [vmem:[%s172 + $0xc] sm:$0xf] %vm1709, %v1692
      %1714 = vst.msk [vmem:[%s172 + $0x10] sm:$0xf] %vm1709, %v1693
      %1715 = vst.msk [vmem:[%s172 + $0x14] sm:$0xf] %vm1709, %v1694
      %1716 = vst.msk [vmem:[%s172 + $0x18] sm:$0xf] %vm1709, %v1695
      %1717 = vst.msk [vmem:[%s172 + $0x1c] sm:$0xf] %vm1709, %v1696
      %1718 = vst.msk [vmem:[%s172 + $0x20] sm:$0xf] %vm1709, %v1697
      %vm1719 = vcmask 254976
      %1720 = vst.msk [vmem:[%s172 + $0x24] sm:$0x3] %vm1719, %v1698
      %s1721 = smul.u32 12, %s14
      %p1722 = scmp.lt.s32.totalorder %s1721, 23
      %s1723 = scalar_select %p1722, %s1721, 23
      %s1724 = smul.addr %s1723, 4
      %s1725 = scalar_lea.vmem %s3, %s1724
      // Predicated region
      $region33: #{cnn_base_forward.6} parent=31 // pred_check
        %p1726 = pneg %p100
      $region34: #{cnn_base_forward.6} parent=31 // pred_check_branch
        %1728 = sbr.rel (%p1726) target = $region36
      $region35: #{cnn_base_forward.6} parent=31 // pred_region
        %s1729 = smul.u32 12, %s14
      $region36: #{cnn_base_forward.6} parent=31 // pred_fallthru
        _
    $region32: #{cnn_base_forward.6} parent=5 // pred_fallthru
      _
    %p1730 = scmp.le.s32.totalorder 2, %s9
    // Predicated region
    $region37: #{cnn_base_forward.6} parent=5 // pred_check
      %p1731 = pneg %p1730
    $region38: #{cnn_base_forward.6} parent=5 // pred_check_branch
      %1733 = sbr.rel (%p1731) target = $region40
    $region39: #{cnn_base_forward.6} parent=5 // pred_region
      %s1734 = ssub.s32 %s9, 2
      // Predicated region
      $region41: #{cnn_base_forward.6} parent=39 // pred_check
        %p1735 = pneg %p106
      $region42: #{cnn_base_forward.6} parent=39 // pred_check_branch
        %1737 = sbr.rel (%p1735) target = $region44
      $region43: #{cnn_base_forward.6} parent=39 // pred_region
        %s1738 = smul.u32 12, %s15
        %p1739 = scmp.lt.s32.totalorder %s1738, 23
        %s1740 = scalar_select %p1739, %s1738, 23
        %s1741 = smul.addr %s1740, 4
        %s1742 = scalar_lea.vmem %s3, %s1741
      $region44: #{cnn_base_forward.6} parent=39 // pred_fallthru
        _
    $region40: #{cnn_base_forward.6} parent=5 // pred_fallthru
      _
  $region6: #{cnn_base_forward.6} parent=0 // loop_footer
    %s13 = sadd.s32 1, %s9
  $region7: #{cnn_base_forward.6} parent=0 // loop_footer_branch
    %8 = sbr.rel target = $region3
  $region8: #{cnn_base_forward.6} parent=0 // loop_exit
    _

// kernel: cnn_base_forward.7
$region0: #{cnn_base_forward.7}
  #allocation0 [shape = 'u32[]', space=smem, size = 0x4, offset = 0x4, fixed_abs, tag = 'smem constant byte address 0x4 - core index']
  #allocation1 [shape = 'u32[144,128]{1,0:T(1,128)}', space=vmem, size = 0x12000, scoped, tag = 'internal scratch']
  %s0 = inlined_call_operand.vmem [shape: bf16[2,1568], index: 0, kind: input, shape index: {}]
  %s1 = inlined_call_operand.vmem [shape: bf16[1568,512], index: 1, kind: input, shape index: {}]
  %s2 = inlined_call_operand.vmem [shape: f32[1,512], index: 2, kind: input, shape index: {}]
  %s3 = inlined_call_operand.vmem [shape: bf16[512,128], index: 3, kind: input, shape index: {}]
  %s4 = inlined_call_operand.vmem [shape: f32[1,128], index: 4, kind: input, shape index: {}]
  %s5 = inlined_call_operand.hbm [shape: bf16[2,512], index: 5, kind: output, shape index: {0}]
  %s6 = inlined_call_operand.vmem [shape: f32[2,128], index: 6, kind: output, shape index: {1}]
  %7 = xla_tuple %s5, %s6
  %s8 = sld [smem:[#allocation0]]
  $region38: #{cnn_base_forward.7} parent=0
    _
  %s10 = ssub.s32 1, %s8
  %s11 = scalar_select 0, %s10, %s8
  $region1: #{cnn_base_forward.7} parent=0
    #allocation2 [shape = 'u8[2048]{0}', space=vmem, size = 0x800, scoped, tag = 'output window, operand 0, single buffered']
    #allocation3 [shape = 's32[1]{0}', space=sflag, size = 0x4, scoped, tag = 'scoped memory for cnn_base_forward.7']
    %12 = vsyncpa [#allocation3], 0
    // Predicated region
    $region2: #{cnn_base_forward.7} parent=1 // pred_check
      _
    $region3: #{cnn_base_forward.7} parent=1 // pred_check_branch
      %14 = sbr.rel (0) target = $region5
    $region4: #{cnn_base_forward.7} parent=1 // pred_region
      _
    $region5: #{cnn_base_forward.7} parent=1 // pred_fallthru
      _
    // Predicated region
    $region6: #{cnn_base_forward.7} parent=1 // pred_check
      _
    $region7: #{cnn_base_forward.7} parent=1 // pred_check_branch
      %16 = sbr.rel (0) target = $region9
    $region8: #{cnn_base_forward.7} parent=1 // pred_region
      _
    $region9: #{cnn_base_forward.7} parent=1 // pred_fallthru
      _
    // Predicated region
    $region10: #{cnn_base_forward.7} parent=1 // pred_check
      _
    $region11: #{cnn_base_forward.7} parent=1 // pred_check_branch
      %18 = sbr.rel (0) target = $region13
    $region12: #{cnn_base_forward.7} parent=1 // pred_region
      _
    $region13: #{cnn_base_forward.7} parent=1 // pred_fallthru
      _
    // Predicated region
    $region14: #{cnn_base_forward.7} parent=1 // pred_check
      _
    $region15: #{cnn_base_forward.7} parent=1 // pred_check_branch
      %20 = sbr.rel (0) target = $region17
    $region16: #{cnn_base_forward.7} parent=1 // pred_region
      _
    $region17: #{cnn_base_forward.7} parent=1 // pred_fallthru
      _
    // Predicated region
    $region18: #{cnn_base_forward.7} parent=1 // pred_check
      _
    $region19: #{cnn_base_forward.7} parent=1 // pred_check_branch
      %22 = sbr.rel (0) target = $region21
    $region20: #{cnn_base_forward.7} parent=1 // pred_region
      _
    $region21: #{cnn_base_forward.7} parent=1 // pred_fallthru
      _
    %v24 = vld [vmem:[%s0] sm:$0xff]
    %v25 = vld [vmem:[%s0 + $0x8] sm:$0x1f]
    %v26 = vld [vmem:[%s1] sm:$0xff]
    %v27 = vld [vmem:[%s1 + $0x8] sm:$0xff]
    %v28 = vld [vmem:[%s1 + $0x10] sm:$0xff]
    %v29 = vld [vmem:[%s1 + $0x18] sm:$0xff]
    %v30 = vld [vmem:[%s1 + $0x20] sm:$0xff]
    %v31 = vld [vmem:[%s1 + $0x28] sm:$0xff]
    %v32 = vld [vmem:[%s1 + $0x30] sm:$0xff]
    %v33 = vld [vmem:[%s1 + $0x38] sm:$0xff]
    %v34 = vld [vmem:[%s1 + $0x40] sm:$0xff]
    %v35 = vld [vmem:[%s1 + $0x48] sm:$0xff]
    %v36 = vld [vmem:[%s1 + $0x50] sm:$0xff]
    %v37 = vld [vmem:[%s1 + $0x58] sm:$0xff]
    %v38 = vld [vmem:[%s1 + $0x60] sm:$0xff]
    %v39 = vld [vmem:[%s1 + $0x68] sm:$0xff]
    %v40 = vld [vmem:[%s1 + $0x70] sm:$0xff]
    %v41 = vld [vmem:[%s1 + $0x78] sm:$0xff]
    %v42 = vld [vmem:[%s1 + $0x80] sm:$0xff]
    %v43 = vld [vmem:[%s1 + $0x88] sm:$0xff]
    %v44 = vld [vmem:[%s1 + $0x90] sm:$0xff]
    %v45 = vld [vmem:[%s1 + $0x98] sm:$0xff]
    %v46 = vld [vmem:[%s1 + $0xa0] sm:$0xff]
    %v47 = vld [vmem:[%s1 + $0xa8] sm:$0xff]
    %v48 = vld [vmem:[%s1 + $0xb0] sm:$0xff]
    %v49 = vld [vmem:[%s1 + $0xb8] sm:$0xff]
    %v50 = vld [vmem:[%s1 + $0xc0] sm:$0xff]
    %v51 = vld [vmem:[%s1 + $0xc8] sm:$0xff]
    %v52 = vld [vmem:[%s1 + $0xd0] sm:$0xff]
    %v53 = vld [vmem:[%s1 + $0xd8] sm:$0xff]
    %v54 = vld [vmem:[%s1 + $0xe0] sm:$0xff]
    %v55 = vld [vmem:[%s1 + $0xe8] sm:$0xff]
    %v56 = vld [vmem:[%s1 + $0xf0] sm:$0xff]
    %v57 = vld [vmem:[%s1 + $0xf8] sm:$0xff]
    %v58 = vld [vmem:[%s1 + $0x100] sm:$0xff]
    %v59 = vld [vmem:[%s1 + $0x108] sm:$0xff]
    %v60 = vld [vmem:[%s1 + $0x110] sm:$0xff]
    %v61 = vld [vmem:[%s1 + $0x118] sm:$0xff]
    %v62 = vld [vmem:[%s1 + $0x120] sm:$0xff]
    %v63 = vld [vmem:[%s1 + $0x128] sm:$0xff]
    %v64 = vld [vmem:[%s1 + $0x130] sm:$0xff]
    %v65 = vld [vmem:[%s1 + $0x138] sm:$0xff]
    %v66 = vld [vmem:[%s1 + $0x140] sm:$0xff]
    %v67 = vld [vmem:[%s1 + $0x148] sm:$0xff]
    %v68 = vld [vmem:[%s1 + $0x150] sm:$0xff]
    %v69 = vld [vmem:[%s1 + $0x158] sm:$0xff]
    %v70 = vld [vmem:[%s1 + $0x160] sm:$0xff]
    %v71 = vld [vmem:[%s1 + $0x168] sm:$0xff]
    %v72 = vld [vmem:[%s1 + $0x170] sm:$0xff]
    %v73 = vld [vmem:[%s1 + $0x178] sm:$0xff]
    %v74 = vld [vmem:[%s1 + $0x180] sm:$0xff]
    %v75 = vld [vmem:[%s1 + $0x188] sm:$0xff]
    %v76 = vld [vmem:[%s1 + $0x190] sm:$0xff]
    %v77 = vld [vmem:[%s1 + $0x198] sm:$0xff]
    %v78 = vld [vmem:[%s1 + $0x1a0] sm:$0xff]
    %v79 = vld [vmem:[%s1 + $0x1a8] sm:$0xff]
    %v80 = vld [vmem:[%s1 + $0x1b0] sm:$0xff]
    %v81 = vld [vmem:[%s1 + $0x1b8] sm:$0xff]
    %v82 = vld [vmem:[%s1 + $0x1c0] sm:$0xff]
    %v83 = vld [vmem:[%s1 + $0x1c8] sm:$0xff]
    %v84 = vld [vmem:[%s1 + $0x1d0] sm:$0xff]
    %v85 = vld [vmem:[%s1 + $0x1d8] sm:$0xff]
    %v86 = vld [vmem:[%s1 + $0x1e0] sm:$0xff]
    %v87 = vld [vmem:[%s1 + $0x1e8] sm:$0xff]
    %v88 = vld [vmem:[%s1 + $0x1f0] sm:$0xff]
    %v89 = vld [vmem:[%s1 + $0x1f8] sm:$0xff]
    %v90 = vld [vmem:[%s1 + $0x200] sm:$0xff]
    %v91 = vld [vmem:[%s1 + $0x208] sm:$0xff]
    %v92 = vld [vmem:[%s1 + $0x210] sm:$0xff]
    %v93 = vld [vmem:[%s1 + $0x218] sm:$0xff]
    %v94 = vld [vmem:[%s1 + $0x220] sm:$0xff]
    %v95 = vld [vmem:[%s1 + $0x228] sm:$0xff]
    %v96 = vld [vmem:[%s1 + $0x230] sm:$0xff]
    %v97 = vld [vmem:[%s1 + $0x238] sm:$0xff]
    %v98 = vld [vmem:[%s1 + $0x240] sm:$0xff]
    %v99 = vld [vmem:[%s1 + $0x248] sm:$0xff]
    %v100 = vld [vmem:[%s1 + $0x250] sm:$0xff]
    %v101 = vld [vmem:[%s1 + $0x258] sm:$0xff]
    %v102 = vld [vmem:[%s1 + $0x260] sm:$0xff]
    %v103 = vld [vmem:[%s1 + $0x268] sm:$0xff]
    %v104 = vld [vmem:[%s1 + $0x270] sm:$0xff]
    %v105 = vld [vmem:[%s1 + $0x278] sm:$0xff]
    %v106 = vld [vmem:[%s1 + $0x280] sm:$0xff]
    %v107 = vld [vmem:[%s1 + $0x288] sm:$0xff]
    %v108 = vld [vmem:[%s1 + $0x290] sm:$0xff]
    %v109 = vld [vmem:[%s1 + $0x298] sm:$0xff]
    %v110 = vld [vmem:[%s1 + $0x2a0] sm:$0xff]
    %v111 = vld [vmem:[%s1 + $0x2a8] sm:$0xff]
    %v112 = vld [vmem:[%s1 + $0x2b0] sm:$0xff]
    %v113 = vld [vmem:[%s1 + $0x2b8] sm:$0xff]
    %v114 = vld [vmem:[%s1 + $0x2c0] sm:$0xff]
    %v115 = vld [vmem:[%s1 + $0x2c8] sm:$0xff]
    %v116 = vld [vmem:[%s1 + $0x2d0] sm:$0xff]
    %v117 = vld [vmem:[%s1 + $0x2d8] sm:$0xff]
    %v118 = vld [vmem:[%s1 + $0x2e0] sm:$0xff]
    %v119 = vld [vmem:[%s1 + $0x2e8] sm:$0xff]
    %v120 = vld [vmem:[%s1 + $0x2f0] sm:$0xff]
    %v121 = vld [vmem:[%s1 + $0x2f8] sm:$0xff]
    %v122 = vld [vmem:[%s1 + $0x300] sm:$0xff]
    %v123 = vld [vmem:[%s1 + $0x308] sm:$0xff]
    %v124 = vld [vmem:[%s1 + $0x310] sm:$0xff]
    %v125 = vld [vmem:[%s1 + $0x318] sm:$0xff]
    %v126 = vld [vmem:[%s1 + $0x320] sm:$0xff]
    %v127 = vld [vmem:[%s1 + $0x328] sm:$0xff]
    %v128 = vld [vmem:[%s1 + $0x330] sm:$0xff]
    %v129 = vld [vmem:[%s1 + $0x338] sm:$0xff]
    %v130 = vld [vmem:[%s1 + $0x340] sm:$0xff]
    %v131 = vld [vmem:[%s1 + $0x348] sm:$0xff]
    %v132 = vld [vmem:[%s1 + $0x350] sm:$0xff]
    %v133 = vld [vmem:[%s1 + $0x358] sm:$0xff]
    %v134 = vld [vmem:[%s1 + $0x360] sm:$0xff]
    %v135 = vld [vmem:[%s1 + $0x368] sm:$0xff]
    %v136 = vld [vmem:[%s1 + $0x370] sm:$0xff]
    %v137 = vld [vmem:[%s1 + $0x378] sm:$0xff]
    %v138 = vld [vmem:[%s1 + $0x380] sm:$0xff]
    %v139 = vld [vmem:[%s1 + $0x388] sm:$0xff]
    %v140 = vld [vmem:[%s1 + $0x390] sm:$0xff]
    %v141 = vld [vmem:[%s1 + $0x398] sm:$0xff]
    %v142 = vld [vmem:[%s1 + $0x3a0] sm:$0xff]
    %v143 = vld [vmem:[%s1 + $0x3a8] sm:$0xff]
    %v144 = vld [vmem:[%s1 + $0x3b0] sm:$0xff]
    %v145 = vld [vmem:[%s1 + $0x3b8] sm:$0xff]
    %v146 = vld [vmem:[%s1 + $0x3c0] sm:$0xff]
    %v147 = vld [vmem:[%s1 + $0x3c8] sm:$0xff]
    %v148 = vld [vmem:[%s1 + $0x3d0] sm:$0xff]
    %v149 = vld [vmem:[%s1 + $0x3d8] sm:$0xff]
    %v150 = vld [vmem:[%s1 + $0x3e0] sm:$0xff]
    %v151 = vld [vmem:[%s1 + $0x3e8] sm:$0xff]
    %v152 = vld [vmem:[%s1 + $0x3f0] sm:$0xff]
    %v153 = vld [vmem:[%s1 + $0x3f8] sm:$0xff]
    %v154 = vld [vmem:[%s1 + $0x400] sm:$0xff]
    %v155 = vld [vmem:[%s1 + $0x408] sm:$0xff]
    %v156 = vld [vmem:[%s1 + $0x410] sm:$0xff]
    %v157 = vld [vmem:[%s1 + $0x418] sm:$0xff]
    %v158 = vld [vmem:[%s1 + $0x420] sm:$0xff]
    %v159 = vld [vmem:[%s1 + $0x428] sm:$0xff]
    %v160 = vld [vmem:[%s1 + $0x430] sm:$0xff]
    %v161 = vld [vmem:[%s1 + $0x438] sm:$0xff]
    %v162 = vld [vmem:[%s1 + $0x440] sm:$0xff]
    %v163 = vld [vmem:[%s1 + $0x448] sm:$0xff]
    %v164 = vld [vmem:[%s1 + $0x450] sm:$0xff]
    %v165 = vld [vmem:[%s1 + $0x458] sm:$0xff]
    %v166 = vld [vmem:[%s1 + $0x460] sm:$0xff]
    %v167 = vld [vmem:[%s1 + $0x468] sm:$0xff]
    %v168 = vld [vmem:[%s1 + $0x470] sm:$0xff]
    %v169 = vld [vmem:[%s1 + $0x478] sm:$0xff]
    %v170 = vld [vmem:[%s1 + $0x480] sm:$0xff]
    %v171 = vld [vmem:[%s1 + $0x488] sm:$0xff]
    %v172 = vld [vmem:[%s1 + $0x490] sm:$0xff]
    %v173 = vld [vmem:[%s1 + $0x498] sm:$0xff]
    %v174 = vld [vmem:[%s1 + $0x4a0] sm:$0xff]
    %v175 = vld [vmem:[%s1 + $0x4a8] sm:$0xff]
    %v176 = vld [vmem:[%s1 + $0x4b0] sm:$0xff]
    %v177 = vld [vmem:[%s1 + $0x4b8] sm:$0xff]
    %v178 = vld [vmem:[%s1 + $0x4c0] sm:$0xff]
    %v179 = vld [vmem:[%s1 + $0x4c8] sm:$0xff]
    %v180 = vld [vmem:[%s1 + $0x4d0] sm:$0xff]
    %v181 = vld [vmem:[%s1 + $0x4d8] sm:$0xff]
    %v182 = vld [vmem:[%s1 + $0x4e0] sm:$0xff]
    %v183 = vld [vmem:[%s1 + $0x4e8] sm:$0xff]
    %v184 = vld [vmem:[%s1 + $0x4f0] sm:$0xff]
    %v185 = vld [vmem:[%s1 + $0x4f8] sm:$0xff]
    %v186 = vld [vmem:[%s1 + $0x500] sm:$0xff]
    %v187 = vld [vmem:[%s1 + $0x508] sm:$0xff]
    %v188 = vld [vmem:[%s1 + $0x510] sm:$0xff]
    %v189 = vld [vmem:[%s1 + $0x518] sm:$0xff]
    %v190 = vld [vmem:[%s1 + $0x520] sm:$0xff]
    %v191 = vld [vmem:[%s1 + $0x528] sm:$0xff]
    %v192 = vld [vmem:[%s1 + $0x530] sm:$0xff]
    %v193 = vld [vmem:[%s1 + $0x538] sm:$0xff]
    %v194 = vld [vmem:[%s1 + $0x540] sm:$0xff]
    %v195 = vld [vmem:[%s1 + $0x548] sm:$0xff]
    %v196 = vld [vmem:[%s1 + $0x550] sm:$0xff]
    %v197 = vld [vmem:[%s1 + $0x558] sm:$0xff]
    %v198 = vld [vmem:[%s1 + $0x560] sm:$0xff]
    %v199 = vld [vmem:[%s1 + $0x568] sm:$0xff]
    %v200 = vld [vmem:[%s1 + $0x570] sm:$0xff]
    %v201 = vld [vmem:[%s1 + $0x578] sm:$0xff]
    %v202 = vld [vmem:[%s1 + $0x580] sm:$0xff]
    %v203 = vld [vmem:[%s1 + $0x588] sm:$0xff]
    %v204 = vld [vmem:[%s1 + $0x590] sm:$0xff]
    %v205 = vld [vmem:[%s1 + $0x598] sm:$0xff]
    %v206 = vld [vmem:[%s1 + $0x5a0] sm:$0xff]
    %v207 = vld [vmem:[%s1 + $0x5a8] sm:$0xff]
    %v208 = vld [vmem:[%s1 + $0x5b0] sm:$0xff]
    %v209 = vld [vmem:[%s1 + $0x5b8] sm:$0xff]
    %v210 = vld [vmem:[%s1 + $0x5c0] sm:$0xff]
    %v211 = vld [vmem:[%s1 + $0x5c8] sm:$0xff]
    %v212 = vld [vmem:[%s1 + $0x5d0] sm:$0xff]
    %v213 = vld [vmem:[%s1 + $0x5d8] sm:$0xff]
    %v214 = vld [vmem:[%s1 + $0x5e0] sm:$0xff]
    %v215 = vld [vmem:[%s1 + $0x5e8] sm:$0xff]
    %v216 = vld [vmem:[%s1 + $0x5f0] sm:$0xff]
    %v217 = vld [vmem:[%s1 + $0x5f8] sm:$0xff]
    %v218 = vld [vmem:[%s1 + $0x600] sm:$0xff]
    %v219 = vld [vmem:[%s1 + $0x608] sm:$0xff]
    %v220 = vld [vmem:[%s1 + $0x610] sm:$0xff]
    %v221 = vld [vmem:[%s1 + $0x618] sm:$0xff]
    %v222 = vld [vmem:[%s1 + $0x620] sm:$0xff]
    %v223 = vld [vmem:[%s1 + $0x628] sm:$0xff]
    %v224 = vld [vmem:[%s1 + $0x630] sm:$0xff]
    %v225 = vld [vmem:[%s1 + $0x638] sm:$0xff]
    %v226 = vld [vmem:[%s1 + $0x640] sm:$0xff]
    %v227 = vld [vmem:[%s1 + $0x648] sm:$0xff]
    %v228 = vld [vmem:[%s1 + $0x650] sm:$0xff]
    %v229 = vld [vmem:[%s1 + $0x658] sm:$0xff]
    %v230 = vld [vmem:[%s1 + $0x660] sm:$0xff]
    %v231 = vld [vmem:[%s1 + $0x668] sm:$0xff]
    %v232 = vld [vmem:[%s1 + $0x670] sm:$0xff]
    %v233 = vld [vmem:[%s1 + $0x678] sm:$0xff]
    %v234 = vld [vmem:[%s1 + $0x680] sm:$0xff]
    %v235 = vld [vmem:[%s1 + $0x688] sm:$0xff]
    %v236 = vld [vmem:[%s1 + $0x690] sm:$0xff]
    %v237 = vld [vmem:[%s1 + $0x698] sm:$0xff]
    %v238 = vld [vmem:[%s1 + $0x6a0] sm:$0xff]
    %v239 = vld [vmem:[%s1 + $0x6a8] sm:$0xff]
    %v240 = vld [vmem:[%s1 + $0x6b0] sm:$0xff]
    %v241 = vld [vmem:[%s1 + $0x6b8] sm:$0xff]
    %v242 = vld [vmem:[%s1 + $0x6c0] sm:$0xff]
    %v243 = vld [vmem:[%s1 + $0x6c8] sm:$0xff]
    %v244 = vld [vmem:[%s1 + $0x6d0] sm:$0xff]
    %v245 = vld [vmem:[%s1 + $0x6d8] sm:$0xff]
    %v246 = vld [vmem:[%s1 + $0x6e0] sm:$0xff]
    %v247 = vld [vmem:[%s1 + $0x6e8] sm:$0xff]
    %v248 = vld [vmem:[%s1 + $0x6f0] sm:$0xff]
    %v249 = vld [vmem:[%s1 + $0x6f8] sm:$0xff]
    %v250 = vld [vmem:[%s1 + $0x700] sm:$0xff]
    %v251 = vld [vmem:[%s1 + $0x708] sm:$0xff]
    %v252 = vld [vmem:[%s1 + $0x710] sm:$0xff]
    %v253 = vld [vmem:[%s1 + $0x718] sm:$0xff]
    %v254 = vld [vmem:[%s1 + $0x720] sm:$0xff]
    %v255 = vld [vmem:[%s1 + $0x728] sm:$0xff]
    %v256 = vld [vmem:[%s1 + $0x730] sm:$0xff]
    %v257 = vld [vmem:[%s1 + $0x738] sm:$0xff]
    %v258 = vld [vmem:[%s1 + $0x740] sm:$0xff]
    %v259 = vld [vmem:[%s1 + $0x748] sm:$0xff]
    %v260 = vld [vmem:[%s1 + $0x750] sm:$0xff]
    %v261 = vld [vmem:[%s1 + $0x758] sm:$0xff]
    %v262 = vld [vmem:[%s1 + $0x760] sm:$0xff]
    %v263 = vld [vmem:[%s1 + $0x768] sm:$0xff]
    %v264 = vld [vmem:[%s1 + $0x770] sm:$0xff]
    %v265 = vld [vmem:[%s1 + $0x778] sm:$0xff]
    %v266 = vld [vmem:[%s1 + $0x780] sm:$0xff]
    %v267 = vld [vmem:[%s1 + $0x788] sm:$0xff]
    %v268 = vld [vmem:[%s1 + $0x790] sm:$0xff]
    %v269 = vld [vmem:[%s1 + $0x798] sm:$0xff]
    %v270 = vld [vmem:[%s1 + $0x7a0] sm:$0xff]
    %v271 = vld [vmem:[%s1 + $0x7a8] sm:$0xff]
    %v272 = vld [vmem:[%s1 + $0x7b0] sm:$0xff]
    %v273 = vld [vmem:[%s1 + $0x7b8] sm:$0xff]
    %v274 = vld [vmem:[%s1 + $0x7c0] sm:$0xff]
    %v275 = vld [vmem:[%s1 + $0x7c8] sm:$0xff]
    %v276 = vld [vmem:[%s1 + $0x7d0] sm:$0xff]
    %v277 = vld [vmem:[%s1 + $0x7d8] sm:$0xff]
    %v278 = vld [vmem:[%s1 + $0x7e0] sm:$0xff]
    %v279 = vld [vmem:[%s1 + $0x7e8] sm:$0xff]
    %v280 = vld [vmem:[%s1 + $0x7f0] sm:$0xff]
    %v281 = vld [vmem:[%s1 + $0x7f8] sm:$0xff]
    %v282 = vld [vmem:[%s1 + $0x800] sm:$0xff]
    %v283 = vld [vmem:[%s1 + $0x808] sm:$0xff]
    %v284 = vld [vmem:[%s1 + $0x810] sm:$0xff]
    %v285 = vld [vmem:[%s1 + $0x818] sm:$0xff]
    %v286 = vld [vmem:[%s1 + $0x820] sm:$0xff]
    %v287 = vld [vmem:[%s1 + $0x828] sm:$0xff]
    %v288 = vld [vmem:[%s1 + $0x830] sm:$0xff]
    %v289 = vld [vmem:[%s1 + $0x838] sm:$0xff]
    %v290 = vld [vmem:[%s1 + $0x840] sm:$0xff]
    %v291 = vld [vmem:[%s1 + $0x848] sm:$0xff]
    %v292 = vld [vmem:[%s1 + $0x850] sm:$0xff]
    %v293 = vld [vmem:[%s1 + $0x858] sm:$0xff]
    %v294 = vld [vmem:[%s1 + $0x860] sm:$0xff]
    %v295 = vld [vmem:[%s1 + $0x868] sm:$0xff]
    %v296 = vld [vmem:[%s1 + $0x870] sm:$0xff]
    %v297 = vld [vmem:[%s1 + $0x878] sm:$0xff]
    %v298 = vld [vmem:[%s1 + $0x880] sm:$0xff]
    %v299 = vld [vmem:[%s1 + $0x888] sm:$0xff]
    %v300 = vld [vmem:[%s1 + $0x890] sm:$0xff]
    %v301 = vld [vmem:[%s1 + $0x898] sm:$0xff]
    %v302 = vld [vmem:[%s1 + $0x8a0] sm:$0xff]
    %v303 = vld [vmem:[%s1 + $0x8a8] sm:$0xff]
    %v304 = vld [vmem:[%s1 + $0x8b0] sm:$0xff]
    %v305 = vld [vmem:[%s1 + $0x8b8] sm:$0xff]
    %v306 = vld [vmem:[%s1 + $0x8c0] sm:$0xff]
    %v307 = vld [vmem:[%s1 + $0x8c8] sm:$0xff]
    %v308 = vld [vmem:[%s1 + $0x8d0] sm:$0xff]
    %v309 = vld [vmem:[%s1 + $0x8d8] sm:$0xff]
    %v310 = vld [vmem:[%s1 + $0x8e0] sm:$0xff]
    %v311 = vld [vmem:[%s1 + $0x8e8] sm:$0xff]
    %v312 = vld [vmem:[%s1 + $0x8f0] sm:$0xff]
    %v313 = vld [vmem:[%s1 + $0x8f8] sm:$0xff]
    %v314 = vld [vmem:[%s1 + $0x900] sm:$0xff]
    %v315 = vld [vmem:[%s1 + $0x908] sm:$0xff]
    %v316 = vld [vmem:[%s1 + $0x910] sm:$0xff]
    %v317 = vld [vmem:[%s1 + $0x918] sm:$0xff]
    %v318 = vld [vmem:[%s1 + $0x920] sm:$0xff]
    %v319 = vld [vmem:[%s1 + $0x928] sm:$0xff]
    %v320 = vld [vmem:[%s1 + $0x930] sm:$0xff]
    %v321 = vld [vmem:[%s1 + $0x938] sm:$0xff]
    %v322 = vld [vmem:[%s1 + $0x940] sm:$0xff]
    %v323 = vld [vmem:[%s1 + $0x948] sm:$0xff]
    %v324 = vld [vmem:[%s1 + $0x950] sm:$0xff]
    %v325 = vld [vmem:[%s1 + $0x958] sm:$0xff]
    %v326 = vld [vmem:[%s1 + $0x960] sm:$0xff]
    %v327 = vld [vmem:[%s1 + $0x968] sm:$0xff]
    %v328 = vld [vmem:[%s1 + $0x970] sm:$0xff]
    %v329 = vld [vmem:[%s1 + $0x978] sm:$0xff]
    %v330 = vld [vmem:[%s1 + $0x980] sm:$0xff]
    %v331 = vld [vmem:[%s1 + $0x988] sm:$0xff]
    %v332 = vld [vmem:[%s1 + $0x990] sm:$0xff]
    %v333 = vld [vmem:[%s1 + $0x998] sm:$0xff]
    %v334 = vld [vmem:[%s1 + $0x9a0] sm:$0xff]
    %v335 = vld [vmem:[%s1 + $0x9a8] sm:$0xff]
    %v336 = vld [vmem:[%s1 + $0x9b0] sm:$0xff]
    %v337 = vld [vmem:[%s1 + $0x9b8] sm:$0xff]
    %v338 = vld [vmem:[%s1 + $0x9c0] sm:$0xff]
    %v339 = vld [vmem:[%s1 + $0x9c8] sm:$0xff]
    %v340 = vld [vmem:[%s1 + $0x9d0] sm:$0xff]
    %v341 = vld [vmem:[%s1 + $0x9d8] sm:$0xff]
    %v342 = vld [vmem:[%s1 + $0x9e0] sm:$0xff]
    %v343 = vld [vmem:[%s1 + $0x9e8] sm:$0xff]
    %v344 = vld [vmem:[%s1 + $0x9f0] sm:$0xff]
    %v345 = vld [vmem:[%s1 + $0x9f8] sm:$0xff]
    %v346 = vld [vmem:[%s1 + $0xa00] sm:$0xff]
    %v347 = vld [vmem:[%s1 + $0xa08] sm:$0xff]
    %v348 = vld [vmem:[%s1 + $0xa10] sm:$0xff]
    %v349 = vld [vmem:[%s1 + $0xa18] sm:$0xff]
    %v350 = vld [vmem:[%s1 + $0xa20] sm:$0xff]
    %v351 = vld [vmem:[%s1 + $0xa28] sm:$0xff]
    %v352 = vld [vmem:[%s1 + $0xa30] sm:$0xff]
    %v353 = vld [vmem:[%s1 + $0xa38] sm:$0xff]
    %v354 = vld [vmem:[%s1 + $0xa40] sm:$0xff]
    %v355 = vld [vmem:[%s1 + $0xa48] sm:$0xff]
    %v356 = vld [vmem:[%s1 + $0xa50] sm:$0xff]
    %v357 = vld [vmem:[%s1 + $0xa58] sm:$0xff]
    %v358 = vld [vmem:[%s1 + $0xa60] sm:$0xff]
    %v359 = vld [vmem:[%s1 + $0xa68] sm:$0xff]
    %v360 = vld [vmem:[%s1 + $0xa70] sm:$0xff]
    %v361 = vld [vmem:[%s1 + $0xa78] sm:$0xff]
    %v362 = vld [vmem:[%s1 + $0xa80] sm:$0xff]
    %v363 = vld [vmem:[%s1 + $0xa88] sm:$0xff]
    %v364 = vld [vmem:[%s1 + $0xa90] sm:$0xff]
    %v365 = vld [vmem:[%s1 + $0xa98] sm:$0xff]
    %v366 = vld [vmem:[%s1 + $0xaa0] sm:$0xff]
    %v367 = vld [vmem:[%s1 + $0xaa8] sm:$0xff]
    %v368 = vld [vmem:[%s1 + $0xab0] sm:$0xff]
    %v369 = vld [vmem:[%s1 + $0xab8] sm:$0xff]
    %v370 = vld [vmem:[%s1 + $0xac0] sm:$0xff]
    %v371 = vld [vmem:[%s1 + $0xac8] sm:$0xff]
    %v372 = vld [vmem:[%s1 + $0xad0] sm:$0xff]
    %v373 = vld [vmem:[%s1 + $0xad8] sm:$0xff]
    %v374 = vld [vmem:[%s1 + $0xae0] sm:$0xff]
    %v375 = vld [vmem:[%s1 + $0xae8] sm:$0xff]
    %v376 = vld [vmem:[%s1 + $0xaf0] sm:$0xff]
    %v377 = vld [vmem:[%s1 + $0xaf8] sm:$0xff]
    %v378 = vld [vmem:[%s1 + $0xb00] sm:$0xff]
    %v379 = vld [vmem:[%s1 + $0xb08] sm:$0xff]
    %v380 = vld [vmem:[%s1 + $0xb10] sm:$0xff]
    %v381 = vld [vmem:[%s1 + $0xb18] sm:$0xff]
    %v382 = vld [vmem:[%s1 + $0xb20] sm:$0xff]
    %v383 = vld [vmem:[%s1 + $0xb28] sm:$0xff]
    %v384 = vld [vmem:[%s1 + $0xb30] sm:$0xff]
    %v385 = vld [vmem:[%s1 + $0xb38] sm:$0xff]
    %v386 = vld [vmem:[%s1 + $0xb40] sm:$0xff]
    %v387 = vld [vmem:[%s1 + $0xb48] sm:$0xff]
    %v388 = vld [vmem:[%s1 + $0xb50] sm:$0xff]
    %v389 = vld [vmem:[%s1 + $0xb58] sm:$0xff]
    %v390 = vld [vmem:[%s1 + $0xb60] sm:$0xff]
    %v391 = vld [vmem:[%s1 + $0xb68] sm:$0xff]
    %v392 = vld [vmem:[%s1 + $0xb70] sm:$0xff]
    %v393 = vld [vmem:[%s1 + $0xb78] sm:$0xff]
    %v394 = vld [vmem:[%s1 + $0xb80] sm:$0xff]
    %v395 = vld [vmem:[%s1 + $0xb88] sm:$0xff]
    %v396 = vld [vmem:[%s1 + $0xb90] sm:$0xff]
    %v397 = vld [vmem:[%s1 + $0xb98] sm:$0xff]
    %v398 = vld [vmem:[%s1 + $0xba0] sm:$0xff]
    %v399 = vld [vmem:[%s1 + $0xba8] sm:$0xff]
    %v400 = vld [vmem:[%s1 + $0xbb0] sm:$0xff]
    %v401 = vld [vmem:[%s1 + $0xbb8] sm:$0xff]
    %v402 = vld [vmem:[%s1 + $0xbc0] sm:$0xff]
    %v403 = vld [vmem:[%s1 + $0xbc8] sm:$0xff]
    %v404 = vld [vmem:[%s1 + $0xbd0] sm:$0xff]
    %v405 = vld [vmem:[%s1 + $0xbd8] sm:$0xff]
    %v406 = vld [vmem:[%s1 + $0xbe0] sm:$0xff]
    %v407 = vld [vmem:[%s1 + $0xbe8] sm:$0xff]
    %v408 = vld [vmem:[%s1 + $0xbf0] sm:$0xff]
    %v409 = vld [vmem:[%s1 + $0xbf8] sm:$0xff]
    %v410 = vld [vmem:[%s1 + $0xc00] sm:$0xff]
    %v411 = vld [vmem:[%s1 + $0xc08] sm:$0xff]
    %v412 = vld [vmem:[%s1 + $0xc10] sm:$0xff]
    %v413 = vld [vmem:[%s1 + $0xc18] sm:$0xff]
    %v414 = vld [vmem:[%s1 + $0xc20] sm:$0xff]
    %v415 = vld [vmem:[%s1 + $0xc28] sm:$0xff]
    %v416 = vld [vmem:[%s1 + $0xc30] sm:$0xff]
    %v417 = vld [vmem:[%s1 + $0xc38] sm:$0xff]
    %v418 = vld [vmem:[%s2] sm:$0xf]
    %v420 = vlaneseq
    %v421 = vshrl.u32 %v420, 7
    %v422 = vsub.s32 0, %v421
    %v423 = vrot.slane %v418, %v422
    %v424 = vlaneseq
    %v425 = vshrl.u32 %v424, 7
    %v426 = vsub.s32 1, %v425
    %v427 = vrot.slane %v418, %v426
    %v428 = vlaneseq
    %v429 = vshrl.u32 %v428, 7
    %v430 = vsub.s32 2, %v429
    %v431 = vrot.slane %v418, %v430
    %v432 = vlaneseq
    %v433 = vshrl.u32 %v432, 7
    %v434 = vsub.s32 3, %v433
    %v435 = vrot.slane %v418, %v434
    %v442 = vcombine.high %v24, %v24
    %v444 = vunpack.c.l.s4 1966171168
    %v445 = vunpack.c.0.s8 %v444
    %v446 = vlaneseq
    %v447 = vshrl.u32 %v446, 7
    %v448 = vsub.s32 %v445, %v447
    %v449 = vrot.slane %v24, %v448
    %v451 = vunpack.c.l.s4 1966171168
    %v452 = vunpack.c.0.s8 %v451
    %v453 = vlaneseq
    %v454 = vshrl.u32 %v453, 7
    %v455 = vsub.s32 %v452, %v454
    %v456 = vrot.slane %v442, %v455
    %v457 = vcombine.high %v449, %v449
    %v458 = vcombine.high %v456, %v456
    %v460 = vunpack.c.l.s4 1966171168
    %v461 = vunpack.c.0.s8 %v460
    %v462 = vlaneseq
    %v463 = vshrl.u32 %v462, 7
    %v464 = vsub.s32 %v461, %v463
    %v465 = vrot.slane %v449, %v464
    %v467 = vunpack.c.l.s4 1966171168
    %v468 = vunpack.c.0.s8 %v467
    %v469 = vlaneseq
    %v470 = vshrl.u32 %v469, 7
    %v471 = vsub.s32 %v468, %v470
    %v472 = vrot.slane %v456, %v471
    %v474 = vunpack.c.l.s4 1966171168
    %v475 = vunpack.c.0.s8 %v474
    %v476 = vlaneseq
    %v477 = vshrl.u32 %v476, 7
    %v478 = vsub.s32 %v475, %v477
    %v479 = vrot.slane %v457, %v478
    %v481 = vunpack.c.l.s4 1966171168
    %v482 = vunpack.c.0.s8 %v481
    %v483 = vlaneseq
    %v484 = vshrl.u32 %v483, 7
    %v485 = vsub.s32 %v482, %v484
    %v486 = vrot.slane %v458, %v485
    %v487 = vcombine.high %v465, %v465
    %v488 = vcombine.high %v472, %v472
    %v489 = vcombine.high %v479, %v479
    %v490 = vcombine.high %v486, %v486
    %v491 = vcombine.high %v25, %v25
    %v493 = vunpack.c.l.s4 1966171168
    %v494 = vunpack.c.0.s8 %v493
    %v495 = vlaneseq
    %v496 = vshrl.u32 %v495, 7
    %v497 = vsub.s32 %v494, %v496
    %v498 = vrot.slane %v25, %v497
    %v500 = vunpack.c.l.s4 1966171168
    %v501 = vunpack.c.0.s8 %v500
    %v502 = vlaneseq
    %v503 = vshrl.u32 %v502, 7
    %v504 = vsub.s32 %v501, %v503
    %v505 = vrot.slane %v491, %v504
    %v506 = vcombine.high %v498, %v498
    %v508 = vunpack.c.l.s4 1966171168
    %v509 = vunpack.c.0.s8 %v508
    %v510 = vlaneseq
    %v511 = vshrl.u32 %v510, 7
    %v512 = vsub.s32 %v509, %v511
    %v513 = vrot.slane %v498, %v512
    %v515 = vunpack.c.l.s4 1966171168
    %v516 = vunpack.c.0.s8 %v515
    %v517 = vlaneseq
    %v518 = vshrl.u32 %v517, 7
    %v519 = vsub.s32 %v516, %v518
    %v520 = vrot.slane %v505, %v519
    %v522 = vunpack.c.l.s4 1966171168
    %v523 = vunpack.c.0.s8 %v522
    %v524 = vlaneseq
    %v525 = vshrl.u32 %v524, 7
    %v526 = vsub.s32 %v523, %v525
    %v527 = vrot.slane %v506, %v526
    %v528 = vcombine.high %v513, %v513
    %v529 = vcombine.high %v527, %v527
    %v934 = vunpack.c.l.b16 %v26
    %v935 = vunpack.c.h.b16 %v26
    %v936 = vunpack.c.l.b16 %v27
    %v937 = vunpack.c.h.b16 %v27
    %v938 = vunpack.c.l.b16 %v28
    %v939 = vunpack.c.h.b16 %v28
    %v940 = vunpack.c.l.b16 %v29
    %v941 = vunpack.c.h.b16 %v29
    %v942 = vunpack.c.l.b16 %v30
    %v943 = vunpack.c.h.b16 %v30
    %v944 = vunpack.c.l.b16 %v31
    %v945 = vunpack.c.h.b16 %v31
    %v946 = vunpack.c.l.b16 %v32
    %v947 = vunpack.c.h.b16 %v32
    %v948 = vunpack.c.l.b16 %v33
    %v949 = vunpack.c.h.b16 %v33
    %v950 = vunpack.c.l.b16 %v34
    %v951 = vunpack.c.h.b16 %v34
    %v952 = vunpack.c.l.b16 %v35
    %v953 = vunpack.c.h.b16 %v35
    %v954 = vunpack.c.l.b16 %v36
    %v955 = vunpack.c.h.b16 %v36
    %v956 = vunpack.c.l.b16 %v37
    %v957 = vunpack.c.h.b16 %v37
    %v958 = vunpack.c.l.b16 %v38
    %v959 = vunpack.c.h.b16 %v38
    %v960 = vunpack.c.l.b16 %v39
    %v961 = vunpack.c.h.b16 %v39
    %v962 = vunpack.c.l.b16 %v40
    %v963 = vunpack.c.h.b16 %v40
    %v964 = vunpack.c.l.b16 %v41
    %v965 = vunpack.c.h.b16 %v41
    %v966 = vunpack.c.l.b16 %v42
    %v967 = vunpack.c.h.b16 %v42
    %v968 = vunpack.c.l.b16 %v43
    %v969 = vunpack.c.h.b16 %v43
    %v970 = vunpack.c.l.b16 %v44
    %v971 = vunpack.c.h.b16 %v44
    %v972 = vunpack.c.l.b16 %v45
    %v973 = vunpack.c.h.b16 %v45
    %v974 = vunpack.c.l.b16 %v46
    %v975 = vunpack.c.h.b16 %v46
    %v976 = vunpack.c.l.b16 %v47
    %v977 = vunpack.c.h.b16 %v47
    %v978 = vunpack.c.l.b16 %v48
    %v979 = vunpack.c.h.b16 %v48
    %v980 = vunpack.c.l.b16 %v49
    %v981 = vunpack.c.h.b16 %v49
    %v982 = vunpack.c.l.b16 %v50
    %v983 = vunpack.c.h.b16 %v50
    %v984 = vunpack.c.l.b16 %v51
    %v985 = vunpack.c.h.b16 %v51
    %v986 = vunpack.c.l.b16 %v52
    %v987 = vunpack.c.h.b16 %v52
    %v988 = vunpack.c.l.b16 %v53
    %v989 = vunpack.c.h.b16 %v53
    %v990 = vunpack.c.l.b16 %v54
    %v991 = vunpack.c.h.b16 %v54
    %v992 = vunpack.c.l.b16 %v55
    %v993 = vunpack.c.h.b16 %v55
    %v994 = vunpack.c.l.b16 %v56
    %v995 = vunpack.c.h.b16 %v56
    %v996 = vunpack.c.l.b16 %v57
    %v997 = vunpack.c.h.b16 %v57
    %v998 = vunpack.c.l.b16 %v58
    %v999 = vunpack.c.h.b16 %v58
    %v1000 = vunpack.c.l.b16 %v59
    %v1001 = vunpack.c.h.b16 %v59
    %v1002 = vunpack.c.l.b16 %v60
    %v1003 = vunpack.c.h.b16 %v60
    %v1004 = vunpack.c.l.b16 %v61
    %v1005 = vunpack.c.h.b16 %v61
    %v1006 = vunpack.c.l.b16 %v62
    %v1007 = vunpack.c.h.b16 %v62
    %v1008 = vunpack.c.l.b16 %v63
    %v1009 = vunpack.c.h.b16 %v63
    %v1010 = vunpack.c.l.b16 %v64
    %v1011 = vunpack.c.h.b16 %v64
    %v1012 = vunpack.c.l.b16 %v65
    %v1013 = vunpack.c.h.b16 %v65
    %v1014 = vunpack.c.l.b16 %v66
    %v1015 = vunpack.c.h.b16 %v66
    %v1016 = vunpack.c.l.b16 %v67
    %v1017 = vunpack.c.h.b16 %v67
    %v1018 = vunpack.c.l.b16 %v68
    %v1019 = vunpack.c.h.b16 %v68
    %v1020 = vunpack.c.l.b16 %v69
    %v1021 = vunpack.c.h.b16 %v69
    %v1022 = vunpack.c.l.b16 %v70
    %v1023 = vunpack.c.h.b16 %v70
    %v1024 = vunpack.c.l.b16 %v71
    %v1025 = vunpack.c.h.b16 %v71
    %v1026 = vunpack.c.l.b16 %v72
    %v1027 = vunpack.c.h.b16 %v72
    %v1028 = vunpack.c.l.b16 %v73
    %v1029 = vunpack.c.h.b16 %v73
    %v1030 = vunpack.c.l.b16 %v74
    %v1031 = vunpack.c.h.b16 %v74
    %v1032 = vunpack.c.l.b16 %v75
    %v1033 = vunpack.c.h.b16 %v75
    %v1034 = vunpack.c.l.b16 %v76
    %v1035 = vunpack.c.h.b16 %v76
    %v1036 = vunpack.c.l.b16 %v77
    %v1037 = vunpack.c.h.b16 %v77
    %v1038 = vunpack.c.l.b16 %v78
    %v1039 = vunpack.c.h.b16 %v78
    %v1040 = vunpack.c.l.b16 %v79
    %v1041 = vunpack.c.h.b16 %v79
    %v1042 = vunpack.c.l.b16 %v80
    %v1043 = vunpack.c.h.b16 %v80
    %v1044 = vunpack.c.l.b16 %v81
    %v1045 = vunpack.c.h.b16 %v81
    %v1046 = vunpack.c.l.b16 %v82
    %v1047 = vunpack.c.h.b16 %v82
    %v1048 = vunpack.c.l.b16 %v83
    %v1049 = vunpack.c.h.b16 %v83
    %v1050 = vunpack.c.l.b16 %v84
    %v1051 = vunpack.c.h.b16 %v84
    %v1052 = vunpack.c.l.b16 %v85
    %v1053 = vunpack.c.h.b16 %v85
    %v1054 = vunpack.c.l.b16 %v86
    %v1055 = vunpack.c.h.b16 %v86
    %v1056 = vunpack.c.l.b16 %v87
    %v1057 = vunpack.c.h.b16 %v87
    %v1058 = vunpack.c.l.b16 %v88
    %v1059 = vunpack.c.h.b16 %v88
    %v1060 = vunpack.c.l.b16 %v89
    %v1061 = vunpack.c.h.b16 %v89
    %v1062 = vunpack.c.l.b16 %v90
    %v1063 = vunpack.c.h.b16 %v90
    %v1064 = vunpack.c.l.b16 %v91
    %v1065 = vunpack.c.h.b16 %v91
    %v1066 = vunpack.c.l.b16 %v92
    %v1067 = vunpack.c.h.b16 %v92
    %v1068 = vunpack.c.l.b16 %v93
    %v1069 = vunpack.c.h.b16 %v93
    %v1070 = vunpack.c.l.b16 %v94
    %v1071 = vunpack.c.h.b16 %v94
    %v1072 = vunpack.c.l.b16 %v95
    %v1073 = vunpack.c.h.b16 %v95
    %v1074 = vunpack.c.l.b16 %v96
    %v1075 = vunpack.c.h.b16 %v96
    %v1076 = vunpack.c.l.b16 %v97
    %v1077 = vunpack.c.h.b16 %v97
    %v1078 = vunpack.c.l.b16 %v98
    %v1079 = vunpack.c.h.b16 %v98
    %v1080 = vunpack.c.l.b16 %v99
    %v1081 = vunpack.c.h.b16 %v99
    %v1082 = vunpack.c.l.b16 %v100
    %v1083 = vunpack.c.h.b16 %v100
    %v1084 = vunpack.c.l.b16 %v101
    %v1085 = vunpack.c.h.b16 %v101
    %v1086 = vunpack.c.l.b16 %v102
    %v1087 = vunpack.c.h.b16 %v102
    %v1088 = vunpack.c.l.b16 %v103
    %v1089 = vunpack.c.h.b16 %v103
    %v1090 = vunpack.c.l.b16 %v104
    %v1091 = vunpack.c.h.b16 %v104
    %v1092 = vunpack.c.l.b16 %v105
    %v1093 = vunpack.c.h.b16 %v105
    %v1094 = vunpack.c.l.b16 %v106
    %v1095 = vunpack.c.h.b16 %v106
    %v1096 = vunpack.c.l.b16 %v107
    %v1097 = vunpack.c.h.b16 %v107
    %v1098 = vunpack.c.l.b16 %v108
    %v1099 = vunpack.c.h.b16 %v108
    %v1100 = vunpack.c.l.b16 %v109
    %v1101 = vunpack.c.h.b16 %v109
    %v1102 = vunpack.c.l.b16 %v110
    %v1103 = vunpack.c.h.b16 %v110
    %v1104 = vunpack.c.l.b16 %v111
    %v1105 = vunpack.c.h.b16 %v111
    %v1106 = vunpack.c.l.b16 %v112
    %v1107 = vunpack.c.h.b16 %v112
    %v1108 = vunpack.c.l.b16 %v113
    %v1109 = vunpack.c.h.b16 %v113
    %v1110 = vunpack.c.l.b16 %v114
    %v1111 = vunpack.c.h.b16 %v114
    %v1112 = vunpack.c.l.b16 %v115
    %v1113 = vunpack.c.h.b16 %v115
    %v1114 = vunpack.c.l.b16 %v116
    %v1115 = vunpack.c.h.b16 %v116
    %v1116 = vunpack.c.l.b16 %v117
    %v1117 = vunpack.c.h.b16 %v117
    %v1118 = vunpack.c.l.b16 %v118
    %v1119 = vunpack.c.h.b16 %v118
    %v1120 = vunpack.c.l.b16 %v119
    %v1121 = vunpack.c.h.b16 %v119
    %v1122 = vunpack.c.l.b16 %v120
    %v1123 = vunpack.c.h.b16 %v120
    %v1124 = vunpack.c.l.b16 %v121
    %v1125 = vunpack.c.h.b16 %v121
    %v1126 = vunpack.c.l.b16 %v122
    %v1127 = vunpack.c.h.b16 %v122
    %v1128 = vunpack.c.l.b16 %v123
    %v1129 = vunpack.c.h.b16 %v123
    %v1130 = vunpack.c.l.b16 %v124
    %v1131 = vunpack.c.h.b16 %v124
    %v1132 = vunpack.c.l.b16 %v125
    %v1133 = vunpack.c.h.b16 %v125
    %v1134 = vunpack.c.l.b16 %v126
    %v1135 = vunpack.c.h.b16 %v126
    %v1136 = vunpack.c.l.b16 %v127
    %v1137 = vunpack.c.h.b16 %v127
    %v1138 = vunpack.c.l.b16 %v128
    %v1139 = vunpack.c.h.b16 %v128
    %v1140 = vunpack.c.l.b16 %v129
    %v1141 = vunpack.c.h.b16 %v129
    %v1142 = vunpack.c.l.b16 %v130
    %v1143 = vunpack.c.h.b16 %v130
    %v1144 = vunpack.c.l.b16 %v131
    %v1145 = vunpack.c.h.b16 %v131
    %v1146 = vunpack.c.l.b16 %v132
    %v1147 = vunpack.c.h.b16 %v132
    %v1148 = vunpack.c.l.b16 %v133
    %v1149 = vunpack.c.h.b16 %v133
    %v1150 = vunpack.c.l.b16 %v134
    %v1151 = vunpack.c.h.b16 %v134
    %v1152 = vunpack.c.l.b16 %v135
    %v1153 = vunpack.c.h.b16 %v135
    %v1154 = vunpack.c.l.b16 %v136
    %v1155 = vunpack.c.h.b16 %v136
    %v1156 = vunpack.c.l.b16 %v137
    %v1157 = vunpack.c.h.b16 %v137
    %v1158 = vunpack.c.l.b16 %v138
    %v1159 = vunpack.c.h.b16 %v138
    %v1160 = vunpack.c.l.b16 %v139
    %v1161 = vunpack.c.h.b16 %v139
    %v1162 = vunpack.c.l.b16 %v140
    %v1163 = vunpack.c.h.b16 %v140
    %v1164 = vunpack.c.l.b16 %v141
    %v1165 = vunpack.c.h.b16 %v141
    %v1166 = vunpack.c.l.b16 %v142
    %v1167 = vunpack.c.h.b16 %v142
    %v1168 = vunpack.c.l.b16 %v143
    %v1169 = vunpack.c.h.b16 %v143
    %v1170 = vunpack.c.l.b16 %v144
    %v1171 = vunpack.c.h.b16 %v144
    %v1172 = vunpack.c.l.b16 %v145
    %v1173 = vunpack.c.h.b16 %v145
    %v1174 = vunpack.c.l.b16 %v146
    %v1175 = vunpack.c.h.b16 %v146
    %v1176 = vunpack.c.l.b16 %v147
    %v1177 = vunpack.c.h.b16 %v147
    %v1178 = vunpack.c.l.b16 %v148
    %v1179 = vunpack.c.h.b16 %v148
    %v1180 = vunpack.c.l.b16 %v149
    %v1181 = vunpack.c.h.b16 %v149
    %v1182 = vunpack.c.l.b16 %v150
    %v1183 = vunpack.c.h.b16 %v150
    %v1184 = vunpack.c.l.b16 %v151
    %v1185 = vunpack.c.h.b16 %v151
    %v1186 = vunpack.c.l.b16 %v152
    %v1187 = vunpack.c.h.b16 %v152
    %v1188 = vunpack.c.l.b16 %v153
    %v1189 = vunpack.c.h.b16 %v153
    %v1190 = vunpack.c.l.b16 %v154
    %v1191 = vunpack.c.h.b16 %v154
    %v1192 = vunpack.c.l.b16 %v155
    %v1193 = vunpack.c.h.b16 %v155
    %v1194 = vunpack.c.l.b16 %v156
    %v1195 = vunpack.c.h.b16 %v156
    %v1196 = vunpack.c.l.b16 %v157
    %v1197 = vunpack.c.h.b16 %v157
    %v1198 = vunpack.c.l.b16 %v158
    %v1199 = vunpack.c.h.b16 %v158
    %v1200 = vunpack.c.l.b16 %v159
    %v1201 = vunpack.c.h.b16 %v159
    %v1202 = vunpack.c.l.b16 %v160
    %v1203 = vunpack.c.h.b16 %v160
    %v1204 = vunpack.c.l.b16 %v161
    %v1205 = vunpack.c.h.b16 %v161
    %v1206 = vunpack.c.l.b16 %v162
    %v1207 = vunpack.c.h.b16 %v162
    %v1208 = vunpack.c.l.b16 %v163
    %v1209 = vunpack.c.h.b16 %v163
    %v1210 = vunpack.c.l.b16 %v164
    %v1211 = vunpack.c.h.b16 %v164
    %v1212 = vunpack.c.l.b16 %v165
    %v1213 = vunpack.c.h.b16 %v165
    %v1214 = vunpack.c.l.b16 %v166
    %v1215 = vunpack.c.h.b16 %v166
    %v1216 = vunpack.c.l.b16 %v167
    %v1217 = vunpack.c.h.b16 %v167
    %v1218 = vunpack.c.l.b16 %v168
    %v1219 = vunpack.c.h.b16 %v168
    %v1220 = vunpack.c.l.b16 %v169
    %v1221 = vunpack.c.h.b16 %v169
    %v1222 = vunpack.c.l.b16 %v170
    %v1223 = vunpack.c.h.b16 %v170
    %v1224 = vunpack.c.l.b16 %v171
    %v1225 = vunpack.c.h.b16 %v171
    %v1226 = vunpack.c.l.b16 %v172
    %v1227 = vunpack.c.h.b16 %v172
    %v1228 = vunpack.c.l.b16 %v173
    %v1229 = vunpack.c.h.b16 %v173
    %v1230 = vunpack.c.l.b16 %v174
    %v1231 = vunpack.c.h.b16 %v174
    %v1232 = vunpack.c.l.b16 %v175
    %v1233 = vunpack.c.h.b16 %v175
    %v1234 = vunpack.c.l.b16 %v176
    %v1235 = vunpack.c.h.b16 %v176
    %v1236 = vunpack.c.l.b16 %v177
    %v1237 = vunpack.c.h.b16 %v177
    %v1238 = vunpack.c.l.b16 %v178
    %v1239 = vunpack.c.h.b16 %v178
    %v1240 = vunpack.c.l.b16 %v179
    %v1241 = vunpack.c.h.b16 %v179
    %v1242 = vunpack.c.l.b16 %v180
    %v1243 = vunpack.c.h.b16 %v180
    %v1244 = vunpack.c.l.b16 %v181
    %v1245 = vunpack.c.h.b16 %v181
    %v1246 = vunpack.c.l.b16 %v182
    %v1247 = vunpack.c.h.b16 %v182
    %v1248 = vunpack.c.l.b16 %v183
    %v1249 = vunpack.c.h.b16 %v183
    %v1250 = vunpack.c.l.b16 %v184
    %v1251 = vunpack.c.h.b16 %v184
    %v1252 = vunpack.c.l.b16 %v185
    %v1253 = vunpack.c.h.b16 %v185
    %v1254 = vunpack.c.l.b16 %v186
    %v1255 = vunpack.c.h.b16 %v186
    %v1256 = vunpack.c.l.b16 %v187
    %v1257 = vunpack.c.h.b16 %v187
    %v1258 = vunpack.c.l.b16 %v188
    %v1259 = vunpack.c.h.b16 %v188
    %v1260 = vunpack.c.l.b16 %v189
    %v1261 = vunpack.c.h.b16 %v189
    %v1262 = vunpack.c.l.b16 %v190
    %v1263 = vunpack.c.h.b16 %v190
    %v1264 = vunpack.c.l.b16 %v191
    %v1265 = vunpack.c.h.b16 %v191
    %v1266 = vunpack.c.l.b16 %v192
    %v1267 = vunpack.c.h.b16 %v192
    %v1268 = vunpack.c.l.b16 %v193
    %v1269 = vunpack.c.h.b16 %v193
    %v1270 = vunpack.c.l.b16 %v194
    %v1271 = vunpack.c.h.b16 %v194
    %v1272 = vunpack.c.l.b16 %v195
    %v1273 = vunpack.c.h.b16 %v195
    %v1274 = vunpack.c.l.b16 %v196
    %v1275 = vunpack.c.h.b16 %v196
    %v1276 = vunpack.c.l.b16 %v197
    %v1277 = vunpack.c.h.b16 %v197
    %v1278 = vunpack.c.l.b16 %v198
    %v1279 = vunpack.c.h.b16 %v198
    %v1280 = vunpack.c.l.b16 %v199
    %v1281 = vunpack.c.h.b16 %v199
    %v1282 = vunpack.c.l.b16 %v200
    %v1283 = vunpack.c.h.b16 %v200
    %v1284 = vunpack.c.l.b16 %v201
    %v1285 = vunpack.c.h.b16 %v201
    %v1286 = vunpack.c.l.b16 %v202
    %v1287 = vunpack.c.h.b16 %v202
    %v1288 = vunpack.c.l.b16 %v203
    %v1289 = vunpack.c.h.b16 %v203
    %v1290 = vunpack.c.l.b16 %v204
    %v1291 = vunpack.c.h.b16 %v204
    %v1292 = vunpack.c.l.b16 %v205
    %v1293 = vunpack.c.h.b16 %v205
    %v1294 = vunpack.c.l.b16 %v206
    %v1295 = vunpack.c.h.b16 %v206
    %v1296 = vunpack.c.l.b16 %v207
    %v1297 = vunpack.c.h.b16 %v207
    %v1298 = vunpack.c.l.b16 %v208
    %v1299 = vunpack.c.h.b16 %v208
    %v1300 = vunpack.c.l.b16 %v209
    %v1301 = vunpack.c.h.b16 %v209
    %v1302 = vunpack.c.l.b16 %v210
    %v1303 = vunpack.c.h.b16 %v210
    %v1304 = vunpack.c.l.b16 %v211
    %v1305 = vunpack.c.h.b16 %v211
    %v1306 = vunpack.c.l.b16 %v212
    %v1307 = vunpack.c.h.b16 %v212
    %v1308 = vunpack.c.l.b16 %v213
    %v1309 = vunpack.c.h.b16 %v213
    %v1310 = vunpack.c.l.b16 %v214
    %v1311 = vunpack.c.h.b16 %v214
    %v1312 = vunpack.c.l.b16 %v215
    %v1313 = vunpack.c.h.b16 %v215
    %v1314 = vunpack.c.l.b16 %v216
    %v1315 = vunpack.c.h.b16 %v216
    %v1316 = vunpack.c.l.b16 %v217
    %v1317 = vunpack.c.h.b16 %v217
    %v1318 = vunpack.c.l.b16 %v218
    %v1319 = vunpack.c.h.b16 %v218
    %v1320 = vunpack.c.l.b16 %v219
    %v1321 = vunpack.c.h.b16 %v219
    %v1322 = vunpack.c.l.b16 %v220
    %v1323 = vunpack.c.h.b16 %v220
    %v1324 = vunpack.c.l.b16 %v221
    %v1325 = vunpack.c.h.b16 %v221
    %v1326 = vunpack.c.l.b16 %v222
    %v1327 = vunpack.c.h.b16 %v222
    %v1328 = vunpack.c.l.b16 %v223
    %v1329 = vunpack.c.h.b16 %v223
    %v1330 = vunpack.c.l.b16 %v224
    %v1331 = vunpack.c.h.b16 %v224
    %v1332 = vunpack.c.l.b16 %v225
    %v1333 = vunpack.c.h.b16 %v225
    %v1334 = vunpack.c.l.b16 %v226
    %v1335 = vunpack.c.h.b16 %v226
    %v1336 = vunpack.c.l.b16 %v227
    %v1337 = vunpack.c.h.b16 %v227
    %v1338 = vunpack.c.l.b16 %v228
    %v1339 = vunpack.c.h.b16 %v228
    %v1340 = vunpack.c.l.b16 %v229
    %v1341 = vunpack.c.h.b16 %v229
    %v1342 = vunpack.c.l.b16 %v230
    %v1343 = vunpack.c.h.b16 %v230
    %v1344 = vunpack.c.l.b16 %v231
    %v1345 = vunpack.c.h.b16 %v231
    %v1346 = vunpack.c.l.b16 %v232
    %v1347 = vunpack.c.h.b16 %v232
    %v1348 = vunpack.c.l.b16 %v233
    %v1349 = vunpack.c.h.b16 %v233
    %v1350 = vunpack.c.l.b16 %v234
    %v1351 = vunpack.c.h.b16 %v234
    %v1352 = vunpack.c.l.b16 %v235
    %v1353 = vunpack.c.h.b16 %v235
    %v1354 = vunpack.c.l.b16 %v236
    %v1355 = vunpack.c.h.b16 %v236
    %v1356 = vunpack.c.l.b16 %v237
    %v1357 = vunpack.c.h.b16 %v237
    %v1358 = vunpack.c.l.b16 %v238
    %v1359 = vunpack.c.h.b16 %v238
    %v1360 = vunpack.c.l.b16 %v239
    %v1361 = vunpack.c.h.b16 %v239
    %v1362 = vunpack.c.l.b16 %v240
    %v1363 = vunpack.c.h.b16 %v240
    %v1364 = vunpack.c.l.b16 %v241
    %v1365 = vunpack.c.h.b16 %v241
    %v1366 = vunpack.c.l.b16 %v242
    %v1367 = vunpack.c.h.b16 %v242
    %v1368 = vunpack.c.l.b16 %v243
    %v1369 = vunpack.c.h.b16 %v243
    %v1370 = vunpack.c.l.b16 %v244
    %v1371 = vunpack.c.h.b16 %v244
    %v1372 = vunpack.c.l.b16 %v245
    %v1373 = vunpack.c.h.b16 %v245
    %v1374 = vunpack.c.l.b16 %v246
    %v1375 = vunpack.c.h.b16 %v246
    %v1376 = vunpack.c.l.b16 %v247
    %v1377 = vunpack.c.h.b16 %v247
    %v1378 = vunpack.c.l.b16 %v248
    %v1379 = vunpack.c.h.b16 %v248
    %v1380 = vunpack.c.l.b16 %v249
    %v1381 = vunpack.c.h.b16 %v249
    %v1382 = vunpack.c.l.b16 %v250
    %v1383 = vunpack.c.h.b16 %v250
    %v1384 = vunpack.c.l.b16 %v251
    %v1385 = vunpack.c.h.b16 %v251
    %v1386 = vunpack.c.l.b16 %v252
    %v1387 = vunpack.c.h.b16 %v252
    %v1388 = vunpack.c.l.b16 %v253
    %v1389 = vunpack.c.h.b16 %v253
    %v1390 = vunpack.c.l.b16 %v254
    %v1391 = vunpack.c.h.b16 %v254
    %v1392 = vunpack.c.l.b16 %v255
    %v1393 = vunpack.c.h.b16 %v255
    %v1394 = vunpack.c.l.b16 %v256
    %v1395 = vunpack.c.h.b16 %v256
    %v1396 = vunpack.c.l.b16 %v257
    %v1397 = vunpack.c.h.b16 %v257
    %v1398 = vunpack.c.l.b16 %v258
    %v1399 = vunpack.c.h.b16 %v258
    %v1400 = vunpack.c.l.b16 %v259
    %v1401 = vunpack.c.h.b16 %v259
    %v1402 = vunpack.c.l.b16 %v260
    %v1403 = vunpack.c.h.b16 %v260
    %v1404 = vunpack.c.l.b16 %v261
    %v1405 = vunpack.c.h.b16 %v261
    %v1406 = vunpack.c.l.b16 %v262
    %v1407 = vunpack.c.h.b16 %v262
    %v1408 = vunpack.c.l.b16 %v263
    %v1409 = vunpack.c.h.b16 %v263
    %v1410 = vunpack.c.l.b16 %v264
    %v1411 = vunpack.c.h.b16 %v264
    %v1412 = vunpack.c.l.b16 %v265
    %v1413 = vunpack.c.h.b16 %v265
    %v1414 = vunpack.c.l.b16 %v266
    %v1415 = vunpack.c.h.b16 %v266
    %v1416 = vunpack.c.l.b16 %v267
    %v1417 = vunpack.c.h.b16 %v267
    %v1418 = vunpack.c.l.b16 %v268
    %v1419 = vunpack.c.h.b16 %v268
    %v1420 = vunpack.c.l.b16 %v269
    %v1421 = vunpack.c.h.b16 %v269
    %v1422 = vunpack.c.l.b16 %v270
    %v1423 = vunpack.c.h.b16 %v270
    %v1424 = vunpack.c.l.b16 %v271
    %v1425 = vunpack.c.h.b16 %v271
    %v1426 = vunpack.c.l.b16 %v272
    %v1427 = vunpack.c.h.b16 %v272
    %v1428 = vunpack.c.l.b16 %v273
    %v1429 = vunpack.c.h.b16 %v273
    %v1430 = vunpack.c.l.b16 %v274
    %v1431 = vunpack.c.h.b16 %v274
    %v1432 = vunpack.c.l.b16 %v275
    %v1433 = vunpack.c.h.b16 %v275
    %v1434 = vunpack.c.l.b16 %v276
    %v1435 = vunpack.c.h.b16 %v276
    %v1436 = vunpack.c.l.b16 %v277
    %v1437 = vunpack.c.h.b16 %v277
    %v1438 = vunpack.c.l.b16 %v278
    %v1439 = vunpack.c.h.b16 %v278
    %v1440 = vunpack.c.l.b16 %v279
    %v1441 = vunpack.c.h.b16 %v279
    %v1442 = vunpack.c.l.b16 %v280
    %v1443 = vunpack.c.h.b16 %v280
    %v1444 = vunpack.c.l.b16 %v281
    %v1445 = vunpack.c.h.b16 %v281
    %v1446 = vunpack.c.l.b16 %v282
    %v1447 = vunpack.c.h.b16 %v282
    %v1448 = vunpack.c.l.b16 %v283
    %v1449 = vunpack.c.h.b16 %v283
    %v1450 = vunpack.c.l.b16 %v284
    %v1451 = vunpack.c.h.b16 %v284
    %v1452 = vunpack.c.l.b16 %v285
    %v1453 = vunpack.c.h.b16 %v285
    %v1454 = vunpack.c.l.b16 %v286
    %v1455 = vunpack.c.h.b16 %v286
    %v1456 = vunpack.c.l.b16 %v287
    %v1457 = vunpack.c.h.b16 %v287
    %v1458 = vunpack.c.l.b16 %v288
    %v1459 = vunpack.c.h.b16 %v288
    %v1460 = vunpack.c.l.b16 %v289
    %v1461 = vunpack.c.h.b16 %v289
    %v1462 = vunpack.c.l.b16 %v290
    %v1463 = vunpack.c.h.b16 %v290
    %v1464 = vunpack.c.l.b16 %v291
    %v1465 = vunpack.c.h.b16 %v291
    %v1466 = vunpack.c.l.b16 %v292
    %v1467 = vunpack.c.h.b16 %v292
    %v1468 = vunpack.c.l.b16 %v293
    %v1469 = vunpack.c.h.b16 %v293
    %v1470 = vunpack.c.l.b16 %v294
    %v1471 = vunpack.c.h.b16 %v294
    %v1472 = vunpack.c.l.b16 %v295
    %v1473 = vunpack.c.h.b16 %v295
    %v1474 = vunpack.c.l.b16 %v296
    %v1475 = vunpack.c.h.b16 %v296
    %v1476 = vunpack.c.l.b16 %v297
    %v1477 = vunpack.c.h.b16 %v297
    %v1478 = vunpack.c.l.b16 %v298
    %v1479 = vunpack.c.h.b16 %v298
    %v1480 = vunpack.c.l.b16 %v299
    %v1481 = vunpack.c.h.b16 %v299
    %v1482 = vunpack.c.l.b16 %v300
    %v1483 = vunpack.c.h.b16 %v300
    %v1484 = vunpack.c.l.b16 %v301
    %v1485 = vunpack.c.h.b16 %v301
    %v1486 = vunpack.c.l.b16 %v302
    %v1487 = vunpack.c.h.b16 %v302
    %v1488 = vunpack.c.l.b16 %v303
    %v1489 = vunpack.c.h.b16 %v303
    %v1490 = vunpack.c.l.b16 %v304
    %v1491 = vunpack.c.h.b16 %v304
    %v1492 = vunpack.c.l.b16 %v305
    %v1493 = vunpack.c.h.b16 %v305
    %v1494 = vunpack.c.l.b16 %v306
    %v1495 = vunpack.c.h.b16 %v306
    %v1496 = vunpack.c.l.b16 %v307
    %v1497 = vunpack.c.h.b16 %v307
    %v1498 = vunpack.c.l.b16 %v308
    %v1499 = vunpack.c.h.b16 %v308
    %v1500 = vunpack.c.l.b16 %v309
    %v1501 = vunpack.c.h.b16 %v309
    %v1502 = vunpack.c.l.b16 %v310
    %v1503 = vunpack.c.h.b16 %v310
    %v1504 = vunpack.c.l.b16 %v311
    %v1505 = vunpack.c.h.b16 %v311
    %v1506 = vunpack.c.l.b16 %v312
    %v1507 = vunpack.c.h.b16 %v312
    %v1508 = vunpack.c.l.b16 %v313
    %v1509 = vunpack.c.h.b16 %v313
    %v1510 = vunpack.c.l.b16 %v314
    %v1511 = vunpack.c.h.b16 %v314
    %v1512 = vunpack.c.l.b16 %v315
    %v1513 = vunpack.c.h.b16 %v315
    %v1514 = vunpack.c.l.b16 %v316
    %v1515 = vunpack.c.h.b16 %v316
    %v1516 = vunpack.c.l.b16 %v317
    %v1517 = vunpack.c.h.b16 %v317
    %v1518 = vunpack.c.l.b16 %v318
    %v1519 = vunpack.c.h.b16 %v318
    %v1520 = vunpack.c.l.b16 %v319
    %v1521 = vunpack.c.h.b16 %v319
    %v1522 = vunpack.c.l.b16 %v320
    %v1523 = vunpack.c.h.b16 %v320
    %v1524 = vunpack.c.l.b16 %v321
    %v1525 = vunpack.c.h.b16 %v321
    %v1526 = vunpack.c.l.b16 %v322
    %v1527 = vunpack.c.h.b16 %v322
    %v1528 = vunpack.c.l.b16 %v323
    %v1529 = vunpack.c.h.b16 %v323
    %v1530 = vunpack.c.l.b16 %v324
    %v1531 = vunpack.c.h.b16 %v324
    %v1532 = vunpack.c.l.b16 %v325
    %v1533 = vunpack.c.h.b16 %v325
    %v1534 = vunpack.c.l.b16 %v326
    %v1535 = vunpack.c.h.b16 %v326
    %v1536 = vunpack.c.l.b16 %v327
    %v1537 = vunpack.c.h.b16 %v327
    %v1538 = vunpack.c.l.b16 %v328
    %v1539 = vunpack.c.h.b16 %v328
    %v1540 = vunpack.c.l.b16 %v329
    %v1541 = vunpack.c.h.b16 %v329
    %v1542 = vunpack.c.l.b16 %v330
    %v1543 = vunpack.c.h.b16 %v330
    %v1544 = vunpack.c.l.b16 %v331
    %v1545 = vunpack.c.h.b16 %v331
    %v1546 = vunpack.c.l.b16 %v332
    %v1547 = vunpack.c.h.b16 %v332
    %v1548 = vunpack.c.l.b16 %v333
    %v1549 = vunpack.c.h.b16 %v333
    %v1550 = vunpack.c.l.b16 %v334
    %v1551 = vunpack.c.h.b16 %v334
    %v1552 = vunpack.c.l.b16 %v335
    %v1553 = vunpack.c.h.b16 %v335
    %v1554 = vunpack.c.l.b16 %v336
    %v1555 = vunpack.c.h.b16 %v336
    %v1556 = vunpack.c.l.b16 %v337
    %v1557 = vunpack.c.h.b16 %v337
    %v1558 = vunpack.c.l.b16 %v338
    %v1559 = vunpack.c.h.b16 %v338
    %v1560 = vunpack.c.l.b16 %v339
    %v1561 = vunpack.c.h.b16 %v339
    %v1562 = vunpack.c.l.b16 %v340
    %v1563 = vunpack.c.h.b16 %v340
    %v1564 = vunpack.c.l.b16 %v341
    %v1565 = vunpack.c.h.b16 %v341
    %v1566 = vunpack.c.l.b16 %v342
    %v1567 = vunpack.c.h.b16 %v342
    %v1568 = vunpack.c.l.b16 %v343
    %v1569 = vunpack.c.h.b16 %v343
    %v1570 = vunpack.c.l.b16 %v344
    %v1571 = vunpack.c.h.b16 %v344
    %v1572 = vunpack.c.l.b16 %v345
    %v1573 = vunpack.c.h.b16 %v345
    %v1574 = vunpack.c.l.b16 %v346
    %v1575 = vunpack.c.h.b16 %v346
    %v1576 = vunpack.c.l.b16 %v347
    %v1577 = vunpack.c.h.b16 %v347
    %v1578 = vunpack.c.l.b16 %v348
    %v1579 = vunpack.c.h.b16 %v348
    %v1580 = vunpack.c.l.b16 %v349
    %v1581 = vunpack.c.h.b16 %v349
    %v1582 = vunpack.c.l.b16 %v350
    %v1583 = vunpack.c.h.b16 %v350
    %v1584 = vunpack.c.l.b16 %v351
    %v1585 = vunpack.c.h.b16 %v351
    %v1586 = vunpack.c.l.b16 %v352
    %v1587 = vunpack.c.h.b16 %v352
    %v1588 = vunpack.c.l.b16 %v353
    %v1589 = vunpack.c.h.b16 %v353
    %v1590 = vunpack.c.l.b16 %v354
    %v1591 = vunpack.c.h.b16 %v354
    %v1592 = vunpack.c.l.b16 %v355
    %v1593 = vunpack.c.h.b16 %v355
    %v1594 = vunpack.c.l.b16 %v356
    %v1595 = vunpack.c.h.b16 %v356
    %v1596 = vunpack.c.l.b16 %v357
    %v1597 = vunpack.c.h.b16 %v357
    %v1598 = vunpack.c.l.b16 %v358
    %v1599 = vunpack.c.h.b16 %v358
    %v1600 = vunpack.c.l.b16 %v359
    %v1601 = vunpack.c.h.b16 %v359
    %v1602 = vunpack.c.l.b16 %v360
    %v1603 = vunpack.c.h.b16 %v360
    %v1604 = vunpack.c.l.b16 %v361
    %v1605 = vunpack.c.h.b16 %v361
    %v1606 = vunpack.c.l.b16 %v362
    %v1607 = vunpack.c.h.b16 %v362
    %v1608 = vunpack.c.l.b16 %v363
    %v1609 = vunpack.c.h.b16 %v363
    %v1610 = vunpack.c.l.b16 %v364
    %v1611 = vunpack.c.h.b16 %v364
    %v1612 = vunpack.c.l.b16 %v365
    %v1613 = vunpack.c.h.b16 %v365
    %v1614 = vunpack.c.l.b16 %v366
    %v1615 = vunpack.c.h.b16 %v366
    %v1616 = vunpack.c.l.b16 %v367
    %v1617 = vunpack.c.h.b16 %v367
    %v1618 = vunpack.c.l.b16 %v368
    %v1619 = vunpack.c.h.b16 %v368
    %v1620 = vunpack.c.l.b16 %v369
    %v1621 = vunpack.c.h.b16 %v369
    %v1622 = vunpack.c.l.b16 %v370
    %v1623 = vunpack.c.h.b16 %v370
    %v1624 = vunpack.c.l.b16 %v371
    %v1625 = vunpack.c.h.b16 %v371
    %v1626 = vunpack.c.l.b16 %v372
    %v1627 = vunpack.c.h.b16 %v372
    %v1628 = vunpack.c.l.b16 %v373
    %v1629 = vunpack.c.h.b16 %v373
    %v1630 = vunpack.c.l.b16 %v374
    %v1631 = vunpack.c.h.b16 %v374
    %v1632 = vunpack.c.l.b16 %v375
    %v1633 = vunpack.c.h.b16 %v375
    %v1634 = vunpack.c.l.b16 %v376
    %v1635 = vunpack.c.h.b16 %v376
    %v1636 = vunpack.c.l.b16 %v377
    %v1637 = vunpack.c.h.b16 %v377
    %v1638 = vunpack.c.l.b16 %v378
    %v1639 = vunpack.c.h.b16 %v378
    %v1640 = vunpack.c.l.b16 %v379
    %v1641 = vunpack.c.h.b16 %v379
    %v1642 = vunpack.c.l.b16 %v380
    %v1643 = vunpack.c.h.b16 %v380
    %v1644 = vunpack.c.l.b16 %v381
    %v1645 = vunpack.c.h.b16 %v381
    %v1646 = vunpack.c.l.b16 %v382
    %v1647 = vunpack.c.h.b16 %v382
    %v1648 = vunpack.c.l.b16 %v383
    %v1649 = vunpack.c.h.b16 %v383
    %v1650 = vunpack.c.l.b16 %v384
    %v1651 = vunpack.c.h.b16 %v384
    %v1652 = vunpack.c.l.b16 %v385
    %v1653 = vunpack.c.h.b16 %v385
    %v1654 = vunpack.c.l.b16 %v386
    %v1655 = vunpack.c.h.b16 %v386
    %v1656 = vunpack.c.l.b16 %v387
    %v1657 = vunpack.c.h.b16 %v387
    %v1658 = vunpack.c.l.b16 %v388
    %v1659 = vunpack.c.h.b16 %v388
    %v1660 = vunpack.c.l.b16 %v389
    %v1661 = vunpack.c.h.b16 %v389
    %v1662 = vunpack.c.l.b16 %v390
    %v1663 = vunpack.c.h.b16 %v390
    %v1664 = vunpack.c.l.b16 %v391
    %v1665 = vunpack.c.h.b16 %v391
    %v1666 = vunpack.c.l.b16 %v392
    %v1667 = vunpack.c.h.b16 %v392
    %v1668 = vunpack.c.l.b16 %v393
    %v1669 = vunpack.c.h.b16 %v393
    %v1670 = vunpack.c.l.b16 %v394
    %v1671 = vunpack.c.h.b16 %v394
    %v1672 = vunpack.c.l.b16 %v395
    %v1673 = vunpack.c.h.b16 %v395
    %v1674 = vunpack.c.l.b16 %v396
    %v1675 = vunpack.c.h.b16 %v396
    %v1676 = vunpack.c.l.b16 %v397
    %v1677 = vunpack.c.h.b16 %v397
    %v1678 = vunpack.c.l.b16 %v398
    %v1679 = vunpack.c.h.b16 %v398
    %v1680 = vunpack.c.l.b16 %v399
    %v1681 = vunpack.c.h.b16 %v399
    %v1682 = vunpack.c.l.b16 %v400
    %v1683 = vunpack.c.h.b16 %v400
    %v1684 = vunpack.c.l.b16 %v401
    %v1685 = vunpack.c.h.b16 %v401
    %v1686 = vunpack.c.l.b16 %v402
    %v1687 = vunpack.c.h.b16 %v402
    %v1688 = vunpack.c.l.b16 %v403
    %v1689 = vunpack.c.h.b16 %v403
    %v1690 = vunpack.c.l.b16 %v404
    %v1691 = vunpack.c.h.b16 %v404
    %v1692 = vunpack.c.l.b16 %v405
    %v1693 = vunpack.c.h.b16 %v405
    %v1694 = vunpack.c.l.b16 %v406
    %v1695 = vunpack.c.h.b16 %v406
    %v1696 = vunpack.c.l.b16 %v407
    %v1697 = vunpack.c.h.b16 %v407
    %v1698 = vunpack.c.l.b16 %v408
    %v1699 = vunpack.c.h.b16 %v408
    %v1700 = vunpack.c.l.b16 %v409
    %v1701 = vunpack.c.h.b16 %v409
    %v1702 = vunpack.c.l.b16 %v410
    %v1703 = vunpack.c.h.b16 %v410
    %v1704 = vunpack.c.l.b16 %v411
    %v1705 = vunpack.c.h.b16 %v411
    %v1706 = vunpack.c.l.b16 %v412
    %v1707 = vunpack.c.h.b16 %v412
    %v1708 = vunpack.c.l.b16 %v413
    %v1709 = vunpack.c.h.b16 %v413
    %v1710 = vunpack.c.l.b16 %v414
    %v1711 = vunpack.c.h.b16 %v414
    %v1712 = vunpack.c.l.b16 %v415
    %v1713 = vunpack.c.h.b16 %v415
    %v1714 = vunpack.c.l.b16 %v416
    %v1715 = vunpack.c.h.b16 %v416
    %v1716 = vunpack.c.l.b16 %v417
    %v1717 = vunpack.c.h.b16 %v417
    %v1718 = vpack.c.b16 %v938, %v934
    %v1719 = vpack.c.b16 %v939, %v935
    %v1720 = vpack.c.b16 %v940, %v936
    %v1721 = vpack.c.b16 %v941, %v937
    %v1722 = vpack.c.b16 %v946, %v942
    %v1723 = vpack.c.b16 %v947, %v943
    %v1724 = vpack.c.b16 %v948, %v944
    %v1725 = vpack.c.b16 %v949, %v945
    %v1726 = vpack.c.b16 %v954, %v950
    %v1727 = vpack.c.b16 %v955, %v951
    %v1728 = vpack.c.b16 %v956, %v952
    %v1729 = vpack.c.b16 %v957, %v953
    %v1730 = vpack.c.b16 %v962, %v958
    %v1731 = vpack.c.b16 %v963, %v959
    %v1732 = vpack.c.b16 %v964, %v960
    %v1733 = vpack.c.b16 %v965, %v961
    %v1734 = vpack.c.b16 %v970, %v966
    %v1735 = vpack.c.b16 %v971, %v967
    %v1736 = vpack.c.b16 %v972, %v968
    %v1737 = vpack.c.b16 %v973, %v969
    %v1738 = vpack.c.b16 %v978, %v974
    %v1739 = vpack.c.b16 %v979, %v975
    %v1740 = vpack.c.b16 %v980, %v976
    %v1741 = vpack.c.b16 %v981, %v977
    %v1742 = vpack.c.b16 %v986, %v982
    %v1743 = vpack.c.b16 %v987, %v983
    %v1744 = vpack.c.b16 %v988, %v984
    %v1745 = vpack.c.b16 %v989, %v985
    %v1746 = vpack.c.b16 %v994, %v990
    %v1747 = vpack.c.b16 %v995, %v991
    %v1748 = vpack.c.b16 %v996, %v992
    %v1749 = vpack.c.b16 %v997, %v993
    %v1750 = vpack.c.b16 %v1002, %v998
    %v1751 = vpack.c.b16 %v1003, %v999
    %v1752 = vpack.c.b16 %v1004, %v1000
    %v1753 = vpack.c.b16 %v1005, %v1001
    %v1754 = vpack.c.b16 %v1010, %v1006
    %v1755 = vpack.c.b16 %v1011, %v1007
    %v1756 = vpack.c.b16 %v1012, %v1008
    %v1757 = vpack.c.b16 %v1013, %v1009
    %v1758 = vpack.c.b16 %v1018, %v1014
    %v1759 = vpack.c.b16 %v1019, %v1015
    %v1760 = vpack.c.b16 %v1020, %v1016
    %v1761 = vpack.c.b16 %v1021, %v1017
    %v1762 = vpack.c.b16 %v1026, %v1022
    %v1763 = vpack.c.b16 %v1027, %v1023
    %v1764 = vpack.c.b16 %v1028, %v1024
    %v1765 = vpack.c.b16 %v1029, %v1025
    %v1766 = vpack.c.b16 %v1034, %v1030
    %v1767 = vpack.c.b16 %v1035, %v1031
    %v1768 = vpack.c.b16 %v1036, %v1032
    %v1769 = vpack.c.b16 %v1037, %v1033
    %v1770 = vpack.c.b16 %v1042, %v1038
    %v1771 = vpack.c.b16 %v1043, %v1039
    %v1772 = vpack.c.b16 %v1044, %v1040
    %v1773 = vpack.c.b16 %v1045, %v1041
    %v1774 = vpack.c.b16 %v1050, %v1046
    %v1775 = vpack.c.b16 %v1051, %v1047
    %v1776 = vpack.c.b16 %v1052, %v1048
    %v1777 = vpack.c.b16 %v1053, %v1049
    %v1778 = vpack.c.b16 %v1058, %v1054
    %v1779 = vpack.c.b16 %v1059, %v1055
    %v1780 = vpack.c.b16 %v1060, %v1056
    %v1781 = vpack.c.b16 %v1061, %v1057
    %v1782 = vpack.c.b16 %v1066, %v1062
    %v1783 = vpack.c.b16 %v1067, %v1063
    %v1784 = vpack.c.b16 %v1068, %v1064
    %v1785 = vpack.c.b16 %v1069, %v1065
    %v1786 = vpack.c.b16 %v1074, %v1070
    %v1787 = vpack.c.b16 %v1075, %v1071
    %v1788 = vpack.c.b16 %v1076, %v1072
    %v1789 = vpack.c.b16 %v1077, %v1073
    %v1790 = vpack.c.b16 %v1082, %v1078
    %v1791 = vpack.c.b16 %v1083, %v1079
    %v1792 = vpack.c.b16 %v1084, %v1080
    %v1793 = vpack.c.b16 %v1085, %v1081
    %v1794 = vpack.c.b16 %v1090, %v1086
    %v1795 = vpack.c.b16 %v1091, %v1087
    %v1796 = vpack.c.b16 %v1092, %v1088
    %v1797 = vpack.c.b16 %v1093, %v1089
    %v1798 = vpack.c.b16 %v1098, %v1094
    %v1799 = vpack.c.b16 %v1099, %v1095
    %v1800 = vpack.c.b16 %v1100, %v1096
    %v1801 = vpack.c.b16 %v1101, %v1097
    %v1802 = vpack.c.b16 %v1106, %v1102
    %v1803 = vpack.c.b16 %v1107, %v1103
    %v1804 = vpack.c.b16 %v1108, %v1104
    %v1805 = vpack.c.b16 %v1109, %v1105
    %v1806 = vpack.c.b16 %v1114, %v1110
    %v1807 = vpack.c.b16 %v1115, %v1111
    %v1808 = vpack.c.b16 %v1116, %v1112
    %v1809 = vpack.c.b16 %v1117, %v1113
    %v1810 = vpack.c.b16 %v1122, %v1118
    %v1811 = vpack.c.b16 %v1123, %v1119
    %v1812 = vpack.c.b16 %v1124, %v1120
    %v1813 = vpack.c.b16 %v1125, %v1121
    %v1814 = vpack.c.b16 %v1130, %v1126
    %v1815 = vpack.c.b16 %v1131, %v1127
    %v1816 = vpack.c.b16 %v1132, %v1128
    %v1817 = vpack.c.b16 %v1133, %v1129
    %v1818 = vpack.c.b16 %v1138, %v1134
    %v1819 = vpack.c.b16 %v1139, %v1135
    %v1820 = vpack.c.b16 %v1140, %v1136
    %v1821 = vpack.c.b16 %v1141, %v1137
    %v1822 = vpack.c.b16 %v1146, %v1142
    %v1823 = vpack.c.b16 %v1147, %v1143
    %v1824 = vpack.c.b16 %v1148, %v1144
    %v1825 = vpack.c.b16 %v1149, %v1145
    %v1826 = vpack.c.b16 %v1154, %v1150
    %v1827 = vpack.c.b16 %v1155, %v1151
    %v1828 = vpack.c.b16 %v1156, %v1152
    %v1829 = vpack.c.b16 %v1157, %v1153
    %v1830 = vpack.c.b16 %v1162, %v1158
    %v1831 = vpack.c.b16 %v1163, %v1159
    %v1832 = vpack.c.b16 %v1164, %v1160
    %v1833 = vpack.c.b16 %v1165, %v1161
    %v1834 = vpack.c.b16 %v1170, %v1166
    %v1835 = vpack.c.b16 %v1171, %v1167
    %v1836 = vpack.c.b16 %v1172, %v1168
    %v1837 = vpack.c.b16 %v1173, %v1169
    %v1838 = vpack.c.b16 %v1178, %v1174
    %v1839 = vpack.c.b16 %v1179, %v1175
    %v1840 = vpack.c.b16 %v1180, %v1176
    %v1841 = vpack.c.b16 %v1181, %v1177
    %v1842 = vpack.c.b16 %v1186, %v1182
    %v1843 = vpack.c.b16 %v1187, %v1183
    %v1844 = vpack.c.b16 %v1188, %v1184
    %v1845 = vpack.c.b16 %v1189, %v1185
    %v1846 = vpack.c.b16 %v1194, %v1190
    %v1847 = vpack.c.b16 %v1195, %v1191
    %v1848 = vpack.c.b16 %v1196, %v1192
    %v1849 = vpack.c.b16 %v1197, %v1193
    %v1850 = vpack.c.b16 %v1202, %v1198
    %v1851 = vpack.c.b16 %v1203, %v1199
    %v1852 = vpack.c.b16 %v1204, %v1200
    %v1853 = vpack.c.b16 %v1205, %v1201
    %v1854 = vpack.c.b16 %v1210, %v1206
    %v1855 = vpack.c.b16 %v1211, %v1207
    %v1856 = vpack.c.b16 %v1212, %v1208
    %v1857 = vpack.c.b16 %v1213, %v1209
    %v1858 = vpack.c.b16 %v1218, %v1214
    %v1859 = vpack.c.b16 %v1219, %v1215
    %v1860 = vpack.c.b16 %v1220, %v1216
    %v1861 = vpack.c.b16 %v1221, %v1217
    %v1862 = vpack.c.b16 %v1226, %v1222
    %v1863 = vpack.c.b16 %v1227, %v1223
    %v1864 = vpack.c.b16 %v1228, %v1224
    %v1865 = vpack.c.b16 %v1229, %v1225
    %v1866 = vpack.c.b16 %v1234, %v1230
    %v1867 = vpack.c.b16 %v1235, %v1231
    %v1868 = vpack.c.b16 %v1236, %v1232
    %v1869 = vpack.c.b16 %v1237, %v1233
    %v1870 = vpack.c.b16 %v1242, %v1238
    %v1871 = vpack.c.b16 %v1243, %v1239
    %v1872 = vpack.c.b16 %v1244, %v1240
    %v1873 = vpack.c.b16 %v1245, %v1241
    %v1874 = vpack.c.b16 %v1250, %v1246
    %v1875 = vpack.c.b16 %v1251, %v1247
    %v1876 = vpack.c.b16 %v1252, %v1248
    %v1877 = vpack.c.b16 %v1253, %v1249
    %v1878 = vpack.c.b16 %v1258, %v1254
    %v1879 = vpack.c.b16 %v1259, %v1255
    %v1880 = vpack.c.b16 %v1260, %v1256
    %v1881 = vpack.c.b16 %v1261, %v1257
    %v1882 = vpack.c.b16 %v1266, %v1262
    %v1883 = vpack.c.b16 %v1267, %v1263
    %v1884 = vpack.c.b16 %v1268, %v1264
    %v1885 = vpack.c.b16 %v1269, %v1265
    %v1886 = vpack.c.b16 %v1274, %v1270
    %v1887 = vpack.c.b16 %v1275, %v1271
    %v1888 = vpack.c.b16 %v1276, %v1272
    %v1889 = vpack.c.b16 %v1277, %v1273
    %v1890 = vpack.c.b16 %v1282, %v1278
    %v1891 = vpack.c.b16 %v1283, %v1279
    %v1892 = vpack.c.b16 %v1284, %v1280
    %v1893 = vpack.c.b16 %v1285, %v1281
    %v1894 = vpack.c.b16 %v1290, %v1286
    %v1895 = vpack.c.b16 %v1291, %v1287
    %v1896 = vpack.c.b16 %v1292, %v1288
    %v1897 = vpack.c.b16 %v1293, %v1289
    %v1898 = vpack.c.b16 %v1298, %v1294
    %v1899 = vpack.c.b16 %v1299, %v1295
    %v1900 = vpack.c.b16 %v1300, %v1296
    %v1901 = vpack.c.b16 %v1301, %v1297
    %v1902 = vpack.c.b16 %v1306, %v1302
    %v1903 = vpack.c.b16 %v1307, %v1303
    %v1904 = vpack.c.b16 %v1308, %v1304
    %v1905 = vpack.c.b16 %v1309, %v1305
    %v1906 = vpack.c.b16 %v1314, %v1310
    %v1907 = vpack.c.b16 %v1315, %v1311
    %v1908 = vpack.c.b16 %v1316, %v1312
    %v1909 = vpack.c.b16 %v1317, %v1313
    %v1910 = vpack.c.b16 %v1322, %v1318
    %v1911 = vpack.c.b16 %v1323, %v1319
    %v1912 = vpack.c.b16 %v1324, %v1320
    %v1913 = vpack.c.b16 %v1325, %v1321
    %v1914 = vpack.c.b16 %v1330, %v1326
    %v1915 = vpack.c.b16 %v1331, %v1327
    %v1916 = vpack.c.b16 %v1332, %v1328
    %v1917 = vpack.c.b16 %v1333, %v1329
    %v1918 = vpack.c.b16 %v1338, %v1334
    %v1919 = vpack.c.b16 %v1339, %v1335
    %v1920 = vpack.c.b16 %v1340, %v1336
    %v1921 = vpack.c.b16 %v1341, %v1337
    %v1922 = vpack.c.b16 %v1346, %v1342
    %v1923 = vpack.c.b16 %v1347, %v1343
    %v1924 = vpack.c.b16 %v1348, %v1344
    %v1925 = vpack.c.b16 %v1349, %v1345
    %v1926 = vpack.c.b16 %v1354, %v1350
    %v1927 = vpack.c.b16 %v1355, %v1351
    %v1928 = vpack.c.b16 %v1356, %v1352
    %v1929 = vpack.c.b16 %v1357, %v1353
    %v1930 = vpack.c.b16 %v1362, %v1358
    %v1931 = vpack.c.b16 %v1363, %v1359
    %v1932 = vpack.c.b16 %v1364, %v1360
    %v1933 = vpack.c.b16 %v1365, %v1361
    %v1934 = vpack.c.b16 %v1370, %v1366
    %v1935 = vpack.c.b16 %v1371, %v1367
    %v1936 = vpack.c.b16 %v1372, %v1368
    %v1937 = vpack.c.b16 %v1373, %v1369
    %v1938 = vpack.c.b16 %v1378, %v1374
    %v1939 = vpack.c.b16 %v1379, %v1375
    %v1940 = vpack.c.b16 %v1380, %v1376
    %v1941 = vpack.c.b16 %v1381, %v1377
    %v1942 = vpack.c.b16 %v1386, %v1382
    %v1943 = vpack.c.b16 %v1387, %v1383
    %v1944 = vpack.c.b16 %v1388, %v1384
    %v1945 = vpack.c.b16 %v1389, %v1385
    %v1946 = vpack.c.b16 %v1394, %v1390
    %v1947 = vpack.c.b16 %v1395, %v1391
    %v1948 = vpack.c.b16 %v1396, %v1392
    %v1949 = vpack.c.b16 %v1397, %v1393
    %v1950 = vpack.c.b16 %v1402, %v1398
    %v1951 = vpack.c.b16 %v1403, %v1399
    %v1952 = vpack.c.b16 %v1404, %v1400
    %v1953 = vpack.c.b16 %v1405, %v1401
    %v1954 = vpack.c.b16 %v1410, %v1406
    %v1955 = vpack.c.b16 %v1411, %v1407
    %v1956 = vpack.c.b16 %v1412, %v1408
    %v1957 = vpack.c.b16 %v1413, %v1409
    %v1958 = vpack.c.b16 %v1418, %v1414
    %v1959 = vpack.c.b16 %v1419, %v1415
    %v1960 = vpack.c.b16 %v1420, %v1416
    %v1961 = vpack.c.b16 %v1421, %v1417
    %v1962 = vpack.c.b16 %v1426, %v1422
    %v1963 = vpack.c.b16 %v1427, %v1423
    %v1964 = vpack.c.b16 %v1428, %v1424
    %v1965 = vpack.c.b16 %v1429, %v1425
    %v1966 = vpack.c.b16 %v1434, %v1430
    %v1967 = vpack.c.b16 %v1435, %v1431
    %v1968 = vpack.c.b16 %v1436, %v1432
    %v1969 = vpack.c.b16 %v1437, %v1433
    %v1970 = vpack.c.b16 %v1442, %v1438
    %v1971 = vpack.c.b16 %v1443, %v1439
    %v1972 = vpack.c.b16 %v1444, %v1440
    %v1973 = vpack.c.b16 %v1445, %v1441
    %v1974 = vpack.c.b16 %v1450, %v1446
    %v1975 = vpack.c.b16 %v1451, %v1447
    %v1976 = vpack.c.b16 %v1452, %v1448
    %v1977 = vpack.c.b16 %v1453, %v1449
    %v1978 = vpack.c.b16 %v1458, %v1454
    %v1979 = vpack.c.b16 %v1459, %v1455
    %v1980 = vpack.c.b16 %v1460, %v1456
    %v1981 = vpack.c.b16 %v1461, %v1457
    %v1982 = vpack.c.b16 %v1466, %v1462
    %v1983 = vpack.c.b16 %v1467, %v1463
    %v1984 = vpack.c.b16 %v1468, %v1464
    %v1985 = vpack.c.b16 %v1469, %v1465
    %v1986 = vpack.c.b16 %v1474, %v1470
    %v1987 = vpack.c.b16 %v1475, %v1471
    %v1988 = vpack.c.b16 %v1476, %v1472
    %v1989 = vpack.c.b16 %v1477, %v1473
    %v1990 = vpack.c.b16 %v1482, %v1478
    %v1991 = vpack.c.b16 %v1483, %v1479
    %v1992 = vpack.c.b16 %v1484, %v1480
    %v1993 = vpack.c.b16 %v1485, %v1481
    %v1994 = vpack.c.b16 %v1490, %v1486
    %v1995 = vpack.c.b16 %v1491, %v1487
    %v1996 = vpack.c.b16 %v1492, %v1488
    %v1997 = vpack.c.b16 %v1493, %v1489
    %v1998 = vpack.c.b16 %v1498, %v1494
    %v1999 = vpack.c.b16 %v1499, %v1495
    %v2000 = vpack.c.b16 %v1500, %v1496
    %v2001 = vpack.c.b16 %v1501, %v1497
    %v2002 = vpack.c.b16 %v1506, %v1502
    %v2003 = vpack.c.b16 %v1507, %v1503
    %v2004 = vpack.c.b16 %v1508, %v1504
    %v2005 = vpack.c.b16 %v1509, %v1505
    %v2006 = vpack.c.b16 %v1514, %v1510
    %v2007 = vpack.c.b16 %v1515, %v1511
    %v2008 = vpack.c.b16 %v1516, %v1512
    %v2009 = vpack.c.b16 %v1517, %v1513
    %v2010 = vpack.c.b16 %v1522, %v1518
    %v2011 = vpack.c.b16 %v1523, %v1519
    %v2012 = vpack.c.b16 %v1524, %v1520
    %v2013 = vpack.c.b16 %v1525, %v1521
    %v2014 = vpack.c.b16 %v1530, %v1526
    %v2015 = vpack.c.b16 %v1531, %v1527
    %v2016 = vpack.c.b16 %v1532, %v1528
    %v2017 = vpack.c.b16 %v1533, %v1529
    %v2018 = vpack.c.b16 %v1538, %v1534
    %v2019 = vpack.c.b16 %v1539, %v1535
    %v2020 = vpack.c.b16 %v1540, %v1536
    %v2021 = vpack.c.b16 %v1541, %v1537
    %v2022 = vpack.c.b16 %v1546, %v1542
    %v2023 = vpack.c.b16 %v1547, %v1543
    %v2024 = vpack.c.b16 %v1548, %v1544
    %v2025 = vpack.c.b16 %v1549, %v1545
    %v2026 = vpack.c.b16 %v1554, %v1550
    %v2027 = vpack.c.b16 %v1555, %v1551
    %v2028 = vpack.c.b16 %v1556, %v1552
    %v2029 = vpack.c.b16 %v1557, %v1553
    %v2030 = vpack.c.b16 %v1562, %v1558
    %v2031 = vpack.c.b16 %v1563, %v1559
    %v2032 = vpack.c.b16 %v1564, %v1560
    %v2033 = vpack.c.b16 %v1565, %v1561
    %v2034 = vpack.c.b16 %v1570, %v1566
    %v2035 = vpack.c.b16 %v1571, %v1567
    %v2036 = vpack.c.b16 %v1572, %v1568
    %v2037 = vpack.c.b16 %v1573, %v1569
    %v2038 = vpack.c.b16 %v1578, %v1574
    %v2039 = vpack.c.b16 %v1579, %v1575
    %v2040 = vpack.c.b16 %v1580, %v1576
    %v2041 = vpack.c.b16 %v1581, %v1577
    %v2042 = vpack.c.b16 %v1586, %v1582
    %v2043 = vpack.c.b16 %v1587, %v1583
    %v2044 = vpack.c.b16 %v1588, %v1584
    %v2045 = vpack.c.b16 %v1589, %v1585
    %v2046 = vpack.c.b16 %v1594, %v1590
    %v2047 = vpack.c.b16 %v1595, %v1591
    %v2048 = vpack.c.b16 %v1596, %v1592
    %v2049 = vpack.c.b16 %v1597, %v1593
    %v2050 = vpack.c.b16 %v1602, %v1598
    %v2051 = vpack.c.b16 %v1603, %v1599
    %v2052 = vpack.c.b16 %v1604, %v1600
    %v2053 = vpack.c.b16 %v1605, %v1601
    %v2054 = vpack.c.b16 %v1610, %v1606
    %v2055 = vpack.c.b16 %v1611, %v1607
    %v2056 = vpack.c.b16 %v1612, %v1608
    %v2057 = vpack.c.b16 %v1613, %v1609
    %v2058 = vpack.c.b16 %v1618, %v1614
    %v2059 = vpack.c.b16 %v1619, %v1615
    %v2060 = vpack.c.b16 %v1620, %v1616
    %v2061 = vpack.c.b16 %v1621, %v1617
    %v2062 = vpack.c.b16 %v1626, %v1622
    %v2063 = vpack.c.b16 %v1627, %v1623
    %v2064 = vpack.c.b16 %v1628, %v1624
    %v2065 = vpack.c.b16 %v1629, %v1625
    %v2066 = vpack.c.b16 %v1634, %v1630
    %v2067 = vpack.c.b16 %v1635, %v1631
    %v2068 = vpack.c.b16 %v1636, %v1632
    %v2069 = vpack.c.b16 %v1637, %v1633
    %v2070 = vpack.c.b16 %v1642, %v1638
    %v2071 = vpack.c.b16 %v1643, %v1639
    %v2072 = vpack.c.b16 %v1644, %v1640
    %v2073 = vpack.c.b16 %v1645, %v1641
    %v2074 = vpack.c.b16 %v1650, %v1646
    %v2075 = vpack.c.b16 %v1651, %v1647
    %v2076 = vpack.c.b16 %v1652, %v1648
    %v2077 = vpack.c.b16 %v1653, %v1649
    %v2078 = vpack.c.b16 %v1658, %v1654
    %v2079 = vpack.c.b16 %v1659, %v1655
    %v2080 = vpack.c.b16 %v1660, %v1656
    %v2081 = vpack.c.b16 %v1661, %v1657
    %v2082 = vpack.c.b16 %v1666, %v1662
    %v2083 = vpack.c.b16 %v1667, %v1663
    %v2084 = vpack.c.b16 %v1668, %v1664
    %v2085 = vpack.c.b16 %v1669, %v1665
    %v2086 = vpack.c.b16 %v1674, %v1670
    %v2087 = vpack.c.b16 %v1675, %v1671
    %v2088 = vpack.c.b16 %v1676, %v1672
    %v2089 = vpack.c.b16 %v1677, %v1673
    %v2090 = vpack.c.b16 %v1682, %v1678
    %v2091 = vpack.c.b16 %v1683, %v1679
    %v2092 = vpack.c.b16 %v1684, %v1680
    %v2093 = vpack.c.b16 %v1685, %v1681
    %v2094 = vpack.c.b16 %v1690, %v1686
    %v2095 = vpack.c.b16 %v1691, %v1687
    %v2096 = vpack.c.b16 %v1692, %v1688
    %v2097 = vpack.c.b16 %v1693, %v1689
    %v2098 = vpack.c.b16 %v1698, %v1694
    %v2099 = vpack.c.b16 %v1699, %v1695
    %v2100 = vpack.c.b16 %v1700, %v1696
    %v2101 = vpack.c.b16 %v1701, %v1697
    %v2102 = vpack.c.b16 %v1706, %v1702
    %v2103 = vpack.c.b16 %v1707, %v1703
    %v2104 = vpack.c.b16 %v1708, %v1704
    %v2105 = vpack.c.b16 %v1709, %v1705
    %v2106 = vpack.c.b16 %v1714, %v1710
    %v2107 = vpack.c.b16 %v1715, %v1711
    %v2108 = vpack.c.b16 %v1716, %v1712
    %v2109 = vpack.c.b16 %v1717, %v1713
    %vm2502 = vcmask 261120
    %v2504 = vsel %vm2502, %v520, 0
    %2506 = vmatprep.subr.bf16.mxu0 %v1747
    %2507 = vmatpush1.bf16.msra.mxu0 %v1746
    %2508 = vmatprep.subr.bf16.mxu0 %v1743
    %2509 = vmatpush1.bf16.msra.mxu0 %v1742
    %2510 = vmatprep.subr.bf16.mxu0 %v1739
    %2511 = vmatpush1.bf16.msra.mxu0 %v1738
    %2512 = vmatprep.subr.bf16.mxu0 %v1735
    %2513 = vmatpush1.bf16.msra.mxu0 %v1734
    %2514 = vmatprep.subr.bf16.mxu0 %v1731
    %2515 = vmatpush1.bf16.msra.mxu0 %v1730
    %2516 = vmatprep.subr.bf16.mxu0 %v1727
    %2517 = vmatpush1.bf16.msra.mxu0 %v1726
    %2518 = vmatprep.subr.bf16.mxu0 %v1723
    %2519 = vmatpush1.bf16.msra.mxu0 %v1722
    %2520 = vmatprep.subr.bf16.mxu0 %v1719
    %2521 = vmatpush1.bf16.msra.mxu0 %v1718
    %2522 = vmatprep.subr.bf16.mxu0 %v1779
    %2523 = vmatpush2.bf16.msra.mxu0 %v1778
    %2524 = vmatprep.subr.bf16.mxu0 %v1775
    %2525 = vmatpush2.bf16.msra.mxu0 %v1774
    %2526 = vmatprep.subr.bf16.mxu0 %v1771
    %2527 = vmatpush2.bf16.msra.mxu0 %v1770
    %2528 = vmatprep.subr.bf16.mxu0 %v1767
    %2529 = vmatpush2.bf16.msra.mxu0 %v1766
    %2530 = vmatprep.subr.bf16.mxu0 %v1763
    %2531 = vmatpush2.bf16.msra.mxu0 %v1762
    %2532 = vmatprep.subr.bf16.mxu0 %v1759
    %2533 = vmatpush2.bf16.msra.mxu0 %v1758
    %2534 = vmatprep.subr.bf16.mxu0 %v1755
    %2535 = vmatpush2.bf16.msra.mxu0 %v1754
    %2536 = vmatprep.subr.bf16.mxu0 %v1751
    %2537 = vmatpush2.bf16.msra.mxu0 %v1750
    %2538 = vmatprep.mubr.bf16.mxu0 %v479
    %2539 = vmatmul.mubr.bf16.gmra.mxu0 %v465
    %v2540 = vpop.f32.mrf.mxu0
    %v2541 = vadd.f32 %v423, %v2540
    %v2542 = vpop.f32.mrf.mxu0
    %v2543 = vadd.f32 %v427, %v2542
    %v2544 = vpop.f32.mrf.mxu0
    %v2545 = vpop.f32.mrf.mxu0
    %2546 = vdwg.mxu0
    %2547 = vmatprep.subr.bf16.mxu0 %v1811
    %2548 = vmatpush1.bf16.msra.mxu0 %v1810
    %2549 = vmatprep.subr.bf16.mxu0 %v1807
    %2550 = vmatpush1.bf16.msra.mxu0 %v1806
    %2551 = vmatprep.subr.bf16.mxu0 %v1803
    %2552 = vmatpush1.bf16.msra.mxu0 %v1802
    %2553 = vmatprep.subr.bf16.mxu0 %v1799
    %2554 = vmatpush1.bf16.msra.mxu0 %v1798
    %2555 = vmatprep.subr.bf16.mxu0 %v1795
    %2556 = vmatpush1.bf16.msra.mxu0 %v1794
    %2557 = vmatprep.subr.bf16.mxu0 %v1791
    %2558 = vmatpush1.bf16.msra.mxu0 %v1790
    %2559 = vmatprep.subr.bf16.mxu0 %v1787
    %2560 = vmatpush1.bf16.msra.mxu0 %v1786
    %2561 = vmatprep.subr.bf16.mxu0 %v1783
    %2562 = vmatpush1.bf16.msra.mxu0 %v1782
    %2563 = vmatprep.subr.bf16.mxu0 %v1843
    %2564 = vmatpush2.bf16.msra.mxu0 %v1842
    %2565 = vmatprep.subr.bf16.mxu0 %v1839
    %2566 = vmatpush2.bf16.msra.mxu0 %v1838
    %2567 = vmatprep.subr.bf16.mxu0 %v1835
    %2568 = vmatpush2.bf16.msra.mxu0 %v1834
    %2569 = vmatprep.subr.bf16.mxu0 %v1831
    %2570 = vmatpush2.bf16.msra.mxu0 %v1830
    %2571 = vmatprep.subr.bf16.mxu0 %v1827
    %2572 = vmatpush2.bf16.msra.mxu0 %v1826
    %2573 = vmatprep.subr.bf16.mxu0 %v1823
    %2574 = vmatpush2.bf16.msra.mxu0 %v1822
    %2575 = vmatprep.subr.bf16.mxu0 %v1819
    %2576 = vmatpush2.bf16.msra.mxu0 %v1818
    %2577 = vmatprep.subr.bf16.mxu0 %v1815
    %2578 = vmatpush2.bf16.msra.mxu0 %v1814
    %2579 = vmatprep.mubr.bf16.mxu0 %v489
    %2580 = vmatmul.mubr.bf16.gmra.mxu0 %v487
    %v2581 = vpop.f32.mrf.mxu0
    %v2582 = vadd.f32 %v2541, %v2581
    %v2583 = vpop.f32.mrf.mxu0
    %v2584 = vadd.f32 %v2543, %v2583
    %v2585 = vpop.f32.mrf.mxu0
    %v2586 = vpop.f32.mrf.mxu0
    %2587 = vdwg.mxu0
    %2588 = vmatprep.subr.bf16.mxu0 %v1875
    %2589 = vmatpush1.bf16.msra.mxu0 %v1874
    %2590 = vmatprep.subr.bf16.mxu0 %v1871
    %2591 = vmatpush1.bf16.msra.mxu0 %v1870
    %2592 = vmatprep.subr.bf16.mxu0 %v1867
    %2593 = vmatpush1.bf16.msra.mxu0 %v1866
    %2594 = vmatprep.subr.bf16.mxu0 %v1863
    %2595 = vmatpush1.bf16.msra.mxu0 %v1862
    %2596 = vmatprep.subr.bf16.mxu0 %v1859
    %2597 = vmatpush1.bf16.msra.mxu0 %v1858
    %2598 = vmatprep.subr.bf16.mxu0 %v1855
    %2599 = vmatpush1.bf16.msra.mxu0 %v1854
    %2600 = vmatprep.subr.bf16.mxu0 %v1851
    %2601 = vmatpush1.bf16.msra.mxu0 %v1850
    %2602 = vmatprep.subr.bf16.mxu0 %v1847
    %2603 = vmatpush1.bf16.msra.mxu0 %v1846
    %2604 = vmatprep.subr.bf16.mxu0 %v1907
    %2605 = vmatpush2.bf16.msra.mxu0 %v1906
    %2606 = vmatprep.subr.bf16.mxu0 %v1903
    %2607 = vmatpush2.bf16.msra.mxu0 %v1902
    %2608 = vmatprep.subr.bf16.mxu0 %v1899
    %2609 = vmatpush2.bf16.msra.mxu0 %v1898
    %2610 = vmatprep.subr.bf16.mxu0 %v1895
    %2611 = vmatpush2.bf16.msra.mxu0 %v1894
    %2612 = vmatprep.subr.bf16.mxu0 %v1891
    %2613 = vmatpush2.bf16.msra.mxu0 %v1890
    %2614 = vmatprep.subr.bf16.mxu0 %v1887
    %2615 = vmatpush2.bf16.msra.mxu0 %v1886
    %2616 = vmatprep.subr.bf16.mxu0 %v1883
    %2617 = vmatpush2.bf16.msra.mxu0 %v1882
    %2618 = vmatprep.subr.bf16.mxu0 %v1879
    %2619 = vmatpush2.bf16.msra.mxu0 %v1878
    %2620 = vmatprep.mubr.bf16.mxu0 %v486
    %2621 = vmatmul.mubr.bf16.gmra.mxu0 %v472
    %v2622 = vpop.f32.mrf.mxu0
    %v2623 = vadd.f32 %v2582, %v2622
    %v2624 = vpop.f32.mrf.mxu0
    %v2625 = vadd.f32 %v2584, %v2624
    %v2626 = vpop.f32.mrf.mxu0
    %v2627 = vpop.f32.mrf.mxu0
    %2628 = vdwg.mxu0
    %2629 = vmatprep.subr.bf16.mxu0 %v1939
    %2630 = vmatpush1.bf16.msra.mxu0 %v1938
    %2631 = vmatprep.subr.bf16.mxu0 %v1935
    %2632 = vmatpush1.bf16.msra.mxu0 %v1934
    %2633 = vmatprep.subr.bf16.mxu0 %v1931
    %2634 = vmatpush1.bf16.msra.mxu0 %v1930
    %2635 = vmatprep.subr.bf16.mxu0 %v1927
    %2636 = vmatpush1.bf16.msra.mxu0 %v1926
    %2637 = vmatprep.subr.bf16.mxu0 %v1923
    %2638 = vmatpush1.bf16.msra.mxu0 %v1922
    %2639 = vmatprep.subr.bf16.mxu0 %v1919
    %2640 = vmatpush1.bf16.msra.mxu0 %v1918
    %2641 = vmatprep.subr.bf16.mxu0 %v1915
    %2642 = vmatpush1.bf16.msra.mxu0 %v1914
    %2643 = vmatprep.subr.bf16.mxu0 %v1911
    %2644 = vmatpush1.bf16.msra.mxu0 %v1910
    %2645 = vmatprep.subr.bf16.mxu0 %v1971
    %2646 = vmatpush2.bf16.msra.mxu0 %v1970
    %2647 = vmatprep.subr.bf16.mxu0 %v1967
    %2648 = vmatpush2.bf16.msra.mxu0 %v1966
    %2649 = vmatprep.subr.bf16.mxu0 %v1963
    %2650 = vmatpush2.bf16.msra.mxu0 %v1962
    %2651 = vmatprep.subr.bf16.mxu0 %v1959
    %2652 = vmatpush2.bf16.msra.mxu0 %v1958
    %2653 = vmatprep.subr.bf16.mxu0 %v1955
    %2654 = vmatpush2.bf16.msra.mxu0 %v1954
    %2655 = vmatprep.subr.bf16.mxu0 %v1951
    %2656 = vmatpush2.bf16.msra.mxu0 %v1950
    %2657 = vmatprep.subr.bf16.mxu0 %v1947
    %2658 = vmatpush2.bf16.msra.mxu0 %v1946
    %2659 = vmatprep.subr.bf16.mxu0 %v1943
    %2660 = vmatpush2.bf16.msra.mxu0 %v1942
    %2661 = vmatprep.mubr.bf16.mxu0 %v490
    %2662 = vmatmul.mubr.bf16.gmra.mxu0 %v488
    %v2663 = vpop.f32.mrf.mxu0
    %v2664 = vadd.f32 %v2623, %v2663
    %v2665 = vpop.f32.mrf.mxu0
    %v2666 = vadd.f32 %v2625, %v2665
    %v2667 = vpop.f32.mrf.mxu0
    %v2668 = vpop.f32.mrf.mxu0
    %2669 = vdwg.mxu0
    %2670 = vmatprep.subr.bf16.mxu0 %v2003
    %2671 = vmatpush1.bf16.msra.mxu0 %v2002
    %2672 = vmatprep.subr.bf16.mxu0 %v1999
    %2673 = vmatpush1.bf16.msra.mxu0 %v1998
    %2674 = vmatprep.subr.bf16.mxu0 %v1995
    %2675 = vmatpush1.bf16.msra.mxu0 %v1994
    %2676 = vmatprep.subr.bf16.mxu0 %v1991
    %2677 = vmatpush1.bf16.msra.mxu0 %v1990
    %2678 = vmatprep.subr.bf16.mxu0 %v1987
    %2679 = vmatpush1.bf16.msra.mxu0 %v1986
    %2680 = vmatprep.subr.bf16.mxu0 %v1983
    %2681 = vmatpush1.bf16.msra.mxu0 %v1982
    %2682 = vmatprep.subr.bf16.mxu0 %v1979
    %2683 = vmatpush1.bf16.msra.mxu0 %v1978
    %2684 = vmatprep.subr.bf16.mxu0 %v1975
    %2685 = vmatpush1.bf16.msra.mxu0 %v1974
    %2686 = vmatprep.subr.bf16.mxu0 %v2035
    %2687 = vmatpush2.bf16.msra.mxu0 %v2034
    %2688 = vmatprep.subr.bf16.mxu0 %v2031
    %2689 = vmatpush2.bf16.msra.mxu0 %v2030
    %2690 = vmatprep.subr.bf16.mxu0 %v2027
    %2691 = vmatpush2.bf16.msra.mxu0 %v2026
    %2692 = vmatprep.subr.bf16.mxu0 %v2023
    %2693 = vmatpush2.bf16.msra.mxu0 %v2022
    %2694 = vmatprep.subr.bf16.mxu0 %v2019
    %2695 = vmatpush2.bf16.msra.mxu0 %v2018
    %2696 = vmatprep.subr.bf16.mxu0 %v2015
    %2697 = vmatpush2.bf16.msra.mxu0 %v2014
    %2698 = vmatprep.subr.bf16.mxu0 %v2011
    %2699 = vmatpush2.bf16.msra.mxu0 %v2010
    %2700 = vmatprep.subr.bf16.mxu0 %v2007
    %2701 = vmatpush2.bf16.msra.mxu0 %v2006
    %2702 = vmatprep.mubr.bf16.mxu0 %v527
    %2703 = vmatmul.mubr.bf16.gmra.mxu0 %v513
    %v2704 = vpop.f32.mrf.mxu0
    %v2705 = vadd.f32 %v2664, %v2704
    %v2706 = vpop.f32.mrf.mxu0
    %v2707 = vadd.f32 %v2666, %v2706
    %v2708 = vpop.f32.mrf.mxu0
    %v2709 = vpop.f32.mrf.mxu0
    %2710 = vdwg.mxu0
    %2711 = vmatprep.subr.bf16.mxu0 %v2067
    %2712 = vmatpush1.bf16.msra.mxu0 %v2066
    %2713 = vmatprep.subr.bf16.mxu0 %v2063
    %2714 = vmatpush1.bf16.msra.mxu0 %v2062
    %2715 = vmatprep.subr.bf16.mxu0 %v2059
    %2716 = vmatpush1.bf16.msra.mxu0 %v2058
    %2717 = vmatprep.subr.bf16.mxu0 %v2055
    %2718 = vmatpush1.bf16.msra.mxu0 %v2054
    %2719 = vmatprep.subr.bf16.mxu0 %v2051
    %2720 = vmatpush1.bf16.msra.mxu0 %v2050
    %2721 = vmatprep.subr.bf16.mxu0 %v2047
    %2722 = vmatpush1.bf16.msra.mxu0 %v2046
    %2723 = vmatprep.subr.bf16.mxu0 %v2043
    %2724 = vmatpush1.bf16.msra.mxu0 %v2042
    %2725 = vmatprep.subr.bf16.mxu0 %v2039
    %2726 = vmatpush1.bf16.msra.mxu0 %v2038
    %2727 = vmatprep.subr.bf16.mxu0 %v2099
    %2728 = vmatpush2.bf16.msra.mxu0 %v2098
    %2729 = vmatprep.subr.bf16.mxu0 %v2095
    %2730 = vmatpush2.bf16.msra.mxu0 %v2094
    %2731 = vmatprep.subr.bf16.mxu0 %v2091
    %2732 = vmatpush2.bf16.msra.mxu0 %v2090
    %2733 = vmatprep.subr.bf16.mxu0 %v2087
    %2734 = vmatpush2.bf16.msra.mxu0 %v2086
    %2735 = vmatprep.subr.bf16.mxu0 %v2083
    %2736 = vmatpush2.bf16.msra.mxu0 %v2082
    %2737 = vmatprep.subr.bf16.mxu0 %v2079
    %2738 = vmatpush2.bf16.msra.mxu0 %v2078
    %2739 = vmatprep.subr.bf16.mxu0 %v2075
    %2740 = vmatpush2.bf16.msra.mxu0 %v2074
    %2741 = vmatprep.subr.bf16.mxu0 %v2071
    %2742 = vmatpush2.bf16.msra.mxu0 %v2070
    %2743 = vmatprep.mubr.bf16.mxu0 %v529
    %2744 = vmatmul.mubr.bf16.gmra.mxu0 %v528
    %v2745 = vpop.f32.mrf.mxu0
    %v2746 = vadd.f32 %v2705, %v2745
    %v2747 = vpop.f32.mrf.mxu0
    %v2748 = vadd.f32 %v2707, %v2747
    %v2749 = vpop.f32.mrf.mxu0
    %v2750 = vpop.f32.mrf.mxu0
    %2751 = vdwg.mxu0
    %2752 = vmatprep.subr.bf16.mxu0 0
    %2753 = vmatpush1.bf16.msra.mxu0 0
    %2754 = vmatprep.subr.bf16.mxu0 0
    %2755 = vmatpush1.bf16.msra.mxu0 0
    %2756 = vmatprep.subr.bf16.mxu0 0
    %2757 = vmatpush1.bf16.msra.mxu0 0
    %2758 = vmatprep.subr.bf16.mxu0 0
    %2759 = vmatpush1.bf16.msra.mxu0 0
    %2760 = vmatprep.subr.bf16.mxu0 0
    %2761 = vmatpush1.bf16.msra.mxu0 0
    %2762 = vmatprep.subr.bf16.mxu0 0
    %2763 = vmatpush1.bf16.msra.mxu0 0
    %2764 = vmatprep.subr.bf16.mxu0 %v2107
    %2765 = vmatpush1.bf16.msra.mxu0 %v2106
    %2766 = vmatprep.subr.bf16.mxu0 %v2103
    %2767 = vmatpush1.bf16.msra.mxu0 %v2102
    %2768 = vmatprep.subr.bf16.mxu0 0
    %2769 = vmatpush2.bf16.msra.mxu0 0
    %2770 = vmatprep.subr.bf16.mxu0 0
    %2771 = vmatpush2.bf16.msra.mxu0 0
    %2772 = vmatprep.subr.bf16.mxu0 0
    %2773 = vmatpush2.bf16.msra.mxu0 0
    %2774 = vmatprep.subr.bf16.mxu0 0
    %2775 = vmatpush2.bf16.msra.mxu0 0
    %2776 = vmatprep.subr.bf16.mxu0 0
    %2777 = vmatpush2.bf16.msra.mxu0 0
    %2778 = vmatprep.subr.bf16.mxu0 0
    %2779 = vmatpush2.bf16.msra.mxu0 0
    %2780 = vmatprep.subr.bf16.mxu0 0
    %2781 = vmatpush2.bf16.msra.mxu0 0
    %2782 = vmatprep.subr.bf16.mxu0 0
    %2783 = vmatpush2.bf16.msra.mxu0 0
    %2784 = vmatprep.mubr.bf16.mxu0 0
    %2785 = vmatmul.mubr.bf16.gmra.mxu0 %v2504
    %v2786 = vpop.f32.mrf.mxu0
    %v2787 = vadd.f32 %v2746, %v2786
    %v2788 = vpop.f32.mrf.mxu0
    %v2789 = vadd.f32 %v2748, %v2788
    %v2790 = vpop.f32.mrf.mxu0
    %v2791 = vpop.f32.mrf.mxu0
    %2792 = vdwg.mxu0
    %2793 = vmatprep.subr.bf16.mxu0 %v1749
    %2794 = vmatpush1.bf16.msra.mxu0 %v1748
    %2795 = vmatprep.subr.bf16.mxu0 %v1745
    %2796 = vmatpush1.bf16.msra.mxu0 %v1744
    %2797 = vmatprep.subr.bf16.mxu0 %v1741
    %2798 = vmatpush1.bf16.msra.mxu0 %v1740
    %2799 = vmatprep.subr.bf16.mxu0 %v1737
    %2800 = vmatpush1.bf16.msra.mxu0 %v1736
    %2801 = vmatprep.subr.bf16.mxu0 %v1733
    %2802 = vmatpush1.bf16.msra.mxu0 %v1732
    %2803 = vmatprep.subr.bf16.mxu0 %v1729
    %2804 = vmatpush1.bf16.msra.mxu0 %v1728
    %2805 = vmatprep.subr.bf16.mxu0 %v1725
    %2806 = vmatpush1.bf16.msra.mxu0 %v1724
    %2807 = vmatprep.subr.bf16.mxu0 %v1721
    %2808 = vmatpush1.bf16.msra.mxu0 %v1720
    %2809 = vmatprep.subr.bf16.mxu0 %v1781
    %2810 = vmatpush2.bf16.msra.mxu0 %v1780
    %2811 = vmatprep.subr.bf16.mxu0 %v1777
    %2812 = vmatpush2.bf16.msra.mxu0 %v1776
    %2813 = vmatprep.subr.bf16.mxu0 %v1773
    %2814 = vmatpush2.bf16.msra.mxu0 %v1772
    %2815 = vmatprep.subr.bf16.mxu0 %v1769
    %2816 = vmatpush2.bf16.msra.mxu0 %v1768
    %2817 = vmatprep.subr.bf16.mxu0 %v1765
    %2818 = vmatpush2.bf16.msra.mxu0 %v1764
    %2819 = vmatprep.subr.bf16.mxu0 %v1761
    %2820 = vmatpush2.bf16.msra.mxu0 %v1760
    %2821 = vmatprep.subr.bf16.mxu0 %v1757
    %2822 = vmatpush2.bf16.msra.mxu0 %v1756
    %2823 = vmatprep.subr.bf16.mxu0 %v1753
    %2824 = vmatpush2.bf16.msra.mxu0 %v1752
    %2825 = vmatprep.mubr.bf16.mxu0 %v479
    %2826 = vmatmul.mubr.bf16.gmra.mxu0 %v465
    %v2827 = vpop.f32.mrf.mxu0
    %v2828 = vadd.f32 %v431, %v2827
    %v2829 = vpop.f32.mrf.mxu0
    %v2830 = vadd.f32 %v435, %v2829
    %v2831 = vpop.f32.mrf.mxu0
    %v2832 = vpop.f32.mrf.mxu0
    %2833 = vdwg.mxu0
    %2834 = vmatprep.subr.bf16.mxu0 %v1813
    %2835 = vmatpush1.bf16.msra.mxu0 %v1812
    %2836 = vmatprep.subr.bf16.mxu0 %v1809
    %2837 = vmatpush1.bf16.msra.mxu0 %v1808
    %2838 = vmatprep.subr.bf16.mxu0 %v1805
    %2839 = vmatpush1.bf16.msra.mxu0 %v1804
    %2840 = vmatprep.subr.bf16.mxu0 %v1801
    %2841 = vmatpush1.bf16.msra.mxu0 %v1800
    %2842 = vmatprep.subr.bf16.mxu0 %v1797
    %2843 = vmatpush1.bf16.msra.mxu0 %v1796
    %2844 = vmatprep.subr.bf16.mxu0 %v1793
    %2845 = vmatpush1.bf16.msra.mxu0 %v1792
    %2846 = vmatprep.subr.bf16.mxu0 %v1789
    %2847 = vmatpush1.bf16.msra.mxu0 %v1788
    %2848 = vmatprep.subr.bf16.mxu0 %v1785
    %2849 = vmatpush1.bf16.msra.mxu0 %v1784
    %2850 = vmatprep.subr.bf16.mxu0 %v1845
    %2851 = vmatpush2.bf16.msra.mxu0 %v1844
    %2852 = vmatprep.subr.bf16.mxu0 %v1841
    %2853 = vmatpush2.bf16.msra.mxu0 %v1840
    %2854 = vmatprep.subr.bf16.mxu0 %v1837
    %2855 = vmatpush2.bf16.msra.mxu0 %v1836
    %2856 = vmatprep.subr.bf16.mxu0 %v1833
    %2857 = vmatpush2.bf16.msra.mxu0 %v1832
    %2858 = vmatprep.subr.bf16.mxu0 %v1829
    %2859 = vmatpush2.bf16.msra.mxu0 %v1828
    %2860 = vmatprep.subr.bf16.mxu0 %v1825
    %2861 = vmatpush2.bf16.msra.mxu0 %v1824
    %2862 = vmatprep.subr.bf16.mxu0 %v1821
    %2863 = vmatpush2.bf16.msra.mxu0 %v1820
    %2864 = vmatprep.subr.bf16.mxu0 %v1817
    %2865 = vmatpush2.bf16.msra.mxu0 %v1816
    %2866 = vmatprep.mubr.bf16.mxu0 %v489
    %2867 = vmatmul.mubr.bf16.gmra.mxu0 %v487
    %v2868 = vpop.f32.mrf.mxu0
    %v2869 = vadd.f32 %v2828, %v2868
    %v2870 = vpop.f32.mrf.mxu0
    %v2871 = vadd.f32 %v2830, %v2870
    %v2872 = vpop.f32.mrf.mxu0
    %v2873 = vpop.f32.mrf.mxu0
    %2874 = vdwg.mxu0
    %2875 = vmatprep.subr.bf16.mxu0 %v1877
    %2876 = vmatpush1.bf16.msra.mxu0 %v1876
    %2877 = vmatprep.subr.bf16.mxu0 %v1873
    %2878 = vmatpush1.bf16.msra.mxu0 %v1872
    %2879 = vmatprep.subr.bf16.mxu0 %v1869
    %2880 = vmatpush1.bf16.msra.mxu0 %v1868
    %2881 = vmatprep.subr.bf16.mxu0 %v1865
    %2882 = vmatpush1.bf16.msra.mxu0 %v1864
    %2883 = vmatprep.subr.bf16.mxu0 %v1861
    %2884 = vmatpush1.bf16.msra.mxu0 %v1860
    %2885 = vmatprep.subr.bf16.mxu0 %v1857
    %2886 = vmatpush1.bf16.msra.mxu0 %v1856
    %2887 = vmatprep.subr.bf16.mxu0 %v1853
    %2888 = vmatpush1.bf16.msra.mxu0 %v1852
    %2889 = vmatprep.subr.bf16.mxu0 %v1849
    %2890 = vmatpush1.bf16.msra.mxu0 %v1848
    %2891 = vmatprep.subr.bf16.mxu0 %v1909
    %2892 = vmatpush2.bf16.msra.mxu0 %v1908
    %2893 = vmatprep.subr.bf16.mxu0 %v1905
    %2894 = vmatpush2.bf16.msra.mxu0 %v1904
    %2895 = vmatprep.subr.bf16.mxu0 %v1901
    %2896 = vmatpush2.bf16.msra.mxu0 %v1900
    %2897 = vmatprep.subr.bf16.mxu0 %v1897
    %2898 = vmatpush2.bf16.msra.mxu0 %v1896
    %2899 = vmatprep.subr.bf16.mxu0 %v1893
    %2900 = vmatpush2.bf16.msra.mxu0 %v1892
    %2901 = vmatprep.subr.bf16.mxu0 %v1889
    %2902 = vmatpush2.bf16.msra.mxu0 %v1888
    %2903 = vmatprep.subr.bf16.mxu0 %v1885
    %2904 = vmatpush2.bf16.msra.mxu0 %v1884
    %2905 = vmatprep.subr.bf16.mxu0 %v1881
    %2906 = vmatpush2.bf16.msra.mxu0 %v1880
    %2907 = vmatprep.mubr.bf16.mxu0 %v486
    %2908 = vmatmul.mubr.bf16.gmra.mxu0 %v472
    %v2909 = vpop.f32.mrf.mxu0
    %v2910 = vadd.f32 %v2869, %v2909
    %v2911 = vpop.f32.mrf.mxu0
    %v2912 = vadd.f32 %v2871, %v2911
    %v2913 = vpop.f32.mrf.mxu0
    %v2914 = vpop.f32.mrf.mxu0
    %2915 = vdwg.mxu0
    %2916 = vmatprep.subr.bf16.mxu0 %v1941
    %2917 = vmatpush1.bf16.msra.mxu0 %v1940
    %2918 = vmatprep.subr.bf16.mxu0 %v1937
    %2919 = vmatpush1.bf16.msra.mxu0 %v1936
    %2920 = vmatprep.subr.bf16.mxu0 %v1933
    %2921 = vmatpush1.bf16.msra.mxu0 %v1932
    %2922 = vmatprep.subr.bf16.mxu0 %v1929
    %2923 = vmatpush1.bf16.msra.mxu0 %v1928
    %2924 = vmatprep.subr.bf16.mxu0 %v1925
    %2925 = vmatpush1.bf16.msra.mxu0 %v1924
    %2926 = vmatprep.subr.bf16.mxu0 %v1921
    %2927 = vmatpush1.bf16.msra.mxu0 %v1920
    %2928 = vmatprep.subr.bf16.mxu0 %v1917
    %2929 = vmatpush1.bf16.msra.mxu0 %v1916
    %2930 = vmatprep.subr.bf16.mxu0 %v1913
    %2931 = vmatpush1.bf16.msra.mxu0 %v1912
    %2932 = vmatprep.subr.bf16.mxu0 %v1973
    %2933 = vmatpush2.bf16.msra.mxu0 %v1972
    %2934 = vmatprep.subr.bf16.mxu0 %v1969
    %2935 = vmatpush2.bf16.msra.mxu0 %v1968
    %2936 = vmatprep.subr.bf16.mxu0 %v1965
    %2937 = vmatpush2.bf16.msra.mxu0 %v1964
    %2938 = vmatprep.subr.bf16.mxu0 %v1961
    %2939 = vmatpush2.bf16.msra.mxu0 %v1960
    %2940 = vmatprep.subr.bf16.mxu0 %v1957
    %2941 = vmatpush2.bf16.msra.mxu0 %v1956
    %2942 = vmatprep.subr.bf16.mxu0 %v1953
    %2943 = vmatpush2.bf16.msra.mxu0 %v1952
    %2944 = vmatprep.subr.bf16.mxu0 %v1949
    %2945 = vmatpush2.bf16.msra.mxu0 %v1948
    %2946 = vmatprep.subr.bf16.mxu0 %v1945
    %2947 = vmatpush2.bf16.msra.mxu0 %v1944
    %2948 = vmatprep.mubr.bf16.mxu0 %v490
    %2949 = vmatmul.mubr.bf16.gmra.mxu0 %v488
    %v2950 = vpop.f32.mrf.mxu0
    %v2951 = vadd.f32 %v2910, %v2950
    %v2952 = vpop.f32.mrf.mxu0
    %v2953 = vadd.f32 %v2912, %v2952
    %v2954 = vpop.f32.mrf.mxu0
    %v2955 = vpop.f32.mrf.mxu0
    %2956 = vdwg.mxu0
    %2957 = vmatprep.subr.bf16.mxu0 %v2005
    %2958 = vmatpush1.bf16.msra.mxu0 %v2004
    %2959 = vmatprep.subr.bf16.mxu0 %v2001
    %2960 = vmatpush1.bf16.msra.mxu0 %v2000
    %2961 = vmatprep.subr.bf16.mxu0 %v1997
    %2962 = vmatpush1.bf16.msra.mxu0 %v1996
    %2963 = vmatprep.subr.bf16.mxu0 %v1993
    %2964 = vmatpush1.bf16.msra.mxu0 %v1992
    %2965 = vmatprep.subr.bf16.mxu0 %v1989
    %2966 = vmatpush1.bf16.msra.mxu0 %v1988
    %2967 = vmatprep.subr.bf16.mxu0 %v1985
    %2968 = vmatpush1.bf16.msra.mxu0 %v1984
    %2969 = vmatprep.subr.bf16.mxu0 %v1981
    %2970 = vmatpush1.bf16.msra.mxu0 %v1980
    %2971 = vmatprep.subr.bf16.mxu0 %v1977
    %2972 = vmatpush1.bf16.msra.mxu0 %v1976
    %2973 = vmatprep.subr.bf16.mxu0 %v2037
    %2974 = vmatpush2.bf16.msra.mxu0 %v2036
    %2975 = vmatprep.subr.bf16.mxu0 %v2033
    %2976 = vmatpush2.bf16.msra.mxu0 %v2032
    %2977 = vmatprep.subr.bf16.mxu0 %v2029
    %2978 = vmatpush2.bf16.msra.mxu0 %v2028
    %2979 = vmatprep.subr.bf16.mxu0 %v2025
    %2980 = vmatpush2.bf16.msra.mxu0 %v2024
    %2981 = vmatprep.subr.bf16.mxu0 %v2021
    %2982 = vmatpush2.bf16.msra.mxu0 %v2020
    %2983 = vmatprep.subr.bf16.mxu0 %v2017
    %2984 = vmatpush2.bf16.msra.mxu0 %v2016
    %2985 = vmatprep.subr.bf16.mxu0 %v2013
    %2986 = vmatpush2.bf16.msra.mxu0 %v2012
    %2987 = vmatprep.subr.bf16.mxu0 %v2009
    %2988 = vmatpush2.bf16.msra.mxu0 %v2008
    %2989 = vmatprep.mubr.bf16.mxu0 %v527
    %2990 = vmatmul.mubr.bf16.gmra.mxu0 %v513
    %v2991 = vpop.f32.mrf.mxu0
    %v2992 = vadd.f32 %v2951, %v2991
    %v2993 = vpop.f32.mrf.mxu0
    %v2994 = vadd.f32 %v2953, %v2993
    %v2995 = vpop.f32.mrf.mxu0
    %v2996 = vpop.f32.mrf.mxu0
    %2997 = vdwg.mxu0
    %2998 = vmatprep.subr.bf16.mxu0 %v2069
    %2999 = vmatpush1.bf16.msra.mxu0 %v2068
    %3000 = vmatprep.subr.bf16.mxu0 %v2065
    %3001 = vmatpush1.bf16.msra.mxu0 %v2064
    %3002 = vmatprep.subr.bf16.mxu0 %v2061
    %3003 = vmatpush1.bf16.msra.mxu0 %v2060
    %3004 = vmatprep.subr.bf16.mxu0 %v2057
    %3005 = vmatpush1.bf16.msra.mxu0 %v2056
    %3006 = vmatprep.subr.bf16.mxu0 %v2053
    %3007 = vmatpush1.bf16.msra.mxu0 %v2052
    %3008 = vmatprep.subr.bf16.mxu0 %v2049
    %3009 = vmatpush1.bf16.msra.mxu0 %v2048
    %3010 = vmatprep.subr.bf16.mxu0 %v2045
    %3011 = vmatpush1.bf16.msra.mxu0 %v2044
    %3012 = vmatprep.subr.bf16.mxu0 %v2041
    %3013 = vmatpush1.bf16.msra.mxu0 %v2040
    %3014 = vmatprep.subr.bf16.mxu0 %v2101
    %3015 = vmatpush2.bf16.msra.mxu0 %v2100
    %3016 = vmatprep.subr.bf16.mxu0 %v2097
    %3017 = vmatpush2.bf16.msra.mxu0 %v2096
    %3018 = vmatprep.subr.bf16.mxu0 %v2093
    %3019 = vmatpush2.bf16.msra.mxu0 %v2092
    %3020 = vmatprep.subr.bf16.mxu0 %v2089
    %3021 = vmatpush2.bf16.msra.mxu0 %v2088
    %3022 = vmatprep.subr.bf16.mxu0 %v2085
    %3023 = vmatpush2.bf16.msra.mxu0 %v2084
    %3024 = vmatprep.subr.bf16.mxu0 %v2081
    %3025 = vmatpush2.bf16.msra.mxu0 %v2080
    %3026 = vmatprep.subr.bf16.mxu0 %v2077
    %3027 = vmatpush2.bf16.msra.mxu0 %v2076
    %3028 = vmatprep.subr.bf16.mxu0 %v2073
    %3029 = vmatpush2.bf16.msra.mxu0 %v2072
    %3030 = vmatprep.mubr.bf16.mxu0 %v529
    %3031 = vmatmul.mubr.bf16.gmra.mxu0 %v528
    %v3032 = vpop.f32.mrf.mxu0
    %v3033 = vadd.f32 %v2992, %v3032
    %v3034 = vpop.f32.mrf.mxu0
    %v3035 = vadd.f32 %v2994, %v3034
    %v3036 = vpop.f32.mrf.mxu0
    %v3037 = vpop.f32.mrf.mxu0
    %3038 = vdwg.mxu0
    %3039 = vmatprep.subr.bf16.mxu0 0
    %3040 = vmatpush1.bf16.msra.mxu0 0
    %3041 = vmatprep.subr.bf16.mxu0 0
    %3042 = vmatpush1.bf16.msra.mxu0 0
    %3043 = vmatprep.subr.bf16.mxu0 0
    %3044 = vmatpush1.bf16.msra.mxu0 0
    %3045 = vmatprep.subr.bf16.mxu0 0
    %3046 = vmatpush1.bf16.msra.mxu0 0
    %3047 = vmatprep.subr.bf16.mxu0 0
    %3048 = vmatpush1.bf16.msra.mxu0 0
    %3049 = vmatprep.subr.bf16.mxu0 0
    %3050 = vmatpush1.bf16.msra.mxu0 0
    %3051 = vmatprep.subr.bf16.mxu0 %v2109
    %3052 = vmatpush1.bf16.msra.mxu0 %v2108
    %3053 = vmatprep.subr.bf16.mxu0 %v2105
    %3054 = vmatpush1.bf16.msra.mxu0 %v2104
    %3055 = vmatprep.subr.bf16.mxu0 0
    %3056 = vmatpush2.bf16.msra.mxu0 0
    %3057 = vmatprep.subr.bf16.mxu0 0
    %3058 = vmatpush2.bf16.msra.mxu0 0
    %3059 = vmatprep.subr.bf16.mxu0 0
    %3060 = vmatpush2.bf16.msra.mxu0 0
    %3061 = vmatprep.subr.bf16.mxu0 0
    %3062 = vmatpush2.bf16.msra.mxu0 0
    %3063 = vmatprep.subr.bf16.mxu0 0
    %3064 = vmatpush2.bf16.msra.mxu0 0
    %3065 = vmatprep.subr.bf16.mxu0 0
    %3066 = vmatpush2.bf16.msra.mxu0 0
    %3067 = vmatprep.subr.bf16.mxu0 0
    %3068 = vmatpush2.bf16.msra.mxu0 0
    %3069 = vmatprep.subr.bf16.mxu0 0
    %3070 = vmatpush2.bf16.msra.mxu0 0
    %3071 = vmatprep.mubr.bf16.mxu0 0
    %3072 = vmatmul.mubr.bf16.gmra.mxu0 %v2504
    %v3073 = vpop.f32.mrf.mxu0
    %v3074 = vadd.f32 %v3033, %v3073
    %v3075 = vpop.f32.mrf.mxu0
    %v3076 = vadd.f32 %v3035, %v3075
    %v3077 = vpop.f32.mrf.mxu0
    %v3078 = vpop.f32.mrf.mxu0
    %3079 = vdwg.mxu0
    %v3080 = vmax.f32 %v2787, 0.0
    %v3081 = vmax.f32 %v2789, 0.0
    %v3082 = vmax.f32 %v3074, 0.0
    %v3083 = vmax.f32 %v3076, 0.0
    %v3084 = vpack.c.bf16 %v3080, %v3080
    %v3085 = vpack.c.bf16 %v3081, %v3081
    %v3086 = vpack.c.bf16 %v3082, %v3082
    %v3087 = vpack.c.bf16 %v3083, %v3083
    %v3092 = vcombine.low %v3084, %v3085
    %v3093 = vcombine.low %v3086, %v3087
    %v3095 = vunpack.c.l.s4 1966171168
    %v3096 = vunpack.c.0.s8 %v3095
    %v3097 = vlaneseq
    %v3098 = vshrl.u32 %v3097, 7
    %v3099 = vsub.s32 %v3096, %v3098
    %v3100 = vrot.slane %v3092, %v3099
    %v3102 = vunpack.c.l.s4 1966171168
    %v3103 = vunpack.c.0.s8 %v3102
    %v3104 = vlaneseq
    %v3105 = vshrl.u32 %v3104, 7
    %v3106 = vsub.s32 %v3103, %v3105
    %v3107 = vrot.slane %v3093, %v3106
    %v3108 = vcombine.low %v3100, %v3107
    %v3110 = vunpack.c.l.s4 1966171168
    %v3111 = vunpack.c.0.s8 %v3110
    %v3112 = vlaneseq
    %v3113 = vshrl.u32 %v3112, 7
    %v3114 = vsub.s32 %v3111, %v3113
    %v3115 = vrot.slane %v3108, %v3114
    %3117 = vst [vmem:[#allocation2] sm:$0xf] %v3115
    %v3118 = vld [vmem:[#allocation2] sm:$0xf]
    %v3119 = vld [vmem:[%s3] sm:$0xf]
    %v3120 = vld [vmem:[%s3 + $0x4] sm:$0xf]
    %v3121 = vld [vmem:[%s3 + $0x8] sm:$0xf]
    %v3122 = vld [vmem:[%s3 + $0xc] sm:$0xf]
    %v3123 = vld [vmem:[%s3 + $0x10] sm:$0xf]
    %v3124 = vld [vmem:[%s3 + $0x14] sm:$0xf]
    %v3125 = vld [vmem:[%s3 + $0x18] sm:$0xf]
    %v3126 = vld [vmem:[%s3 + $0x1c] sm:$0xf]
    %v3127 = vld [vmem:[%s3 + $0x20] sm:$0xf]
    %v3128 = vld [vmem:[%s3 + $0x24] sm:$0xf]
    %v3129 = vld [vmem:[%s3 + $0x28] sm:$0xf]
    %v3130 = vld [vmem:[%s3 + $0x2c] sm:$0xf]
    %v3131 = vld [vmem:[%s3 + $0x30] sm:$0xf]
    %v3132 = vld [vmem:[%s3 + $0x34] sm:$0xf]
    %v3133 = vld [vmem:[%s3 + $0x38] sm:$0xf]
    %v3134 = vld [vmem:[%s3 + $0x3c] sm:$0xf]
    %v3135 = vld [vmem:[%s3 + $0x40] sm:$0xf]
    %v3136 = vld [vmem:[%s3 + $0x44] sm:$0xf]
    %v3137 = vld [vmem:[%s3 + $0x48] sm:$0xf]
    %v3138 = vld [vmem:[%s3 + $0x4c] sm:$0xf]
    %v3139 = vld [vmem:[%s3 + $0x50] sm:$0xf]
    %v3140 = vld [vmem:[%s3 + $0x54] sm:$0xf]
    %v3141 = vld [vmem:[%s3 + $0x58] sm:$0xf]
    %v3142 = vld [vmem:[%s3 + $0x5c] sm:$0xf]
    %v3143 = vld [vmem:[%s3 + $0x60] sm:$0xf]
    %v3144 = vld [vmem:[%s3 + $0x64] sm:$0xf]
    %v3145 = vld [vmem:[%s3 + $0x68] sm:$0xf]
    %v3146 = vld [vmem:[%s3 + $0x6c] sm:$0xf]
    %v3147 = vld [vmem:[%s3 + $0x70] sm:$0xf]
    %v3148 = vld [vmem:[%s3 + $0x74] sm:$0xf]
    %v3149 = vld [vmem:[%s3 + $0x78] sm:$0xf]
    %v3150 = vld [vmem:[%s3 + $0x7c] sm:$0xf]
    %v3151 = vld [vmem:[%s3 + $0x80] sm:$0xf]
    %v3152 = vld [vmem:[%s3 + $0x84] sm:$0xf]
    %v3153 = vld [vmem:[%s3 + $0x88] sm:$0xf]
    %v3154 = vld [vmem:[%s3 + $0x8c] sm:$0xf]
    %v3155 = vld [vmem:[%s3 + $0x90] sm:$0xf]
    %v3156 = vld [vmem:[%s3 + $0x94] sm:$0xf]
    %v3157 = vld [vmem:[%s3 + $0x98] sm:$0xf]
    %v3158 = vld [vmem:[%s3 + $0x9c] sm:$0xf]
    %v3159 = vld [vmem:[%s3 + $0xa0] sm:$0xf]
    %v3160 = vld [vmem:[%s3 + $0xa4] sm:$0xf]
    %v3161 = vld [vmem:[%s3 + $0xa8] sm:$0xf]
    %v3162 = vld [vmem:[%s3 + $0xac] sm:$0xf]
    %v3163 = vld [vmem:[%s3 + $0xb0] sm:$0xf]
    %v3164 = vld [vmem:[%s3 + $0xb4] sm:$0xf]
    %v3165 = vld [vmem:[%s3 + $0xb8] sm:$0xf]
    %v3166 = vld [vmem:[%s3 + $0xbc] sm:$0xf]
    %v3167 = vld [vmem:[%s3 + $0xc0] sm:$0xf]
    %v3168 = vld [vmem:[%s3 + $0xc4] sm:$0xf]
    %v3169 = vld [vmem:[%s3 + $0xc8] sm:$0xf]
    %v3170 = vld [vmem:[%s3 + $0xcc] sm:$0xf]
    %v3171 = vld [vmem:[%s3 + $0xd0] sm:$0xf]
    %v3172 = vld [vmem:[%s3 + $0xd4] sm:$0xf]
    %v3173 = vld [vmem:[%s3 + $0xd8] sm:$0xf]
    %v3174 = vld [vmem:[%s3 + $0xdc] sm:$0xf]
    %v3175 = vld [vmem:[%s3 + $0xe0] sm:$0xf]
    %v3176 = vld [vmem:[%s3 + $0xe4] sm:$0xf]
    %v3177 = vld [vmem:[%s3 + $0xe8] sm:$0xf]
    %v3178 = vld [vmem:[%s3 + $0xec] sm:$0xf]
    %v3179 = vld [vmem:[%s3 + $0xf0] sm:$0xf]
    %v3180 = vld [vmem:[%s3 + $0xf4] sm:$0xf]
    %v3181 = vld [vmem:[%s3 + $0xf8] sm:$0xf]
    %v3182 = vld [vmem:[%s3 + $0xfc] sm:$0xf]
    %v3183 = vld [vmem:[%s4] sm:$0x1]
    %v3185 = vlaneseq
    %v3186 = vshrl.u32 %v3185, 7
    %v3187 = vsub.s32 0, %v3186
    %v3188 = vrot.slane %v3183, %v3187
    %v3192 = vunpack.c.l.s4 1966171168
    %v3193 = vunpack.c.0.s8 %v3192
    %v3194 = vlaneseq
    %v3195 = vshrl.u32 %v3194, 7
    %v3196 = vsub.s32 %v3193, %v3195
    %v3197 = vrot.slane %v3118, %v3196
    %v3198 = vcombine.high %v3197, %v3197
    %v3200 = vunpack.c.l.s4 1966171168
    %v3201 = vunpack.c.0.s8 %v3200
    %v3202 = vlaneseq
    %v3203 = vshrl.u32 %v3202, 7
    %v3204 = vsub.s32 %v3201, %v3203
    %v3205 = vrot.slane %v3197, %v3204
    %v3207 = vunpack.c.l.s4 1966171168
    %v3208 = vunpack.c.0.s8 %v3207
    %v3209 = vlaneseq
    %v3210 = vshrl.u32 %v3209, 7
    %v3211 = vsub.s32 %v3208, %v3210
    %v3212 = vrot.slane %v3198, %v3211
    %v3213 = vcombine.high %v3205, %v3205
    %v3214 = vcombine.high %v3212, %v3212
    %v3283 = vunpack.c.l.b16 %v3119
    %v3284 = vunpack.c.l.b16 %v3120
    %v3285 = vunpack.c.l.b16 %v3121
    %v3286 = vunpack.c.l.b16 %v3122
    %v3287 = vunpack.c.l.b16 %v3123
    %v3288 = vunpack.c.l.b16 %v3124
    %v3289 = vunpack.c.l.b16 %v3125
    %v3290 = vunpack.c.l.b16 %v3126
    %v3291 = vunpack.c.l.b16 %v3127
    %v3292 = vunpack.c.l.b16 %v3128
    %v3293 = vunpack.c.l.b16 %v3129
    %v3294 = vunpack.c.l.b16 %v3130
    %v3295 = vunpack.c.l.b16 %v3131
    %v3296 = vunpack.c.l.b16 %v3132
    %v3297 = vunpack.c.l.b16 %v3133
    %v3298 = vunpack.c.l.b16 %v3134
    %v3299 = vunpack.c.l.b16 %v3135
    %v3300 = vunpack.c.l.b16 %v3136
    %v3301 = vunpack.c.l.b16 %v3137
    %v3302 = vunpack.c.l.b16 %v3138
    %v3303 = vunpack.c.l.b16 %v3139
    %v3304 = vunpack.c.l.b16 %v3140
    %v3305 = vunpack.c.l.b16 %v3141
    %v3306 = vunpack.c.l.b16 %v3142
    %v3307 = vunpack.c.l.b16 %v3143
    %v3308 = vunpack.c.l.b16 %v3144
    %v3309 = vunpack.c.l.b16 %v3145
    %v3310 = vunpack.c.l.b16 %v3146
    %v3311 = vunpack.c.l.b16 %v3147
    %v3312 = vunpack.c.l.b16 %v3148
    %v3313 = vunpack.c.l.b16 %v3149
    %v3314 = vunpack.c.l.b16 %v3150
    %v3315 = vunpack.c.l.b16 %v3151
    %v3316 = vunpack.c.l.b16 %v3152
    %v3317 = vunpack.c.l.b16 %v3153
    %v3318 = vunpack.c.l.b16 %v3154
    %v3319 = vunpack.c.l.b16 %v3155
    %v3320 = vunpack.c.l.b16 %v3156
    %v3321 = vunpack.c.l.b16 %v3157
    %v3322 = vunpack.c.l.b16 %v3158
    %v3323 = vunpack.c.l.b16 %v3159
    %v3324 = vunpack.c.l.b16 %v3160
    %v3325 = vunpack.c.l.b16 %v3161
    %v3326 = vunpack.c.l.b16 %v3162
    %v3327 = vunpack.c.l.b16 %v3163
    %v3328 = vunpack.c.l.b16 %v3164
    %v3329 = vunpack.c.l.b16 %v3165
    %v3330 = vunpack.c.l.b16 %v3166
    %v3331 = vunpack.c.l.b16 %v3167
    %v3332 = vunpack.c.l.b16 %v3168
    %v3333 = vunpack.c.l.b16 %v3169
    %v3334 = vunpack.c.l.b16 %v3170
    %v3335 = vunpack.c.l.b16 %v3171
    %v3336 = vunpack.c.l.b16 %v3172
    %v3337 = vunpack.c.l.b16 %v3173
    %v3338 = vunpack.c.l.b16 %v3174
    %v3339 = vunpack.c.l.b16 %v3175
    %v3340 = vunpack.c.l.b16 %v3176
    %v3341 = vunpack.c.l.b16 %v3177
    %v3342 = vunpack.c.l.b16 %v3178
    %v3343 = vunpack.c.l.b16 %v3179
    %v3344 = vunpack.c.l.b16 %v3180
    %v3345 = vunpack.c.l.b16 %v3181
    %v3346 = vunpack.c.l.b16 %v3182
    %v3347 = vpack.c.b16 %v3284, %v3283
    %v3348 = vpack.c.b16 %v3286, %v3285
    %v3349 = vpack.c.b16 %v3288, %v3287
    %v3350 = vpack.c.b16 %v3290, %v3289
    %v3351 = vpack.c.b16 %v3292, %v3291
    %v3352 = vpack.c.b16 %v3294, %v3293
    %v3353 = vpack.c.b16 %v3296, %v3295
    %v3354 = vpack.c.b16 %v3298, %v3297
    %v3355 = vpack.c.b16 %v3300, %v3299
    %v3356 = vpack.c.b16 %v3302, %v3301
    %v3357 = vpack.c.b16 %v3304, %v3303
    %v3358 = vpack.c.b16 %v3306, %v3305
    %v3359 = vpack.c.b16 %v3308, %v3307
    %v3360 = vpack.c.b16 %v3310, %v3309
    %v3361 = vpack.c.b16 %v3312, %v3311
    %v3362 = vpack.c.b16 %v3314, %v3313
    %v3363 = vpack.c.b16 %v3316, %v3315
    %v3364 = vpack.c.b16 %v3318, %v3317
    %v3365 = vpack.c.b16 %v3320, %v3319
    %v3366 = vpack.c.b16 %v3322, %v3321
    %v3367 = vpack.c.b16 %v3324, %v3323
    %v3368 = vpack.c.b16 %v3326, %v3325
    %v3369 = vpack.c.b16 %v3328, %v3327
    %v3370 = vpack.c.b16 %v3330, %v3329
    %v3371 = vpack.c.b16 %v3332, %v3331
    %v3372 = vpack.c.b16 %v3334, %v3333
    %v3373 = vpack.c.b16 %v3336, %v3335
    %v3374 = vpack.c.b16 %v3338, %v3337
    %v3375 = vpack.c.b16 %v3340, %v3339
    %v3376 = vpack.c.b16 %v3342, %v3341
    %v3377 = vpack.c.b16 %v3344, %v3343
    %v3378 = vpack.c.b16 %v3346, %v3345
    %3411 = vmatprep.subr.bf16.mxu0 0
    %3412 = vmatpush1.bf16.msra.mxu0 %v3354
    %3413 = vmatprep.subr.bf16.mxu0 0
    %3414 = vmatpush1.bf16.msra.mxu0 %v3353
    %3415 = vmatprep.subr.bf16.mxu0 0
    %3416 = vmatpush1.bf16.msra.mxu0 %v3352
    %3417 = vmatprep.subr.bf16.mxu0 0
    %3418 = vmatpush1.bf16.msra.mxu0 %v3351
    %3419 = vmatprep.subr.bf16.mxu0 0
    %3420 = vmatpush1.bf16.msra.mxu0 %v3350
    %3421 = vmatprep.subr.bf16.mxu0 0
    %3422 = vmatpush1.bf16.msra.mxu0 %v3349
    %3423 = vmatprep.subr.bf16.mxu0 0
    %3424 = vmatpush1.bf16.msra.mxu0 %v3348
    %3425 = vmatprep.subr.bf16.mxu0 0
    %3426 = vmatpush1.bf16.msra.mxu0 %v3347
    %3427 = vmatprep.subr.bf16.mxu0 0
    %3428 = vmatpush2.bf16.msra.mxu0 %v3362
    %3429 = vmatprep.subr.bf16.mxu0 0
    %3430 = vmatpush2.bf16.msra.mxu0 %v3361
    %3431 = vmatprep.subr.bf16.mxu0 0
    %3432 = vmatpush2.bf16.msra.mxu0 %v3360
    %3433 = vmatprep.subr.bf16.mxu0 0
    %3434 = vmatpush2.bf16.msra.mxu0 %v3359
    %3435 = vmatprep.subr.bf16.mxu0 0
    %3436 = vmatpush2.bf16.msra.mxu0 %v3358
    %3437 = vmatprep.subr.bf16.mxu0 0
    %3438 = vmatpush2.bf16.msra.mxu0 %v3357
    %3439 = vmatprep.subr.bf16.mxu0 0
    %3440 = vmatpush2.bf16.msra.mxu0 %v3356
    %3441 = vmatprep.subr.bf16.mxu0 0
    %3442 = vmatpush2.bf16.msra.mxu0 %v3355
    %3443 = vmatprep.mubr.bf16.mxu0 %v3212
    %3444 = vmatmul.mubr.bf16.gmra.mxu0 %v3205
    %v3445 = vpop.f32.mrf.mxu0
    %v3446 = vadd.f32 %v3188, %v3445
    %v3447 = vpop.f32.mrf.mxu0
    %v3448 = vpop.f32.mrf.mxu0
    %v3449 = vpop.f32.mrf.mxu0
    %3450 = vdwg.mxu0
    %3451 = vmatprep.subr.bf16.mxu0 0
    %3452 = vmatpush1.bf16.msra.mxu0 %v3370
    %3453 = vmatprep.subr.bf16.mxu0 0
    %3454 = vmatpush1.bf16.msra.mxu0 %v3369
    %3455 = vmatprep.subr.bf16.mxu0 0
    %3456 = vmatpush1.bf16.msra.mxu0 %v3368
    %3457 = vmatprep.subr.bf16.mxu0 0
    %3458 = vmatpush1.bf16.msra.mxu0 %v3367
    %3459 = vmatprep.subr.bf16.mxu0 0
    %3460 = vmatpush1.bf16.msra.mxu0 %v3366
    %3461 = vmatprep.subr.bf16.mxu0 0
    %3462 = vmatpush1.bf16.msra.mxu0 %v3365
    %3463 = vmatprep.subr.bf16.mxu0 0
    %3464 = vmatpush1.bf16.msra.mxu0 %v3364
    %3465 = vmatprep.subr.bf16.mxu0 0
    %3466 = vmatpush1.bf16.msra.mxu0 %v3363
    %3467 = vmatprep.subr.bf16.mxu0 0
    %3468 = vmatpush2.bf16.msra.mxu0 %v3378
    %3469 = vmatprep.subr.bf16.mxu0 0
    %3470 = vmatpush2.bf16.msra.mxu0 %v3377
    %3471 = vmatprep.subr.bf16.mxu0 0
    %3472 = vmatpush2.bf16.msra.mxu0 %v3376
    %3473 = vmatprep.subr.bf16.mxu0 0
    %3474 = vmatpush2.bf16.msra.mxu0 %v3375
    %3475 = vmatprep.subr.bf16.mxu0 0
    %3476 = vmatpush2.bf16.msra.mxu0 %v3374
    %3477 = vmatprep.subr.bf16.mxu0 0
    %3478 = vmatpush2.bf16.msra.mxu0 %v3373
    %3479 = vmatprep.subr.bf16.mxu0 0
    %3480 = vmatpush2.bf16.msra.mxu0 %v3372
    %3481 = vmatprep.subr.bf16.mxu0 0
    %3482 = vmatpush2.bf16.msra.mxu0 %v3371
    %3483 = vmatprep.mubr.bf16.mxu0 %v3214
    %3484 = vmatmul.mubr.bf16.gmra.mxu0 %v3213
    %v3485 = vpop.f32.mrf.mxu0
    %v3486 = vadd.f32 %v3446, %v3485
    %v3487 = vpop.f32.mrf.mxu0
    %v3488 = vpop.f32.mrf.mxu0
    %v3489 = vpop.f32.mrf.mxu0
    %3490 = vdwg.mxu0
    %3491 = vst [vmem:[%s6] sm:$0x3] %v3486
    // Predicated region
    $region22: #{cnn_base_forward.7} parent=1 // pred_check
      _
    $region23: #{cnn_base_forward.7} parent=1 // pred_check_branch
      %3493 = sbr.rel (0) target = $region25
    $region24: #{cnn_base_forward.7} parent=1 // pred_region
      %s3495 = ssub.s32 64, 64
      %3496 = vsyncadd [#allocation3], %s3495
      %s3498 = sshll.u32 [#allocation2], 4
      %s3499 = int_to_ptr.vmem [resolvable:$true] %s3498
      %3501 = dma.vmem_to_hbm [thread:$0]  %s3499, 64, %s5, [#allocation3]
    $region25: #{cnn_base_forward.7} parent=1 // pred_fallthru
      _
    // Predicated region
    $region26: #{cnn_base_forward.7} parent=1 // pred_check
      _
    $region27: #{cnn_base_forward.7} parent=1 // pred_check_branch
      %3503 = sbr.rel (0) target = $region29
    $region28: #{cnn_base_forward.7} parent=1 // pred_region
      _
    $region29: #{cnn_base_forward.7} parent=1 // pred_fallthru
      _
    // Predicated region
    $region30: #{cnn_base_forward.7} parent=1 // pred_check
      _
    $region31: #{cnn_base_forward.7} parent=1 // pred_check_branch
      %3505 = sbr.rel (0) target = $region33
    $region32: #{cnn_base_forward.7} parent=1 // pred_region
      %3506 = dma.done [#allocation3], 64
    $region33: #{cnn_base_forward.7} parent=1 // pred_fallthru
      _
    // Predicated region
    $region34: #{cnn_base_forward.7} parent=1 // pred_check
      _
    $region35: #{cnn_base_forward.7} parent=1 // pred_check_branch
      %3508 = sbr.rel (0) target = $region37
    $region36: #{cnn_base_forward.7} parent=1 // pred_region
      _
    $region37: #{cnn_base_forward.7} parent=1 // pred_fallthru
      _
    %3509 = vsyncpa [#allocation3], 1

</llo_original>
